<compile_context>
chip_gen: v7x
topology: tpu7x:2x2x1
jax: 0.10.0
libtpu: 0.0.40
codegen_flags: <defaults>
</compile_context>

<pallas_src>
import math

import jax
import jax.numpy as jnp
import numpy as np
from jax.experimental import pallas as pl
from jax.experimental.pallas import tpu as pltpu

NEG_SLOPE = 0.01   # nn.LeakyReLU default
BN_EPS = 1e-5      # nn.BatchNorm2d default

_VMEM = pl.BlockSpec(memory_space=pltpu.MemorySpace.VMEM)


# ---------------------------------------------------------------------------
# In-kernel helpers
# ---------------------------------------------------------------------------
def _leaky(y):
    return jnp.where(y >= 0.0, y, NEG_SLOPE * y)


def _bn_act(y, gamma, beta, act):
    # BatchNorm2d, training mode: biased batch statistics per channel.
    # Layout is (C, N*H*W) so the per-channel reduction is a lane reduce.
    mean = jnp.mean(y, axis=1, keepdims=True)
    d = y - mean
    var = jnp.mean(d * d, axis=1, keepdims=True)
    y = d * jax.lax.rsqrt(var + BN_EPS)
    y = y * gamma + beta
    if act:
        y = _leaky(y)
    return y


def _conv_taps(a, s_ref, w_ref):
    """Conv as gather-by-matmul.

    a      : (Cin, P_in) activation in CP layout
    s_ref  : (taps, P_in, P_out) constant 0/1 tap-selection operators
    w_ref  : (Cout, taps*Cin) flattened conv weight (tap-major, cin-minor)
    returns: (Cout, P_out)
    """
    n_taps = s_ref.shape[0]
    patches = jnp.concatenate(
        [jnp.dot(a, s_ref[t], preferred_element_type=jnp.float32)
         for t in range(n_taps)],
        axis=0)                                                     # (taps*Cin, P_out)
    return jnp.dot(w_ref[...], patches, preferred_element_type=jnp.float32)


def _make_kernel(n_convs, latent_dim, fs):
    """Single fused forward kernel.  Argument order (all VMEM refs):

      x_cp, eps_cp,
      [S_l, Wflat_l, gamma_l, beta_l]  x n_convs          (encoder 3x3 convs)
      S_h, Wh_flat, gamma_h, beta_h                        (enc_h conv)
      W_mulv, b_mulv                                       (fused mu|logvar head)
      W_mu2_s, b_mu2_s, F                                  (fc_mu2 + View pivot)
      [K_l, Wd_l, gammad_l, betad_l]  x n_convs            (decoder layers)
      rec_ref, mulv_ref                                    (outputs)
    """

    def kernel(*refs):
        x_ref, eps_ref = refs[0], refs[1]
        p = 2
        enc = [refs[p + 4 * l: p + 4 * l + 4] for l in range(n_convs)]
        p += 4 * n_convs
        sh_ref, wh_ref, gh_ref, bh_ref = refs[p:p + 4]
        p += 4
        wmulv_ref, bmulv_ref = refs[p:p + 2]
        p += 2
        wmu2_ref, bmu2_ref, f_ref = refs[p:p + 3]
        p += 3
        dec = [refs[p + 4 * l: p + 4 * l + 4] for l in range(n_convs)]
        p += 4 * n_convs
        rec_ref, mulv_ref = refs[p], refs[p + 1]

        # ----------------- encoder -----------------
        a = x_ref[...]                                              # (Cin0, N*H*W)
        for l in range(n_convs):
            s_r, w_r, g_r, b_r = enc[l]
            a = _bn_act(_conv_taps(a, s_r, w_r), g_r[...], b_r[...], act=True)
        # final encoder conv (kernel = stride = flatten_size) -> (h_dim, N)
        h = _bn_act(_conv_taps(a, sh_ref, wh_ref), gh_ref[...], bh_ref[...], act=True)

        # -------- fused fc_mu | fc_logvar + reparameterize --------
        mulv = jnp.dot(wmulv_ref[...], h,
                       preferred_element_type=jnp.float32) + bmulv_ref[...]
        mu = mulv[:latent_dim, :]
        logvar = mulv[latent_dim:, :]
        z = eps_ref[...] * jnp.exp(0.5 * logvar) + mu               # (latent, N)
        mulv_ref[...] = mulv

        # -------- fc_mu2: Linear -> View(N, C, fs, fs) -> LeakyReLU --------
        # Produced directly in CP layout (C_last, N*fs*fs): one (C,latent) weight
        # slice per spatial offset s, scattered into its column stripe via F[s].
        d = None
        for s in range(fs * fs):
            u = jnp.dot(wmu2_ref[s], z,
                        preferred_element_type=jnp.float32) + bmu2_ref[s]
            u = _leaky(u)                                           # (C_last, N)
            t = jnp.dot(u, f_ref[s], preferred_element_type=jnp.float32)
            d = t if d is None else d + t                           # (C_last, N*fs*fs)

        # ----------------- decoder -----------------
        for l in range(n_convs):
            k_r, wd_r, gd_r, bd_r = dec[l]
            up = jnp.dot(d, k_r[...], preferred_element_type=jnp.float32)   # bilinear
            v = jnp.dot(wd_r[...], up, preferred_element_type=jnp.float32)  # 1x1 conv
            d = _bn_act(v, gd_r[...], bd_r[...], act=(l < n_convs - 1))

        rec_ref[...] = d                                            # lane-dense store

    return kernel


# ---------------------------------------------------------------------------
# Constant-operator builders (run once at init, plain numpy)
# ---------------------------------------------------------------------------
def _conv_selection(N, Hin, Win, kh, kw, stride, pad):
    """0/1 operators S[t] of shape (N*Hin*Win, N*Ho*Wo); (a @ S[t]) gathers tap t."""
    Ho = (Hin - kh + 2 * pad) // stride + 1
    Wo = (Win - kw + 2 * pad) // stride + 1
    S = np.zeros((kh * kw, N * Hin * Win, N * Ho * Wo), np.float32)
    for n in range(N):
        for ho in range(Ho):
            for wo in range(Wo):
                po = (n * Ho + ho) * Wo + wo
                for di in range(kh):
                    hi = ho * stride - pad + di
                    if not (0 <= hi < Hin):
                        continue
                    for dj in range(kw):
                        wi = wo * stride - pad + dj
                        if 0 <= wi < Win:
                            S[di * kw + dj, (n * Hin + hi) * Win + wi, po] = 1.0
    return S, Ho, Wo


def _bilinear_matrix(in_size, scale):
    # nn.Upsample(mode='bilinear', align_corners=False) as a linear map (out x in)
    out_size = int(math.floor(in_size * scale))
    A = np.zeros((out_size, in_size), np.float32)
    for o in range(out_size):
        src = (o + 0.5) / scale - 0.5
        src = max(src, 0.0)
        i0 = int(np.floor(src))
        lam = src - i0
        i0 = min(i0, in_size - 1)
        i1 = min(i0 + 1, in_size - 1)
        A[o, i0] += 1.0 - lam
        A[o, i1] += lam
    return A


def _upsample_operator(N, in_size, scale):
    """Block-diagonal (A (x) A) so the 2-D bilinear upsample is one matmul in CP layout."""
    A = _bilinear_matrix(in_size, scale)                 # (out, in)
    K = np.kron(A, A).T.astype(np.float32)               # (in*in, out*out)
    Kfull = np.kron(np.eye(N, dtype=np.float32), K)      # (N*in*in, N*out*out)
    return Kfull, A.shape[0]


# ---------------------------------------------------------------------------
# Parameter initialization (deterministic, synthetic, PyTorch layouts)
# ---------------------------------------------------------------------------
def _uniform(key, shape, fan_in):
    bound = 1.0 / math.sqrt(fan_in)
    return jax.random.uniform(key, shape, jnp.float32, -bound, bound)


def output_size(s, k, stride, pad):
    return (s - k + 2 * pad) // stride + 1


def init_params(key, *, img_size, in_ch, latent_dim, h_dim, kernel_size, stride, padding):
    n_convs = len(in_ch) - 1
    fs = img_size
    for _ in range(n_convs):
        fs = output_size(fs, kernel_size, stride, padding)

    keys = iter(jax.random.split(key, 64))
    params = {"cfg": dict(img_size=img_size, in_ch=list(in_ch), latent_dim=latent_dim,
                          h_dim=h_dim, n_convs=n_convs, flatten_size=fs,
                          kernel_size=kernel_size, stride=stride, padding=padding)}

    # NOTE: conv biases in front of train-mode BatchNorm are exactly cancelled by
    # the per-channel mean subtraction, so they are omitted (zero effect on forward).
    enc = []
    for i in range(n_convs):
        cin, cout = in_ch[i], in_ch[i + 1]
        fan_in = cin * kernel_size * kernel_size
        enc.append(dict(
            w=_uniform(next(keys), (cout, cin, kernel_size, kernel_size), fan_in),
            gamma=jnp.ones((cout,), jnp.float32),
            beta=jnp.zeros((cout,), jnp.float32)))
    params["enc"] = enc

    fan_in = in_ch[-1] * fs * fs
    params["enc_h"] = dict(
        w=_uniform(next(keys), (h_dim, in_ch[-1], fs, fs), fan_in),
        gamma=jnp.ones((h_dim,), jnp.float32),
        beta=jnp.zeros((h_dim,), jnp.float32))

    params["w_mu"] = _uniform(next(keys), (latent_dim, h_dim), h_dim)   # nn.Linear (out,in)
    params["b_mu"] = _uniform(next(keys), (latent_dim,), h_dim)
    params["w_lv"] = _uniform(next(keys), (latent_dim, h_dim), h_dim)
    params["b_lv"] = _uniform(next(keys), (latent_dim,), h_dim)

    mu2_out = in_ch[-1] * fs * fs
    params["w_mu2"] = _uniform(next(keys), (mu2_out, latent_dim), latent_dim)
    params["b_mu2"] = _uniform(next(keys), (mu2_out,), latent_dim)

    dec = []
    for i in range(n_convs):
        cin, cout = in_ch[-1 - i], in_ch[-2 - i]
        dec.append(dict(
            w=_uniform(next(keys), (cout, cin), cin),   # 1x1 conv weight (Cout, Cin)
            gamma=jnp.ones((cout,), jnp.float32),
            beta=jnp.zeros((cout,), jnp.float32)))
    params["dec"] = dec
    return params


# ---------------------------------------------------------------------------
# Build the fused forward function for a fixed batch size
# ---------------------------------------------------------------------------
def build_forward(params, batch_size):
    cfg = params["cfg"]
    N = batch_size
    in_ch, n_convs, fs = cfg["in_ch"], cfg["n_convs"], cfg["flatten_size"]
    L, h_dim, img = cfg["latent_dim"], cfg["h_dim"], cfg["img_size"]
    k, st, pd = cfg["kernel_size"], cfg["stride"], cfg["padding"]

    ops = []   # static kernel operands (everything except x, eps)

    # encoder 3x3 convs
    s_cur = img
    for l in range(n_convs):
        cin, cout = in_ch[l], in_ch[l + 1]
        S, Ho, _ = _conv_selection(N, s_cur, s_cur, k, k, st, pd)
        w = params["enc"][l]["w"]                                       # (Cout,Cin,k,k)
        w_flat = jnp.transpose(w, (0, 2, 3, 1)).reshape(cout, k * k * cin)
        ops += [jnp.asarray(S), w_flat,
                params["enc"][l]["gamma"].reshape(cout, 1),
                params["enc"][l]["beta"].reshape(cout, 1)]
        s_cur = Ho
    assert s_cur == fs

    # enc_h conv (kernel = stride = flatten_size, pad 0)
    S_h, _, _ = _conv_selection(N, fs, fs, fs, fs, fs, 0)
    wh = params["enc_h"]["w"]
    wh_flat = jnp.transpose(wh, (0, 2, 3, 1)).reshape(h_dim, fs * fs * in_ch[-1])
    ops += [jnp.asarray(S_h), wh_flat,
            params["enc_h"]["gamma"].reshape(h_dim, 1),
            params["enc_h"]["beta"].reshape(h_dim, 1)]

    # fused mu|logvar head
    w_mulv = jnp.concatenate([params["w_mu"], params["w_lv"]], axis=0)   # (2L, h_dim)
    b_mulv = jnp.concatenate([params["b_mu"], params["b_lv"]], axis=0).reshape(2 * L, 1)
    ops += [w_mulv, b_mulv]

    # fc_mu2: pre-slice the Linear weight per spatial offset (pure re-layout of the
    # same parameter) + column-scatter operators F so View lands directly in CP layout.
    cl = in_ch[-1]
    w_mu2 = params["w_mu2"].reshape(cl, fs * fs, L)                      # row = c*fs*fs + s
    w_mu2_s = jnp.transpose(w_mu2, (1, 0, 2))                            # (fs*fs, C, L)
    b_mu2_s = jnp.transpose(params["b_mu2"].reshape(cl, fs * fs), (1, 0)).reshape(fs * fs, cl, 1)
    F = np.zeros((fs * fs, N, N * fs * fs), np.float32)
    for s in range(fs * fs):
        for n in range(N):
            F[s, n, n * fs * fs + s] = 1.0
    ops += [w_mu2_s, b_mu2_s, jnp.asarray(F)]

    # decoder: fused (bilinear upsample) + 1x1 conv + BN (+ LeakyReLU / Identity)
    s_cur = fs
    for i in range(n_convs):
        last_pad = img // 2 ** i % 2
        scale = (img // 2 ** i) / (img // 2 ** (i + 1) + last_pad)
        Kfull, s_out = _upsample_operator(N, s_cur, scale)
        cout = in_ch[-2 - i]
        ops += [jnp.asarray(Kfull), params["dec"][i]["w"],
                params["dec"][i]["gamma"].reshape(cout, 1),
                params["dec"][i]["beta"].reshape(cout, 1)]
        s_cur = s_out
    assert s_cur == img

    ops = [jnp.asarray(o, jnp.float32) for o in ops]

    kernel = _make_kernel(n_convs, L, fs)
    n_in = 2 + len(ops)
    call = pl.pallas_call(
        kernel,
        out_shape=(jax.ShapeDtypeStruct((in_ch[0], N * img * img), jnp.float32),
                   jax.ShapeDtypeStruct((2 * L, N), jnp.float32)),
        in_specs=[_VMEM] * n_in,
        out_specs=(_VMEM, _VMEM),
    )

    @jax.jit
    def _forward(x, eps, *ops_):
        # single NCHW -> CP conversion at the boundary
        x_cp = jnp.transpose(x, (1, 0, 2, 3)).reshape(in_ch[0], N * img * img)
        eps_cp = jnp.transpose(eps, (1, 0))
        rec_cp, mulv = call(x_cp.astype(jnp.float32), eps_cp.astype(jnp.float32), *ops_)
        rec = jnp.transpose(rec_cp.reshape(in_ch[0], N, img, img), (1, 0, 2, 3))
        mu = jnp.transpose(mulv[:L, :], (1, 0))
        logvar = jnp.transpose(mulv[L:, :], (1, 0))
        return rec, mu, logvar

    def forward(x, eps):
        rec, mu, logvar = _forward(x, eps, *ops)
        return rec, x, mu, logvar

    return forward


# ---------------------------------------------------------------------------
if __name__ == "__main__":
    # Small config consistent with ConvolutionalVAE(__init__):
    # img_size=16, in_ch=[1, 8, 16, 32], latent_dim=8, h_dim=32, kernel=3, stride=2, pad=1
    key = jax.random.PRNGKey(0)
    k_param, k_x, k_eps = jax.random.split(key, 3)

    params = init_params(k_param, img_size=16, in_ch=[1, 8, 16, 32],
                         latent_dim=8, h_dim=32, kernel_size=3, stride=2, padding=1)

    N = 2
    x = jax.random.normal(k_x, (N, 1, 16, 16), jnp.float32)
    # TODO(synk): reparameterization noise uses jax.random instead of torch.randn_like RNG.
    eps = jax.random.normal(k_eps, (N, params["cfg"]["latent_dim"]), jnp.float32)

    forward = build_forward(params, N)
    rec, x_out, mu, logvar = forward(x, eps)
    jax.block_until_ready((rec, mu, logvar))

    assert rec.shape == (N, 1, 16, 16)
    assert mu.shape == (N, 8) and logvar.shape == (N, 8)
    assert bool(jnp.all(jnp.isfinite(rec))) and bool(jnp.all(jnp.isfinite(mu)))
    print("KERNEL_OK")
</pallas_src>

<mosaic_0001>
module attributes {stable_mosaic.version = 11 : i64} {
  func.func @kernel(%arg0: memref<1x512xf32, #tpu.memory_space<vmem>>, %arg1: memref<8x2xf32, #tpu.memory_space<vmem>>, %arg2: memref<9x512x128xf32, #tpu.memory_space<vmem>>, %arg3: memref<8x9xf32, #tpu.memory_space<vmem>>, %arg4: memref<8x1xf32, #tpu.memory_space<vmem>>, %arg5: memref<8x1xf32, #tpu.memory_space<vmem>>, %arg6: memref<9x128x32xf32, #tpu.memory_space<vmem>>, %arg7: memref<16x72xf32, #tpu.memory_space<vmem>>, %arg8: memref<16x1xf32, #tpu.memory_space<vmem>>, %arg9: memref<16x1xf32, #tpu.memory_space<vmem>>, %arg10: memref<9x32x8xf32, #tpu.memory_space<vmem>>, %arg11: memref<32x144xf32, #tpu.memory_space<vmem>>, %arg12: memref<32x1xf32, #tpu.memory_space<vmem>>, %arg13: memref<32x1xf32, #tpu.memory_space<vmem>>, %arg14: memref<4x8x2xf32, #tpu.memory_space<vmem>>, %arg15: memref<32x128xf32, #tpu.memory_space<vmem>>, %arg16: memref<32x1xf32, #tpu.memory_space<vmem>>, %arg17: memref<32x1xf32, #tpu.memory_space<vmem>>, %arg18: memref<16x32xf32, #tpu.memory_space<vmem>>, %arg19: memref<16x1xf32, #tpu.memory_space<vmem>>, %arg20: memref<4x32x8xf32, #tpu.memory_space<vmem>>, %arg21: memref<4x32x1xf32, #tpu.memory_space<vmem>>, %arg22: memref<4x2x8xf32, #tpu.memory_space<vmem>>, %arg23: memref<8x32xf32, #tpu.memory_space<vmem>>, %arg24: memref<16x32xf32, #tpu.memory_space<vmem>>, %arg25: memref<16x1xf32, #tpu.memory_space<vmem>>, %arg26: memref<16x1xf32, #tpu.memory_space<vmem>>, %arg27: memref<32x128xf32, #tpu.memory_space<vmem>>, %arg28: memref<8x16xf32, #tpu.memory_space<vmem>>, %arg29: memref<8x1xf32, #tpu.memory_space<vmem>>, %arg30: memref<8x1xf32, #tpu.memory_space<vmem>>, %arg31: memref<128x512xf32, #tpu.memory_space<vmem>>, %arg32: memref<1x8xf32, #tpu.memory_space<vmem>>, %arg33: memref<1x1xf32, #tpu.memory_space<vmem>>, %arg34: memref<1x1xf32, #tpu.memory_space<vmem>>, %arg35: memref<1x512xf32, #tpu.memory_space<vmem>>, %arg36: memref<16x2xf32, #tpu.memory_space<vmem>>) attributes {dimension_semantics = [], scalar_prefetch = 0 : i64, scratch_operands = 0 : i64, tpu.core_type = #tpu.core_type<tc>} {
    %c0 = arith.constant 0 : index
    %c0_0 = arith.constant 0 : index
    %0 = vector.load %arg0[%c0, %c0_0] : memref<1x512xf32, #tpu.memory_space<vmem>>, vector<1x512xf32>
    %c0_1 = arith.constant 0 : index
    %c0_2 = arith.constant 0 : index
    %c0_3 = arith.constant 0 : index
    %1 = vector.load %arg2[%c0_1, %c0_2, %c0_3] : memref<9x512x128xf32, #tpu.memory_space<vmem>>, vector<1x512x128xf32>
    %2 = vector.shape_cast %1 : vector<1x512x128xf32> to vector<512x128xf32>
    %cst = arith.constant dense<0.000000e+00> : vector<1x128xf32>
    %3 = tpu.matmul %0, %2, %cst {dimension_numbers = #tpu.dot_dimension_numbers<[1], [0], [0], [1], [0, 0, 1, 1], [], []>} : vector<1x512xf32>, vector<512x128xf32>, vector<1x128xf32> -> vector<1x128xf32>
    %c1 = arith.constant 1 : index
    %c0_4 = arith.constant 0 : index
    %c0_5 = arith.constant 0 : index
    %4 = vector.load %arg2[%c1, %c0_4, %c0_5] : memref<9x512x128xf32, #tpu.memory_space<vmem>>, vector<1x512x128xf32>
    %5 = vector.shape_cast %4 : vector<1x512x128xf32> to vector<512x128xf32>
    %cst_6 = arith.constant dense<0.000000e+00> : vector<1x128xf32>
    %6 = tpu.matmul %0, %5, %cst_6 {dimension_numbers = #tpu.dot_dimension_numbers<[1], [0], [0], [1], [0, 0, 1, 1], [], []>} : vector<1x512xf32>, vector<512x128xf32>, vector<1x128xf32> -> vector<1x128xf32>
    %c2 = arith.constant 2 : index
    %c0_7 = arith.constant 0 : index
    %c0_8 = arith.constant 0 : index
    %7 = vector.load %arg2[%c2, %c0_7, %c0_8] : memref<9x512x128xf32, #tpu.memory_space<vmem>>, vector<1x512x128xf32>
    %8 = vector.shape_cast %7 : vector<1x512x128xf32> to vector<512x128xf32>
    %cst_9 = arith.constant dense<0.000000e+00> : vector<1x128xf32>
    %9 = tpu.matmul %0, %8, %cst_9 {dimension_numbers = #tpu.dot_dimension_numbers<[1], [0], [0], [1], [0, 0, 1, 1], [], []>} : vector<1x512xf32>, vector<512x128xf32>, vector<1x128xf32> -> vector<1x128xf32>
    %c3 = arith.constant 3 : index
    %c0_10 = arith.constant 0 : index
    %c0_11 = arith.constant 0 : index
    %10 = vector.load %arg2[%c3, %c0_10, %c0_11] : memref<9x512x128xf32, #tpu.memory_space<vmem>>, vector<1x512x128xf32>
    %11 = vector.shape_cast %10 : vector<1x512x128xf32> to vector<512x128xf32>
    %cst_12 = arith.constant dense<0.000000e+00> : vector<1x128xf32>
    %12 = tpu.matmul %0, %11, %cst_12 {dimension_numbers = #tpu.dot_dimension_numbers<[1], [0], [0], [1], [0, 0, 1, 1], [], []>} : vector<1x512xf32>, vector<512x128xf32>, vector<1x128xf32> -> vector<1x128xf32>
    %c4 = arith.constant 4 : index
    %c0_13 = arith.constant 0 : index
    %c0_14 = arith.constant 0 : index
    %13 = vector.load %arg2[%c4, %c0_13, %c0_14] : memref<9x512x128xf32, #tpu.memory_space<vmem>>, vector<1x512x128xf32>
    %14 = vector.shape_cast %13 : vector<1x512x128xf32> to vector<512x128xf32>
    %cst_15 = arith.constant dense<0.000000e+00> : vector<1x128xf32>
    %15 = tpu.matmul %0, %14, %cst_15 {dimension_numbers = #tpu.dot_dimension_numbers<[1], [0], [0], [1], [0, 0, 1, 1], [], []>} : vector<1x512xf32>, vector<512x128xf32>, vector<1x128xf32> -> vector<1x128xf32>
    %c5 = arith.constant 5 : index
    %c0_16 = arith.constant 0 : index
    %c0_17 = arith.constant 0 : index
    %16 = vector.load %arg2[%c5, %c0_16, %c0_17] : memref<9x512x128xf32, #tpu.memory_space<vmem>>, vector<1x512x128xf32>
    %17 = vector.shape_cast %16 : vector<1x512x128xf32> to vector<512x128xf32>
    %cst_18 = arith.constant dense<0.000000e+00> : vector<1x128xf32>
    %18 = tpu.matmul %0, %17, %cst_18 {dimension_numbers = #tpu.dot_dimension_numbers<[1], [0], [0], [1], [0, 0, 1, 1], [], []>} : vector<1x512xf32>, vector<512x128xf32>, vector<1x128xf32> -> vector<1x128xf32>
    %c6 = arith.constant 6 : index
    %c0_19 = arith.constant 0 : index
    %c0_20 = arith.constant 0 : index
    %19 = vector.load %arg2[%c6, %c0_19, %c0_20] : memref<9x512x128xf32, #tpu.memory_space<vmem>>, vector<1x512x128xf32>
    %20 = vector.shape_cast %19 : vector<1x512x128xf32> to vector<512x128xf32>
    %cst_21 = arith.constant dense<0.000000e+00> : vector<1x128xf32>
    %21 = tpu.matmul %0, %20, %cst_21 {dimension_numbers = #tpu.dot_dimension_numbers<[1], [0], [0], [1], [0, 0, 1, 1], [], []>} : vector<1x512xf32>, vector<512x128xf32>, vector<1x128xf32> -> vector<1x128xf32>
    %c7 = arith.constant 7 : index
    %c0_22 = arith.constant 0 : index
    %c0_23 = arith.constant 0 : index
    %22 = vector.load %arg2[%c7, %c0_22, %c0_23] : memref<9x512x128xf32, #tpu.memory_space<vmem>>, vector<1x512x128xf32>
    %23 = vector.shape_cast %22 : vector<1x512x128xf32> to vector<512x128xf32>
    %cst_24 = arith.constant dense<0.000000e+00> : vector<1x128xf32>
    %24 = tpu.matmul %0, %23, %cst_24 {dimension_numbers = #tpu.dot_dimension_numbers<[1], [0], [0], [1], [0, 0, 1, 1], [], []>} : vector<1x512xf32>, vector<512x128xf32>, vector<1x128xf32> -> vector<1x128xf32>
    %c8 = arith.constant 8 : index
    %c0_25 = arith.constant 0 : index
    %c0_26 = arith.constant 0 : index
    %25 = vector.load %arg2[%c8, %c0_25, %c0_26] : memref<9x512x128xf32, #tpu.memory_space<vmem>>, vector<1x512x128xf32>
    %26 = vector.shape_cast %25 : vector<1x512x128xf32> to vector<512x128xf32>
    %cst_27 = arith.constant dense<0.000000e+00> : vector<1x128xf32>
    %27 = tpu.matmul %0, %26, %cst_27 {dimension_numbers = #tpu.dot_dimension_numbers<[1], [0], [0], [1], [0, 0, 1, 1], [], []>} : vector<1x512xf32>, vector<512x128xf32>, vector<1x128xf32> -> vector<1x128xf32>
    %28 = tpu.concatenate %3, %6, %9, %12, %15, %18, %21, %24, %27 in 0 : vector<1x128xf32>, vector<1x128xf32>, vector<1x128xf32>, vector<1x128xf32>, vector<1x128xf32>, vector<1x128xf32>, vector<1x128xf32>, vector<1x128xf32>, vector<1x128xf32> -> vector<9x128xf32>
    %c0_28 = arith.constant 0 : index
    %c0_29 = arith.constant 0 : index
    %29 = vector.load %arg3[%c0_28, %c0_29] : memref<8x9xf32, #tpu.memory_space<vmem>>, vector<8x9xf32>
    %cst_30 = arith.constant dense<0.000000e+00> : vector<8x128xf32>
    %30 = tpu.matmul %29, %28, %cst_30 {dimension_numbers = #tpu.dot_dimension_numbers<[1], [0], [0], [1], [0, 0, 1, 1], [], []>} : vector<8x9xf32>, vector<9x128xf32>, vector<8x128xf32> -> vector<8x128xf32>
    %c0_31 = arith.constant 0 : index
    %c0_32 = arith.constant 0 : index
    %31 = vector.load %arg4[%c0_31, %c0_32] : memref<8x1xf32, #tpu.memory_space<vmem>>, vector<8x1xf32>
    %c0_33 = arith.constant 0 : index
    %c0_34 = arith.constant 0 : index
    %32 = vector.load %arg5[%c0_33, %c0_34] : memref<8x1xf32, #tpu.memory_space<vmem>>, vector<8x1xf32>
    %cst_35 = arith.constant dense<0.000000e+00> : vector<8xf32>
    %33 = vector.multi_reduction <add>, %30, %cst_35 [1] : vector<8x128xf32> to vector<8xf32>
    %34 = vector.shape_cast %33 : vector<8xf32> to vector<8x1xf32>
    %cst_36 = arith.constant 1.280000e+02 : f32
    %35 = vector.broadcast %cst_36 : f32 to vector<8x1xf32>
    %36 = arith.divf %34, %35 : vector<8x1xf32>
    %37 = vector.broadcast %36 : vector<8x1xf32> to vector<8x128xf32>
    %38 = arith.subf %30, %37 : vector<8x128xf32>
    %39 = arith.mulf %38, %38 : vector<8x128xf32>
    %cst_37 = arith.constant dense<0.000000e+00> : vector<8xf32>
    %40 = vector.multi_reduction <add>, %39, %cst_37 [1] : vector<8x128xf32> to vector<8xf32>
    %41 = vector.shape_cast %40 : vector<8xf32> to vector<8x1xf32>
    %cst_38 = arith.constant 1.280000e+02 : f32
    %42 = vector.broadcast %cst_38 : f32 to vector<8x1xf32>
    %43 = arith.divf %41, %42 : vector<8x1xf32>
    %cst_39 = arith.constant 9.99999974E-6 : f32
    %44 = vector.broadcast %cst_39 : f32 to vector<8x1xf32>
    %45 = arith.addf %43, %44 : vector<8x1xf32>
    %46 = math.rsqrt %45 : vector<8x1xf32>
    %47 = vector.broadcast %46 : vector<8x1xf32> to vector<8x128xf32>
    %48 = arith.mulf %38, %47 : vector<8x128xf32>
    %49 = vector.broadcast %31 : vector<8x1xf32> to vector<8x128xf32>
    %50 = arith.mulf %48, %49 : vector<8x128xf32>
    %51 = vector.broadcast %32 : vector<8x1xf32> to vector<8x128xf32>
    %52 = arith.addf %50, %51 : vector<8x128xf32>
    %cst_40 = arith.constant 0.000000e+00 : f32
    %53 = vector.broadcast %cst_40 : f32 to vector<8x128xf32>
    %54 = arith.cmpf oge, %52, %53 : vector<8x128xf32>
    %cst_41 = arith.constant 0.00999999977 : f32
    %55 = vector.broadcast %cst_41 : f32 to vector<8x128xf32>
    %56 = arith.mulf %55, %52 : vector<8x128xf32>
    %57 = arith.select %54, %52, %56 : vector<8x128xi1>, vector<8x128xf32>
    %c0_42 = arith.constant 0 : index
    %c0_43 = arith.constant 0 : index
    %c0_44 = arith.constant 0 : index
    %58 = vector.load %arg6[%c0_42, %c0_43, %c0_44] : memref<9x128x32xf32, #tpu.memory_space<vmem>>, vector<1x128x32xf32>
    %59 = vector.shape_cast %58 : vector<1x128x32xf32> to vector<128x32xf32>
    %cst_45 = arith.constant dense<0.000000e+00> : vector<8x32xf32>
    %60 = tpu.matmul %57, %59, %cst_45 {dimension_numbers = #tpu.dot_dimension_numbers<[1], [0], [0], [1], [0, 0, 1, 1], [], []>} : vector<8x128xf32>, vector<128x32xf32>, vector<8x32xf32> -> vector<8x32xf32>
    %c1_46 = arith.constant 1 : index
    %c0_47 = arith.constant 0 : index
    %c0_48 = arith.constant 0 : index
    %61 = vector.load %arg6[%c1_46, %c0_47, %c0_48] : memref<9x128x32xf32, #tpu.memory_space<vmem>>, vector<1x128x32xf32>
    %62 = vector.shape_cast %61 : vector<1x128x32xf32> to vector<128x32xf32>
    %cst_49 = arith.constant dense<0.000000e+00> : vector<8x32xf32>
    %63 = tpu.matmul %57, %62, %cst_49 {dimension_numbers = #tpu.dot_dimension_numbers<[1], [0], [0], [1], [0, 0, 1, 1], [], []>} : vector<8x128xf32>, vector<128x32xf32>, vector<8x32xf32> -> vector<8x32xf32>
    %c2_50 = arith.constant 2 : index
    %c0_51 = arith.constant 0 : index
    %c0_52 = arith.constant 0 : index
    %64 = vector.load %arg6[%c2_50, %c0_51, %c0_52] : memref<9x128x32xf32, #tpu.memory_space<vmem>>, vector<1x128x32xf32>
    %65 = vector.shape_cast %64 : vector<1x128x32xf32> to vector<128x32xf32>
    %cst_53 = arith.constant dense<0.000000e+00> : vector<8x32xf32>
    %66 = tpu.matmul %57, %65, %cst_53 {dimension_numbers = #tpu.dot_dimension_numbers<[1], [0], [0], [1], [0, 0, 1, 1], [], []>} : vector<8x128xf32>, vector<128x32xf32>, vector<8x32xf32> -> vector<8x32xf32>
    %c3_54 = arith.constant 3 : index
    %c0_55 = arith.constant 0 : index
    %c0_56 = arith.constant 0 : index
    %67 = vector.load %arg6[%c3_54, %c0_55, %c0_56] : memref<9x128x32xf32, #tpu.memory_space<vmem>>, vector<1x128x32xf32>
    %68 = vector.shape_cast %67 : vector<1x128x32xf32> to vector<128x32xf32>
    %cst_57 = arith.constant dense<0.000000e+00> : vector<8x32xf32>
    %69 = tpu.matmul %57, %68, %cst_57 {dimension_numbers = #tpu.dot_dimension_numbers<[1], [0], [0], [1], [0, 0, 1, 1], [], []>} : vector<8x128xf32>, vector<128x32xf32>, vector<8x32xf32> -> vector<8x32xf32>
    %c4_58 = arith.constant 4 : index
    %c0_59 = arith.constant 0 : index
    %c0_60 = arith.constant 0 : index
    %70 = vector.load %arg6[%c4_58, %c0_59, %c0_60] : memref<9x128x32xf32, #tpu.memory_space<vmem>>, vector<1x128x32xf32>
    %71 = vector.shape_cast %70 : vector<1x128x32xf32> to vector<128x32xf32>
    %cst_61 = arith.constant dense<0.000000e+00> : vector<8x32xf32>
    %72 = tpu.matmul %57, %71, %cst_61 {dimension_numbers = #tpu.dot_dimension_numbers<[1], [0], [0], [1], [0, 0, 1, 1], [], []>} : vector<8x128xf32>, vector<128x32xf32>, vector<8x32xf32> -> vector<8x32xf32>
    %c5_62 = arith.constant 5 : index
    %c0_63 = arith.constant 0 : index
    %c0_64 = arith.constant 0 : index
    %73 = vector.load %arg6[%c5_62, %c0_63, %c0_64] : memref<9x128x32xf32, #tpu.memory_space<vmem>>, vector<1x128x32xf32>
    %74 = vector.shape_cast %73 : vector<1x128x32xf32> to vector<128x32xf32>
    %cst_65 = arith.constant dense<0.000000e+00> : vector<8x32xf32>
    %75 = tpu.matmul %57, %74, %cst_65 {dimension_numbers = #tpu.dot_dimension_numbers<[1], [0], [0], [1], [0, 0, 1, 1], [], []>} : vector<8x128xf32>, vector<128x32xf32>, vector<8x32xf32> -> vector<8x32xf32>
    %c6_66 = arith.constant 6 : index
    %c0_67 = arith.constant 0 : index
    %c0_68 = arith.constant 0 : index
    %76 = vector.load %arg6[%c6_66, %c0_67, %c0_68] : memref<9x128x32xf32, #tpu.memory_space<vmem>>, vector<1x128x32xf32>
    %77 = vector.shape_cast %76 : vector<1x128x32xf32> to vector<128x32xf32>
    %cst_69 = arith.constant dense<0.000000e+00> : vector<8x32xf32>
    %78 = tpu.matmul %57, %77, %cst_69 {dimension_numbers = #tpu.dot_dimension_numbers<[1], [0], [0], [1], [0, 0, 1, 1], [], []>} : vector<8x128xf32>, vector<128x32xf32>, vector<8x32xf32> -> vector<8x32xf32>
    %c7_70 = arith.constant 7 : index
    %c0_71 = arith.constant 0 : index
    %c0_72 = arith.constant 0 : index
    %79 = vector.load %arg6[%c7_70, %c0_71, %c0_72] : memref<9x128x32xf32, #tpu.memory_space<vmem>>, vector<1x128x32xf32>
    %80 = vector.shape_cast %79 : vector<1x128x32xf32> to vector<128x32xf32>
    %cst_73 = arith.constant dense<0.000000e+00> : vector<8x32xf32>
    %81 = tpu.matmul %57, %80, %cst_73 {dimension_numbers = #tpu.dot_dimension_numbers<[1], [0], [0], [1], [0, 0, 1, 1], [], []>} : vector<8x128xf32>, vector<128x32xf32>, vector<8x32xf32> -> vector<8x32xf32>
    %c8_74 = arith.constant 8 : index
    %c0_75 = arith.constant 0 : index
    %c0_76 = arith.constant 0 : index
    %82 = vector.load %arg6[%c8_74, %c0_75, %c0_76] : memref<9x128x32xf32, #tpu.memory_space<vmem>>, vector<1x128x32xf32>
    %83 = vector.shape_cast %82 : vector<1x128x32xf32> to vector<128x32xf32>
    %cst_77 = arith.constant dense<0.000000e+00> : vector<8x32xf32>
    %84 = tpu.matmul %57, %83, %cst_77 {dimension_numbers = #tpu.dot_dimension_numbers<[1], [0], [0], [1], [0, 0, 1, 1], [], []>} : vector<8x128xf32>, vector<128x32xf32>, vector<8x32xf32> -> vector<8x32xf32>
    %85 = tpu.concatenate %60, %63, %66, %69, %72, %75, %78, %81, %84 in 0 : vector<8x32xf32>, vector<8x32xf32>, vector<8x32xf32>, vector<8x32xf32>, vector<8x32xf32>, vector<8x32xf32>, vector<8x32xf32>, vector<8x32xf32>, vector<8x32xf32> -> vector<72x32xf32>
    %c0_78 = arith.constant 0 : index
    %c0_79 = arith.constant 0 : index
    %86 = vector.load %arg7[%c0_78, %c0_79] : memref<16x72xf32, #tpu.memory_space<vmem>>, vector<16x72xf32>
    %cst_80 = arith.constant dense<0.000000e+00> : vector<16x32xf32>
    %87 = tpu.matmul %86, %85, %cst_80 {dimension_numbers = #tpu.dot_dimension_numbers<[1], [0], [0], [1], [0, 0, 1, 1], [], []>} : vector<16x72xf32>, vector<72x32xf32>, vector<16x32xf32> -> vector<16x32xf32>
    %c0_81 = arith.constant 0 : index
    %c0_82 = arith.constant 0 : index
    %88 = vector.load %arg8[%c0_81, %c0_82] : memref<16x1xf32, #tpu.memory_space<vmem>>, vector<16x1xf32>
    %c0_83 = arith.constant 0 : index
    %c0_84 = arith.constant 0 : index
    %89 = vector.load %arg9[%c0_83, %c0_84] : memref<16x1xf32, #tpu.memory_space<vmem>>, vector<16x1xf32>
    %cst_85 = arith.constant dense<0.000000e+00> : vector<16xf32>
    %90 = vector.multi_reduction <add>, %87, %cst_85 [1] : vector<16x32xf32> to vector<16xf32>
    %91 = vector.shape_cast %90 : vector<16xf32> to vector<16x1xf32>
    %cst_86 = arith.constant 3.200000e+01 : f32
    %92 = vector.broadcast %cst_86 : f32 to vector<16x1xf32>
    %93 = arith.divf %91, %92 : vector<16x1xf32>
    %94 = vector.broadcast %93 : vector<16x1xf32> to vector<16x32xf32>
    %95 = arith.subf %87, %94 : vector<16x32xf32>
    %96 = arith.mulf %95, %95 : vector<16x32xf32>
    %cst_87 = arith.constant dense<0.000000e+00> : vector<16xf32>
    %97 = vector.multi_reduction <add>, %96, %cst_87 [1] : vector<16x32xf32> to vector<16xf32>
    %98 = vector.shape_cast %97 : vector<16xf32> to vector<16x1xf32>
    %cst_88 = arith.constant 3.200000e+01 : f32
    %99 = vector.broadcast %cst_88 : f32 to vector<16x1xf32>
    %100 = arith.divf %98, %99 : vector<16x1xf32>
    %cst_89 = arith.constant 9.99999974E-6 : f32
    %101 = vector.broadcast %cst_89 : f32 to vector<16x1xf32>
    %102 = arith.addf %100, %101 : vector<16x1xf32>
    %103 = math.rsqrt %102 : vector<16x1xf32>
    %104 = vector.broadcast %103 : vector<16x1xf32> to vector<16x32xf32>
    %105 = arith.mulf %95, %104 : vector<16x32xf32>
    %106 = vector.broadcast %88 : vector<16x1xf32> to vector<16x32xf32>
    %107 = arith.mulf %105, %106 : vector<16x32xf32>
    %108 = vector.broadcast %89 : vector<16x1xf32> to vector<16x32xf32>
    %109 = arith.addf %107, %108 : vector<16x32xf32>
    %cst_90 = arith.constant 0.000000e+00 : f32
    %110 = vector.broadcast %cst_90 : f32 to vector<16x32xf32>
    %111 = arith.cmpf oge, %109, %110 : vector<16x32xf32>
    %cst_91 = arith.constant 0.00999999977 : f32
    %112 = vector.broadcast %cst_91 : f32 to vector<16x32xf32>
    %113 = arith.mulf %112, %109 : vector<16x32xf32>
    %114 = arith.select %111, %109, %113 : vector<16x32xi1>, vector<16x32xf32>
    %c0_92 = arith.constant 0 : index
    %c0_93 = arith.constant 0 : index
    %c0_94 = arith.constant 0 : index
    %115 = vector.load %arg10[%c0_92, %c0_93, %c0_94] : memref<9x32x8xf32, #tpu.memory_space<vmem>>, vector<1x32x8xf32>
    %116 = vector.shape_cast %115 : vector<1x32x8xf32> to vector<32x8xf32>
    %cst_95 = arith.constant dense<0.000000e+00> : vector<16x8xf32>
    %117 = tpu.matmul %114, %116, %cst_95 {dimension_numbers = #tpu.dot_dimension_numbers<[1], [0], [0], [1], [0, 0, 1, 1], [], []>} : vector<16x32xf32>, vector<32x8xf32>, vector<16x8xf32> -> vector<16x8xf32>
    %c1_96 = arith.constant 1 : index
    %c0_97 = arith.constant 0 : index
    %c0_98 = arith.constant 0 : index
    %118 = vector.load %arg10[%c1_96, %c0_97, %c0_98] : memref<9x32x8xf32, #tpu.memory_space<vmem>>, vector<1x32x8xf32>
    %119 = vector.shape_cast %118 : vector<1x32x8xf32> to vector<32x8xf32>
    %cst_99 = arith.constant dense<0.000000e+00> : vector<16x8xf32>
    %120 = tpu.matmul %114, %119, %cst_99 {dimension_numbers = #tpu.dot_dimension_numbers<[1], [0], [0], [1], [0, 0, 1, 1], [], []>} : vector<16x32xf32>, vector<32x8xf32>, vector<16x8xf32> -> vector<16x8xf32>
    %c2_100 = arith.constant 2 : index
    %c0_101 = arith.constant 0 : index
    %c0_102 = arith.constant 0 : index
    %121 = vector.load %arg10[%c2_100, %c0_101, %c0_102] : memref<9x32x8xf32, #tpu.memory_space<vmem>>, vector<1x32x8xf32>
    %122 = vector.shape_cast %121 : vector<1x32x8xf32> to vector<32x8xf32>
    %cst_103 = arith.constant dense<0.000000e+00> : vector<16x8xf32>
    %123 = tpu.matmul %114, %122, %cst_103 {dimension_numbers = #tpu.dot_dimension_numbers<[1], [0], [0], [1], [0, 0, 1, 1], [], []>} : vector<16x32xf32>, vector<32x8xf32>, vector<16x8xf32> -> vector<16x8xf32>
    %c3_104 = arith.constant 3 : index
    %c0_105 = arith.constant 0 : index
    %c0_106 = arith.constant 0 : index
    %124 = vector.load %arg10[%c3_104, %c0_105, %c0_106] : memref<9x32x8xf32, #tpu.memory_space<vmem>>, vector<1x32x8xf32>
    %125 = vector.shape_cast %124 : vector<1x32x8xf32> to vector<32x8xf32>
    %cst_107 = arith.constant dense<0.000000e+00> : vector<16x8xf32>
    %126 = tpu.matmul %114, %125, %cst_107 {dimension_numbers = #tpu.dot_dimension_numbers<[1], [0], [0], [1], [0, 0, 1, 1], [], []>} : vector<16x32xf32>, vector<32x8xf32>, vector<16x8xf32> -> vector<16x8xf32>
    %c4_108 = arith.constant 4 : index
    %c0_109 = arith.constant 0 : index
    %c0_110 = arith.constant 0 : index
    %127 = vector.load %arg10[%c4_108, %c0_109, %c0_110] : memref<9x32x8xf32, #tpu.memory_space<vmem>>, vector<1x32x8xf32>
    %128 = vector.shape_cast %127 : vector<1x32x8xf32> to vector<32x8xf32>
    %cst_111 = arith.constant dense<0.000000e+00> : vector<16x8xf32>
    %129 = tpu.matmul %114, %128, %cst_111 {dimension_numbers = #tpu.dot_dimension_numbers<[1], [0], [0], [1], [0, 0, 1, 1], [], []>} : vector<16x32xf32>, vector<32x8xf32>, vector<16x8xf32> -> vector<16x8xf32>
    %c5_112 = arith.constant 5 : index
    %c0_113 = arith.constant 0 : index
    %c0_114 = arith.constant 0 : index
    %130 = vector.load %arg10[%c5_112, %c0_113, %c0_114] : memref<9x32x8xf32, #tpu.memory_space<vmem>>, vector<1x32x8xf32>
    %131 = vector.shape_cast %130 : vector<1x32x8xf32> to vector<32x8xf32>
    %cst_115 = arith.constant dense<0.000000e+00> : vector<16x8xf32>
    %132 = tpu.matmul %114, %131, %cst_115 {dimension_numbers = #tpu.dot_dimension_numbers<[1], [0], [0], [1], [0, 0, 1, 1], [], []>} : vector<16x32xf32>, vector<32x8xf32>, vector<16x8xf32> -> vector<16x8xf32>
    %c6_116 = arith.constant 6 : index
    %c0_117 = arith.constant 0 : index
    %c0_118 = arith.constant 0 : index
    %133 = vector.load %arg10[%c6_116, %c0_117, %c0_118] : memref<9x32x8xf32, #tpu.memory_space<vmem>>, vector<1x32x8xf32>
    %134 = vector.shape_cast %133 : vector<1x32x8xf32> to vector<32x8xf32>
    %cst_119 = arith.constant dense<0.000000e+00> : vector<16x8xf32>
    %135 = tpu.matmul %114, %134, %cst_119 {dimension_numbers = #tpu.dot_dimension_numbers<[1], [0], [0], [1], [0, 0, 1, 1], [], []>} : vector<16x32xf32>, vector<32x8xf32>, vector<16x8xf32> -> vector<16x8xf32>
    %c7_120 = arith.constant 7 : index
    %c0_121 = arith.constant 0 : index
    %c0_122 = arith.constant 0 : index
    %136 = vector.load %arg10[%c7_120, %c0_121, %c0_122] : memref<9x32x8xf32, #tpu.memory_space<vmem>>, vector<1x32x8xf32>
    %137 = vector.shape_cast %136 : vector<1x32x8xf32> to vector<32x8xf32>
    %cst_123 = arith.constant dense<0.000000e+00> : vector<16x8xf32>
    %138 = tpu.matmul %114, %137, %cst_123 {dimension_numbers = #tpu.dot_dimension_numbers<[1], [0], [0], [1], [0, 0, 1, 1], [], []>} : vector<16x32xf32>, vector<32x8xf32>, vector<16x8xf32> -> vector<16x8xf32>
    %c8_124 = arith.constant 8 : index
    %c0_125 = arith.constant 0 : index
    %c0_126 = arith.constant 0 : index
    %139 = vector.load %arg10[%c8_124, %c0_125, %c0_126] : memref<9x32x8xf32, #tpu.memory_space<vmem>>, vector<1x32x8xf32>
    %140 = vector.shape_cast %139 : vector<1x32x8xf32> to vector<32x8xf32>
    %cst_127 = arith.constant dense<0.000000e+00> : vector<16x8xf32>
    %141 = tpu.matmul %114, %140, %cst_127 {dimension_numbers = #tpu.dot_dimension_numbers<[1], [0], [0], [1], [0, 0, 1, 1], [], []>} : vector<16x32xf32>, vector<32x8xf32>, vector<16x8xf32> -> vector<16x8xf32>
    %142 = tpu.concatenate %117, %120, %123, %126, %129, %132, %135, %138, %141 in 0 : vector<16x8xf32>, vector<16x8xf32>, vector<16x8xf32>, vector<16x8xf32>, vector<16x8xf32>, vector<16x8xf32>, vector<16x8xf32>, vector<16x8xf32>, vector<16x8xf32> -> vector<144x8xf32>
    %c0_128 = arith.constant 0 : index
    %c0_129 = arith.constant 0 : index
    %143 = vector.load %arg11[%c0_128, %c0_129] : memref<32x144xf32, #tpu.memory_space<vmem>>, vector<32x144xf32>
    %cst_130 = arith.constant dense<0.000000e+00> : vector<32x8xf32>
    %144 = tpu.matmul %143, %142, %cst_130 {dimension_numbers = #tpu.dot_dimension_numbers<[1], [0], [0], [1], [0, 0, 1, 1], [], []>} : vector<32x144xf32>, vector<144x8xf32>, vector<32x8xf32> -> vector<32x8xf32>
    %c0_131 = arith.constant 0 : index
    %c0_132 = arith.constant 0 : index
    %145 = vector.load %arg12[%c0_131, %c0_132] : memref<32x1xf32, #tpu.memory_space<vmem>>, vector<32x1xf32>
    %c0_133 = arith.constant 0 : index
    %c0_134 = arith.constant 0 : index
    %146 = vector.load %arg13[%c0_133, %c0_134] : memref<32x1xf32, #tpu.memory_space<vmem>>, vector<32x1xf32>
    %cst_135 = arith.constant dense<0.000000e+00> : vector<32xf32>
    %147 = vector.multi_reduction <add>, %144, %cst_135 [1] : vector<32x8xf32> to vector<32xf32>
    %148 = vector.shape_cast %147 : vector<32xf32> to vector<32x1xf32>
    %cst_136 = arith.constant 8.000000e+00 : f32
    %149 = vector.broadcast %cst_136 : f32 to vector<32x1xf32>
    %150 = arith.divf %148, %149 : vector<32x1xf32>
    %151 = vector.broadcast %150 : vector<32x1xf32> to vector<32x8xf32>
    %152 = arith.subf %144, %151 : vector<32x8xf32>
    %153 = arith.mulf %152, %152 : vector<32x8xf32>
    %cst_137 = arith.constant dense<0.000000e+00> : vector<32xf32>
    %154 = vector.multi_reduction <add>, %153, %cst_137 [1] : vector<32x8xf32> to vector<32xf32>
    %155 = vector.shape_cast %154 : vector<32xf32> to vector<32x1xf32>
    %cst_138 = arith.constant 8.000000e+00 : f32
    %156 = vector.broadcast %cst_138 : f32 to vector<32x1xf32>
    %157 = arith.divf %155, %156 : vector<32x1xf32>
    %cst_139 = arith.constant 9.99999974E-6 : f32
    %158 = vector.broadcast %cst_139 : f32 to vector<32x1xf32>
    %159 = arith.addf %157, %158 : vector<32x1xf32>
    %160 = math.rsqrt %159 : vector<32x1xf32>
    %161 = vector.broadcast %160 : vector<32x1xf32> to vector<32x8xf32>
    %162 = arith.mulf %152, %161 : vector<32x8xf32>
    %163 = vector.broadcast %145 : vector<32x1xf32> to vector<32x8xf32>
    %164 = arith.mulf %162, %163 : vector<32x8xf32>
    %165 = vector.broadcast %146 : vector<32x1xf32> to vector<32x8xf32>
    %166 = arith.addf %164, %165 : vector<32x8xf32>
    %cst_140 = arith.constant 0.000000e+00 : f32
    %167 = vector.broadcast %cst_140 : f32 to vector<32x8xf32>
    %168 = arith.cmpf oge, %166, %167 : vector<32x8xf32>
    %cst_141 = arith.constant 0.00999999977 : f32
    %169 = vector.broadcast %cst_141 : f32 to vector<32x8xf32>
    %170 = arith.mulf %169, %166 : vector<32x8xf32>
    %171 = arith.select %168, %166, %170 : vector<32x8xi1>, vector<32x8xf32>
    %c0_142 = arith.constant 0 : index
    %c0_143 = arith.constant 0 : index
    %c0_144 = arith.constant 0 : index
    %172 = vector.load %arg14[%c0_142, %c0_143, %c0_144] : memref<4x8x2xf32, #tpu.memory_space<vmem>>, vector<1x8x2xf32>
    %173 = vector.shape_cast %172 : vector<1x8x2xf32> to vector<8x2xf32>
    %cst_145 = arith.constant dense<0.000000e+00> : vector<32x2xf32>
    %174 = tpu.matmul %171, %173, %cst_145 {dimension_numbers = #tpu.dot_dimension_numbers<[1], [0], [0], [1], [0, 0, 1, 1], [], []>} : vector<32x8xf32>, vector<8x2xf32>, vector<32x2xf32> -> vector<32x2xf32>
    %c1_146 = arith.constant 1 : index
    %c0_147 = arith.constant 0 : index
    %c0_148 = arith.constant 0 : index
    %175 = vector.load %arg14[%c1_146, %c0_147, %c0_148] : memref<4x8x2xf32, #tpu.memory_space<vmem>>, vector<1x8x2xf32>
    %176 = vector.shape_cast %175 : vector<1x8x2xf32> to vector<8x2xf32>
    %cst_149 = arith.constant dense<0.000000e+00> : vector<32x2xf32>
    %177 = tpu.matmul %171, %176, %cst_149 {dimension_numbers = #tpu.dot_dimension_numbers<[1], [0], [0], [1], [0, 0, 1, 1], [], []>} : vector<32x8xf32>, vector<8x2xf32>, vector<32x2xf32> -> vector<32x2xf32>
    %c2_150 = arith.constant 2 : index
    %c0_151 = arith.constant 0 : index
    %c0_152 = arith.constant 0 : index
    %178 = vector.load %arg14[%c2_150, %c0_151, %c0_152] : memref<4x8x2xf32, #tpu.memory_space<vmem>>, vector<1x8x2xf32>
    %179 = vector.shape_cast %178 : vector<1x8x2xf32> to vector<8x2xf32>
    %cst_153 = arith.constant dense<0.000000e+00> : vector<32x2xf32>
    %180 = tpu.matmul %171, %179, %cst_153 {dimension_numbers = #tpu.dot_dimension_numbers<[1], [0], [0], [1], [0, 0, 1, 1], [], []>} : vector<32x8xf32>, vector<8x2xf32>, vector<32x2xf32> -> vector<32x2xf32>
    %c3_154 = arith.constant 3 : index
    %c0_155 = arith.constant 0 : index
    %c0_156 = arith.constant 0 : index
    %181 = vector.load %arg14[%c3_154, %c0_155, %c0_156] : memref<4x8x2xf32, #tpu.memory_space<vmem>>, vector<1x8x2xf32>
    %182 = vector.shape_cast %181 : vector<1x8x2xf32> to vector<8x2xf32>
    %cst_157 = arith.constant dense<0.000000e+00> : vector<32x2xf32>
    %183 = tpu.matmul %171, %182, %cst_157 {dimension_numbers = #tpu.dot_dimension_numbers<[1], [0], [0], [1], [0, 0, 1, 1], [], []>} : vector<32x8xf32>, vector<8x2xf32>, vector<32x2xf32> -> vector<32x2xf32>
    %184 = tpu.concatenate %174, %177, %180, %183 in 0 : vector<32x2xf32>, vector<32x2xf32>, vector<32x2xf32>, vector<32x2xf32> -> vector<128x2xf32>
    %c0_158 = arith.constant 0 : index
    %c0_159 = arith.constant 0 : index
    %185 = vector.load %arg15[%c0_158, %c0_159] : memref<32x128xf32, #tpu.memory_space<vmem>>, vector<32x128xf32>
    %cst_160 = arith.constant dense<0.000000e+00> : vector<32x2xf32>
    %186 = tpu.matmul %185, %184, %cst_160 {dimension_numbers = #tpu.dot_dimension_numbers<[1], [0], [0], [1], [0, 0, 1, 1], [], []>} : vector<32x128xf32>, vector<128x2xf32>, vector<32x2xf32> -> vector<32x2xf32>
    %c0_161 = arith.constant 0 : index
    %c0_162 = arith.constant 0 : index
    %187 = vector.load %arg16[%c0_161, %c0_162] : memref<32x1xf32, #tpu.memory_space<vmem>>, vector<32x1xf32>
    %c0_163 = arith.constant 0 : index
    %c0_164 = arith.constant 0 : index
    %188 = vector.load %arg17[%c0_163, %c0_164] : memref<32x1xf32, #tpu.memory_space<vmem>>, vector<32x1xf32>
    %cst_165 = arith.constant dense<0.000000e+00> : vector<32xf32>
    %189 = vector.multi_reduction <add>, %186, %cst_165 [1] : vector<32x2xf32> to vector<32xf32>
    %190 = vector.shape_cast %189 : vector<32xf32> to vector<32x1xf32>
    %cst_166 = arith.constant 2.000000e+00 : f32
    %191 = vector.broadcast %cst_166 : f32 to vector<32x1xf32>
    %192 = arith.divf %190, %191 : vector<32x1xf32>
    %193 = vector.broadcast %192 : vector<32x1xf32> to vector<32x2xf32>
    %194 = arith.subf %186, %193 : vector<32x2xf32>
    %195 = arith.mulf %194, %194 : vector<32x2xf32>
    %cst_167 = arith.constant dense<0.000000e+00> : vector<32xf32>
    %196 = vector.multi_reduction <add>, %195, %cst_167 [1] : vector<32x2xf32> to vector<32xf32>
    %197 = vector.shape_cast %196 : vector<32xf32> to vector<32x1xf32>
    %cst_168 = arith.constant 2.000000e+00 : f32
    %198 = vector.broadcast %cst_168 : f32 to vector<32x1xf32>
    %199 = arith.divf %197, %198 : vector<32x1xf32>
    %cst_169 = arith.constant 9.99999974E-6 : f32
    %200 = vector.broadcast %cst_169 : f32 to vector<32x1xf32>
    %201 = arith.addf %199, %200 : vector<32x1xf32>
    %202 = math.rsqrt %201 : vector<32x1xf32>
    %203 = vector.broadcast %202 : vector<32x1xf32> to vector<32x2xf32>
    %204 = arith.mulf %194, %203 : vector<32x2xf32>
    %205 = vector.broadcast %187 : vector<32x1xf32> to vector<32x2xf32>
    %206 = arith.mulf %204, %205 : vector<32x2xf32>
    %207 = vector.broadcast %188 : vector<32x1xf32> to vector<32x2xf32>
    %208 = arith.addf %206, %207 : vector<32x2xf32>
    %cst_170 = arith.constant 0.000000e+00 : f32
    %209 = vector.broadcast %cst_170 : f32 to vector<32x2xf32>
    %210 = arith.cmpf oge, %208, %209 : vector<32x2xf32>
    %cst_171 = arith.constant 0.00999999977 : f32
    %211 = vector.broadcast %cst_171 : f32 to vector<32x2xf32>
    %212 = arith.mulf %211, %208 : vector<32x2xf32>
    %213 = arith.select %210, %208, %212 : vector<32x2xi1>, vector<32x2xf32>
    %c0_172 = arith.constant 0 : index
    %c0_173 = arith.constant 0 : index
    %214 = vector.load %arg18[%c0_172, %c0_173] : memref<16x32xf32, #tpu.memory_space<vmem>>, vector<16x32xf32>
    %cst_174 = arith.constant dense<0.000000e+00> : vector<16x2xf32>
    %215 = tpu.matmul %214, %213, %cst_174 {dimension_numbers = #tpu.dot_dimension_numbers<[1], [0], [0], [1], [0, 0, 1, 1], [], []>} : vector<16x32xf32>, vector<32x2xf32>, vector<16x2xf32> -> vector<16x2xf32>
    %c0_175 = arith.constant 0 : index
    %c0_176 = arith.constant 0 : index
    %216 = vector.load %arg19[%c0_175, %c0_176] : memref<16x1xf32, #tpu.memory_space<vmem>>, vector<16x1xf32>
    %217 = vector.broadcast %216 : vector<16x1xf32> to vector<16x2xf32>
    %218 = arith.addf %215, %217 : vector<16x2xf32>
    %219 = vector.extract_strided_slice %218 {offsets = [0, 0], sizes = [8, 2], strides = [1, 1]} : vector<16x2xf32> to vector<8x2xf32>
    %220 = vector.extract_strided_slice %218 {offsets = [8, 0], sizes = [8, 2], strides = [1, 1]} : vector<16x2xf32> to vector<8x2xf32>
    %c0_177 = arith.constant 0 : index
    %c0_178 = arith.constant 0 : index
    %221 = vector.load %arg1[%c0_177, %c0_178] : memref<8x2xf32, #tpu.memory_space<vmem>>, vector<8x2xf32>
    %cst_179 = arith.constant 5.000000e-01 : f32
    %222 = vector.broadcast %cst_179 : f32 to vector<8x2xf32>
    %223 = arith.mulf %222, %220 : vector<8x2xf32>
    %224 = math.exp %223 : vector<8x2xf32>
    %225 = arith.mulf %221, %224 : vector<8x2xf32>
    %226 = arith.addf %225, %219 : vector<8x2xf32>
    %c0_180 = arith.constant 0 : index
    %c0_181 = arith.constant 0 : index
    %227 = vector.load %arg36[%c0_180, %c0_181] : memref<16x2xf32, #tpu.memory_space<vmem>>, vector<16x2xf32>
    tpu.vector_store %arg36[%c0_180, %c0_181], %218 {strides = array<i32>} : memref<16x2xf32, #tpu.memory_space<vmem>>, vector<16x2xf32>,
    %c0_182 = arith.constant 0 : index
    %c0_183 = arith.constant 0 : index
    %c0_184 = arith.constant 0 : index
    %228 = vector.load %arg20[%c0_182, %c0_183, %c0_184] : memref<4x32x8xf32, #tpu.memory_space<vmem>>, vector<1x32x8xf32>
    %229 = vector.shape_cast %228 : vector<1x32x8xf32> to vector<32x8xf32>
    %cst_185 = arith.constant dense<0.000000e+00> : vector<32x2xf32>
    %230 = tpu.matmul %229, %226, %cst_185 {dimension_numbers = #tpu.dot_dimension_numbers<[1], [0], [0], [1], [0, 0, 1, 1], [], []>} : vector<32x8xf32>, vector<8x2xf32>, vector<32x2xf32> -> vector<32x2xf32>
    %c0_186 = arith.constant 0 : index
    %c0_187 = arith.constant 0 : index
    %c0_188 = arith.constant 0 : index
    %231 = vector.load %arg21[%c0_186, %c0_187, %c0_188] : memref<4x32x1xf32, #tpu.memory_space<vmem>>, vector<1x32x1xf32>
    %232 = vector.shape_cast %231 : vector<1x32x1xf32> to vector<32x1xf32>
    %233 = vector.broadcast %232 : vector<32x1xf32> to vector<32x2xf32>
    %234 = arith.addf %230, %233 : vector<32x2xf32>
    %cst_189 = arith.constant 0.000000e+00 : f32
    %235 = vector.broadcast %cst_189 : f32 to vector<32x2xf32>
    %236 = arith.cmpf oge, %234, %235 : vector<32x2xf32>
    %cst_190 = arith.constant 0.00999999977 : f32
    %237 = vector.broadcast %cst_190 : f32 to vector<32x2xf32>
    %238 = arith.mulf %237, %234 : vector<32x2xf32>
    %239 = arith.select %236, %234, %238 : vector<32x2xi1>, vector<32x2xf32>
    %c0_191 = arith.constant 0 : index
    %c0_192 = arith.constant 0 : index
    %c0_193 = arith.constant 0 : index
    %240 = vector.load %arg22[%c0_191, %c0_192, %c0_193] : memref<4x2x8xf32, #tpu.memory_space<vmem>>, vector<1x2x8xf32>
    %241 = vector.shape_cast %240 : vector<1x2x8xf32> to vector<2x8xf32>
    %cst_194 = arith.constant dense<0.000000e+00> : vector<32x8xf32>
    %242 = tpu.matmul %239, %241, %cst_194 {dimension_numbers = #tpu.dot_dimension_numbers<[1], [0], [0], [1], [0, 0, 1, 1], [], []>} : vector<32x2xf32>, vector<2x8xf32>, vector<32x8xf32> -> vector<32x8xf32>
    %c1_195 = arith.constant 1 : index
    %c0_196 = arith.constant 0 : index
    %c0_197 = arith.constant 0 : index
    %243 = vector.load %arg20[%c1_195, %c0_196, %c0_197] : memref<4x32x8xf32, #tpu.memory_space<vmem>>, vector<1x32x8xf32>
    %244 = vector.shape_cast %243 : vector<1x32x8xf32> to vector<32x8xf32>
    %cst_198 = arith.constant dense<0.000000e+00> : vector<32x2xf32>
    %245 = tpu.matmul %244, %226, %cst_198 {dimension_numbers = #tpu.dot_dimension_numbers<[1], [0], [0], [1], [0, 0, 1, 1], [], []>} : vector<32x8xf32>, vector<8x2xf32>, vector<32x2xf32> -> vector<32x2xf32>
    %c1_199 = arith.constant 1 : index
    %c0_200 = arith.constant 0 : index
    %c0_201 = arith.constant 0 : index
    %246 = vector.load %arg21[%c1_199, %c0_200, %c0_201] : memref<4x32x1xf32, #tpu.memory_space<vmem>>, vector<1x32x1xf32>
    %247 = vector.shape_cast %246 : vector<1x32x1xf32> to vector<32x1xf32>
    %248 = vector.broadcast %247 : vector<32x1xf32> to vector<32x2xf32>
    %249 = arith.addf %245, %248 : vector<32x2xf32>
    %cst_202 = arith.constant 0.000000e+00 : f32
    %250 = vector.broadcast %cst_202 : f32 to vector<32x2xf32>
    %251 = arith.cmpf oge, %249, %250 : vector<32x2xf32>
    %cst_203 = arith.constant 0.00999999977 : f32
    %252 = vector.broadcast %cst_203 : f32 to vector<32x2xf32>
    %253 = arith.mulf %252, %249 : vector<32x2xf32>
    %254 = arith.select %251, %249, %253 : vector<32x2xi1>, vector<32x2xf32>
    %c1_204 = arith.constant 1 : index
    %c0_205 = arith.constant 0 : index
    %c0_206 = arith.constant 0 : index
    %255 = vector.load %arg22[%c1_204, %c0_205, %c0_206] : memref<4x2x8xf32, #tpu.memory_space<vmem>>, vector<1x2x8xf32>
    %256 = vector.shape_cast %255 : vector<1x2x8xf32> to vector<2x8xf32>
    %cst_207 = arith.constant dense<0.000000e+00> : vector<32x8xf32>
    %257 = tpu.matmul %254, %256, %cst_207 {dimension_numbers = #tpu.dot_dimension_numbers<[1], [0], [0], [1], [0, 0, 1, 1], [], []>} : vector<32x2xf32>, vector<2x8xf32>, vector<32x8xf32> -> vector<32x8xf32>
    %258 = arith.addf %242, %257 : vector<32x8xf32>
    %c2_208 = arith.constant 2 : index
    %c0_209 = arith.constant 0 : index
    %c0_210 = arith.constant 0 : index
    %259 = vector.load %arg20[%c2_208, %c0_209, %c0_210] : memref<4x32x8xf32, #tpu.memory_space<vmem>>, vector<1x32x8xf32>
    %260 = vector.shape_cast %259 : vector<1x32x8xf32> to vector<32x8xf32>
    %cst_211 = arith.constant dense<0.000000e+00> : vector<32x2xf32>
    %261 = tpu.matmul %260, %226, %cst_211 {dimension_numbers = #tpu.dot_dimension_numbers<[1], [0], [0], [1], [0, 0, 1, 1], [], []>} : vector<32x8xf32>, vector<8x2xf32>, vector<32x2xf32> -> vector<32x2xf32>
    %c2_212 = arith.constant 2 : index
    %c0_213 = arith.constant 0 : index
    %c0_214 = arith.constant 0 : index
    %262 = vector.load %arg21[%c2_212, %c0_213, %c0_214] : memref<4x32x1xf32, #tpu.memory_space<vmem>>, vector<1x32x1xf32>
    %263 = vector.shape_cast %262 : vector<1x32x1xf32> to vector<32x1xf32>
    %264 = vector.broadcast %263 : vector<32x1xf32> to vector<32x2xf32>
    %265 = arith.addf %261, %264 : vector<32x2xf32>
    %cst_215 = arith.constant 0.000000e+00 : f32
    %266 = vector.broadcast %cst_215 : f32 to vector<32x2xf32>
    %267 = arith.cmpf oge, %265, %266 : vector<32x2xf32>
    %cst_216 = arith.constant 0.00999999977 : f32
    %268 = vector.broadcast %cst_216 : f32 to vector<32x2xf32>
    %269 = arith.mulf %268, %265 : vector<32x2xf32>
    %270 = arith.select %267, %265, %269 : vector<32x2xi1>, vector<32x2xf32>
    %c2_217 = arith.constant 2 : index
    %c0_218 = arith.constant 0 : index
    %c0_219 = arith.constant 0 : index
    %271 = vector.load %arg22[%c2_217, %c0_218, %c0_219] : memref<4x2x8xf32, #tpu.memory_space<vmem>>, vector<1x2x8xf32>
    %272 = vector.shape_cast %271 : vector<1x2x8xf32> to vector<2x8xf32>
    %cst_220 = arith.constant dense<0.000000e+00> : vector<32x8xf32>
    %273 = tpu.matmul %270, %272, %cst_220 {dimension_numbers = #tpu.dot_dimension_numbers<[1], [0], [0], [1], [0, 0, 1, 1], [], []>} : vector<32x2xf32>, vector<2x8xf32>, vector<32x8xf32> -> vector<32x8xf32>
    %274 = arith.addf %258, %273 : vector<32x8xf32>
    %c3_221 = arith.constant 3 : index
    %c0_222 = arith.constant 0 : index
    %c0_223 = arith.constant 0 : index
    %275 = vector.load %arg20[%c3_221, %c0_222, %c0_223] : memref<4x32x8xf32, #tpu.memory_space<vmem>>, vector<1x32x8xf32>
    %276 = vector.shape_cast %275 : vector<1x32x8xf32> to vector<32x8xf32>
    %cst_224 = arith.constant dense<0.000000e+00> : vector<32x2xf32>
    %277 = tpu.matmul %276, %226, %cst_224 {dimension_numbers = #tpu.dot_dimension_numbers<[1], [0], [0], [1], [0, 0, 1, 1], [], []>} : vector<32x8xf32>, vector<8x2xf32>, vector<32x2xf32> -> vector<32x2xf32>
    %c3_225 = arith.constant 3 : index
    %c0_226 = arith.constant 0 : index
    %c0_227 = arith.constant 0 : index
    %278 = vector.load %arg21[%c3_225, %c0_226, %c0_227] : memref<4x32x1xf32, #tpu.memory_space<vmem>>, vector<1x32x1xf32>
    %279 = vector.shape_cast %278 : vector<1x32x1xf32> to vector<32x1xf32>
    %280 = vector.broadcast %279 : vector<32x1xf32> to vector<32x2xf32>
    %281 = arith.addf %277, %280 : vector<32x2xf32>
    %cst_228 = arith.constant 0.000000e+00 : f32
    %282 = vector.broadcast %cst_228 : f32 to vector<32x2xf32>
    %283 = arith.cmpf oge, %281, %282 : vector<32x2xf32>
    %cst_229 = arith.constant 0.00999999977 : f32
    %284 = vector.broadcast %cst_229 : f32 to vector<32x2xf32>
    %285 = arith.mulf %284, %281 : vector<32x2xf32>
    %286 = arith.select %283, %281, %285 : vector<32x2xi1>, vector<32x2xf32>
    %c3_230 = arith.constant 3 : index
    %c0_231 = arith.constant 0 : index
    %c0_232 = arith.constant 0 : index
    %287 = vector.load %arg22[%c3_230, %c0_231, %c0_232] : memref<4x2x8xf32, #tpu.memory_space<vmem>>, vector<1x2x8xf32>
    %288 = vector.shape_cast %287 : vector<1x2x8xf32> to vector<2x8xf32>
    %cst_233 = arith.constant dense<0.000000e+00> : vector<32x8xf32>
    %289 = tpu.matmul %286, %288, %cst_233 {dimension_numbers = #tpu.dot_dimension_numbers<[1], [0], [0], [1], [0, 0, 1, 1], [], []>} : vector<32x2xf32>, vector<2x8xf32>, vector<32x8xf32> -> vector<32x8xf32>
    %290 = arith.addf %274, %289 : vector<32x8xf32>
    %c0_234 = arith.constant 0 : index
    %c0_235 = arith.constant 0 : index
    %291 = vector.load %arg23[%c0_234, %c0_235] : memref<8x32xf32, #tpu.memory_space<vmem>>, vector<8x32xf32>
    %cst_236 = arith.constant dense<0.000000e+00> : vector<32x32xf32>
    %292 = tpu.matmul %290, %291, %cst_236 {dimension_numbers = #tpu.dot_dimension_numbers<[1], [0], [0], [1], [0, 0, 1, 1], [], []>} : vector<32x8xf32>, vector<8x32xf32>, vector<32x32xf32> -> vector<32x32xf32>
    %c0_237 = arith.constant 0 : index
    %c0_238 = arith.constant 0 : index
    %293 = vector.load %arg24[%c0_237, %c0_238] : memref<16x32xf32, #tpu.memory_space<vmem>>, vector<16x32xf32>
    %cst_239 = arith.constant dense<0.000000e+00> : vector<16x32xf32>
    %294 = tpu.matmul %293, %292, %cst_239 {dimension_numbers = #tpu.dot_dimension_numbers<[1], [0], [0], [1], [0, 0, 1, 1], [], []>} : vector<16x32xf32>, vector<32x32xf32>, vector<16x32xf32> -> vector<16x32xf32>
    %c0_240 = arith.constant 0 : index
    %c0_241 = arith.constant 0 : index
    %295 = vector.load %arg25[%c0_240, %c0_241] : memref<16x1xf32, #tpu.memory_space<vmem>>, vector<16x1xf32>
    %c0_242 = arith.constant 0 : index
    %c0_243 = arith.constant 0 : index
    %296 = vector.load %arg26[%c0_242, %c0_243] : memref<16x1xf32, #tpu.memory_space<vmem>>, vector<16x1xf32>
    %cst_244 = arith.constant dense<0.000000e+00> : vector<16xf32>
    %297 = vector.multi_reduction <add>, %294, %cst_244 [1] : vector<16x32xf32> to vector<16xf32>
    %298 = vector.shape_cast %297 : vector<16xf32> to vector<16x1xf32>
    %cst_245 = arith.constant 3.200000e+01 : f32
    %299 = vector.broadcast %cst_245 : f32 to vector<16x1xf32>
    %300 = arith.divf %298, %299 : vector<16x1xf32>
    %301 = vector.broadcast %300 : vector<16x1xf32> to vector<16x32xf32>
    %302 = arith.subf %294, %301 : vector<16x32xf32>
    %303 = arith.mulf %302, %302 : vector<16x32xf32>
    %cst_246 = arith.constant dense<0.000000e+00> : vector<16xf32>
    %304 = vector.multi_reduction <add>, %303, %cst_246 [1] : vector<16x32xf32> to vector<16xf32>
    %305 = vector.shape_cast %304 : vector<16xf32> to vector<16x1xf32>
    %cst_247 = arith.constant 3.200000e+01 : f32
    %306 = vector.broadcast %cst_247 : f32 to vector<16x1xf32>
    %307 = arith.divf %305, %306 : vector<16x1xf32>
    %cst_248 = arith.constant 9.99999974E-6 : f32
    %308 = vector.broadcast %cst_248 : f32 to vector<16x1xf32>
    %309 = arith.addf %307, %308 : vector<16x1xf32>
    %310 = math.rsqrt %309 : vector<16x1xf32>
    %311 = vector.broadcast %310 : vector<16x1xf32> to vector<16x32xf32>
    %312 = arith.mulf %302, %311 : vector<16x32xf32>
    %313 = vector.broadcast %295 : vector<16x1xf32> to vector<16x32xf32>
    %314 = arith.mulf %312, %313 : vector<16x32xf32>
    %315 = vector.broadcast %296 : vector<16x1xf32> to vector<16x32xf32>
    %316 = arith.addf %314, %315 : vector<16x32xf32>
    %cst_249 = arith.constant 0.000000e+00 : f32
    %317 = vector.broadcast %cst_249 : f32 to vector<16x32xf32>
    %318 = arith.cmpf oge, %316, %317 : vector<16x32xf32>
    %cst_250 = arith.constant 0.00999999977 : f32
    %319 = vector.broadcast %cst_250 : f32 to vector<16x32xf32>
    %320 = arith.mulf %319, %316 : vector<16x32xf32>
    %321 = arith.select %318, %316, %320 : vector<16x32xi1>, vector<16x32xf32>
    %c0_251 = arith.constant 0 : index
    %c0_252 = arith.constant 0 : index
    %322 = vector.load %arg27[%c0_251, %c0_252] : memref<32x128xf32, #tpu.memory_space<vmem>>, vector<32x128xf32>
    %cst_253 = arith.constant dense<0.000000e+00> : vector<16x128xf32>
    %323 = tpu.matmul %321, %322, %cst_253 {dimension_numbers = #tpu.dot_dimension_numbers<[1], [0], [0], [1], [0, 0, 1, 1], [], []>} : vector<16x32xf32>, vector<32x128xf32>, vector<16x128xf32> -> vector<16x128xf32>
    %c0_254 = arith.constant 0 : index
    %c0_255 = arith.constant 0 : index
    %324 = vector.load %arg28[%c0_254, %c0_255] : memref<8x16xf32, #tpu.memory_space<vmem>>, vector<8x16xf32>
    %cst_256 = arith.constant dense<0.000000e+00> : vector<8x128xf32>
    %325 = tpu.matmul %324, %323, %cst_256 {dimension_numbers = #tpu.dot_dimension_numbers<[1], [0], [0], [1], [0, 0, 1, 1], [], []>} : vector<8x16xf32>, vector<16x128xf32>, vector<8x128xf32> -> vector<8x128xf32>
    %c0_257 = arith.constant 0 : index
    %c0_258 = arith.constant 0 : index
    %326 = vector.load %arg29[%c0_257, %c0_258] : memref<8x1xf32, #tpu.memory_space<vmem>>, vector<8x1xf32>
    %c0_259 = arith.constant 0 : index
    %c0_260 = arith.constant 0 : index
    %327 = vector.load %arg30[%c0_259, %c0_260] : memref<8x1xf32, #tpu.memory_space<vmem>>, vector<8x1xf32>
    %cst_261 = arith.constant dense<0.000000e+00> : vector<8xf32>
    %328 = vector.multi_reduction <add>, %325, %cst_261 [1] : vector<8x128xf32> to vector<8xf32>
    %329 = vector.shape_cast %328 : vector<8xf32> to vector<8x1xf32>
    %cst_262 = arith.constant 1.280000e+02 : f32
    %330 = vector.broadcast %cst_262 : f32 to vector<8x1xf32>
    %331 = arith.divf %329, %330 : vector<8x1xf32>
    %332 = vector.broadcast %331 : vector<8x1xf32> to vector<8x128xf32>
    %333 = arith.subf %325, %332 : vector<8x128xf32>
    %334 = arith.mulf %333, %333 : vector<8x128xf32>
    %cst_263 = arith.constant dense<0.000000e+00> : vector<8xf32>
    %335 = vector.multi_reduction <add>, %334, %cst_263 [1] : vector<8x128xf32> to vector<8xf32>
    %336 = vector.shape_cast %335 : vector<8xf32> to vector<8x1xf32>
    %cst_264 = arith.constant 1.280000e+02 : f32
    %337 = vector.broadcast %cst_264 : f32 to vector<8x1xf32>
    %338 = arith.divf %336, %337 : vector<8x1xf32>
    %cst_265 = arith.constant 9.99999974E-6 : f32
    %339 = vector.broadcast %cst_265 : f32 to vector<8x1xf32>
    %340 = arith.addf %338, %339 : vector<8x1xf32>
    %341 = math.rsqrt %340 : vector<8x1xf32>
    %342 = vector.broadcast %341 : vector<8x1xf32> to vector<8x128xf32>
    %343 = arith.mulf %333, %342 : vector<8x128xf32>
    %344 = vector.broadcast %326 : vector<8x1xf32> to vector<8x128xf32>
    %345 = arith.mulf %343, %344 : vector<8x128xf32>
    %346 = vector.broadcast %327 : vector<8x1xf32> to vector<8x128xf32>
    %347 = arith.addf %345, %346 : vector<8x128xf32>
    %cst_266 = arith.constant 0.000000e+00 : f32
    %348 = vector.broadcast %cst_266 : f32 to vector<8x128xf32>
    %349 = arith.cmpf oge, %347, %348 : vector<8x128xf32>
    %cst_267 = arith.constant 0.00999999977 : f32
    %350 = vector.broadcast %cst_267 : f32 to vector<8x128xf32>
    %351 = arith.mulf %350, %347 : vector<8x128xf32>
    %352 = arith.select %349, %347, %351 : vector<8x128xi1>, vector<8x128xf32>
    %c0_268 = arith.constant 0 : index
    %c0_269 = arith.constant 0 : index
    %353 = vector.load %arg31[%c0_268, %c0_269] : memref<128x512xf32, #tpu.memory_space<vmem>>, vector<128x512xf32>
    %cst_270 = arith.constant dense<0.000000e+00> : vector<8x512xf32>
    %354 = tpu.matmul %352, %353, %cst_270 {dimension_numbers = #tpu.dot_dimension_numbers<[1], [0], [0], [1], [0, 0, 1, 1], [], []>} : vector<8x128xf32>, vector<128x512xf32>, vector<8x512xf32> -> vector<8x512xf32>
    %c0_271 = arith.constant 0 : index
    %c0_272 = arith.constant 0 : index
    %355 = vector.load %arg32[%c0_271, %c0_272] : memref<1x8xf32, #tpu.memory_space<vmem>>, vector<1x8xf32>
    %cst_273 = arith.constant dense<0.000000e+00> : vector<1x512xf32>
    %356 = tpu.matmul %355, %354, %cst_273 {dimension_numbers = #tpu.dot_dimension_numbers<[1], [0], [0], [1], [0, 0, 1, 1], [], []>} : vector<1x8xf32>, vector<8x512xf32>, vector<1x512xf32> -> vector<1x512xf32>
    %c0_274 = arith.constant 0 : index
    %c0_275 = arith.constant 0 : index
    %357 = vector.load %arg33[%c0_274, %c0_275] : memref<1x1xf32, #tpu.memory_space<vmem>>, vector<1x1xf32>
    %c0_276 = arith.constant 0 : index
    %c0_277 = arith.constant 0 : index
    %358 = vector.load %arg34[%c0_276, %c0_277] : memref<1x1xf32, #tpu.memory_space<vmem>>, vector<1x1xf32>
    %cst_278 = arith.constant dense<0.000000e+00> : vector<1xf32>
    %359 = vector.multi_reduction <add>, %356, %cst_278 [1] : vector<1x512xf32> to vector<1xf32>
    %360 = vector.shape_cast %359 : vector<1xf32> to vector<1x1xf32>
    %cst_279 = arith.constant 5.120000e+02 : f32
    %361 = vector.broadcast %cst_279 : f32 to vector<1x1xf32>
    %362 = arith.divf %360, %361 : vector<1x1xf32>
    %363 = vector.broadcast %362 : vector<1x1xf32> to vector<1x512xf32>
    %364 = arith.subf %356, %363 : vector<1x512xf32>
    %365 = arith.mulf %364, %364 : vector<1x512xf32>
    %cst_280 = arith.constant dense<0.000000e+00> : vector<1xf32>
    %366 = vector.multi_reduction <add>, %365, %cst_280 [1] : vector<1x512xf32> to vector<1xf32>
    %367 = vector.shape_cast %366 : vector<1xf32> to vector<1x1xf32>
    %cst_281 = arith.constant 5.120000e+02 : f32
    %368 = vector.broadcast %cst_281 : f32 to vector<1x1xf32>
    %369 = arith.divf %367, %368 : vector<1x1xf32>
    %cst_282 = arith.constant 9.99999974E-6 : f32
    %370 = vector.broadcast %cst_282 : f32 to vector<1x1xf32>
    %371 = arith.addf %369, %370 : vector<1x1xf32>
    %372 = math.rsqrt %371 : vector<1x1xf32>
    %373 = vector.broadcast %372 : vector<1x1xf32> to vector<1x512xf32>
    %374 = arith.mulf %364, %373 : vector<1x512xf32>
    %375 = vector.broadcast %357 : vector<1x1xf32> to vector<1x512xf32>
    %376 = arith.mulf %374, %375 : vector<1x512xf32>
    %377 = vector.broadcast %358 : vector<1x1xf32> to vector<1x512xf32>
    %378 = arith.addf %376, %377 : vector<1x512xf32>
    %c0_283 = arith.constant 0 : index
    %c0_284 = arith.constant 0 : index
    %379 = vector.load %arg35[%c0_283, %c0_284] : memref<1x512xf32, #tpu.memory_space<vmem>>, vector<1x512xf32>
    tpu.vector_store %arg35[%c0_283, %c0_284], %378 {strides = array<i32>} : memref<1x512xf32, #tpu.memory_space<vmem>>, vector<1x512xf32>,
    return
  }
}

</mosaic_0001>

<llo_original>
// kernel: _forward.1
$region0: #{_forward.1}
  #allocation0 [shape = 'u32[]', space=smem, size = 0x4, offset = 0x4, fixed_abs, tag = 'smem constant byte address 0x4 - core index']
  #allocation1 [shape = 'u32[144,128]{1,0:T(1,128)}', space=vmem, size = 0x12000, scoped, tag = 'internal scratch']
  #allocation2 [shape = 'f32[1,1]{1,0:T(1,128)S(1)}', space=vmem, size = 0x200, scoped, tag = 'scoped memory for _forward.1']
  #allocation3 [shape = 'f32[1,1]{1,0:T(1,128)S(1)}', space=vmem, size = 0x200, scoped, tag = 'scoped memory for _forward.1']
  %s0 = inlined_call_operand.smem [shape: u32[37], index: -1, kind: input, shape index: {}]
  %s1 = sld [smem:[%s0]]
  %s2 = scalar_lea.smem %s0, 1
  %s3 = sld [smem:[%s2]]
  %s4 = scalar_lea.smem %s0, 2
  %s5 = sld [smem:[%s4]]
  %s6 = scalar_lea.smem %s0, 3
  %s7 = sld [smem:[%s6]]
  %s8 = scalar_lea.smem %s0, 4
  %s9 = sld [smem:[%s8]]
  %s10 = scalar_lea.smem %s0, 5
  %s11 = sld [smem:[%s10]]
  %s12 = scalar_lea.smem %s0, 6
  %s13 = sld [smem:[%s12]]
  %s14 = scalar_lea.smem %s0, 7
  %s15 = sld [smem:[%s14]]
  %s16 = scalar_lea.smem %s0, 8
  %s17 = sld [smem:[%s16]]
  %s18 = scalar_lea.smem %s0, 9
  %s19 = sld [smem:[%s18]]
  %s20 = scalar_lea.smem %s0, 10
  %s21 = sld [smem:[%s20]]
  %s22 = scalar_lea.smem %s0, 11
  %s23 = sld [smem:[%s22]]
  %s24 = scalar_lea.smem %s0, 12
  %s25 = sld [smem:[%s24]]
  %s26 = scalar_lea.smem %s0, 13
  %s27 = sld [smem:[%s26]]
  %s28 = scalar_lea.smem %s0, 14
  %s29 = sld [smem:[%s28]]
  %s30 = scalar_lea.smem %s0, 15
  %s31 = sld [smem:[%s30]]
  %s32 = scalar_lea.smem %s0, 16
  %s33 = sld [smem:[%s32]]
  %s34 = scalar_lea.smem %s0, 17
  %s35 = sld [smem:[%s34]]
  %s36 = scalar_lea.smem %s0, 18
  %s37 = sld [smem:[%s36]]
  %s38 = scalar_lea.smem %s0, 19
  %s39 = sld [smem:[%s38]]
  %s40 = scalar_lea.smem %s0, 20
  %s41 = sld [smem:[%s40]]
  %s42 = scalar_lea.smem %s0, 21
  %s43 = sld [smem:[%s42]]
  %s44 = scalar_lea.smem %s0, 22
  %s45 = sld [smem:[%s44]]
  %s46 = scalar_lea.smem %s0, 23
  %s47 = sld [smem:[%s46]]
  %s48 = scalar_lea.smem %s0, 24
  %s49 = sld [smem:[%s48]]
  %s50 = scalar_lea.smem %s0, 25
  %s51 = sld [smem:[%s50]]
  %s52 = scalar_lea.smem %s0, 26
  %s53 = sld [smem:[%s52]]
  %s54 = scalar_lea.smem %s0, 27
  %s55 = sld [smem:[%s54]]
  %s56 = scalar_lea.smem %s0, 28
  %s57 = sld [smem:[%s56]]
  %s58 = scalar_lea.smem %s0, 29
  %s59 = sld [smem:[%s58]]
  %s60 = scalar_lea.smem %s0, 30
  %s61 = sld [smem:[%s60]]
  %s62 = scalar_lea.smem %s0, 31
  %s63 = sld [smem:[%s62]]
  %s64 = scalar_lea.smem %s0, 32
  %s65 = sld [smem:[%s64]]
  %s66 = scalar_lea.smem %s0, 33
  %s67 = sld [smem:[%s66]]
  %s68 = scalar_lea.smem %s0, 34
  %s69 = sld [smem:[%s68]]
  %s70 = scalar_lea.smem %s0, 35
  %s71 = sld [smem:[%s70]]
  %s72 = scalar_lea.smem %s0, 36
  %s73 = sld [smem:[%s72]]
  %74 = xla_tuple %s71, %s73
  %s75 = sld [smem:[#allocation0]]
  $region210: #{_forward.1} parent=0
    _
  %s77 = ssub.s32 1, %s75
  %s78 = scalar_select 0, %s77, %s75
  %v79 = vstv %s67
  %80 = vst [vmem:[#allocation2] sm:$0x1] %v79
  %v81 = vstv %s69
  %82 = vst [vmem:[#allocation3] sm:$0x1] %v81
  $region1: #{_forward.1} parent=0
    #allocation4 [shape = 'u8[2359296]{0}', space=vmem, size = 0x240000, scoped, tag = 'input window, operand 2, single buffered']
    #allocation5 [shape = 's32[1]{0}', space=sflag, size = 0x4, scoped, tag = 'scoped memory for _forward.1']
    #allocation6 [shape = 'u8[4096]{0}', space=vmem, size = 0x1000, scoped, tag = 'input window, operand 3, single buffered']
    #allocation7 [shape = 's32[1]{0}', space=sflag, size = 0x4, scoped, tag = 'scoped memory for _forward.1']
    #allocation8 [shape = 'u8[8192]{0}', space=vmem, size = 0x2000, scoped, tag = 'input window, operand 7, single buffered']
    #allocation9 [shape = 'u8[32768]{0}', space=vmem, size = 0x8000, scoped, tag = 'input window, operand 11, single buffered']
    #allocation10 [shape = 's32[1]{0}', space=sflag, size = 0x4, scoped, tag = 'scoped memory for _forward.1']
    #allocation11 [shape = 'u8[16384]{0}', space=vmem, size = 0x4000, scoped, tag = 'input window, operand 15, single buffered']
    #allocation12 [shape = 'u8[8192]{0}', space=vmem, size = 0x2000, scoped, tag = 'input window, operand 18, single buffered']
    #allocation13 [shape = 's32[1]{0}', space=sflag, size = 0x4, scoped, tag = 'scoped memory for _forward.1']
    #allocation14 [shape = 'u8[4096]{0}', space=vmem, size = 0x1000, scoped, tag = 'input window, operand 22, single buffered']
    #allocation15 [shape = 'u8[4096]{0}', space=vmem, size = 0x1000, scoped, tag = 'input window, operand 23, single buffered']
    #allocation16 [shape = 's32[1]{0}', space=sflag, size = 0x4, scoped, tag = 'scoped memory for _forward.1']
    #allocation17 [shape = 'u8[8192]{0}', space=vmem, size = 0x2000, scoped, tag = 'input window, operand 24, single buffered']
    #allocation18 [shape = 'u8[16384]{0}', space=vmem, size = 0x4000, scoped, tag = 'input window, operand 27, single buffered']
    #allocation19 [shape = 's32[1]{0}', space=sflag, size = 0x4, scoped, tag = 'scoped memory for _forward.1']
    #allocation20 [shape = 'u8[4096]{0}', space=vmem, size = 0x1000, scoped, tag = 'input window, operand 28, single buffered']
    #allocation21 [shape = 'u8[262144]{0}', space=vmem, size = 0x40000, scoped, tag = 'input window, operand 31, single buffered']
    #allocation22 [shape = 's32[1]{0}', space=sflag, size = 0x4, scoped, tag = 'scoped memory for _forward.1']
    #allocation23 [shape = 'u8[512]{0}', space=vmem, size = 0x400, scoped, tag = 'input window, operand 32, single buffered']
    %83 = vsyncpa [#allocation5], 0
    %84 = vsyncpa [#allocation7], 0
    %85 = vsyncpa [#allocation10], 0
    %86 = vsyncpa [#allocation13], 0
    %87 = vsyncpa [#allocation16], 0
    %88 = vsyncpa [#allocation19], 0
    %89 = vsyncpa [#allocation22], 0
    // Predicated region
    $region2: #{_forward.1} parent=1 // pred_check
      _
    $region3: #{_forward.1} parent=1 // pred_check_branch
      %91 = sbr.rel (0) target = $region5
    $region4: #{_forward.1} parent=1 // pred_region
      _
    $region5: #{_forward.1} parent=1 // pred_fallthru
      _
    // Predicated region
    $region6: #{_forward.1} parent=1 // pred_check
      _
    $region7: #{_forward.1} parent=1 // pred_check_branch
      %93 = sbr.rel (0) target = $region9
    $region8: #{_forward.1} parent=1 // pred_region
      _
    $region9: #{_forward.1} parent=1 // pred_fallthru
      _
    // Predicated region
    $region10: #{_forward.1} parent=1 // pred_check
      _
    $region11: #{_forward.1} parent=1 // pred_check_branch
      %95 = sbr.rel (0) target = $region13
    $region12: #{_forward.1} parent=1 // pred_region
      %s97 = ssub.s32 73728, 73728
      %98 = vsyncadd [#allocation5], %s97
      %s99 = sshll.u32 [#allocation4], 4
      %s100 = int_to_ptr.vmem [resolvable:$true] %s99
      %105 = dma.hbm_to_vmem [thread:$0]  %s5, 73728, %s100, [#allocation5], 128, 128, 8
    $region13: #{_forward.1} parent=1 // pred_fallthru
      _
    // Predicated region
    $region14: #{_forward.1} parent=1 // pred_check
      _
    $region15: #{_forward.1} parent=1 // pred_check_branch
      %107 = sbr.rel (0) target = $region17
    $region16: #{_forward.1} parent=1 // pred_region
      %s109 = ssub.s32 128, 128
      %110 = vsyncadd [#allocation7], %s109
      %s112 = sshll.u32 [#allocation6], 4
      %s113 = int_to_ptr.vmem [resolvable:$true] %s112
      %115 = dma.hbm_to_vmem [thread:$0]  %s7, 128, %s113, [#allocation7]
    $region17: #{_forward.1} parent=1 // pred_fallthru
      _
    // Predicated region
    $region18: #{_forward.1} parent=1 // pred_check
      _
    $region19: #{_forward.1} parent=1 // pred_check_branch
      %117 = sbr.rel (0) target = $region21
    $region20: #{_forward.1} parent=1 // pred_region
      _
    $region21: #{_forward.1} parent=1 // pred_fallthru
      _
    // Predicated region
    $region22: #{_forward.1} parent=1 // pred_check
      _
    $region23: #{_forward.1} parent=1 // pred_check_branch
      %119 = sbr.rel (0) target = $region25
    $region24: #{_forward.1} parent=1 // pred_region
      _
    $region25: #{_forward.1} parent=1 // pred_fallthru
      _
    // Predicated region
    $region26: #{_forward.1} parent=1 // pred_check
      _
    $region27: #{_forward.1} parent=1 // pred_check_branch
      %121 = sbr.rel (0) target = $region29
    $region28: #{_forward.1} parent=1 // pred_region
      _
    $region29: #{_forward.1} parent=1 // pred_fallthru
      _
    // Predicated region
    $region30: #{_forward.1} parent=1 // pred_check
      _
    $region31: #{_forward.1} parent=1 // pred_check_branch
      %123 = sbr.rel (0) target = $region33
    $region32: #{_forward.1} parent=1 // pred_region
      %s125 = ssub.s32 256, 256
      %126 = vsyncadd [#allocation7], %s125
      %s127 = sshll.u32 [#allocation8], 4
      %s128 = int_to_ptr.vmem [resolvable:$true] %s127
      %133 = dma.hbm_to_vmem [thread:$0]  %s15, 256, %s128, [#allocation7], 128, 128, 8
    $region33: #{_forward.1} parent=1 // pred_fallthru
      _
    // Predicated region
    $region34: #{_forward.1} parent=1 // pred_check
      _
    $region35: #{_forward.1} parent=1 // pred_check_branch
      %135 = sbr.rel (0) target = $region37
    $region36: #{_forward.1} parent=1 // pred_region
      _
    $region37: #{_forward.1} parent=1 // pred_fallthru
      _
    // Predicated region
    $region38: #{_forward.1} parent=1 // pred_check
      _
    $region39: #{_forward.1} parent=1 // pred_check_branch
      %137 = sbr.rel (0) target = $region41
    $region40: #{_forward.1} parent=1 // pred_region
      _
    $region41: #{_forward.1} parent=1 // pred_fallthru
      _
    // Predicated region
    $region42: #{_forward.1} parent=1 // pred_check
      _
    $region43: #{_forward.1} parent=1 // pred_check_branch
      %139 = sbr.rel (0) target = $region45
    $region44: #{_forward.1} parent=1 // pred_region
      _
    $region45: #{_forward.1} parent=1 // pred_fallthru
      _
    // Predicated region
    $region46: #{_forward.1} parent=1 // pred_check
      _
    $region47: #{_forward.1} parent=1 // pred_check_branch
      %141 = sbr.rel (0) target = $region49
    $region48: #{_forward.1} parent=1 // pred_region
      %s143 = ssub.s32 1024, 1024
      %144 = vsyncadd [#allocation10], %s143
      %s145 = sshll.u32 [#allocation9], 4
      %s146 = int_to_ptr.vmem [resolvable:$true] %s145
      %151 = dma.hbm_to_vmem [thread:$0]  %s23, 1024, %s146, [#allocation10], 256, 256, 16
    $region49: #{_forward.1} parent=1 // pred_fallthru
      _
    // Predicated region
    $region50: #{_forward.1} parent=1 // pred_check
      _
    $region51: #{_forward.1} parent=1 // pred_check_branch
      %153 = sbr.rel (0) target = $region53
    $region52: #{_forward.1} parent=1 // pred_region
      _
    $region53: #{_forward.1} parent=1 // pred_fallthru
      _
    // Predicated region
    $region54: #{_forward.1} parent=1 // pred_check
      _
    $region55: #{_forward.1} parent=1 // pred_check_branch
      %155 = sbr.rel (0) target = $region57
    $region56: #{_forward.1} parent=1 // pred_region
      _
    $region57: #{_forward.1} parent=1 // pred_fallthru
      _
    // Predicated region
    $region58: #{_forward.1} parent=1 // pred_check
      _
    $region59: #{_forward.1} parent=1 // pred_check_branch
      %157 = sbr.rel (0) target = $region61
    $region60: #{_forward.1} parent=1 // pred_region
      _
    $region61: #{_forward.1} parent=1 // pred_fallthru
      _
    // Predicated region
    $region62: #{_forward.1} parent=1 // pred_check
      _
    $region63: #{_forward.1} parent=1 // pred_check_branch
      %159 = sbr.rel (0) target = $region65
    $region64: #{_forward.1} parent=1 // pred_region
      %s161 = ssub.s32 512, 512
      %162 = vsyncadd [#allocation10], %s161
      %s163 = sshll.u32 [#allocation11], 4
      %s164 = int_to_ptr.vmem [resolvable:$true] %s163
      %169 = dma.hbm_to_vmem [thread:$0]  %s31, 512, %s164, [#allocation10], 128, 128, 8
    $region65: #{_forward.1} parent=1 // pred_fallthru
      _
    // Predicated region
    $region66: #{_forward.1} parent=1 // pred_check
      _
    $region67: #{_forward.1} parent=1 // pred_check_branch
      %171 = sbr.rel (0) target = $region69
    $region68: #{_forward.1} parent=1 // pred_region
      _
    $region69: #{_forward.1} parent=1 // pred_fallthru
      _
    // Predicated region
    $region70: #{_forward.1} parent=1 // pred_check
      _
    $region71: #{_forward.1} parent=1 // pred_check_branch
      %173 = sbr.rel (0) target = $region73
    $region72: #{_forward.1} parent=1 // pred_region
      _
    $region73: #{_forward.1} parent=1 // pred_fallthru
      _
    // Predicated region
    $region74: #{_forward.1} parent=1 // pred_check
      _
    $region75: #{_forward.1} parent=1 // pred_check_branch
      %175 = sbr.rel (0) target = $region77
    $region76: #{_forward.1} parent=1 // pred_region
      %s177 = ssub.s32 256, 256
      %178 = vsyncadd [#allocation13], %s177
      %s179 = sshll.u32 [#allocation12], 4
      %s180 = int_to_ptr.vmem [resolvable:$true] %s179
      %185 = dma.hbm_to_vmem [thread:$0]  %s37, 256, %s180, [#allocation13], 128, 128, 8
    $region77: #{_forward.1} parent=1 // pred_fallthru
      _
    // Predicated region
    $region78: #{_forward.1} parent=1 // pred_check
      _
    $region79: #{_forward.1} parent=1 // pred_check_branch
      %187 = sbr.rel (0) target = $region81
    $region80: #{_forward.1} parent=1 // pred_region
      _
    $region81: #{_forward.1} parent=1 // pred_fallthru
      _
    // Predicated region
    $region82: #{_forward.1} parent=1 // pred_check
      _
    $region83: #{_forward.1} parent=1 // pred_check_branch
      %189 = sbr.rel (0) target = $region85
    $region84: #{_forward.1} parent=1 // pred_region
      _
    $region85: #{_forward.1} parent=1 // pred_fallthru
      _
    // Predicated region
    $region86: #{_forward.1} parent=1 // pred_check
      _
    $region87: #{_forward.1} parent=1 // pred_check_branch
      %191 = sbr.rel (0) target = $region89
    $region88: #{_forward.1} parent=1 // pred_region
      _
    $region89: #{_forward.1} parent=1 // pred_fallthru
      _
    // Predicated region
    $region90: #{_forward.1} parent=1 // pred_check
      _
    $region91: #{_forward.1} parent=1 // pred_check_branch
      %193 = sbr.rel (0) target = $region93
    $region92: #{_forward.1} parent=1 // pred_region
      %s195 = ssub.s32 128, 128
      %196 = vsyncadd [#allocation13], %s195
      %s197 = sshll.u32 [#allocation14], 4
      %s198 = int_to_ptr.vmem [resolvable:$true] %s197
      %203 = dma.hbm_to_vmem [thread:$0]  %s45, 128, %s198, [#allocation13], 32, 32, 2
    $region93: #{_forward.1} parent=1 // pred_fallthru
      _
    // Predicated region
    $region94: #{_forward.1} parent=1 // pred_check
      _
    $region95: #{_forward.1} parent=1 // pred_check_branch
      %205 = sbr.rel (0) target = $region97
    $region96: #{_forward.1} parent=1 // pred_region
      %s207 = ssub.s32 128, 128
      %208 = vsyncadd [#allocation16], %s207
      %s210 = sshll.u32 [#allocation15], 4
      %s211 = int_to_ptr.vmem [resolvable:$true] %s210
      %213 = dma.hbm_to_vmem [thread:$0]  %s47, 128, %s211, [#allocation16]
    $region97: #{_forward.1} parent=1 // pred_fallthru
      _
    // Predicated region
    $region98: #{_forward.1} parent=1 // pred_check
      _
    $region99: #{_forward.1} parent=1 // pred_check_branch
      %215 = sbr.rel (0) target = $region101
    $region100: #{_forward.1} parent=1 // pred_region
      %s217 = ssub.s32 256, 256
      %218 = vsyncadd [#allocation16], %s217
      %s219 = sshll.u32 [#allocation17], 4
      %s220 = int_to_ptr.vmem [resolvable:$true] %s219
      %225 = dma.hbm_to_vmem [thread:$0]  %s49, 256, %s220, [#allocation16], 128, 128, 8
    $region101: #{_forward.1} parent=1 // pred_fallthru
      _
    // Predicated region
    $region102: #{_forward.1} parent=1 // pred_check
      _
    $region103: #{_forward.1} parent=1 // pred_check_branch
      %227 = sbr.rel (0) target = $region105
    $region104: #{_forward.1} parent=1 // pred_region
      _
    $region105: #{_forward.1} parent=1 // pred_fallthru
      _
    // Predicated region
    $region106: #{_forward.1} parent=1 // pred_check
      _
    $region107: #{_forward.1} parent=1 // pred_check_branch
      %229 = sbr.rel (0) target = $region109
    $region108: #{_forward.1} parent=1 // pred_region
      _
    $region109: #{_forward.1} parent=1 // pred_fallthru
      _
    // Predicated region
    $region110: #{_forward.1} parent=1 // pred_check
      _
    $region111: #{_forward.1} parent=1 // pred_check_branch
      %231 = sbr.rel (0) target = $region113
    $region112: #{_forward.1} parent=1 // pred_region
      %s233 = ssub.s32 512, 512
      %234 = vsyncadd [#allocation19], %s233
      %s235 = sshll.u32 [#allocation18], 4
      %s236 = int_to_ptr.vmem [resolvable:$true] %s235
      %241 = dma.hbm_to_vmem [thread:$0]  %s55, 512, %s236, [#allocation19], 128, 128, 8
    $region113: #{_forward.1} parent=1 // pred_fallthru
      _
    // Predicated region
    $region114: #{_forward.1} parent=1 // pred_check
      _
    $region115: #{_forward.1} parent=1 // pred_check_branch
      %243 = sbr.rel (0) target = $region117
    $region116: #{_forward.1} parent=1 // pred_region
      %s245 = ssub.s32 128, 128
      %246 = vsyncadd [#allocation19], %s245
      %s248 = sshll.u32 [#allocation20], 4
      %s249 = int_to_ptr.vmem [resolvable:$true] %s248
      %251 = dma.hbm_to_vmem [thread:$0]  %s57, 128, %s249, [#allocation19]
    $region117: #{_forward.1} parent=1 // pred_fallthru
      _
    // Predicated region
    $region118: #{_forward.1} parent=1 // pred_check
      _
    $region119: #{_forward.1} parent=1 // pred_check_branch
      %253 = sbr.rel (0) target = $region121
    $region120: #{_forward.1} parent=1 // pred_region
      _
    $region121: #{_forward.1} parent=1 // pred_fallthru
      _
    // Predicated region
    $region122: #{_forward.1} parent=1 // pred_check
      _
    $region123: #{_forward.1} parent=1 // pred_check_branch
      %255 = sbr.rel (0) target = $region125
    $region124: #{_forward.1} parent=1 // pred_region
      _
    $region125: #{_forward.1} parent=1 // pred_fallthru
      _
    // Predicated region
    $region126: #{_forward.1} parent=1 // pred_check
      _
    $region127: #{_forward.1} parent=1 // pred_check_branch
      %257 = sbr.rel (0) target = $region129
    $region128: #{_forward.1} parent=1 // pred_region
      %s259 = ssub.s32 8192, 8192
      %260 = vsyncadd [#allocation22], %s259
      %s261 = sshll.u32 [#allocation21], 4
      %s262 = int_to_ptr.vmem [resolvable:$true] %s261
      %267 = dma.hbm_to_vmem [thread:$0]  %s63, 8192, %s262, [#allocation22], 512, 512, 32
    $region129: #{_forward.1} parent=1 // pred_fallthru
      _
    // Predicated region
    $region130: #{_forward.1} parent=1 // pred_check
      _
    $region131: #{_forward.1} parent=1 // pred_check_branch
      %269 = sbr.rel (0) target = $region133
    $region132: #{_forward.1} parent=1 // pred_region
      %s271 = ssub.s32 16, 16
      %272 = vsyncadd [#allocation22], %s271
      %s274 = sshll.u32 [#allocation23], 4
      %s275 = int_to_ptr.vmem [resolvable:$true] %s274
      %277 = dma.hbm_to_vmem [thread:$0]  %s65, 16, %s275, [#allocation22]
    $region133: #{_forward.1} parent=1 // pred_fallthru
      _
    // Predicated region
    $region134: #{_forward.1} parent=1 // pred_check
      _
    $region135: #{_forward.1} parent=1 // pred_check_branch
      %279 = sbr.rel (0) target = $region137
    $region136: #{_forward.1} parent=1 // pred_region
      _
    $region137: #{_forward.1} parent=1 // pred_fallthru
      _
    // Predicated region
    $region138: #{_forward.1} parent=1 // pred_check
      _
    $region139: #{_forward.1} parent=1 // pred_check_branch
      %281 = sbr.rel (0) target = $region141
    $region140: #{_forward.1} parent=1 // pred_region
      _
    $region141: #{_forward.1} parent=1 // pred_fallthru
      _
    // Predicated region
    $region142: #{_forward.1} parent=1 // pred_check
      _
    $region143: #{_forward.1} parent=1 // pred_check_branch
      %283 = sbr.rel (0) target = $region145
    $region144: #{_forward.1} parent=1 // pred_region
      %284 = dma.done [#allocation5], 73728
    $region145: #{_forward.1} parent=1 // pred_fallthru
      _
    // Predicated region
    $region146: #{_forward.1} parent=1 // pred_check
      _
    $region147: #{_forward.1} parent=1 // pred_check_branch
      %286 = sbr.rel (0) target = $region149
    $region148: #{_forward.1} parent=1 // pred_region
      %287 = dma.done [#allocation7], 128
    $region149: #{_forward.1} parent=1 // pred_fallthru
      _
    // Predicated region
    $region150: #{_forward.1} parent=1 // pred_check
      _
    $region151: #{_forward.1} parent=1 // pred_check_branch
      %289 = sbr.rel (0) target = $region153
    $region152: #{_forward.1} parent=1 // pred_region
      %290 = dma.done [#allocation7], 256
    $region153: #{_forward.1} parent=1 // pred_fallthru
      _
    // Predicated region
    $region154: #{_forward.1} parent=1 // pred_check
      _
    $region155: #{_forward.1} parent=1 // pred_check_branch
      %292 = sbr.rel (0) target = $region157
    $region156: #{_forward.1} parent=1 // pred_region
      %293 = dma.done [#allocation10], 1024
    $region157: #{_forward.1} parent=1 // pred_fallthru
      _
    // Predicated region
    $region158: #{_forward.1} parent=1 // pred_check
      _
    $region159: #{_forward.1} parent=1 // pred_check_branch
      %295 = sbr.rel (0) target = $region161
    $region160: #{_forward.1} parent=1 // pred_region
      %296 = dma.done [#allocation10], 512
    $region161: #{_forward.1} parent=1 // pred_fallthru
      _
    // Predicated region
    $region162: #{_forward.1} parent=1 // pred_check
      _
    $region163: #{_forward.1} parent=1 // pred_check_branch
      %298 = sbr.rel (0) target = $region165
    $region164: #{_forward.1} parent=1 // pred_region
      %299 = dma.done [#allocation13], 256
    $region165: #{_forward.1} parent=1 // pred_fallthru
      _
    // Predicated region
    $region166: #{_forward.1} parent=1 // pred_check
      _
    $region167: #{_forward.1} parent=1 // pred_check_branch
      %301 = sbr.rel (0) target = $region169
    $region168: #{_forward.1} parent=1 // pred_region
      %302 = dma.done [#allocation13], 128
    $region169: #{_forward.1} parent=1 // pred_fallthru
      _
    // Predicated region
    $region170: #{_forward.1} parent=1 // pred_check
      _
    $region171: #{_forward.1} parent=1 // pred_check_branch
      %304 = sbr.rel (0) target = $region173
    $region172: #{_forward.1} parent=1 // pred_region
      %305 = dma.done [#allocation16], 128
    $region173: #{_forward.1} parent=1 // pred_fallthru
      _
    // Predicated region
    $region174: #{_forward.1} parent=1 // pred_check
      _
    $region175: #{_forward.1} parent=1 // pred_check_branch
      %307 = sbr.rel (0) target = $region177
    $region176: #{_forward.1} parent=1 // pred_region
      %308 = dma.done [#allocation16], 256
    $region177: #{_forward.1} parent=1 // pred_fallthru
      _
    // Predicated region
    $region178: #{_forward.1} parent=1 // pred_check
      _
    $region179: #{_forward.1} parent=1 // pred_check_branch
      %310 = sbr.rel (0) target = $region181
    $region180: #{_forward.1} parent=1 // pred_region
      %311 = dma.done [#allocation19], 512
    $region181: #{_forward.1} parent=1 // pred_fallthru
      _
    // Predicated region
    $region182: #{_forward.1} parent=1 // pred_check
      _
    $region183: #{_forward.1} parent=1 // pred_check_branch
      %313 = sbr.rel (0) target = $region185
    $region184: #{_forward.1} parent=1 // pred_region
      %314 = dma.done [#allocation19], 128
    $region185: #{_forward.1} parent=1 // pred_fallthru
      _
    // Predicated region
    $region186: #{_forward.1} parent=1 // pred_check
      _
    $region187: #{_forward.1} parent=1 // pred_check_branch
      %316 = sbr.rel (0) target = $region189
    $region188: #{_forward.1} parent=1 // pred_region
      %317 = dma.done [#allocation22], 8192
    $region189: #{_forward.1} parent=1 // pred_fallthru
      _
    // Predicated region
    $region190: #{_forward.1} parent=1 // pred_check
      _
    $region191: #{_forward.1} parent=1 // pred_check_branch
      %319 = sbr.rel (0) target = $region193
    $region192: #{_forward.1} parent=1 // pred_region
      %320 = dma.done [#allocation22], 16
    $region193: #{_forward.1} parent=1 // pred_fallthru
      _
    %v321 = vld [vmem:[%s1] sm:$0xf]
    %v322 = vld [vmem:[#allocation4] sm:$0xff]
    %v323 = vld [vmem:[#allocation4 + $0x8] sm:$0xff]
    %v324 = vld [vmem:[#allocation4 + $0x10] sm:$0xff]
    %v325 = vld [vmem:[#allocation4 + $0x18] sm:$0xff]
    %v326 = vld [vmem:[#allocation4 + $0x20] sm:$0xff]
    %v327 = vld [vmem:[#allocation4 + $0x28] sm:$0xff]
    %v328 = vld [vmem:[#allocation4 + $0x30] sm:$0xff]
    %v329 = vld [vmem:[#allocation4 + $0x38] sm:$0xff]
    %v330 = vld [vmem:[#allocation4 + $0x40] sm:$0xff]
    %v331 = vld [vmem:[#allocation4 + $0x48] sm:$0xff]
    %v332 = vld [vmem:[#allocation4 + $0x50] sm:$0xff]
    %v333 = vld [vmem:[#allocation4 + $0x58] sm:$0xff]
    %v334 = vld [vmem:[#allocation4 + $0x60] sm:$0xff]
    %v335 = vld [vmem:[#allocation4 + $0x68] sm:$0xff]
    %v336 = vld [vmem:[#allocation4 + $0x70] sm:$0xff]
    %v337 = vld [vmem:[#allocation4 + $0x78] sm:$0xff]
    %v338 = vld [vmem:[#allocation4 + $0x80] sm:$0xff]
    %v339 = vld [vmem:[#allocation4 + $0x88] sm:$0xff]
    %v340 = vld [vmem:[#allocation4 + $0x90] sm:$0xff]
    %v341 = vld [vmem:[#allocation4 + $0x98] sm:$0xff]
    %v342 = vld [vmem:[#allocation4 + $0xa0] sm:$0xff]
    %v343 = vld [vmem:[#allocation4 + $0xa8] sm:$0xff]
    %v344 = vld [vmem:[#allocation4 + $0xb0] sm:$0xff]
    %v345 = vld [vmem:[#allocation4 + $0xb8] sm:$0xff]
    %v346 = vld [vmem:[#allocation4 + $0xc0] sm:$0xff]
    %v347 = vld [vmem:[#allocation4 + $0xc8] sm:$0xff]
    %v348 = vld [vmem:[#allocation4 + $0xd0] sm:$0xff]
    %v349 = vld [vmem:[#allocation4 + $0xd8] sm:$0xff]
    %v350 = vld [vmem:[#allocation4 + $0xe0] sm:$0xff]
    %v351 = vld [vmem:[#allocation4 + $0xe8] sm:$0xff]
    %v352 = vld [vmem:[#allocation4 + $0xf0] sm:$0xff]
    %v353 = vld [vmem:[#allocation4 + $0xf8] sm:$0xff]
    %v354 = vld [vmem:[#allocation4 + $0x100] sm:$0xff]
    %v355 = vld [vmem:[#allocation4 + $0x108] sm:$0xff]
    %v356 = vld [vmem:[#allocation4 + $0x110] sm:$0xff]
    %v357 = vld [vmem:[#allocation4 + $0x118] sm:$0xff]
    %v358 = vld [vmem:[#allocation4 + $0x120] sm:$0xff]
    %v359 = vld [vmem:[#allocation4 + $0x128] sm:$0xff]
    %v360 = vld [vmem:[#allocation4 + $0x130] sm:$0xff]
    %v361 = vld [vmem:[#allocation4 + $0x138] sm:$0xff]
    %v362 = vld [vmem:[#allocation4 + $0x140] sm:$0xff]
    %v363 = vld [vmem:[#allocation4 + $0x148] sm:$0xff]
    %v364 = vld [vmem:[#allocation4 + $0x150] sm:$0xff]
    %v365 = vld [vmem:[#allocation4 + $0x158] sm:$0xff]
    %v366 = vld [vmem:[#allocation4 + $0x160] sm:$0xff]
    %v367 = vld [vmem:[#allocation4 + $0x168] sm:$0xff]
    %v368 = vld [vmem:[#allocation4 + $0x170] sm:$0xff]
    %v369 = vld [vmem:[#allocation4 + $0x178] sm:$0xff]
    %v370 = vld [vmem:[#allocation4 + $0x180] sm:$0xff]
    %v371 = vld [vmem:[#allocation4 + $0x188] sm:$0xff]
    %v372 = vld [vmem:[#allocation4 + $0x190] sm:$0xff]
    %v373 = vld [vmem:[#allocation4 + $0x198] sm:$0xff]
    %v374 = vld [vmem:[#allocation4 + $0x1a0] sm:$0xff]
    %v375 = vld [vmem:[#allocation4 + $0x1a8] sm:$0xff]
    %v376 = vld [vmem:[#allocation4 + $0x1b0] sm:$0xff]
    %v377 = vld [vmem:[#allocation4 + $0x1b8] sm:$0xff]
    %v378 = vld [vmem:[#allocation4 + $0x1c0] sm:$0xff]
    %v379 = vld [vmem:[#allocation4 + $0x1c8] sm:$0xff]
    %v380 = vld [vmem:[#allocation4 + $0x1d0] sm:$0xff]
    %v381 = vld [vmem:[#allocation4 + $0x1d8] sm:$0xff]
    %v382 = vld [vmem:[#allocation4 + $0x1e0] sm:$0xff]
    %v383 = vld [vmem:[#allocation4 + $0x1e8] sm:$0xff]
    %v384 = vld [vmem:[#allocation4 + $0x1f0] sm:$0xff]
    %v385 = vld [vmem:[#allocation4 + $0x1f8] sm:$0xff]
    %v387 = vlaneseq
    %v388 = vshrl.u32 %v387, 7
    %v389 = vsub.s32 0, %v388
    %v390 = vrot.slane %v321, %v389
    %v391 = vlaneseq
    %v392 = vshrl.u32 %v391, 7
    %v393 = vsub.s32 1, %v392
    %v394 = vrot.slane %v321, %v393
    %v395 = vlaneseq
    %v396 = vshrl.u32 %v395, 7
    %v397 = vsub.s32 2, %v396
    %v398 = vrot.slane %v321, %v397
    %v399 = vlaneseq
    %v400 = vshrl.u32 %v399, 7
    %v401 = vsub.s32 3, %v400
    %v402 = vrot.slane %v321, %v401
    %407 = vmatprep.subr.mxu0 0.0
    %408 = vmatpush1.msra.mxu0 %v322
    %409 = vmatprep.subr.mxu0 0.0
    %410 = vmatpush1.msra.mxu0 %v323
    %411 = vmatprep.subr.mxu0 0.0
    %412 = vmatpush1.msra.mxu0 %v324
    %413 = vmatprep.subr.mxu0 0.0
    %414 = vmatpush1.msra.mxu0 %v325
    %415 = vmatprep.subr.mxu0 0.0
    %416 = vmatpush1.msra.mxu0 %v326
    %417 = vmatprep.subr.mxu0 0.0
    %418 = vmatpush1.msra.mxu0 %v327
    %419 = vmatprep.subr.mxu0 0.0
    %420 = vmatpush1.msra.mxu0 %v328
    %421 = vmatprep.subr.mxu0 0.0
    %422 = vmatpush1.msra.mxu0 %v329
    %423 = vmatprep.subr.mxu0 0.0
    %424 = vmatpush1.msra.mxu0 %v330
    %425 = vmatprep.subr.mxu0 0.0
    %426 = vmatpush1.msra.mxu0 %v331
    %427 = vmatprep.subr.mxu0 0.0
    %428 = vmatpush1.msra.mxu0 %v332
    %429 = vmatprep.subr.mxu0 0.0
    %430 = vmatpush1.msra.mxu0 %v333
    %431 = vmatprep.subr.mxu0 0.0
    %432 = vmatpush1.msra.mxu0 %v334
    %433 = vmatprep.subr.mxu0 0.0
    %434 = vmatpush1.msra.mxu0 %v335
    %435 = vmatprep.subr.mxu0 0.0
    %436 = vmatpush1.msra.mxu0 %v336
    %437 = vmatprep.subr.mxu0 0.0
    %438 = vmatpush1.msra.mxu0 %v337
    %439 = vmatprep.subr.mxu0 0.0
    %440 = vmatpush1.msra.mxu0 %v338
    %441 = vmatprep.subr.mxu0 0.0
    %442 = vmatpush1.msra.mxu0 %v339
    %443 = vmatprep.subr.mxu0 0.0
    %444 = vmatpush1.msra.mxu0 %v340
    %445 = vmatprep.subr.mxu0 0.0
    %446 = vmatpush1.msra.mxu0 %v341
    %447 = vmatprep.subr.mxu0 0.0
    %448 = vmatpush1.msra.mxu0 %v342
    %449 = vmatprep.subr.mxu0 0.0
    %450 = vmatpush1.msra.mxu0 %v343
    %451 = vmatprep.subr.mxu0 0.0
    %452 = vmatpush1.msra.mxu0 %v344
    %453 = vmatprep.subr.mxu0 0.0
    %454 = vmatpush1.msra.mxu0 %v345
    %455 = vmatprep.subr.mxu0 0.0
    %456 = vmatpush1.msra.mxu0 %v346
    %457 = vmatprep.subr.mxu0 0.0
    %458 = vmatpush1.msra.mxu0 %v347
    %459 = vmatprep.subr.mxu0 0.0
    %460 = vmatpush1.msra.mxu0 %v348
    %461 = vmatprep.subr.mxu0 0.0
    %462 = vmatpush1.msra.mxu0 %v349
    %463 = vmatprep.subr.mxu0 0.0
    %464 = vmatpush1.msra.mxu0 %v350
    %465 = vmatprep.subr.mxu0 0.0
    %466 = vmatpush1.msra.mxu0 %v351
    %467 = vmatprep.subr.mxu0 0.0
    %468 = vmatpush1.msra.mxu0 %v352
    %469 = vmatprep.subr.mxu0 0.0
    %470 = vmatpush1.msra.mxu0 %v353
    %471 = vmatprep.mubr.f32.mxu0 %v394
    %472 = vmatmul.mubr.f32.gmra.mrb[0].mxu0 %v390
    %v473 = vpop.f32.mrb[0].mxu0
    %v474 = vadd.f32 0.0, %v473
    %v475 = vpop.f32.mrb[0].mxu0
    %476 = vdwg.mxu0
    %477 = vmatprep.subr.mxu0 0.0
    %478 = vmatpush1.msra.mxu0 %v354
    %479 = vmatprep.subr.mxu0 0.0
    %480 = vmatpush1.msra.mxu0 %v355
    %481 = vmatprep.subr.mxu0 0.0
    %482 = vmatpush1.msra.mxu0 %v356
    %483 = vmatprep.subr.mxu0 0.0
    %484 = vmatpush1.msra.mxu0 %v357
    %485 = vmatprep.subr.mxu0 0.0
    %486 = vmatpush1.msra.mxu0 %v358
    %487 = vmatprep.subr.mxu0 0.0
    %488 = vmatpush1.msra.mxu0 %v359
    %489 = vmatprep.subr.mxu0 0.0
    %490 = vmatpush1.msra.mxu0 %v360
    %491 = vmatprep.subr.mxu0 0.0
    %492 = vmatpush1.msra.mxu0 %v361
    %493 = vmatprep.subr.mxu0 0.0
    %494 = vmatpush1.msra.mxu0 %v362
    %495 = vmatprep.subr.mxu0 0.0
    %496 = vmatpush1.msra.mxu0 %v363
    %497 = vmatprep.subr.mxu0 0.0
    %498 = vmatpush1.msra.mxu0 %v364
    %499 = vmatprep.subr.mxu0 0.0
    %500 = vmatpush1.msra.mxu0 %v365
    %501 = vmatprep.subr.mxu0 0.0
    %502 = vmatpush1.msra.mxu0 %v366
    %503 = vmatprep.subr.mxu0 0.0
    %504 = vmatpush1.msra.mxu0 %v367
    %505 = vmatprep.subr.mxu0 0.0
    %506 = vmatpush1.msra.mxu0 %v368
    %507 = vmatprep.subr.mxu0 0.0
    %508 = vmatpush1.msra.mxu0 %v369
    %509 = vmatprep.subr.mxu0 0.0
    %510 = vmatpush1.msra.mxu0 %v370
    %511 = vmatprep.subr.mxu0 0.0
    %512 = vmatpush1.msra.mxu0 %v371
    %513 = vmatprep.subr.mxu0 0.0
    %514 = vmatpush1.msra.mxu0 %v372
    %515 = vmatprep.subr.mxu0 0.0
    %516 = vmatpush1.msra.mxu0 %v373
    %517 = vmatprep.subr.mxu0 0.0
    %518 = vmatpush1.msra.mxu0 %v374
    %519 = vmatprep.subr.mxu0 0.0
    %520 = vmatpush1.msra.mxu0 %v375
    %521 = vmatprep.subr.mxu0 0.0
    %522 = vmatpush1.msra.mxu0 %v376
    %523 = vmatprep.subr.mxu0 0.0
    %524 = vmatpush1.msra.mxu0 %v377
    %525 = vmatprep.subr.mxu0 0.0
    %526 = vmatpush1.msra.mxu0 %v378
    %527 = vmatprep.subr.mxu0 0.0
    %528 = vmatpush1.msra.mxu0 %v379
    %529 = vmatprep.subr.mxu0 0.0
    %530 = vmatpush1.msra.mxu0 %v380
    %531 = vmatprep.subr.mxu0 0.0
    %532 = vmatpush1.msra.mxu0 %v381
    %533 = vmatprep.subr.mxu0 0.0
    %534 = vmatpush1.msra.mxu0 %v382
    %535 = vmatprep.subr.mxu0 0.0
    %536 = vmatpush1.msra.mxu0 %v383
    %537 = vmatprep.subr.mxu0 0.0
    %538 = vmatpush1.msra.mxu0 %v384
    %539 = vmatprep.subr.mxu0 0.0
    %540 = vmatpush1.msra.mxu0 %v385
    %541 = vmatprep.mubr.f32.mxu0 %v402
    %542 = vmatmul.mubr.f32.gmra.mrb[0].mxu0 %v398
    %v543 = vpop.f32.mrb[0].mxu0
    %v544 = vadd.f32 %v474, %v543
    %v545 = vpop.f32.mrb[0].mxu0
    %546 = vdwg.mxu0
    %s547 = scalar_lea.vmem [#allocation4], 512
    %v548 = vld [vmem:[%s547] sm:$0xff]
    %v549 = vld [vmem:[%s547 + $0x8] sm:$0xff]
    %v550 = vld [vmem:[%s547 + $0x10] sm:$0xff]
    %v551 = vld [vmem:[%s547 + $0x18] sm:$0xff]
    %v552 = vld [vmem:[%s547 + $0x20] sm:$0xff]
    %v553 = vld [vmem:[%s547 + $0x28] sm:$0xff]
    %v554 = vld [vmem:[%s547 + $0x30] sm:$0xff]
    %v555 = vld [vmem:[%s547 + $0x38] sm:$0xff]
    %v556 = vld [vmem:[%s547 + $0x40] sm:$0xff]
    %v557 = vld [vmem:[%s547 + $0x48] sm:$0xff]
    %v558 = vld [vmem:[%s547 + $0x50] sm:$0xff]
    %v559 = vld [vmem:[%s547 + $0x58] sm:$0xff]
    %v560 = vld [vmem:[%s547 + $0x60] sm:$0xff]
    %v561 = vld [vmem:[%s547 + $0x68] sm:$0xff]
    %v562 = vld [vmem:[%s547 + $0x70] sm:$0xff]
    %v563 = vld [vmem:[%s547 + $0x78] sm:$0xff]
    %v564 = vld [vmem:[%s547 + $0x80] sm:$0xff]
    %v565 = vld [vmem:[%s547 + $0x88] sm:$0xff]
    %v566 = vld [vmem:[%s547 + $0x90] sm:$0xff]
    %v567 = vld [vmem:[%s547 + $0x98] sm:$0xff]
    %v568 = vld [vmem:[%s547 + $0xa0] sm:$0xff]
    %v569 = vld [vmem:[%s547 + $0xa8] sm:$0xff]
    %v570 = vld [vmem:[%s547 + $0xb0] sm:$0xff]
    %v571 = vld [vmem:[%s547 + $0xb8] sm:$0xff]
    %v572 = vld [vmem:[%s547 + $0xc0] sm:$0xff]
    %v573 = vld [vmem:[%s547 + $0xc8] sm:$0xff]
    %v574 = vld [vmem:[%s547 + $0xd0] sm:$0xff]
    %v575 = vld [vmem:[%s547 + $0xd8] sm:$0xff]
    %v576 = vld [vmem:[%s547 + $0xe0] sm:$0xff]
    %v577 = vld [vmem:[%s547 + $0xe8] sm:$0xff]
    %v578 = vld [vmem:[%s547 + $0xf0] sm:$0xff]
    %v579 = vld [vmem:[%s547 + $0xf8] sm:$0xff]
    %v580 = vld [vmem:[%s547 + $0x100] sm:$0xff]
    %v581 = vld [vmem:[%s547 + $0x108] sm:$0xff]
    %v582 = vld [vmem:[%s547 + $0x110] sm:$0xff]
    %v583 = vld [vmem:[%s547 + $0x118] sm:$0xff]
    %v584 = vld [vmem:[%s547 + $0x120] sm:$0xff]
    %v585 = vld [vmem:[%s547 + $0x128] sm:$0xff]
    %v586 = vld [vmem:[%s547 + $0x130] sm:$0xff]
    %v587 = vld [vmem:[%s547 + $0x138] sm:$0xff]
    %v588 = vld [vmem:[%s547 + $0x140] sm:$0xff]
    %v589 = vld [vmem:[%s547 + $0x148] sm:$0xff]
    %v590 = vld [vmem:[%s547 + $0x150] sm:$0xff]
    %v591 = vld [vmem:[%s547 + $0x158] sm:$0xff]
    %v592 = vld [vmem:[%s547 + $0x160] sm:$0xff]
    %v593 = vld [vmem:[%s547 + $0x168] sm:$0xff]
    %v594 = vld [vmem:[%s547 + $0x170] sm:$0xff]
    %v595 = vld [vmem:[%s547 + $0x178] sm:$0xff]
    %v596 = vld [vmem:[%s547 + $0x180] sm:$0xff]
    %v597 = vld [vmem:[%s547 + $0x188] sm:$0xff]
    %v598 = vld [vmem:[%s547 + $0x190] sm:$0xff]
    %v599 = vld [vmem:[%s547 + $0x198] sm:$0xff]
    %v600 = vld [vmem:[%s547 + $0x1a0] sm:$0xff]
    %v601 = vld [vmem:[%s547 + $0x1a8] sm:$0xff]
    %v602 = vld [vmem:[%s547 + $0x1b0] sm:$0xff]
    %v603 = vld [vmem:[%s547 + $0x1b8] sm:$0xff]
    %v604 = vld [vmem:[%s547 + $0x1c0] sm:$0xff]
    %v605 = vld [vmem:[%s547 + $0x1c8] sm:$0xff]
    %v606 = vld [vmem:[%s547 + $0x1d0] sm:$0xff]
    %v607 = vld [vmem:[%s547 + $0x1d8] sm:$0xff]
    %v608 = vld [vmem:[%s547 + $0x1e0] sm:$0xff]
    %v609 = vld [vmem:[%s547 + $0x1e8] sm:$0xff]
    %v610 = vld [vmem:[%s547 + $0x1f0] sm:$0xff]
    %v611 = vld [vmem:[%s547 + $0x1f8] sm:$0xff]
    %612 = vmatprep.subr.mxu0 0.0
    %613 = vmatpush1.msra.mxu0 %v548
    %614 = vmatprep.subr.mxu0 0.0
    %615 = vmatpush1.msra.mxu0 %v549
    %616 = vmatprep.subr.mxu0 0.0
    %617 = vmatpush1.msra.mxu0 %v550
    %618 = vmatprep.subr.mxu0 0.0
    %619 = vmatpush1.msra.mxu0 %v551
    %620 = vmatprep.subr.mxu0 0.0
    %621 = vmatpush1.msra.mxu0 %v552
    %622 = vmatprep.subr.mxu0 0.0
    %623 = vmatpush1.msra.mxu0 %v553
    %624 = vmatprep.subr.mxu0 0.0
    %625 = vmatpush1.msra.mxu0 %v554
    %626 = vmatprep.subr.mxu0 0.0
    %627 = vmatpush1.msra.mxu0 %v555
    %628 = vmatprep.subr.mxu0 0.0
    %629 = vmatpush1.msra.mxu0 %v556
    %630 = vmatprep.subr.mxu0 0.0
    %631 = vmatpush1.msra.mxu0 %v557
    %632 = vmatprep.subr.mxu0 0.0
    %633 = vmatpush1.msra.mxu0 %v558
    %634 = vmatprep.subr.mxu0 0.0
    %635 = vmatpush1.msra.mxu0 %v559
    %636 = vmatprep.subr.mxu0 0.0
    %637 = vmatpush1.msra.mxu0 %v560
    %638 = vmatprep.subr.mxu0 0.0
    %639 = vmatpush1.msra.mxu0 %v561
    %640 = vmatprep.subr.mxu0 0.0
    %641 = vmatpush1.msra.mxu0 %v562
    %642 = vmatprep.subr.mxu0 0.0
    %643 = vmatpush1.msra.mxu0 %v563
    %644 = vmatprep.subr.mxu0 0.0
    %645 = vmatpush1.msra.mxu0 %v564
    %646 = vmatprep.subr.mxu0 0.0
    %647 = vmatpush1.msra.mxu0 %v565
    %648 = vmatprep.subr.mxu0 0.0
    %649 = vmatpush1.msra.mxu0 %v566
    %650 = vmatprep.subr.mxu0 0.0
    %651 = vmatpush1.msra.mxu0 %v567
    %652 = vmatprep.subr.mxu0 0.0
    %653 = vmatpush1.msra.mxu0 %v568
    %654 = vmatprep.subr.mxu0 0.0
    %655 = vmatpush1.msra.mxu0 %v569
    %656 = vmatprep.subr.mxu0 0.0
    %657 = vmatpush1.msra.mxu0 %v570
    %658 = vmatprep.subr.mxu0 0.0
    %659 = vmatpush1.msra.mxu0 %v571
    %660 = vmatprep.subr.mxu0 0.0
    %661 = vmatpush1.msra.mxu0 %v572
    %662 = vmatprep.subr.mxu0 0.0
    %663 = vmatpush1.msra.mxu0 %v573
    %664 = vmatprep.subr.mxu0 0.0
    %665 = vmatpush1.msra.mxu0 %v574
    %666 = vmatprep.subr.mxu0 0.0
    %667 = vmatpush1.msra.mxu0 %v575
    %668 = vmatprep.subr.mxu0 0.0
    %669 = vmatpush1.msra.mxu0 %v576
    %670 = vmatprep.subr.mxu0 0.0
    %671 = vmatpush1.msra.mxu0 %v577
    %672 = vmatprep.subr.mxu0 0.0
    %673 = vmatpush1.msra.mxu0 %v578
    %674 = vmatprep.subr.mxu0 0.0
    %675 = vmatpush1.msra.mxu0 %v579
    %676 = vmatprep.mubr.f32.mxu0 %v394
    %677 = vmatmul.mubr.f32.gmra.mrb[0].mxu0 %v390
    %v678 = vpop.f32.mrb[0].mxu0
    %v679 = vadd.f32 0.0, %v678
    %v680 = vpop.f32.mrb[0].mxu0
    %681 = vdwg.mxu0
    %682 = vmatprep.subr.mxu0 0.0
    %683 = vmatpush1.msra.mxu0 %v580
    %684 = vmatprep.subr.mxu0 0.0
    %685 = vmatpush1.msra.mxu0 %v581
    %686 = vmatprep.subr.mxu0 0.0
    %687 = vmatpush1.msra.mxu0 %v582
    %688 = vmatprep.subr.mxu0 0.0
    %689 = vmatpush1.msra.mxu0 %v583
    %690 = vmatprep.subr.mxu0 0.0
    %691 = vmatpush1.msra.mxu0 %v584
    %692 = vmatprep.subr.mxu0 0.0
    %693 = vmatpush1.msra.mxu0 %v585
    %694 = vmatprep.subr.mxu0 0.0
    %695 = vmatpush1.msra.mxu0 %v586
    %696 = vmatprep.subr.mxu0 0.0
    %697 = vmatpush1.msra.mxu0 %v587
    %698 = vmatprep.subr.mxu0 0.0
    %699 = vmatpush1.msra.mxu0 %v588
    %700 = vmatprep.subr.mxu0 0.0
    %701 = vmatpush1.msra.mxu0 %v589
    %702 = vmatprep.subr.mxu0 0.0
    %703 = vmatpush1.msra.mxu0 %v590
    %704 = vmatprep.subr.mxu0 0.0
    %705 = vmatpush1.msra.mxu0 %v591
    %706 = vmatprep.subr.mxu0 0.0
    %707 = vmatpush1.msra.mxu0 %v592
    %708 = vmatprep.subr.mxu0 0.0
    %709 = vmatpush1.msra.mxu0 %v593
    %710 = vmatprep.subr.mxu0 0.0
    %711 = vmatpush1.msra.mxu0 %v594
    %712 = vmatprep.subr.mxu0 0.0
    %713 = vmatpush1.msra.mxu0 %v595
    %714 = vmatprep.subr.mxu0 0.0
    %715 = vmatpush1.msra.mxu0 %v596
    %716 = vmatprep.subr.mxu0 0.0
    %717 = vmatpush1.msra.mxu0 %v597
    %718 = vmatprep.subr.mxu0 0.0
    %719 = vmatpush1.msra.mxu0 %v598
    %720 = vmatprep.subr.mxu0 0.0
    %721 = vmatpush1.msra.mxu0 %v599
    %722 = vmatprep.subr.mxu0 0.0
    %723 = vmatpush1.msra.mxu0 %v600
    %724 = vmatprep.subr.mxu0 0.0
    %725 = vmatpush1.msra.mxu0 %v601
    %726 = vmatprep.subr.mxu0 0.0
    %727 = vmatpush1.msra.mxu0 %v602
    %728 = vmatprep.subr.mxu0 0.0
    %729 = vmatpush1.msra.mxu0 %v603
    %730 = vmatprep.subr.mxu0 0.0
    %731 = vmatpush1.msra.mxu0 %v604
    %732 = vmatprep.subr.mxu0 0.0
    %733 = vmatpush1.msra.mxu0 %v605
    %734 = vmatprep.subr.mxu0 0.0
    %735 = vmatpush1.msra.mxu0 %v606
    %736 = vmatprep.subr.mxu0 0.0
    %737 = vmatpush1.msra.mxu0 %v607
    %738 = vmatprep.subr.mxu0 0.0
    %739 = vmatpush1.msra.mxu0 %v608
    %740 = vmatprep.subr.mxu0 0.0
    %741 = vmatpush1.msra.mxu0 %v609
    %742 = vmatprep.subr.mxu0 0.0
    %743 = vmatpush1.msra.mxu0 %v610
    %744 = vmatprep.subr.mxu0 0.0
    %745 = vmatpush1.msra.mxu0 %v611
    %746 = vmatprep.mubr.f32.mxu0 %v402
    %747 = vmatmul.mubr.f32.gmra.mrb[0].mxu0 %v398
    %v748 = vpop.f32.mrb[0].mxu0
    %v749 = vadd.f32 %v679, %v748
    %v750 = vpop.f32.mrb[0].mxu0
    %751 = vdwg.mxu0
    %s752 = scalar_lea.vmem [#allocation4], 1024
    %v753 = vld [vmem:[%s752] sm:$0xff]
    %v754 = vld [vmem:[%s752 + $0x8] sm:$0xff]
    %v755 = vld [vmem:[%s752 + $0x10] sm:$0xff]
    %v756 = vld [vmem:[%s752 + $0x18] sm:$0xff]
    %v757 = vld [vmem:[%s752 + $0x20] sm:$0xff]
    %v758 = vld [vmem:[%s752 + $0x28] sm:$0xff]
    %v759 = vld [vmem:[%s752 + $0x30] sm:$0xff]
    %v760 = vld [vmem:[%s752 + $0x38] sm:$0xff]
    %v761 = vld [vmem:[%s752 + $0x40] sm:$0xff]
    %v762 = vld [vmem:[%s752 + $0x48] sm:$0xff]
    %v763 = vld [vmem:[%s752 + $0x50] sm:$0xff]
    %v764 = vld [vmem:[%s752 + $0x58] sm:$0xff]
    %v765 = vld [vmem:[%s752 + $0x60] sm:$0xff]
    %v766 = vld [vmem:[%s752 + $0x68] sm:$0xff]
    %v767 = vld [vmem:[%s752 + $0x70] sm:$0xff]
    %v768 = vld [vmem:[%s752 + $0x78] sm:$0xff]
    %v769 = vld [vmem:[%s752 + $0x80] sm:$0xff]
    %v770 = vld [vmem:[%s752 + $0x88] sm:$0xff]
    %v771 = vld [vmem:[%s752 + $0x90] sm:$0xff]
    %v772 = vld [vmem:[%s752 + $0x98] sm:$0xff]
    %v773 = vld [vmem:[%s752 + $0xa0] sm:$0xff]
    %v774 = vld [vmem:[%s752 + $0xa8] sm:$0xff]
    %v775 = vld [vmem:[%s752 + $0xb0] sm:$0xff]
    %v776 = vld [vmem:[%s752 + $0xb8] sm:$0xff]
    %v777 = vld [vmem:[%s752 + $0xc0] sm:$0xff]
    %v778 = vld [vmem:[%s752 + $0xc8] sm:$0xff]
    %v779 = vld [vmem:[%s752 + $0xd0] sm:$0xff]
    %v780 = vld [vmem:[%s752 + $0xd8] sm:$0xff]
    %v781 = vld [vmem:[%s752 + $0xe0] sm:$0xff]
    %v782 = vld [vmem:[%s752 + $0xe8] sm:$0xff]
    %v783 = vld [vmem:[%s752 + $0xf0] sm:$0xff]
    %v784 = vld [vmem:[%s752 + $0xf8] sm:$0xff]
    %v785 = vld [vmem:[%s752 + $0x100] sm:$0xff]
    %v786 = vld [vmem:[%s752 + $0x108] sm:$0xff]
    %v787 = vld [vmem:[%s752 + $0x110] sm:$0xff]
    %v788 = vld [vmem:[%s752 + $0x118] sm:$0xff]
    %v789 = vld [vmem:[%s752 + $0x120] sm:$0xff]
    %v790 = vld [vmem:[%s752 + $0x128] sm:$0xff]
    %v791 = vld [vmem:[%s752 + $0x130] sm:$0xff]
    %v792 = vld [vmem:[%s752 + $0x138] sm:$0xff]
    %v793 = vld [vmem:[%s752 + $0x140] sm:$0xff]
    %v794 = vld [vmem:[%s752 + $0x148] sm:$0xff]
    %v795 = vld [vmem:[%s752 + $0x150] sm:$0xff]
    %v796 = vld [vmem:[%s752 + $0x158] sm:$0xff]
    %v797 = vld [vmem:[%s752 + $0x160] sm:$0xff]
    %v798 = vld [vmem:[%s752 + $0x168] sm:$0xff]
    %v799 = vld [vmem:[%s752 + $0x170] sm:$0xff]
    %v800 = vld [vmem:[%s752 + $0x178] sm:$0xff]
    %v801 = vld [vmem:[%s752 + $0x180] sm:$0xff]
    %v802 = vld [vmem:[%s752 + $0x188] sm:$0xff]
    %v803 = vld [vmem:[%s752 + $0x190] sm:$0xff]
    %v804 = vld [vmem:[%s752 + $0x198] sm:$0xff]
    %v805 = vld [vmem:[%s752 + $0x1a0] sm:$0xff]
    %v806 = vld [vmem:[%s752 + $0x1a8] sm:$0xff]
    %v807 = vld [vmem:[%s752 + $0x1b0] sm:$0xff]
    %v808 = vld [vmem:[%s752 + $0x1b8] sm:$0xff]
    %v809 = vld [vmem:[%s752 + $0x1c0] sm:$0xff]
    %v810 = vld [vmem:[%s752 + $0x1c8] sm:$0xff]
    %v811 = vld [vmem:[%s752 + $0x1d0] sm:$0xff]
    %v812 = vld [vmem:[%s752 + $0x1d8] sm:$0xff]
    %v813 = vld [vmem:[%s752 + $0x1e0] sm:$0xff]
    %v814 = vld [vmem:[%s752 + $0x1e8] sm:$0xff]
    %v815 = vld [vmem:[%s752 + $0x1f0] sm:$0xff]
    %v816 = vld [vmem:[%s752 + $0x1f8] sm:$0xff]
    %817 = vmatprep.subr.mxu0 0.0
    %818 = vmatpush1.msra.mxu0 %v753
    %819 = vmatprep.subr.mxu0 0.0
    %820 = vmatpush1.msra.mxu0 %v754
    %821 = vmatprep.subr.mxu0 0.0
    %822 = vmatpush1.msra.mxu0 %v755
    %823 = vmatprep.subr.mxu0 0.0
    %824 = vmatpush1.msra.mxu0 %v756
    %825 = vmatprep.subr.mxu0 0.0
    %826 = vmatpush1.msra.mxu0 %v757
    %827 = vmatprep.subr.mxu0 0.0
    %828 = vmatpush1.msra.mxu0 %v758
    %829 = vmatprep.subr.mxu0 0.0
    %830 = vmatpush1.msra.mxu0 %v759
    %831 = vmatprep.subr.mxu0 0.0
    %832 = vmatpush1.msra.mxu0 %v760
    %833 = vmatprep.subr.mxu0 0.0
    %834 = vmatpush1.msra.mxu0 %v761
    %835 = vmatprep.subr.mxu0 0.0
    %836 = vmatpush1.msra.mxu0 %v762
    %837 = vmatprep.subr.mxu0 0.0
    %838 = vmatpush1.msra.mxu0 %v763
    %839 = vmatprep.subr.mxu0 0.0
    %840 = vmatpush1.msra.mxu0 %v764
    %841 = vmatprep.subr.mxu0 0.0
    %842 = vmatpush1.msra.mxu0 %v765
    %843 = vmatprep.subr.mxu0 0.0
    %844 = vmatpush1.msra.mxu0 %v766
    %845 = vmatprep.subr.mxu0 0.0
    %846 = vmatpush1.msra.mxu0 %v767
    %847 = vmatprep.subr.mxu0 0.0
    %848 = vmatpush1.msra.mxu0 %v768
    %849 = vmatprep.subr.mxu0 0.0
    %850 = vmatpush1.msra.mxu0 %v769
    %851 = vmatprep.subr.mxu0 0.0
    %852 = vmatpush1.msra.mxu0 %v770
    %853 = vmatprep.subr.mxu0 0.0
    %854 = vmatpush1.msra.mxu0 %v771
    %855 = vmatprep.subr.mxu0 0.0
    %856 = vmatpush1.msra.mxu0 %v772
    %857 = vmatprep.subr.mxu0 0.0
    %858 = vmatpush1.msra.mxu0 %v773
    %859 = vmatprep.subr.mxu0 0.0
    %860 = vmatpush1.msra.mxu0 %v774
    %861 = vmatprep.subr.mxu0 0.0
    %862 = vmatpush1.msra.mxu0 %v775
    %863 = vmatprep.subr.mxu0 0.0
    %864 = vmatpush1.msra.mxu0 %v776
    %865 = vmatprep.subr.mxu0 0.0
    %866 = vmatpush1.msra.mxu0 %v777
    %867 = vmatprep.subr.mxu0 0.0
    %868 = vmatpush1.msra.mxu0 %v778
    %869 = vmatprep.subr.mxu0 0.0
    %870 = vmatpush1.msra.mxu0 %v779
    %871 = vmatprep.subr.mxu0 0.0
    %872 = vmatpush1.msra.mxu0 %v780
    %873 = vmatprep.subr.mxu0 0.0
    %874 = vmatpush1.msra.mxu0 %v781
    %875 = vmatprep.subr.mxu0 0.0
    %876 = vmatpush1.msra.mxu0 %v782
    %877 = vmatprep.subr.mxu0 0.0
    %878 = vmatpush1.msra.mxu0 %v783
    %879 = vmatprep.subr.mxu0 0.0
    %880 = vmatpush1.msra.mxu0 %v784
    %881 = vmatprep.mubr.f32.mxu0 %v394
    %882 = vmatmul.mubr.f32.gmra.mrb[0].mxu0 %v390
    %v883 = vpop.f32.mrb[0].mxu0
    %v884 = vadd.f32 0.0, %v883
    %v885 = vpop.f32.mrb[0].mxu0
    %886 = vdwg.mxu0
    %887 = vmatprep.subr.mxu0 0.0
    %888 = vmatpush1.msra.mxu0 %v785
    %889 = vmatprep.subr.mxu0 0.0
    %890 = vmatpush1.msra.mxu0 %v786
    %891 = vmatprep.subr.mxu0 0.0
    %892 = vmatpush1.msra.mxu0 %v787
    %893 = vmatprep.subr.mxu0 0.0
    %894 = vmatpush1.msra.mxu0 %v788
    %895 = vmatprep.subr.mxu0 0.0
    %896 = vmatpush1.msra.mxu0 %v789
    %897 = vmatprep.subr.mxu0 0.0
    %898 = vmatpush1.msra.mxu0 %v790
    %899 = vmatprep.subr.mxu0 0.0
    %900 = vmatpush1.msra.mxu0 %v791
    %901 = vmatprep.subr.mxu0 0.0
    %902 = vmatpush1.msra.mxu0 %v792
    %903 = vmatprep.subr.mxu0 0.0
    %904 = vmatpush1.msra.mxu0 %v793
    %905 = vmatprep.subr.mxu0 0.0
    %906 = vmatpush1.msra.mxu0 %v794
    %907 = vmatprep.subr.mxu0 0.0
    %908 = vmatpush1.msra.mxu0 %v795
    %909 = vmatprep.subr.mxu0 0.0
    %910 = vmatpush1.msra.mxu0 %v796
    %911 = vmatprep.subr.mxu0 0.0
    %912 = vmatpush1.msra.mxu0 %v797
    %913 = vmatprep.subr.mxu0 0.0
    %914 = vmatpush1.msra.mxu0 %v798
    %915 = vmatprep.subr.mxu0 0.0
    %916 = vmatpush1.msra.mxu0 %v799
    %917 = vmatprep.subr.mxu0 0.0
    %918 = vmatpush1.msra.mxu0 %v800
    %919 = vmatprep.subr.mxu0 0.0
    %920 = vmatpush1.msra.mxu0 %v801
    %921 = vmatprep.subr.mxu0 0.0
    %922 = vmatpush1.msra.mxu0 %v802
    %923 = vmatprep.subr.mxu0 0.0
    %924 = vmatpush1.msra.mxu0 %v803
    %925 = vmatprep.subr.mxu0 0.0
    %926 = vmatpush1.msra.mxu0 %v804
    %927 = vmatprep.subr.mxu0 0.0
    %928 = vmatpush1.msra.mxu0 %v805
    %929 = vmatprep.subr.mxu0 0.0
    %930 = vmatpush1.msra.mxu0 %v806
    %931 = vmatprep.subr.mxu0 0.0
    %932 = vmatpush1.msra.mxu0 %v807
    %933 = vmatprep.subr.mxu0 0.0
    %934 = vmatpush1.msra.mxu0 %v808
    %935 = vmatprep.subr.mxu0 0.0
    %936 = vmatpush1.msra.mxu0 %v809
    %937 = vmatprep.subr.mxu0 0.0
    %938 = vmatpush1.msra.mxu0 %v810
    %939 = vmatprep.subr.mxu0 0.0
    %940 = vmatpush1.msra.mxu0 %v811
    %941 = vmatprep.subr.mxu0 0.0
    %942 = vmatpush1.msra.mxu0 %v812
    %943 = vmatprep.subr.mxu0 0.0
    %944 = vmatpush1.msra.mxu0 %v813
    %945 = vmatprep.subr.mxu0 0.0
    %946 = vmatpush1.msra.mxu0 %v814
    %947 = vmatprep.subr.mxu0 0.0
    %948 = vmatpush1.msra.mxu0 %v815
    %949 = vmatprep.subr.mxu0 0.0
    %950 = vmatpush1.msra.mxu0 %v816
    %951 = vmatprep.mubr.f32.mxu0 %v402
    %952 = vmatmul.mubr.f32.gmra.mrb[0].mxu0 %v398
    %v953 = vpop.f32.mrb[0].mxu0
    %v954 = vadd.f32 %v884, %v953
    %v955 = vpop.f32.mrb[0].mxu0
    %956 = vdwg.mxu0
    %s957 = scalar_lea.vmem [#allocation4], 1536
    %v958 = vld [vmem:[%s957] sm:$0xff]
    %v959 = vld [vmem:[%s957 + $0x8] sm:$0xff]
    %v960 = vld [vmem:[%s957 + $0x10] sm:$0xff]
    %v961 = vld [vmem:[%s957 + $0x18] sm:$0xff]
    %v962 = vld [vmem:[%s957 + $0x20] sm:$0xff]
    %v963 = vld [vmem:[%s957 + $0x28] sm:$0xff]
    %v964 = vld [vmem:[%s957 + $0x30] sm:$0xff]
    %v965 = vld [vmem:[%s957 + $0x38] sm:$0xff]
    %v966 = vld [vmem:[%s957 + $0x40] sm:$0xff]
    %v967 = vld [vmem:[%s957 + $0x48] sm:$0xff]
    %v968 = vld [vmem:[%s957 + $0x50] sm:$0xff]
    %v969 = vld [vmem:[%s957 + $0x58] sm:$0xff]
    %v970 = vld [vmem:[%s957 + $0x60] sm:$0xff]
    %v971 = vld [vmem:[%s957 + $0x68] sm:$0xff]
    %v972 = vld [vmem:[%s957 + $0x70] sm:$0xff]
    %v973 = vld [vmem:[%s957 + $0x78] sm:$0xff]
    %v974 = vld [vmem:[%s957 + $0x80] sm:$0xff]
    %v975 = vld [vmem:[%s957 + $0x88] sm:$0xff]
    %v976 = vld [vmem:[%s957 + $0x90] sm:$0xff]
    %v977 = vld [vmem:[%s957 + $0x98] sm:$0xff]
    %v978 = vld [vmem:[%s957 + $0xa0] sm:$0xff]
    %v979 = vld [vmem:[%s957 + $0xa8] sm:$0xff]
    %v980 = vld [vmem:[%s957 + $0xb0] sm:$0xff]
    %v981 = vld [vmem:[%s957 + $0xb8] sm:$0xff]
    %v982 = vld [vmem:[%s957 + $0xc0] sm:$0xff]
    %v983 = vld [vmem:[%s957 + $0xc8] sm:$0xff]
    %v984 = vld [vmem:[%s957 + $0xd0] sm:$0xff]
    %v985 = vld [vmem:[%s957 + $0xd8] sm:$0xff]
    %v986 = vld [vmem:[%s957 + $0xe0] sm:$0xff]
    %v987 = vld [vmem:[%s957 + $0xe8] sm:$0xff]
    %v988 = vld [vmem:[%s957 + $0xf0] sm:$0xff]
    %v989 = vld [vmem:[%s957 + $0xf8] sm:$0xff]
    %v990 = vld [vmem:[%s957 + $0x100] sm:$0xff]
    %v991 = vld [vmem:[%s957 + $0x108] sm:$0xff]
    %v992 = vld [vmem:[%s957 + $0x110] sm:$0xff]
    %v993 = vld [vmem:[%s957 + $0x118] sm:$0xff]
    %v994 = vld [vmem:[%s957 + $0x120] sm:$0xff]
    %v995 = vld [vmem:[%s957 + $0x128] sm:$0xff]
    %v996 = vld [vmem:[%s957 + $0x130] sm:$0xff]
    %v997 = vld [vmem:[%s957 + $0x138] sm:$0xff]
    %v998 = vld [vmem:[%s957 + $0x140] sm:$0xff]
    %v999 = vld [vmem:[%s957 + $0x148] sm:$0xff]
    %v1000 = vld [vmem:[%s957 + $0x150] sm:$0xff]
    %v1001 = vld [vmem:[%s957 + $0x158] sm:$0xff]
    %v1002 = vld [vmem:[%s957 + $0x160] sm:$0xff]
    %v1003 = vld [vmem:[%s957 + $0x168] sm:$0xff]
    %v1004 = vld [vmem:[%s957 + $0x170] sm:$0xff]
    %v1005 = vld [vmem:[%s957 + $0x178] sm:$0xff]
    %v1006 = vld [vmem:[%s957 + $0x180] sm:$0xff]
    %v1007 = vld [vmem:[%s957 + $0x188] sm:$0xff]
    %v1008 = vld [vmem:[%s957 + $0x190] sm:$0xff]
    %v1009 = vld [vmem:[%s957 + $0x198] sm:$0xff]
    %v1010 = vld [vmem:[%s957 + $0x1a0] sm:$0xff]
    %v1011 = vld [vmem:[%s957 + $0x1a8] sm:$0xff]
    %v1012 = vld [vmem:[%s957 + $0x1b0] sm:$0xff]
    %v1013 = vld [vmem:[%s957 + $0x1b8] sm:$0xff]
    %v1014 = vld [vmem:[%s957 + $0x1c0] sm:$0xff]
    %v1015 = vld [vmem:[%s957 + $0x1c8] sm:$0xff]
    %v1016 = vld [vmem:[%s957 + $0x1d0] sm:$0xff]
    %v1017 = vld [vmem:[%s957 + $0x1d8] sm:$0xff]
    %v1018 = vld [vmem:[%s957 + $0x1e0] sm:$0xff]
    %v1019 = vld [vmem:[%s957 + $0x1e8] sm:$0xff]
    %v1020 = vld [vmem:[%s957 + $0x1f0] sm:$0xff]
    %v1021 = vld [vmem:[%s957 + $0x1f8] sm:$0xff]
    %1022 = vmatprep.subr.mxu0 0.0
    %1023 = vmatpush1.msra.mxu0 %v958
    %1024 = vmatprep.subr.mxu0 0.0
    %1025 = vmatpush1.msra.mxu0 %v959
    %1026 = vmatprep.subr.mxu0 0.0
    %1027 = vmatpush1.msra.mxu0 %v960
    %1028 = vmatprep.subr.mxu0 0.0
    %1029 = vmatpush1.msra.mxu0 %v961
    %1030 = vmatprep.subr.mxu0 0.0
    %1031 = vmatpush1.msra.mxu0 %v962
    %1032 = vmatprep.subr.mxu0 0.0
    %1033 = vmatpush1.msra.mxu0 %v963
    %1034 = vmatprep.subr.mxu0 0.0
    %1035 = vmatpush1.msra.mxu0 %v964
    %1036 = vmatprep.subr.mxu0 0.0
    %1037 = vmatpush1.msra.mxu0 %v965
    %1038 = vmatprep.subr.mxu0 0.0
    %1039 = vmatpush1.msra.mxu0 %v966
    %1040 = vmatprep.subr.mxu0 0.0
    %1041 = vmatpush1.msra.mxu0 %v967
    %1042 = vmatprep.subr.mxu0 0.0
    %1043 = vmatpush1.msra.mxu0 %v968
    %1044 = vmatprep.subr.mxu0 0.0
    %1045 = vmatpush1.msra.mxu0 %v969
    %1046 = vmatprep.subr.mxu0 0.0
    %1047 = vmatpush1.msra.mxu0 %v970
    %1048 = vmatprep.subr.mxu0 0.0
    %1049 = vmatpush1.msra.mxu0 %v971
    %1050 = vmatprep.subr.mxu0 0.0
    %1051 = vmatpush1.msra.mxu0 %v972
    %1052 = vmatprep.subr.mxu0 0.0
    %1053 = vmatpush1.msra.mxu0 %v973
    %1054 = vmatprep.subr.mxu0 0.0
    %1055 = vmatpush1.msra.mxu0 %v974
    %1056 = vmatprep.subr.mxu0 0.0
    %1057 = vmatpush1.msra.mxu0 %v975
    %1058 = vmatprep.subr.mxu0 0.0
    %1059 = vmatpush1.msra.mxu0 %v976
    %1060 = vmatprep.subr.mxu0 0.0
    %1061 = vmatpush1.msra.mxu0 %v977
    %1062 = vmatprep.subr.mxu0 0.0
    %1063 = vmatpush1.msra.mxu0 %v978
    %1064 = vmatprep.subr.mxu0 0.0
    %1065 = vmatpush1.msra.mxu0 %v979
    %1066 = vmatprep.subr.mxu0 0.0
    %1067 = vmatpush1.msra.mxu0 %v980
    %1068 = vmatprep.subr.mxu0 0.0
    %1069 = vmatpush1.msra.mxu0 %v981
    %1070 = vmatprep.subr.mxu0 0.0
    %1071 = vmatpush1.msra.mxu0 %v982
    %1072 = vmatprep.subr.mxu0 0.0
    %1073 = vmatpush1.msra.mxu0 %v983
    %1074 = vmatprep.subr.mxu0 0.0
    %1075 = vmatpush1.msra.mxu0 %v984
    %1076 = vmatprep.subr.mxu0 0.0
    %1077 = vmatpush1.msra.mxu0 %v985
    %1078 = vmatprep.subr.mxu0 0.0
    %1079 = vmatpush1.msra.mxu0 %v986
    %1080 = vmatprep.subr.mxu0 0.0
    %1081 = vmatpush1.msra.mxu0 %v987
    %1082 = vmatprep.subr.mxu0 0.0
    %1083 = vmatpush1.msra.mxu0 %v988
    %1084 = vmatprep.subr.mxu0 0.0
    %1085 = vmatpush1.msra.mxu0 %v989
    %1086 = vmatprep.mubr.f32.mxu0 %v394
    %1087 = vmatmul.mubr.f32.gmra.mrb[0].mxu0 %v390
    %v1088 = vpop.f32.mrb[0].mxu0
    %v1089 = vadd.f32 0.0, %v1088
    %v1090 = vpop.f32.mrb[0].mxu0
    %1091 = vdwg.mxu0
    %1092 = vmatprep.subr.mxu0 0.0
    %1093 = vmatpush1.msra.mxu0 %v990
    %1094 = vmatprep.subr.mxu0 0.0
    %1095 = vmatpush1.msra.mxu0 %v991
    %1096 = vmatprep.subr.mxu0 0.0
    %1097 = vmatpush1.msra.mxu0 %v992
    %1098 = vmatprep.subr.mxu0 0.0
    %1099 = vmatpush1.msra.mxu0 %v993
    %1100 = vmatprep.subr.mxu0 0.0
    %1101 = vmatpush1.msra.mxu0 %v994
    %1102 = vmatprep.subr.mxu0 0.0
    %1103 = vmatpush1.msra.mxu0 %v995
    %1104 = vmatprep.subr.mxu0 0.0
    %1105 = vmatpush1.msra.mxu0 %v996
    %1106 = vmatprep.subr.mxu0 0.0
    %1107 = vmatpush1.msra.mxu0 %v997
    %1108 = vmatprep.subr.mxu0 0.0
    %1109 = vmatpush1.msra.mxu0 %v998
    %1110 = vmatprep.subr.mxu0 0.0
    %1111 = vmatpush1.msra.mxu0 %v999
    %1112 = vmatprep.subr.mxu0 0.0
    %1113 = vmatpush1.msra.mxu0 %v1000
    %1114 = vmatprep.subr.mxu0 0.0
    %1115 = vmatpush1.msra.mxu0 %v1001
    %1116 = vmatprep.subr.mxu0 0.0
    %1117 = vmatpush1.msra.mxu0 %v1002
    %1118 = vmatprep.subr.mxu0 0.0
    %1119 = vmatpush1.msra.mxu0 %v1003
    %1120 = vmatprep.subr.mxu0 0.0
    %1121 = vmatpush1.msra.mxu0 %v1004
    %1122 = vmatprep.subr.mxu0 0.0
    %1123 = vmatpush1.msra.mxu0 %v1005
    %1124 = vmatprep.subr.mxu0 0.0
    %1125 = vmatpush1.msra.mxu0 %v1006
    %1126 = vmatprep.subr.mxu0 0.0
    %1127 = vmatpush1.msra.mxu0 %v1007
    %1128 = vmatprep.subr.mxu0 0.0
    %1129 = vmatpush1.msra.mxu0 %v1008
    %1130 = vmatprep.subr.mxu0 0.0
    %1131 = vmatpush1.msra.mxu0 %v1009
    %1132 = vmatprep.subr.mxu0 0.0
    %1133 = vmatpush1.msra.mxu0 %v1010
    %1134 = vmatprep.subr.mxu0 0.0
    %1135 = vmatpush1.msra.mxu0 %v1011
    %1136 = vmatprep.subr.mxu0 0.0
    %1137 = vmatpush1.msra.mxu0 %v1012
    %1138 = vmatprep.subr.mxu0 0.0
    %1139 = vmatpush1.msra.mxu0 %v1013
    %1140 = vmatprep.subr.mxu0 0.0
    %1141 = vmatpush1.msra.mxu0 %v1014
    %1142 = vmatprep.subr.mxu0 0.0
    %1143 = vmatpush1.msra.mxu0 %v1015
    %1144 = vmatprep.subr.mxu0 0.0
    %1145 = vmatpush1.msra.mxu0 %v1016
    %1146 = vmatprep.subr.mxu0 0.0
    %1147 = vmatpush1.msra.mxu0 %v1017
    %1148 = vmatprep.subr.mxu0 0.0
    %1149 = vmatpush1.msra.mxu0 %v1018
    %1150 = vmatprep.subr.mxu0 0.0
    %1151 = vmatpush1.msra.mxu0 %v1019
    %1152 = vmatprep.subr.mxu0 0.0
    %1153 = vmatpush1.msra.mxu0 %v1020
    %1154 = vmatprep.subr.mxu0 0.0
    %1155 = vmatpush1.msra.mxu0 %v1021
    %1156 = vmatprep.mubr.f32.mxu0 %v402
    %1157 = vmatmul.mubr.f32.gmra.mrb[0].mxu0 %v398
    %v1158 = vpop.f32.mrb[0].mxu0
    %v1159 = vadd.f32 %v1089, %v1158
    %v1160 = vpop.f32.mrb[0].mxu0
    %1161 = vdwg.mxu0
    %s1162 = scalar_lea.vmem [#allocation4], 2048
    %v1163 = vld [vmem:[%s1162] sm:$0xff]
    %v1164 = vld [vmem:[%s1162 + $0x8] sm:$0xff]
    %v1165 = vld [vmem:[%s1162 + $0x10] sm:$0xff]
    %v1166 = vld [vmem:[%s1162 + $0x18] sm:$0xff]
    %v1167 = vld [vmem:[%s1162 + $0x20] sm:$0xff]
    %v1168 = vld [vmem:[%s1162 + $0x28] sm:$0xff]
    %v1169 = vld [vmem:[%s1162 + $0x30] sm:$0xff]
    %v1170 = vld [vmem:[%s1162 + $0x38] sm:$0xff]
    %v1171 = vld [vmem:[%s1162 + $0x40] sm:$0xff]
    %v1172 = vld [vmem:[%s1162 + $0x48] sm:$0xff]
    %v1173 = vld [vmem:[%s1162 + $0x50] sm:$0xff]
    %v1174 = vld [vmem:[%s1162 + $0x58] sm:$0xff]
    %v1175 = vld [vmem:[%s1162 + $0x60] sm:$0xff]
    %v1176 = vld [vmem:[%s1162 + $0x68] sm:$0xff]
    %v1177 = vld [vmem:[%s1162 + $0x70] sm:$0xff]
    %v1178 = vld [vmem:[%s1162 + $0x78] sm:$0xff]
    %v1179 = vld [vmem:[%s1162 + $0x80] sm:$0xff]
    %v1180 = vld [vmem:[%s1162 + $0x88] sm:$0xff]
    %v1181 = vld [vmem:[%s1162 + $0x90] sm:$0xff]
    %v1182 = vld [vmem:[%s1162 + $0x98] sm:$0xff]
    %v1183 = vld [vmem:[%s1162 + $0xa0] sm:$0xff]
    %v1184 = vld [vmem:[%s1162 + $0xa8] sm:$0xff]
    %v1185 = vld [vmem:[%s1162 + $0xb0] sm:$0xff]
    %v1186 = vld [vmem:[%s1162 + $0xb8] sm:$0xff]
    %v1187 = vld [vmem:[%s1162 + $0xc0] sm:$0xff]
    %v1188 = vld [vmem:[%s1162 + $0xc8] sm:$0xff]
    %v1189 = vld [vmem:[%s1162 + $0xd0] sm:$0xff]
    %v1190 = vld [vmem:[%s1162 + $0xd8] sm:$0xff]
    %v1191 = vld [vmem:[%s1162 + $0xe0] sm:$0xff]
    %v1192 = vld [vmem:[%s1162 + $0xe8] sm:$0xff]
    %v1193 = vld [vmem:[%s1162 + $0xf0] sm:$0xff]
    %v1194 = vld [vmem:[%s1162 + $0xf8] sm:$0xff]
    %v1195 = vld [vmem:[%s1162 + $0x100] sm:$0xff]
    %v1196 = vld [vmem:[%s1162 + $0x108] sm:$0xff]
    %v1197 = vld [vmem:[%s1162 + $0x110] sm:$0xff]
    %v1198 = vld [vmem:[%s1162 + $0x118] sm:$0xff]
    %v1199 = vld [vmem:[%s1162 + $0x120] sm:$0xff]
    %v1200 = vld [vmem:[%s1162 + $0x128] sm:$0xff]
    %v1201 = vld [vmem:[%s1162 + $0x130] sm:$0xff]
    %v1202 = vld [vmem:[%s1162 + $0x138] sm:$0xff]
    %v1203 = vld [vmem:[%s1162 + $0x140] sm:$0xff]
    %v1204 = vld [vmem:[%s1162 + $0x148] sm:$0xff]
    %v1205 = vld [vmem:[%s1162 + $0x150] sm:$0xff]
    %v1206 = vld [vmem:[%s1162 + $0x158] sm:$0xff]
    %v1207 = vld [vmem:[%s1162 + $0x160] sm:$0xff]
    %v1208 = vld [vmem:[%s1162 + $0x168] sm:$0xff]
    %v1209 = vld [vmem:[%s1162 + $0x170] sm:$0xff]
    %v1210 = vld [vmem:[%s1162 + $0x178] sm:$0xff]
    %v1211 = vld [vmem:[%s1162 + $0x180] sm:$0xff]
    %v1212 = vld [vmem:[%s1162 + $0x188] sm:$0xff]
    %v1213 = vld [vmem:[%s1162 + $0x190] sm:$0xff]
    %v1214 = vld [vmem:[%s1162 + $0x198] sm:$0xff]
    %v1215 = vld [vmem:[%s1162 + $0x1a0] sm:$0xff]
    %v1216 = vld [vmem:[%s1162 + $0x1a8] sm:$0xff]
    %v1217 = vld [vmem:[%s1162 + $0x1b0] sm:$0xff]
    %v1218 = vld [vmem:[%s1162 + $0x1b8] sm:$0xff]
    %v1219 = vld [vmem:[%s1162 + $0x1c0] sm:$0xff]
    %v1220 = vld [vmem:[%s1162 + $0x1c8] sm:$0xff]
    %v1221 = vld [vmem:[%s1162 + $0x1d0] sm:$0xff]
    %v1222 = vld [vmem:[%s1162 + $0x1d8] sm:$0xff]
    %v1223 = vld [vmem:[%s1162 + $0x1e0] sm:$0xff]
    %v1224 = vld [vmem:[%s1162 + $0x1e8] sm:$0xff]
    %v1225 = vld [vmem:[%s1162 + $0x1f0] sm:$0xff]
    %v1226 = vld [vmem:[%s1162 + $0x1f8] sm:$0xff]
    %1227 = vmatprep.subr.mxu0 0.0
    %1228 = vmatpush1.msra.mxu0 %v1163
    %1229 = vmatprep.subr.mxu0 0.0
    %1230 = vmatpush1.msra.mxu0 %v1164
    %1231 = vmatprep.subr.mxu0 0.0
    %1232 = vmatpush1.msra.mxu0 %v1165
    %1233 = vmatprep.subr.mxu0 0.0
    %1234 = vmatpush1.msra.mxu0 %v1166
    %1235 = vmatprep.subr.mxu0 0.0
    %1236 = vmatpush1.msra.mxu0 %v1167
    %1237 = vmatprep.subr.mxu0 0.0
    %1238 = vmatpush1.msra.mxu0 %v1168
    %1239 = vmatprep.subr.mxu0 0.0
    %1240 = vmatpush1.msra.mxu0 %v1169
    %1241 = vmatprep.subr.mxu0 0.0
    %1242 = vmatpush1.msra.mxu0 %v1170
    %1243 = vmatprep.subr.mxu0 0.0
    %1244 = vmatpush1.msra.mxu0 %v1171
    %1245 = vmatprep.subr.mxu0 0.0
    %1246 = vmatpush1.msra.mxu0 %v1172
    %1247 = vmatprep.subr.mxu0 0.0
    %1248 = vmatpush1.msra.mxu0 %v1173
    %1249 = vmatprep.subr.mxu0 0.0
    %1250 = vmatpush1.msra.mxu0 %v1174
    %1251 = vmatprep.subr.mxu0 0.0
    %1252 = vmatpush1.msra.mxu0 %v1175
    %1253 = vmatprep.subr.mxu0 0.0
    %1254 = vmatpush1.msra.mxu0 %v1176
    %1255 = vmatprep.subr.mxu0 0.0
    %1256 = vmatpush1.msra.mxu0 %v1177
    %1257 = vmatprep.subr.mxu0 0.0
    %1258 = vmatpush1.msra.mxu0 %v1178
    %1259 = vmatprep.subr.mxu0 0.0
    %1260 = vmatpush1.msra.mxu0 %v1179
    %1261 = vmatprep.subr.mxu0 0.0
    %1262 = vmatpush1.msra.mxu0 %v1180
    %1263 = vmatprep.subr.mxu0 0.0
    %1264 = vmatpush1.msra.mxu0 %v1181
    %1265 = vmatprep.subr.mxu0 0.0
    %1266 = vmatpush1.msra.mxu0 %v1182
    %1267 = vmatprep.subr.mxu0 0.0
    %1268 = vmatpush1.msra.mxu0 %v1183
    %1269 = vmatprep.subr.mxu0 0.0
    %1270 = vmatpush1.msra.mxu0 %v1184
    %1271 = vmatprep.subr.mxu0 0.0
    %1272 = vmatpush1.msra.mxu0 %v1185
    %1273 = vmatprep.subr.mxu0 0.0
    %1274 = vmatpush1.msra.mxu0 %v1186
    %1275 = vmatprep.subr.mxu0 0.0
    %1276 = vmatpush1.msra.mxu0 %v1187
    %1277 = vmatprep.subr.mxu0 0.0
    %1278 = vmatpush1.msra.mxu0 %v1188
    %1279 = vmatprep.subr.mxu0 0.0
    %1280 = vmatpush1.msra.mxu0 %v1189
    %1281 = vmatprep.subr.mxu0 0.0
    %1282 = vmatpush1.msra.mxu0 %v1190
    %1283 = vmatprep.subr.mxu0 0.0
    %1284 = vmatpush1.msra.mxu0 %v1191
    %1285 = vmatprep.subr.mxu0 0.0
    %1286 = vmatpush1.msra.mxu0 %v1192
    %1287 = vmatprep.subr.mxu0 0.0
    %1288 = vmatpush1.msra.mxu0 %v1193
    %1289 = vmatprep.subr.mxu0 0.0
    %1290 = vmatpush1.msra.mxu0 %v1194
    %1291 = vmatprep.mubr.f32.mxu0 %v394
    %1292 = vmatmul.mubr.f32.gmra.mrb[0].mxu0 %v390
    %v1293 = vpop.f32.mrb[0].mxu0
    %v1294 = vadd.f32 0.0, %v1293
    %v1295 = vpop.f32.mrb[0].mxu0
    %1296 = vdwg.mxu0
    %1297 = vmatprep.subr.mxu0 0.0
    %1298 = vmatpush1.msra.mxu0 %v1195
    %1299 = vmatprep.subr.mxu0 0.0
    %1300 = vmatpush1.msra.mxu0 %v1196
    %1301 = vmatprep.subr.mxu0 0.0
    %1302 = vmatpush1.msra.mxu0 %v1197
    %1303 = vmatprep.subr.mxu0 0.0
    %1304 = vmatpush1.msra.mxu0 %v1198
    %1305 = vmatprep.subr.mxu0 0.0
    %1306 = vmatpush1.msra.mxu0 %v1199
    %1307 = vmatprep.subr.mxu0 0.0
    %1308 = vmatpush1.msra.mxu0 %v1200
    %1309 = vmatprep.subr.mxu0 0.0
    %1310 = vmatpush1.msra.mxu0 %v1201
    %1311 = vmatprep.subr.mxu0 0.0
    %1312 = vmatpush1.msra.mxu0 %v1202
    %1313 = vmatprep.subr.mxu0 0.0
    %1314 = vmatpush1.msra.mxu0 %v1203
    %1315 = vmatprep.subr.mxu0 0.0
    %1316 = vmatpush1.msra.mxu0 %v1204
    %1317 = vmatprep.subr.mxu0 0.0
    %1318 = vmatpush1.msra.mxu0 %v1205
    %1319 = vmatprep.subr.mxu0 0.0
    %1320 = vmatpush1.msra.mxu0 %v1206
    %1321 = vmatprep.subr.mxu0 0.0
    %1322 = vmatpush1.msra.mxu0 %v1207
    %1323 = vmatprep.subr.mxu0 0.0
    %1324 = vmatpush1.msra.mxu0 %v1208
    %1325 = vmatprep.subr.mxu0 0.0
    %1326 = vmatpush1.msra.mxu0 %v1209
    %1327 = vmatprep.subr.mxu0 0.0
    %1328 = vmatpush1.msra.mxu0 %v1210
    %1329 = vmatprep.subr.mxu0 0.0
    %1330 = vmatpush1.msra.mxu0 %v1211
    %1331 = vmatprep.subr.mxu0 0.0
    %1332 = vmatpush1.msra.mxu0 %v1212
    %1333 = vmatprep.subr.mxu0 0.0
    %1334 = vmatpush1.msra.mxu0 %v1213
    %1335 = vmatprep.subr.mxu0 0.0
    %1336 = vmatpush1.msra.mxu0 %v1214
    %1337 = vmatprep.subr.mxu0 0.0
    %1338 = vmatpush1.msra.mxu0 %v1215
    %1339 = vmatprep.subr.mxu0 0.0
    %1340 = vmatpush1.msra.mxu0 %v1216
    %1341 = vmatprep.subr.mxu0 0.0
    %1342 = vmatpush1.msra.mxu0 %v1217
    %1343 = vmatprep.subr.mxu0 0.0
    %1344 = vmatpush1.msra.mxu0 %v1218
    %1345 = vmatprep.subr.mxu0 0.0
    %1346 = vmatpush1.msra.mxu0 %v1219
    %1347 = vmatprep.subr.mxu0 0.0
    %1348 = vmatpush1.msra.mxu0 %v1220
    %1349 = vmatprep.subr.mxu0 0.0
    %1350 = vmatpush1.msra.mxu0 %v1221
    %1351 = vmatprep.subr.mxu0 0.0
    %1352 = vmatpush1.msra.mxu0 %v1222
    %1353 = vmatprep.subr.mxu0 0.0
    %1354 = vmatpush1.msra.mxu0 %v1223
    %1355 = vmatprep.subr.mxu0 0.0
    %1356 = vmatpush1.msra.mxu0 %v1224
    %1357 = vmatprep.subr.mxu0 0.0
    %1358 = vmatpush1.msra.mxu0 %v1225
    %1359 = vmatprep.subr.mxu0 0.0
    %1360 = vmatpush1.msra.mxu0 %v1226
    %1361 = vmatprep.mubr.f32.mxu0 %v402
    %1362 = vmatmul.mubr.f32.gmra.mrb[0].mxu0 %v398
    %v1363 = vpop.f32.mrb[0].mxu0
    %v1364 = vadd.f32 %v1294, %v1363
    %v1365 = vpop.f32.mrb[0].mxu0
    %1366 = vdwg.mxu0
    %s1367 = scalar_lea.vmem [#allocation4], 2560
    %v1368 = vld [vmem:[%s1367] sm:$0xff]
    %v1369 = vld [vmem:[%s1367 + $0x8] sm:$0xff]
    %v1370 = vld [vmem:[%s1367 + $0x10] sm:$0xff]
    %v1371 = vld [vmem:[%s1367 + $0x18] sm:$0xff]
    %v1372 = vld [vmem:[%s1367 + $0x20] sm:$0xff]
    %v1373 = vld [vmem:[%s1367 + $0x28] sm:$0xff]
    %v1374 = vld [vmem:[%s1367 + $0x30] sm:$0xff]
    %v1375 = vld [vmem:[%s1367 + $0x38] sm:$0xff]
    %v1376 = vld [vmem:[%s1367 + $0x40] sm:$0xff]
    %v1377 = vld [vmem:[%s1367 + $0x48] sm:$0xff]
    %v1378 = vld [vmem:[%s1367 + $0x50] sm:$0xff]
    %v1379 = vld [vmem:[%s1367 + $0x58] sm:$0xff]
    %v1380 = vld [vmem:[%s1367 + $0x60] sm:$0xff]
    %v1381 = vld [vmem:[%s1367 + $0x68] sm:$0xff]
    %v1382 = vld [vmem:[%s1367 + $0x70] sm:$0xff]
    %v1383 = vld [vmem:[%s1367 + $0x78] sm:$0xff]
    %v1384 = vld [vmem:[%s1367 + $0x80] sm:$0xff]
    %v1385 = vld [vmem:[%s1367 + $0x88] sm:$0xff]
    %v1386 = vld [vmem:[%s1367 + $0x90] sm:$0xff]
    %v1387 = vld [vmem:[%s1367 + $0x98] sm:$0xff]
    %v1388 = vld [vmem:[%s1367 + $0xa0] sm:$0xff]
    %v1389 = vld [vmem:[%s1367 + $0xa8] sm:$0xff]
    %v1390 = vld [vmem:[%s1367 + $0xb0] sm:$0xff]
    %v1391 = vld [vmem:[%s1367 + $0xb8] sm:$0xff]
    %v1392 = vld [vmem:[%s1367 + $0xc0] sm:$0xff]
    %v1393 = vld [vmem:[%s1367 + $0xc8] sm:$0xff]
    %v1394 = vld [vmem:[%s1367 + $0xd0] sm:$0xff]
    %v1395 = vld [vmem:[%s1367 + $0xd8] sm:$0xff]
    %v1396 = vld [vmem:[%s1367 + $0xe0] sm:$0xff]
    %v1397 = vld [vmem:[%s1367 + $0xe8] sm:$0xff]
    %v1398 = vld [vmem:[%s1367 + $0xf0] sm:$0xff]
    %v1399 = vld [vmem:[%s1367 + $0xf8] sm:$0xff]
    %v1400 = vld [vmem:[%s1367 + $0x100] sm:$0xff]
    %v1401 = vld [vmem:[%s1367 + $0x108] sm:$0xff]
    %v1402 = vld [vmem:[%s1367 + $0x110] sm:$0xff]
    %v1403 = vld [vmem:[%s1367 + $0x118] sm:$0xff]
    %v1404 = vld [vmem:[%s1367 + $0x120] sm:$0xff]
    %v1405 = vld [vmem:[%s1367 + $0x128] sm:$0xff]
    %v1406 = vld [vmem:[%s1367 + $0x130] sm:$0xff]
    %v1407 = vld [vmem:[%s1367 + $0x138] sm:$0xff]
    %v1408 = vld [vmem:[%s1367 + $0x140] sm:$0xff]
    %v1409 = vld [vmem:[%s1367 + $0x148] sm:$0xff]
    %v1410 = vld [vmem:[%s1367 + $0x150] sm:$0xff]
    %v1411 = vld [vmem:[%s1367 + $0x158] sm:$0xff]
    %v1412 = vld [vmem:[%s1367 + $0x160] sm:$0xff]
    %v1413 = vld [vmem:[%s1367 + $0x168] sm:$0xff]
    %v1414 = vld [vmem:[%s1367 + $0x170] sm:$0xff]
    %v1415 = vld [vmem:[%s1367 + $0x178] sm:$0xff]
    %v1416 = vld [vmem:[%s1367 + $0x180] sm:$0xff]
    %v1417 = vld [vmem:[%s1367 + $0x188] sm:$0xff]
    %v1418 = vld [vmem:[%s1367 + $0x190] sm:$0xff]
    %v1419 = vld [vmem:[%s1367 + $0x198] sm:$0xff]
    %v1420 = vld [vmem:[%s1367 + $0x1a0] sm:$0xff]
    %v1421 = vld [vmem:[%s1367 + $0x1a8] sm:$0xff]
    %v1422 = vld [vmem:[%s1367 + $0x1b0] sm:$0xff]
    %v1423 = vld [vmem:[%s1367 + $0x1b8] sm:$0xff]
    %v1424 = vld [vmem:[%s1367 + $0x1c0] sm:$0xff]
    %v1425 = vld [vmem:[%s1367 + $0x1c8] sm:$0xff]
    %v1426 = vld [vmem:[%s1367 + $0x1d0] sm:$0xff]
    %v1427 = vld [vmem:[%s1367 + $0x1d8] sm:$0xff]
    %v1428 = vld [vmem:[%s1367 + $0x1e0] sm:$0xff]
    %v1429 = vld [vmem:[%s1367 + $0x1e8] sm:$0xff]
    %v1430 = vld [vmem:[%s1367 + $0x1f0] sm:$0xff]
    %v1431 = vld [vmem:[%s1367 + $0x1f8] sm:$0xff]
    %1432 = vmatprep.subr.mxu0 0.0
    %1433 = vmatpush1.msra.mxu0 %v1368
    %1434 = vmatprep.subr.mxu0 0.0
    %1435 = vmatpush1.msra.mxu0 %v1369
    %1436 = vmatprep.subr.mxu0 0.0
    %1437 = vmatpush1.msra.mxu0 %v1370
    %1438 = vmatprep.subr.mxu0 0.0
    %1439 = vmatpush1.msra.mxu0 %v1371
    %1440 = vmatprep.subr.mxu0 0.0
    %1441 = vmatpush1.msra.mxu0 %v1372
    %1442 = vmatprep.subr.mxu0 0.0
    %1443 = vmatpush1.msra.mxu0 %v1373
    %1444 = vmatprep.subr.mxu0 0.0
    %1445 = vmatpush1.msra.mxu0 %v1374
    %1446 = vmatprep.subr.mxu0 0.0
    %1447 = vmatpush1.msra.mxu0 %v1375
    %1448 = vmatprep.subr.mxu0 0.0
    %1449 = vmatpush1.msra.mxu0 %v1376
    %1450 = vmatprep.subr.mxu0 0.0
    %1451 = vmatpush1.msra.mxu0 %v1377
    %1452 = vmatprep.subr.mxu0 0.0
    %1453 = vmatpush1.msra.mxu0 %v1378
    %1454 = vmatprep.subr.mxu0 0.0
    %1455 = vmatpush1.msra.mxu0 %v1379
    %1456 = vmatprep.subr.mxu0 0.0
    %1457 = vmatpush1.msra.mxu0 %v1380
    %1458 = vmatprep.subr.mxu0 0.0
    %1459 = vmatpush1.msra.mxu0 %v1381
    %1460 = vmatprep.subr.mxu0 0.0
    %1461 = vmatpush1.msra.mxu0 %v1382
    %1462 = vmatprep.subr.mxu0 0.0
    %1463 = vmatpush1.msra.mxu0 %v1383
    %1464 = vmatprep.subr.mxu0 0.0
    %1465 = vmatpush1.msra.mxu0 %v1384
    %1466 = vmatprep.subr.mxu0 0.0
    %1467 = vmatpush1.msra.mxu0 %v1385
    %1468 = vmatprep.subr.mxu0 0.0
    %1469 = vmatpush1.msra.mxu0 %v1386
    %1470 = vmatprep.subr.mxu0 0.0
    %1471 = vmatpush1.msra.mxu0 %v1387
    %1472 = vmatprep.subr.mxu0 0.0
    %1473 = vmatpush1.msra.mxu0 %v1388
    %1474 = vmatprep.subr.mxu0 0.0
    %1475 = vmatpush1.msra.mxu0 %v1389
    %1476 = vmatprep.subr.mxu0 0.0
    %1477 = vmatpush1.msra.mxu0 %v1390
    %1478 = vmatprep.subr.mxu0 0.0
    %1479 = vmatpush1.msra.mxu0 %v1391
    %1480 = vmatprep.subr.mxu0 0.0
    %1481 = vmatpush1.msra.mxu0 %v1392
    %1482 = vmatprep.subr.mxu0 0.0
    %1483 = vmatpush1.msra.mxu0 %v1393
    %1484 = vmatprep.subr.mxu0 0.0
    %1485 = vmatpush1.msra.mxu0 %v1394
    %1486 = vmatprep.subr.mxu0 0.0
    %1487 = vmatpush1.msra.mxu0 %v1395
    %1488 = vmatprep.subr.mxu0 0.0
    %1489 = vmatpush1.msra.mxu0 %v1396
    %1490 = vmatprep.subr.mxu0 0.0
    %1491 = vmatpush1.msra.mxu0 %v1397
    %1492 = vmatprep.subr.mxu0 0.0
    %1493 = vmatpush1.msra.mxu0 %v1398
    %1494 = vmatprep.subr.mxu0 0.0
    %1495 = vmatpush1.msra.mxu0 %v1399
    %1496 = vmatprep.mubr.f32.mxu0 %v394
    %1497 = vmatmul.mubr.f32.gmra.mrb[0].mxu0 %v390
    %v1498 = vpop.f32.mrb[0].mxu0
    %v1499 = vadd.f32 0.0, %v1498
    %v1500 = vpop.f32.mrb[0].mxu0
    %1501 = vdwg.mxu0
    %1502 = vmatprep.subr.mxu0 0.0
    %1503 = vmatpush1.msra.mxu0 %v1400
    %1504 = vmatprep.subr.mxu0 0.0
    %1505 = vmatpush1.msra.mxu0 %v1401
    %1506 = vmatprep.subr.mxu0 0.0
    %1507 = vmatpush1.msra.mxu0 %v1402
    %1508 = vmatprep.subr.mxu0 0.0
    %1509 = vmatpush1.msra.mxu0 %v1403
    %1510 = vmatprep.subr.mxu0 0.0
    %1511 = vmatpush1.msra.mxu0 %v1404
    %1512 = vmatprep.subr.mxu0 0.0
    %1513 = vmatpush1.msra.mxu0 %v1405
    %1514 = vmatprep.subr.mxu0 0.0
    %1515 = vmatpush1.msra.mxu0 %v1406
    %1516 = vmatprep.subr.mxu0 0.0
    %1517 = vmatpush1.msra.mxu0 %v1407
    %1518 = vmatprep.subr.mxu0 0.0
    %1519 = vmatpush1.msra.mxu0 %v1408
    %1520 = vmatprep.subr.mxu0 0.0
    %1521 = vmatpush1.msra.mxu0 %v1409
    %1522 = vmatprep.subr.mxu0 0.0
    %1523 = vmatpush1.msra.mxu0 %v1410
    %1524 = vmatprep.subr.mxu0 0.0
    %1525 = vmatpush1.msra.mxu0 %v1411
    %1526 = vmatprep.subr.mxu0 0.0
    %1527 = vmatpush1.msra.mxu0 %v1412
    %1528 = vmatprep.subr.mxu0 0.0
    %1529 = vmatpush1.msra.mxu0 %v1413
    %1530 = vmatprep.subr.mxu0 0.0
    %1531 = vmatpush1.msra.mxu0 %v1414
    %1532 = vmatprep.subr.mxu0 0.0
    %1533 = vmatpush1.msra.mxu0 %v1415
    %1534 = vmatprep.subr.mxu0 0.0
    %1535 = vmatpush1.msra.mxu0 %v1416
    %1536 = vmatprep.subr.mxu0 0.0
    %1537 = vmatpush1.msra.mxu0 %v1417
    %1538 = vmatprep.subr.mxu0 0.0
    %1539 = vmatpush1.msra.mxu0 %v1418
    %1540 = vmatprep.subr.mxu0 0.0
    %1541 = vmatpush1.msra.mxu0 %v1419
    %1542 = vmatprep.subr.mxu0 0.0
    %1543 = vmatpush1.msra.mxu0 %v1420
    %1544 = vmatprep.subr.mxu0 0.0
    %1545 = vmatpush1.msra.mxu0 %v1421
    %1546 = vmatprep.subr.mxu0 0.0
    %1547 = vmatpush1.msra.mxu0 %v1422
    %1548 = vmatprep.subr.mxu0 0.0
    %1549 = vmatpush1.msra.mxu0 %v1423
    %1550 = vmatprep.subr.mxu0 0.0
    %1551 = vmatpush1.msra.mxu0 %v1424
    %1552 = vmatprep.subr.mxu0 0.0
    %1553 = vmatpush1.msra.mxu0 %v1425
    %1554 = vmatprep.subr.mxu0 0.0
    %1555 = vmatpush1.msra.mxu0 %v1426
    %1556 = vmatprep.subr.mxu0 0.0
    %1557 = vmatpush1.msra.mxu0 %v1427
    %1558 = vmatprep.subr.mxu0 0.0
    %1559 = vmatpush1.msra.mxu0 %v1428
    %1560 = vmatprep.subr.mxu0 0.0
    %1561 = vmatpush1.msra.mxu0 %v1429
    %1562 = vmatprep.subr.mxu0 0.0
    %1563 = vmatpush1.msra.mxu0 %v1430
    %1564 = vmatprep.subr.mxu0 0.0
    %1565 = vmatpush1.msra.mxu0 %v1431
    %1566 = vmatprep.mubr.f32.mxu0 %v402
    %1567 = vmatmul.mubr.f32.gmra.mrb[0].mxu0 %v398
    %v1568 = vpop.f32.mrb[0].mxu0
    %v1569 = vadd.f32 %v1499, %v1568
    %v1570 = vpop.f32.mrb[0].mxu0
    %1571 = vdwg.mxu0
    %s1572 = scalar_lea.vmem [#allocation4], 3072
    %v1573 = vld [vmem:[%s1572] sm:$0xff]
    %v1574 = vld [vmem:[%s1572 + $0x8] sm:$0xff]
    %v1575 = vld [vmem:[%s1572 + $0x10] sm:$0xff]
    %v1576 = vld [vmem:[%s1572 + $0x18] sm:$0xff]
    %v1577 = vld [vmem:[%s1572 + $0x20] sm:$0xff]
    %v1578 = vld [vmem:[%s1572 + $0x28] sm:$0xff]
    %v1579 = vld [vmem:[%s1572 + $0x30] sm:$0xff]
    %v1580 = vld [vmem:[%s1572 + $0x38] sm:$0xff]
    %v1581 = vld [vmem:[%s1572 + $0x40] sm:$0xff]
    %v1582 = vld [vmem:[%s1572 + $0x48] sm:$0xff]
    %v1583 = vld [vmem:[%s1572 + $0x50] sm:$0xff]
    %v1584 = vld [vmem:[%s1572 + $0x58] sm:$0xff]
    %v1585 = vld [vmem:[%s1572 + $0x60] sm:$0xff]
    %v1586 = vld [vmem:[%s1572 + $0x68] sm:$0xff]
    %v1587 = vld [vmem:[%s1572 + $0x70] sm:$0xff]
    %v1588 = vld [vmem:[%s1572 + $0x78] sm:$0xff]
    %v1589 = vld [vmem:[%s1572 + $0x80] sm:$0xff]
    %v1590 = vld [vmem:[%s1572 + $0x88] sm:$0xff]
    %v1591 = vld [vmem:[%s1572 + $0x90] sm:$0xff]
    %v1592 = vld [vmem:[%s1572 + $0x98] sm:$0xff]
    %v1593 = vld [vmem:[%s1572 + $0xa0] sm:$0xff]
    %v1594 = vld [vmem:[%s1572 + $0xa8] sm:$0xff]
    %v1595 = vld [vmem:[%s1572 + $0xb0] sm:$0xff]
    %v1596 = vld [vmem:[%s1572 + $0xb8] sm:$0xff]
    %v1597 = vld [vmem:[%s1572 + $0xc0] sm:$0xff]
    %v1598 = vld [vmem:[%s1572 + $0xc8] sm:$0xff]
    %v1599 = vld [vmem:[%s1572 + $0xd0] sm:$0xff]
    %v1600 = vld [vmem:[%s1572 + $0xd8] sm:$0xff]
    %v1601 = vld [vmem:[%s1572 + $0xe0] sm:$0xff]
    %v1602 = vld [vmem:[%s1572 + $0xe8] sm:$0xff]
    %v1603 = vld [vmem:[%s1572 + $0xf0] sm:$0xff]
    %v1604 = vld [vmem:[%s1572 + $0xf8] sm:$0xff]
    %v1605 = vld [vmem:[%s1572 + $0x100] sm:$0xff]
    %v1606 = vld [vmem:[%s1572 + $0x108] sm:$0xff]
    %v1607 = vld [vmem:[%s1572 + $0x110] sm:$0xff]
    %v1608 = vld [vmem:[%s1572 + $0x118] sm:$0xff]
    %v1609 = vld [vmem:[%s1572 + $0x120] sm:$0xff]
    %v1610 = vld [vmem:[%s1572 + $0x128] sm:$0xff]
    %v1611 = vld [vmem:[%s1572 + $0x130] sm:$0xff]
    %v1612 = vld [vmem:[%s1572 + $0x138] sm:$0xff]
    %v1613 = vld [vmem:[%s1572 + $0x140] sm:$0xff]
    %v1614 = vld [vmem:[%s1572 + $0x148] sm:$0xff]
    %v1615 = vld [vmem:[%s1572 + $0x150] sm:$0xff]
    %v1616 = vld [vmem:[%s1572 + $0x158] sm:$0xff]
    %v1617 = vld [vmem:[%s1572 + $0x160] sm:$0xff]
    %v1618 = vld [vmem:[%s1572 + $0x168] sm:$0xff]
    %v1619 = vld [vmem:[%s1572 + $0x170] sm:$0xff]
    %v1620 = vld [vmem:[%s1572 + $0x178] sm:$0xff]
    %v1621 = vld [vmem:[%s1572 + $0x180] sm:$0xff]
    %v1622 = vld [vmem:[%s1572 + $0x188] sm:$0xff]
    %v1623 = vld [vmem:[%s1572 + $0x190] sm:$0xff]
    %v1624 = vld [vmem:[%s1572 + $0x198] sm:$0xff]
    %v1625 = vld [vmem:[%s1572 + $0x1a0] sm:$0xff]
    %v1626 = vld [vmem:[%s1572 + $0x1a8] sm:$0xff]
    %v1627 = vld [vmem:[%s1572 + $0x1b0] sm:$0xff]
    %v1628 = vld [vmem:[%s1572 + $0x1b8] sm:$0xff]
    %v1629 = vld [vmem:[%s1572 + $0x1c0] sm:$0xff]
    %v1630 = vld [vmem:[%s1572 + $0x1c8] sm:$0xff]
    %v1631 = vld [vmem:[%s1572 + $0x1d0] sm:$0xff]
    %v1632 = vld [vmem:[%s1572 + $0x1d8] sm:$0xff]
    %v1633 = vld [vmem:[%s1572 + $0x1e0] sm:$0xff]
    %v1634 = vld [vmem:[%s1572 + $0x1e8] sm:$0xff]
    %v1635 = vld [vmem:[%s1572 + $0x1f0] sm:$0xff]
    %v1636 = vld [vmem:[%s1572 + $0x1f8] sm:$0xff]
    %1637 = vmatprep.subr.mxu0 0.0
    %1638 = vmatpush1.msra.mxu0 %v1573
    %1639 = vmatprep.subr.mxu0 0.0
    %1640 = vmatpush1.msra.mxu0 %v1574
    %1641 = vmatprep.subr.mxu0 0.0
    %1642 = vmatpush1.msra.mxu0 %v1575
    %1643 = vmatprep.subr.mxu0 0.0
    %1644 = vmatpush1.msra.mxu0 %v1576
    %1645 = vmatprep.subr.mxu0 0.0
    %1646 = vmatpush1.msra.mxu0 %v1577
    %1647 = vmatprep.subr.mxu0 0.0
    %1648 = vmatpush1.msra.mxu0 %v1578
    %1649 = vmatprep.subr.mxu0 0.0
    %1650 = vmatpush1.msra.mxu0 %v1579
    %1651 = vmatprep.subr.mxu0 0.0
    %1652 = vmatpush1.msra.mxu0 %v1580
    %1653 = vmatprep.subr.mxu0 0.0
    %1654 = vmatpush1.msra.mxu0 %v1581
    %1655 = vmatprep.subr.mxu0 0.0
    %1656 = vmatpush1.msra.mxu0 %v1582
    %1657 = vmatprep.subr.mxu0 0.0
    %1658 = vmatpush1.msra.mxu0 %v1583
    %1659 = vmatprep.subr.mxu0 0.0
    %1660 = vmatpush1.msra.mxu0 %v1584
    %1661 = vmatprep.subr.mxu0 0.0
    %1662 = vmatpush1.msra.mxu0 %v1585
    %1663 = vmatprep.subr.mxu0 0.0
    %1664 = vmatpush1.msra.mxu0 %v1586
    %1665 = vmatprep.subr.mxu0 0.0
    %1666 = vmatpush1.msra.mxu0 %v1587
    %1667 = vmatprep.subr.mxu0 0.0
    %1668 = vmatpush1.msra.mxu0 %v1588
    %1669 = vmatprep.subr.mxu0 0.0
    %1670 = vmatpush1.msra.mxu0 %v1589
    %1671 = vmatprep.subr.mxu0 0.0
    %1672 = vmatpush1.msra.mxu0 %v1590
    %1673 = vmatprep.subr.mxu0 0.0
    %1674 = vmatpush1.msra.mxu0 %v1591
    %1675 = vmatprep.subr.mxu0 0.0
    %1676 = vmatpush1.msra.mxu0 %v1592
    %1677 = vmatprep.subr.mxu0 0.0
    %1678 = vmatpush1.msra.mxu0 %v1593
    %1679 = vmatprep.subr.mxu0 0.0
    %1680 = vmatpush1.msra.mxu0 %v1594
    %1681 = vmatprep.subr.mxu0 0.0
    %1682 = vmatpush1.msra.mxu0 %v1595
    %1683 = vmatprep.subr.mxu0 0.0
    %1684 = vmatpush1.msra.mxu0 %v1596
    %1685 = vmatprep.subr.mxu0 0.0
    %1686 = vmatpush1.msra.mxu0 %v1597
    %1687 = vmatprep.subr.mxu0 0.0
    %1688 = vmatpush1.msra.mxu0 %v1598
    %1689 = vmatprep.subr.mxu0 0.0
    %1690 = vmatpush1.msra.mxu0 %v1599
    %1691 = vmatprep.subr.mxu0 0.0
    %1692 = vmatpush1.msra.mxu0 %v1600
    %1693 = vmatprep.subr.mxu0 0.0
    %1694 = vmatpush1.msra.mxu0 %v1601
    %1695 = vmatprep.subr.mxu0 0.0
    %1696 = vmatpush1.msra.mxu0 %v1602
    %1697 = vmatprep.subr.mxu0 0.0
    %1698 = vmatpush1.msra.mxu0 %v1603
    %1699 = vmatprep.subr.mxu0 0.0
    %1700 = vmatpush1.msra.mxu0 %v1604
    %1701 = vmatprep.mubr.f32.mxu0 %v394
    %1702 = vmatmul.mubr.f32.gmra.mrb[0].mxu0 %v390
    %v1703 = vpop.f32.mrb[0].mxu0
    %v1704 = vadd.f32 0.0, %v1703
    %v1705 = vpop.f32.mrb[0].mxu0
    %1706 = vdwg.mxu0
    %1707 = vmatprep.subr.mxu0 0.0
    %1708 = vmatpush1.msra.mxu0 %v1605
    %1709 = vmatprep.subr.mxu0 0.0
    %1710 = vmatpush1.msra.mxu0 %v1606
    %1711 = vmatprep.subr.mxu0 0.0
    %1712 = vmatpush1.msra.mxu0 %v1607
    %1713 = vmatprep.subr.mxu0 0.0
    %1714 = vmatpush1.msra.mxu0 %v1608
    %1715 = vmatprep.subr.mxu0 0.0
    %1716 = vmatpush1.msra.mxu0 %v1609
    %1717 = vmatprep.subr.mxu0 0.0
    %1718 = vmatpush1.msra.mxu0 %v1610
    %1719 = vmatprep.subr.mxu0 0.0
    %1720 = vmatpush1.msra.mxu0 %v1611
    %1721 = vmatprep.subr.mxu0 0.0
    %1722 = vmatpush1.msra.mxu0 %v1612
    %1723 = vmatprep.subr.mxu0 0.0
    %1724 = vmatpush1.msra.mxu0 %v1613
    %1725 = vmatprep.subr.mxu0 0.0
    %1726 = vmatpush1.msra.mxu0 %v1614
    %1727 = vmatprep.subr.mxu0 0.0
    %1728 = vmatpush1.msra.mxu0 %v1615
    %1729 = vmatprep.subr.mxu0 0.0
    %1730 = vmatpush1.msra.mxu0 %v1616
    %1731 = vmatprep.subr.mxu0 0.0
    %1732 = vmatpush1.msra.mxu0 %v1617
    %1733 = vmatprep.subr.mxu0 0.0
    %1734 = vmatpush1.msra.mxu0 %v1618
    %1735 = vmatprep.subr.mxu0 0.0
    %1736 = vmatpush1.msra.mxu0 %v1619
    %1737 = vmatprep.subr.mxu0 0.0
    %1738 = vmatpush1.msra.mxu0 %v1620
    %1739 = vmatprep.subr.mxu0 0.0
    %1740 = vmatpush1.msra.mxu0 %v1621
    %1741 = vmatprep.subr.mxu0 0.0
    %1742 = vmatpush1.msra.mxu0 %v1622
    %1743 = vmatprep.subr.mxu0 0.0
    %1744 = vmatpush1.msra.mxu0 %v1623
    %1745 = vmatprep.subr.mxu0 0.0
    %1746 = vmatpush1.msra.mxu0 %v1624
    %1747 = vmatprep.subr.mxu0 0.0
    %1748 = vmatpush1.msra.mxu0 %v1625
    %1749 = vmatprep.subr.mxu0 0.0
    %1750 = vmatpush1.msra.mxu0 %v1626
    %1751 = vmatprep.subr.mxu0 0.0
    %1752 = vmatpush1.msra.mxu0 %v1627
    %1753 = vmatprep.subr.mxu0 0.0
    %1754 = vmatpush1.msra.mxu0 %v1628
    %1755 = vmatprep.subr.mxu0 0.0
    %1756 = vmatpush1.msra.mxu0 %v1629
    %1757 = vmatprep.subr.mxu0 0.0
    %1758 = vmatpush1.msra.mxu0 %v1630
    %1759 = vmatprep.subr.mxu0 0.0
    %1760 = vmatpush1.msra.mxu0 %v1631
    %1761 = vmatprep.subr.mxu0 0.0
    %1762 = vmatpush1.msra.mxu0 %v1632
    %1763 = vmatprep.subr.mxu0 0.0
    %1764 = vmatpush1.msra.mxu0 %v1633
    %1765 = vmatprep.subr.mxu0 0.0
    %1766 = vmatpush1.msra.mxu0 %v1634
    %1767 = vmatprep.subr.mxu0 0.0
    %1768 = vmatpush1.msra.mxu0 %v1635
    %1769 = vmatprep.subr.mxu0 0.0
    %1770 = vmatpush1.msra.mxu0 %v1636
    %1771 = vmatprep.mubr.f32.mxu0 %v402
    %1772 = vmatmul.mubr.f32.gmra.mrb[0].mxu0 %v398
    %v1773 = vpop.f32.mrb[0].mxu0
    %v1774 = vadd.f32 %v1704, %v1773
    %v1775 = vpop.f32.mrb[0].mxu0
    %1776 = vdwg.mxu0
    %s1777 = scalar_lea.vmem [#allocation4], 3584
    %v1778 = vld [vmem:[%s1777] sm:$0xff]
    %v1779 = vld [vmem:[%s1777 + $0x8] sm:$0xff]
    %v1780 = vld [vmem:[%s1777 + $0x10] sm:$0xff]
    %v1781 = vld [vmem:[%s1777 + $0x18] sm:$0xff]
    %v1782 = vld [vmem:[%s1777 + $0x20] sm:$0xff]
    %v1783 = vld [vmem:[%s1777 + $0x28] sm:$0xff]
    %v1784 = vld [vmem:[%s1777 + $0x30] sm:$0xff]
    %v1785 = vld [vmem:[%s1777 + $0x38] sm:$0xff]
    %v1786 = vld [vmem:[%s1777 + $0x40] sm:$0xff]
    %v1787 = vld [vmem:[%s1777 + $0x48] sm:$0xff]
    %v1788 = vld [vmem:[%s1777 + $0x50] sm:$0xff]
    %v1789 = vld [vmem:[%s1777 + $0x58] sm:$0xff]
    %v1790 = vld [vmem:[%s1777 + $0x60] sm:$0xff]
    %v1791 = vld [vmem:[%s1777 + $0x68] sm:$0xff]
    %v1792 = vld [vmem:[%s1777 + $0x70] sm:$0xff]
    %v1793 = vld [vmem:[%s1777 + $0x78] sm:$0xff]
    %v1794 = vld [vmem:[%s1777 + $0x80] sm:$0xff]
    %v1795 = vld [vmem:[%s1777 + $0x88] sm:$0xff]
    %v1796 = vld [vmem:[%s1777 + $0x90] sm:$0xff]
    %v1797 = vld [vmem:[%s1777 + $0x98] sm:$0xff]
    %v1798 = vld [vmem:[%s1777 + $0xa0] sm:$0xff]
    %v1799 = vld [vmem:[%s1777 + $0xa8] sm:$0xff]
    %v1800 = vld [vmem:[%s1777 + $0xb0] sm:$0xff]
    %v1801 = vld [vmem:[%s1777 + $0xb8] sm:$0xff]
    %v1802 = vld [vmem:[%s1777 + $0xc0] sm:$0xff]
    %v1803 = vld [vmem:[%s1777 + $0xc8] sm:$0xff]
    %v1804 = vld [vmem:[%s1777 + $0xd0] sm:$0xff]
    %v1805 = vld [vmem:[%s1777 + $0xd8] sm:$0xff]
    %v1806 = vld [vmem:[%s1777 + $0xe0] sm:$0xff]
    %v1807 = vld [vmem:[%s1777 + $0xe8] sm:$0xff]
    %v1808 = vld [vmem:[%s1777 + $0xf0] sm:$0xff]
    %v1809 = vld [vmem:[%s1777 + $0xf8] sm:$0xff]
    %v1810 = vld [vmem:[%s1777 + $0x100] sm:$0xff]
    %v1811 = vld [vmem:[%s1777 + $0x108] sm:$0xff]
    %v1812 = vld [vmem:[%s1777 + $0x110] sm:$0xff]
    %v1813 = vld [vmem:[%s1777 + $0x118] sm:$0xff]
    %v1814 = vld [vmem:[%s1777 + $0x120] sm:$0xff]
    %v1815 = vld [vmem:[%s1777 + $0x128] sm:$0xff]
    %v1816 = vld [vmem:[%s1777 + $0x130] sm:$0xff]
    %v1817 = vld [vmem:[%s1777 + $0x138] sm:$0xff]
    %v1818 = vld [vmem:[%s1777 + $0x140] sm:$0xff]
    %v1819 = vld [vmem:[%s1777 + $0x148] sm:$0xff]
    %v1820 = vld [vmem:[%s1777 + $0x150] sm:$0xff]
    %v1821 = vld [vmem:[%s1777 + $0x158] sm:$0xff]
    %v1822 = vld [vmem:[%s1777 + $0x160] sm:$0xff]
    %v1823 = vld [vmem:[%s1777 + $0x168] sm:$0xff]
    %v1824 = vld [vmem:[%s1777 + $0x170] sm:$0xff]
    %v1825 = vld [vmem:[%s1777 + $0x178] sm:$0xff]
    %v1826 = vld [vmem:[%s1777 + $0x180] sm:$0xff]
    %v1827 = vld [vmem:[%s1777 + $0x188] sm:$0xff]
    %v1828 = vld [vmem:[%s1777 + $0x190] sm:$0xff]
    %v1829 = vld [vmem:[%s1777 + $0x198] sm:$0xff]
    %v1830 = vld [vmem:[%s1777 + $0x1a0] sm:$0xff]
    %v1831 = vld [vmem:[%s1777 + $0x1a8] sm:$0xff]
    %v1832 = vld [vmem:[%s1777 + $0x1b0] sm:$0xff]
    %v1833 = vld [vmem:[%s1777 + $0x1b8] sm:$0xff]
    %v1834 = vld [vmem:[%s1777 + $0x1c0] sm:$0xff]
    %v1835 = vld [vmem:[%s1777 + $0x1c8] sm:$0xff]
    %v1836 = vld [vmem:[%s1777 + $0x1d0] sm:$0xff]
    %v1837 = vld [vmem:[%s1777 + $0x1d8] sm:$0xff]
    %v1838 = vld [vmem:[%s1777 + $0x1e0] sm:$0xff]
    %v1839 = vld [vmem:[%s1777 + $0x1e8] sm:$0xff]
    %v1840 = vld [vmem:[%s1777 + $0x1f0] sm:$0xff]
    %v1841 = vld [vmem:[%s1777 + $0x1f8] sm:$0xff]
    %1842 = vmatprep.subr.mxu0 0.0
    %1843 = vmatpush1.msra.mxu0 %v1778
    %1844 = vmatprep.subr.mxu0 0.0
    %1845 = vmatpush1.msra.mxu0 %v1779
    %1846 = vmatprep.subr.mxu0 0.0
    %1847 = vmatpush1.msra.mxu0 %v1780
    %1848 = vmatprep.subr.mxu0 0.0
    %1849 = vmatpush1.msra.mxu0 %v1781
    %1850 = vmatprep.subr.mxu0 0.0
    %1851 = vmatpush1.msra.mxu0 %v1782
    %1852 = vmatprep.subr.mxu0 0.0
    %1853 = vmatpush1.msra.mxu0 %v1783
    %1854 = vmatprep.subr.mxu0 0.0
    %1855 = vmatpush1.msra.mxu0 %v1784
    %1856 = vmatprep.subr.mxu0 0.0
    %1857 = vmatpush1.msra.mxu0 %v1785
    %1858 = vmatprep.subr.mxu0 0.0
    %1859 = vmatpush1.msra.mxu0 %v1786
    %1860 = vmatprep.subr.mxu0 0.0
    %1861 = vmatpush1.msra.mxu0 %v1787
    %1862 = vmatprep.subr.mxu0 0.0
    %1863 = vmatpush1.msra.mxu0 %v1788
    %1864 = vmatprep.subr.mxu0 0.0
    %1865 = vmatpush1.msra.mxu0 %v1789
    %1866 = vmatprep.subr.mxu0 0.0
    %1867 = vmatpush1.msra.mxu0 %v1790
    %1868 = vmatprep.subr.mxu0 0.0
    %1869 = vmatpush1.msra.mxu0 %v1791
    %1870 = vmatprep.subr.mxu0 0.0
    %1871 = vmatpush1.msra.mxu0 %v1792
    %1872 = vmatprep.subr.mxu0 0.0
    %1873 = vmatpush1.msra.mxu0 %v1793
    %1874 = vmatprep.subr.mxu0 0.0
    %1875 = vmatpush1.msra.mxu0 %v1794
    %1876 = vmatprep.subr.mxu0 0.0
    %1877 = vmatpush1.msra.mxu0 %v1795
    %1878 = vmatprep.subr.mxu0 0.0
    %1879 = vmatpush1.msra.mxu0 %v1796
    %1880 = vmatprep.subr.mxu0 0.0
    %1881 = vmatpush1.msra.mxu0 %v1797
    %1882 = vmatprep.subr.mxu0 0.0
    %1883 = vmatpush1.msra.mxu0 %v1798
    %1884 = vmatprep.subr.mxu0 0.0
    %1885 = vmatpush1.msra.mxu0 %v1799
    %1886 = vmatprep.subr.mxu0 0.0
    %1887 = vmatpush1.msra.mxu0 %v1800
    %1888 = vmatprep.subr.mxu0 0.0
    %1889 = vmatpush1.msra.mxu0 %v1801
    %1890 = vmatprep.subr.mxu0 0.0
    %1891 = vmatpush1.msra.mxu0 %v1802
    %1892 = vmatprep.subr.mxu0 0.0
    %1893 = vmatpush1.msra.mxu0 %v1803
    %1894 = vmatprep.subr.mxu0 0.0
    %1895 = vmatpush1.msra.mxu0 %v1804
    %1896 = vmatprep.subr.mxu0 0.0
    %1897 = vmatpush1.msra.mxu0 %v1805
    %1898 = vmatprep.subr.mxu0 0.0
    %1899 = vmatpush1.msra.mxu0 %v1806
    %1900 = vmatprep.subr.mxu0 0.0
    %1901 = vmatpush1.msra.mxu0 %v1807
    %1902 = vmatprep.subr.mxu0 0.0
    %1903 = vmatpush1.msra.mxu0 %v1808
    %1904 = vmatprep.subr.mxu0 0.0
    %1905 = vmatpush1.msra.mxu0 %v1809
    %1906 = vmatprep.mubr.f32.mxu0 %v394
    %1907 = vmatmul.mubr.f32.gmra.mrb[0].mxu0 %v390
    %v1908 = vpop.f32.mrb[0].mxu0
    %v1909 = vadd.f32 0.0, %v1908
    %v1910 = vpop.f32.mrb[0].mxu0
    %1911 = vdwg.mxu0
    %1912 = vmatprep.subr.mxu0 0.0
    %1913 = vmatpush1.msra.mxu0 %v1810
    %1914 = vmatprep.subr.mxu0 0.0
    %1915 = vmatpush1.msra.mxu0 %v1811
    %1916 = vmatprep.subr.mxu0 0.0
    %1917 = vmatpush1.msra.mxu0 %v1812
    %1918 = vmatprep.subr.mxu0 0.0
    %1919 = vmatpush1.msra.mxu0 %v1813
    %1920 = vmatprep.subr.mxu0 0.0
    %1921 = vmatpush1.msra.mxu0 %v1814
    %1922 = vmatprep.subr.mxu0 0.0
    %1923 = vmatpush1.msra.mxu0 %v1815
    %1924 = vmatprep.subr.mxu0 0.0
    %1925 = vmatpush1.msra.mxu0 %v1816
    %1926 = vmatprep.subr.mxu0 0.0
    %1927 = vmatpush1.msra.mxu0 %v1817
    %1928 = vmatprep.subr.mxu0 0.0
    %1929 = vmatpush1.msra.mxu0 %v1818
    %1930 = vmatprep.subr.mxu0 0.0
    %1931 = vmatpush1.msra.mxu0 %v1819
    %1932 = vmatprep.subr.mxu0 0.0
    %1933 = vmatpush1.msra.mxu0 %v1820
    %1934 = vmatprep.subr.mxu0 0.0
    %1935 = vmatpush1.msra.mxu0 %v1821
    %1936 = vmatprep.subr.mxu0 0.0
    %1937 = vmatpush1.msra.mxu0 %v1822
    %1938 = vmatprep.subr.mxu0 0.0
    %1939 = vmatpush1.msra.mxu0 %v1823
    %1940 = vmatprep.subr.mxu0 0.0
    %1941 = vmatpush1.msra.mxu0 %v1824
    %1942 = vmatprep.subr.mxu0 0.0
    %1943 = vmatpush1.msra.mxu0 %v1825
    %1944 = vmatprep.subr.mxu0 0.0
    %1945 = vmatpush1.msra.mxu0 %v1826
    %1946 = vmatprep.subr.mxu0 0.0
    %1947 = vmatpush1.msra.mxu0 %v1827
    %1948 = vmatprep.subr.mxu0 0.0
    %1949 = vmatpush1.msra.mxu0 %v1828
    %1950 = vmatprep.subr.mxu0 0.0
    %1951 = vmatpush1.msra.mxu0 %v1829
    %1952 = vmatprep.subr.mxu0 0.0
    %1953 = vmatpush1.msra.mxu0 %v1830
    %1954 = vmatprep.subr.mxu0 0.0
    %1955 = vmatpush1.msra.mxu0 %v1831
    %1956 = vmatprep.subr.mxu0 0.0
    %1957 = vmatpush1.msra.mxu0 %v1832
    %1958 = vmatprep.subr.mxu0 0.0
    %1959 = vmatpush1.msra.mxu0 %v1833
    %1960 = vmatprep.subr.mxu0 0.0
    %1961 = vmatpush1.msra.mxu0 %v1834
    %1962 = vmatprep.subr.mxu0 0.0
    %1963 = vmatpush1.msra.mxu0 %v1835
    %1964 = vmatprep.subr.mxu0 0.0
    %1965 = vmatpush1.msra.mxu0 %v1836
    %1966 = vmatprep.subr.mxu0 0.0
    %1967 = vmatpush1.msra.mxu0 %v1837
    %1968 = vmatprep.subr.mxu0 0.0
    %1969 = vmatpush1.msra.mxu0 %v1838
    %1970 = vmatprep.subr.mxu0 0.0
    %1971 = vmatpush1.msra.mxu0 %v1839
    %1972 = vmatprep.subr.mxu0 0.0
    %1973 = vmatpush1.msra.mxu0 %v1840
    %1974 = vmatprep.subr.mxu0 0.0
    %1975 = vmatpush1.msra.mxu0 %v1841
    %1976 = vmatprep.mubr.f32.mxu0 %v402
    %1977 = vmatmul.mubr.f32.gmra.mrb[0].mxu0 %v398
    %v1978 = vpop.f32.mrb[0].mxu0
    %v1979 = vadd.f32 %v1909, %v1978
    %v1980 = vpop.f32.mrb[0].mxu0
    %1981 = vdwg.mxu0
    %s1982 = scalar_lea.vmem [#allocation4], 4096
    %v1983 = vld [vmem:[%s1982] sm:$0xff]
    %v1984 = vld [vmem:[%s1982 + $0x8] sm:$0xff]
    %v1985 = vld [vmem:[%s1982 + $0x10] sm:$0xff]
    %v1986 = vld [vmem:[%s1982 + $0x18] sm:$0xff]
    %v1987 = vld [vmem:[%s1982 + $0x20] sm:$0xff]
    %v1988 = vld [vmem:[%s1982 + $0x28] sm:$0xff]
    %v1989 = vld [vmem:[%s1982 + $0x30] sm:$0xff]
    %v1990 = vld [vmem:[%s1982 + $0x38] sm:$0xff]
    %v1991 = vld [vmem:[%s1982 + $0x40] sm:$0xff]
    %v1992 = vld [vmem:[%s1982 + $0x48] sm:$0xff]
    %v1993 = vld [vmem:[%s1982 + $0x50] sm:$0xff]
    %v1994 = vld [vmem:[%s1982 + $0x58] sm:$0xff]
    %v1995 = vld [vmem:[%s1982 + $0x60] sm:$0xff]
    %v1996 = vld [vmem:[%s1982 + $0x68] sm:$0xff]
    %v1997 = vld [vmem:[%s1982 + $0x70] sm:$0xff]
    %v1998 = vld [vmem:[%s1982 + $0x78] sm:$0xff]
    %v1999 = vld [vmem:[%s1982 + $0x80] sm:$0xff]
    %v2000 = vld [vmem:[%s1982 + $0x88] sm:$0xff]
    %v2001 = vld [vmem:[%s1982 + $0x90] sm:$0xff]
    %v2002 = vld [vmem:[%s1982 + $0x98] sm:$0xff]
    %v2003 = vld [vmem:[%s1982 + $0xa0] sm:$0xff]
    %v2004 = vld [vmem:[%s1982 + $0xa8] sm:$0xff]
    %v2005 = vld [vmem:[%s1982 + $0xb0] sm:$0xff]
    %v2006 = vld [vmem:[%s1982 + $0xb8] sm:$0xff]
    %v2007 = vld [vmem:[%s1982 + $0xc0] sm:$0xff]
    %v2008 = vld [vmem:[%s1982 + $0xc8] sm:$0xff]
    %v2009 = vld [vmem:[%s1982 + $0xd0] sm:$0xff]
    %v2010 = vld [vmem:[%s1982 + $0xd8] sm:$0xff]
    %v2011 = vld [vmem:[%s1982 + $0xe0] sm:$0xff]
    %v2012 = vld [vmem:[%s1982 + $0xe8] sm:$0xff]
    %v2013 = vld [vmem:[%s1982 + $0xf0] sm:$0xff]
    %v2014 = vld [vmem:[%s1982 + $0xf8] sm:$0xff]
    %v2015 = vld [vmem:[%s1982 + $0x100] sm:$0xff]
    %v2016 = vld [vmem:[%s1982 + $0x108] sm:$0xff]
    %v2017 = vld [vmem:[%s1982 + $0x110] sm:$0xff]
    %v2018 = vld [vmem:[%s1982 + $0x118] sm:$0xff]
    %v2019 = vld [vmem:[%s1982 + $0x120] sm:$0xff]
    %v2020 = vld [vmem:[%s1982 + $0x128] sm:$0xff]
    %v2021 = vld [vmem:[%s1982 + $0x130] sm:$0xff]
    %v2022 = vld [vmem:[%s1982 + $0x138] sm:$0xff]
    %v2023 = vld [vmem:[%s1982 + $0x140] sm:$0xff]
    %v2024 = vld [vmem:[%s1982 + $0x148] sm:$0xff]
    %v2025 = vld [vmem:[%s1982 + $0x150] sm:$0xff]
    %v2026 = vld [vmem:[%s1982 + $0x158] sm:$0xff]
    %v2027 = vld [vmem:[%s1982 + $0x160] sm:$0xff]
    %v2028 = vld [vmem:[%s1982 + $0x168] sm:$0xff]
    %v2029 = vld [vmem:[%s1982 + $0x170] sm:$0xff]
    %v2030 = vld [vmem:[%s1982 + $0x178] sm:$0xff]
    %v2031 = vld [vmem:[%s1982 + $0x180] sm:$0xff]
    %v2032 = vld [vmem:[%s1982 + $0x188] sm:$0xff]
    %v2033 = vld [vmem:[%s1982 + $0x190] sm:$0xff]
    %v2034 = vld [vmem:[%s1982 + $0x198] sm:$0xff]
    %v2035 = vld [vmem:[%s1982 + $0x1a0] sm:$0xff]
    %v2036 = vld [vmem:[%s1982 + $0x1a8] sm:$0xff]
    %v2037 = vld [vmem:[%s1982 + $0x1b0] sm:$0xff]
    %v2038 = vld [vmem:[%s1982 + $0x1b8] sm:$0xff]
    %v2039 = vld [vmem:[%s1982 + $0x1c0] sm:$0xff]
    %v2040 = vld [vmem:[%s1982 + $0x1c8] sm:$0xff]
    %v2041 = vld [vmem:[%s1982 + $0x1d0] sm:$0xff]
    %v2042 = vld [vmem:[%s1982 + $0x1d8] sm:$0xff]
    %v2043 = vld [vmem:[%s1982 + $0x1e0] sm:$0xff]
    %v2044 = vld [vmem:[%s1982 + $0x1e8] sm:$0xff]
    %v2045 = vld [vmem:[%s1982 + $0x1f0] sm:$0xff]
    %v2046 = vld [vmem:[%s1982 + $0x1f8] sm:$0xff]
    %2047 = vmatprep.subr.mxu0 0.0
    %2048 = vmatpush1.msra.mxu0 %v1983
    %2049 = vmatprep.subr.mxu0 0.0
    %2050 = vmatpush1.msra.mxu0 %v1984
    %2051 = vmatprep.subr.mxu0 0.0
    %2052 = vmatpush1.msra.mxu0 %v1985
    %2053 = vmatprep.subr.mxu0 0.0
    %2054 = vmatpush1.msra.mxu0 %v1986
    %2055 = vmatprep.subr.mxu0 0.0
    %2056 = vmatpush1.msra.mxu0 %v1987
    %2057 = vmatprep.subr.mxu0 0.0
    %2058 = vmatpush1.msra.mxu0 %v1988
    %2059 = vmatprep.subr.mxu0 0.0
    %2060 = vmatpush1.msra.mxu0 %v1989
    %2061 = vmatprep.subr.mxu0 0.0
    %2062 = vmatpush1.msra.mxu0 %v1990
    %2063 = vmatprep.subr.mxu0 0.0
    %2064 = vmatpush1.msra.mxu0 %v1991
    %2065 = vmatprep.subr.mxu0 0.0
    %2066 = vmatpush1.msra.mxu0 %v1992
    %2067 = vmatprep.subr.mxu0 0.0
    %2068 = vmatpush1.msra.mxu0 %v1993
    %2069 = vmatprep.subr.mxu0 0.0
    %2070 = vmatpush1.msra.mxu0 %v1994
    %2071 = vmatprep.subr.mxu0 0.0
    %2072 = vmatpush1.msra.mxu0 %v1995
    %2073 = vmatprep.subr.mxu0 0.0
    %2074 = vmatpush1.msra.mxu0 %v1996
    %2075 = vmatprep.subr.mxu0 0.0
    %2076 = vmatpush1.msra.mxu0 %v1997
    %2077 = vmatprep.subr.mxu0 0.0
    %2078 = vmatpush1.msra.mxu0 %v1998
    %2079 = vmatprep.subr.mxu0 0.0
    %2080 = vmatpush1.msra.mxu0 %v1999
    %2081 = vmatprep.subr.mxu0 0.0
    %2082 = vmatpush1.msra.mxu0 %v2000
    %2083 = vmatprep.subr.mxu0 0.0
    %2084 = vmatpush1.msra.mxu0 %v2001
    %2085 = vmatprep.subr.mxu0 0.0
    %2086 = vmatpush1.msra.mxu0 %v2002
    %2087 = vmatprep.subr.mxu0 0.0
    %2088 = vmatpush1.msra.mxu0 %v2003
    %2089 = vmatprep.subr.mxu0 0.0
    %2090 = vmatpush1.msra.mxu0 %v2004
    %2091 = vmatprep.subr.mxu0 0.0
    %2092 = vmatpush1.msra.mxu0 %v2005
    %2093 = vmatprep.subr.mxu0 0.0
    %2094 = vmatpush1.msra.mxu0 %v2006
    %2095 = vmatprep.subr.mxu0 0.0
    %2096 = vmatpush1.msra.mxu0 %v2007
    %2097 = vmatprep.subr.mxu0 0.0
    %2098 = vmatpush1.msra.mxu0 %v2008
    %2099 = vmatprep.subr.mxu0 0.0
    %2100 = vmatpush1.msra.mxu0 %v2009
    %2101 = vmatprep.subr.mxu0 0.0
    %2102 = vmatpush1.msra.mxu0 %v2010
    %2103 = vmatprep.subr.mxu0 0.0
    %2104 = vmatpush1.msra.mxu0 %v2011
    %2105 = vmatprep.subr.mxu0 0.0
    %2106 = vmatpush1.msra.mxu0 %v2012
    %2107 = vmatprep.subr.mxu0 0.0
    %2108 = vmatpush1.msra.mxu0 %v2013
    %2109 = vmatprep.subr.mxu0 0.0
    %2110 = vmatpush1.msra.mxu0 %v2014
    %2111 = vmatprep.mubr.f32.mxu0 %v394
    %2112 = vmatmul.mubr.f32.gmra.mrb[0].mxu0 %v390
    %v2113 = vpop.f32.mrb[0].mxu0
    %v2114 = vadd.f32 0.0, %v2113
    %v2115 = vpop.f32.mrb[0].mxu0
    %2116 = vdwg.mxu0
    %2117 = vmatprep.subr.mxu0 0.0
    %2118 = vmatpush1.msra.mxu0 %v2015
    %2119 = vmatprep.subr.mxu0 0.0
    %2120 = vmatpush1.msra.mxu0 %v2016
    %2121 = vmatprep.subr.mxu0 0.0
    %2122 = vmatpush1.msra.mxu0 %v2017
    %2123 = vmatprep.subr.mxu0 0.0
    %2124 = vmatpush1.msra.mxu0 %v2018
    %2125 = vmatprep.subr.mxu0 0.0
    %2126 = vmatpush1.msra.mxu0 %v2019
    %2127 = vmatprep.subr.mxu0 0.0
    %2128 = vmatpush1.msra.mxu0 %v2020
    %2129 = vmatprep.subr.mxu0 0.0
    %2130 = vmatpush1.msra.mxu0 %v2021
    %2131 = vmatprep.subr.mxu0 0.0
    %2132 = vmatpush1.msra.mxu0 %v2022
    %2133 = vmatprep.subr.mxu0 0.0
    %2134 = vmatpush1.msra.mxu0 %v2023
    %2135 = vmatprep.subr.mxu0 0.0
    %2136 = vmatpush1.msra.mxu0 %v2024
    %2137 = vmatprep.subr.mxu0 0.0
    %2138 = vmatpush1.msra.mxu0 %v2025
    %2139 = vmatprep.subr.mxu0 0.0
    %2140 = vmatpush1.msra.mxu0 %v2026
    %2141 = vmatprep.subr.mxu0 0.0
    %2142 = vmatpush1.msra.mxu0 %v2027
    %2143 = vmatprep.subr.mxu0 0.0
    %2144 = vmatpush1.msra.mxu0 %v2028
    %2145 = vmatprep.subr.mxu0 0.0
    %2146 = vmatpush1.msra.mxu0 %v2029
    %2147 = vmatprep.subr.mxu0 0.0
    %2148 = vmatpush1.msra.mxu0 %v2030
    %2149 = vmatprep.subr.mxu0 0.0
    %2150 = vmatpush1.msra.mxu0 %v2031
    %2151 = vmatprep.subr.mxu0 0.0
    %2152 = vmatpush1.msra.mxu0 %v2032
    %2153 = vmatprep.subr.mxu0 0.0
    %2154 = vmatpush1.msra.mxu0 %v2033
    %2155 = vmatprep.subr.mxu0 0.0
    %2156 = vmatpush1.msra.mxu0 %v2034
    %2157 = vmatprep.subr.mxu0 0.0
    %2158 = vmatpush1.msra.mxu0 %v2035
    %2159 = vmatprep.subr.mxu0 0.0
    %2160 = vmatpush1.msra.mxu0 %v2036
    %2161 = vmatprep.subr.mxu0 0.0
    %2162 = vmatpush1.msra.mxu0 %v2037
    %2163 = vmatprep.subr.mxu0 0.0
    %2164 = vmatpush1.msra.mxu0 %v2038
    %2165 = vmatprep.subr.mxu0 0.0
    %2166 = vmatpush1.msra.mxu0 %v2039
    %2167 = vmatprep.subr.mxu0 0.0
    %2168 = vmatpush1.msra.mxu0 %v2040
    %2169 = vmatprep.subr.mxu0 0.0
    %2170 = vmatpush1.msra.mxu0 %v2041
    %2171 = vmatprep.subr.mxu0 0.0
    %2172 = vmatpush1.msra.mxu0 %v2042
    %2173 = vmatprep.subr.mxu0 0.0
    %2174 = vmatpush1.msra.mxu0 %v2043
    %2175 = vmatprep.subr.mxu0 0.0
    %2176 = vmatpush1.msra.mxu0 %v2044
    %2177 = vmatprep.subr.mxu0 0.0
    %2178 = vmatpush1.msra.mxu0 %v2045
    %2179 = vmatprep.subr.mxu0 0.0
    %2180 = vmatpush1.msra.mxu0 %v2046
    %2181 = vmatprep.mubr.f32.mxu0 %v402
    %2182 = vmatmul.mubr.f32.gmra.mrb[0].mxu0 %v398
    %v2183 = vpop.f32.mrb[0].mxu0
    %v2184 = vadd.f32 %v2114, %v2183
    %v2185 = vpop.f32.mrb[0].mxu0
    %2186 = vdwg.mxu0
    %v2188 = vrot.slane %v749, 7
    %v2191 = vrot.slane %v954, 6
    %v2194 = vrot.slane %v1159, 5
    %v2197 = vrot.slane %v1364, 4
    %v2200 = vrot.slane %v1569, 3
    %v2203 = vrot.slane %v1774, 2
    %v2206 = vrot.slane %v1979, 1
    %vm2208 = vcmask 1040384
    %v2209 = vsel %vm2208, %v544, %v2188
    %vm2210 = vcmask 1041408
    %v2211 = vsel %vm2210, %v2209, %v2191
    %vm2212 = vcmask 1042432
    %v2213 = vsel %vm2212, %v2211, %v2194
    %vm2214 = vcmask 1043456
    %v2215 = vsel %vm2214, %v2213, %v2197
    %vm2216 = vcmask 1044480
    %v2217 = vsel %vm2216, %v2215, %v2200
    %vm2218 = vcmask 1045504
    %v2219 = vsel %vm2218, %v2217, %v2203
    %vm2220 = vcmask 1046528
    %v2221 = vsel %vm2220, %v2219, %v2206
    %v2222 = vld [vmem:[#allocation6] sm:$0xff]
    %vm2223 = vcmask 72704
    %v2225 = vsel %vm2223, %v2222, 0
    %v2228 = vsel %vm2208, %v2184, 0
    %2230 = vmatprep.subr.mxu0 0.0
    %2231 = vmatpush1.msra.mxu0 %v2221
    %2232 = vmatprep.subr.mxu0 0.0
    %2233 = vmatpush1.msra.mxu0 %v2228
    %2234 = vmatprep.subr.mxu0 0.0
    %2235 = vmatpush1.msra.mxu0 0.0
    %2236 = vmatprep.subr.mxu0 0.0
    %2237 = vmatpush1.msra.mxu0 0.0
    %2238 = vmatprep.subr.mxu0 0.0
    %2239 = vmatpush1.msra.mxu0 0.0
    %2240 = vmatprep.subr.mxu0 0.0
    %2241 = vmatpush1.msra.mxu0 0.0
    %2242 = vmatprep.subr.mxu0 0.0
    %2243 = vmatpush1.msra.mxu0 0.0
    %2244 = vmatprep.subr.mxu0 0.0
    %2245 = vmatpush1.msra.mxu0 0.0
    %2246 = vmatprep.subr.mxu0 0.0
    %2247 = vmatpush1.msra.mxu0 0.0
    %2248 = vmatprep.subr.mxu0 0.0
    %2249 = vmatpush1.msra.mxu0 0.0
    %2250 = vmatprep.subr.mxu0 0.0
    %2251 = vmatpush1.msra.mxu0 0.0
    %2252 = vmatprep.subr.mxu0 0.0
    %2253 = vmatpush1.msra.mxu0 0.0
    %2254 = vmatprep.subr.mxu0 0.0
    %2255 = vmatpush1.msra.mxu0 0.0
    %2256 = vmatprep.subr.mxu0 0.0
    %2257 = vmatpush1.msra.mxu0 0.0
    %2258 = vmatprep.subr.mxu0 0.0
    %2259 = vmatpush1.msra.mxu0 0.0
    %2260 = vmatprep.subr.mxu0 0.0
    %2261 = vmatpush1.msra.mxu0 0.0
    %2262 = vmatprep.subr.mxu0 0.0
    %2263 = vmatpush1.msra.mxu0 0.0
    %2264 = vmatprep.subr.mxu0 0.0
    %2265 = vmatpush1.msra.mxu0 0.0
    %2266 = vmatprep.subr.mxu0 0.0
    %2267 = vmatpush1.msra.mxu0 0.0
    %2268 = vmatprep.subr.mxu0 0.0
    %2269 = vmatpush1.msra.mxu0 0.0
    %2270 = vmatprep.subr.mxu0 0.0
    %2271 = vmatpush1.msra.mxu0 0.0
    %2272 = vmatprep.subr.mxu0 0.0
    %2273 = vmatpush1.msra.mxu0 0.0
    %2274 = vmatprep.subr.mxu0 0.0
    %2275 = vmatpush1.msra.mxu0 0.0
    %2276 = vmatprep.subr.mxu0 0.0
    %2277 = vmatpush1.msra.mxu0 0.0
    %2278 = vmatprep.subr.mxu0 0.0
    %2279 = vmatpush1.msra.mxu0 0.0
    %2280 = vmatprep.subr.mxu0 0.0
    %2281 = vmatpush1.msra.mxu0 0.0
    %2282 = vmatprep.subr.mxu0 0.0
    %2283 = vmatpush1.msra.mxu0 0.0
    %2284 = vmatprep.subr.mxu0 0.0
    %2285 = vmatpush1.msra.mxu0 0.0
    %2286 = vmatprep.subr.mxu0 0.0
    %2287 = vmatpush1.msra.mxu0 0.0
    %2288 = vmatprep.subr.mxu0 0.0
    %2289 = vmatpush1.msra.mxu0 0.0
    %2290 = vmatprep.subr.mxu0 0.0
    %2291 = vmatpush1.msra.mxu0 0.0
    %2292 = vmatprep.subr.mxu0 0.0
    %2293 = vmatpush1.msra.mxu0 0.0
    %2294 = vmatprep.mubr.f32.mxu0 0.0
    %2295 = vmatmul.mubr.f32.gmra.mrb[0].mxu0 %v2225
    %v2296 = vpop.f32.mrb[0].mxu0
    %v2297 = vadd.f32 0.0, %v2296
    %v2298 = vpop.f32.mrb[0].mxu0
    %2299 = vdwg.mxu0
    %v2300 = vld [vmem:[%s9] sm:$0xff]
    %v2301 = vld [vmem:[%s11] sm:$0xff]
    %2302 = vadd.xlane.f32.xlu0 %v2297
    %v2303 = vpop.xlane.xlu0 %2302
    %v2304 = vrcp.pop 128.0
    %v2305 = vmul.f32 %v2303, %v2304
    %v2306 = vsub.f32 %v2297, %v2305
    %v2307 = vmul.f32 %v2306, %v2306
    %2308 = vadd.xlane.f32.xlu0 %v2307
    %v2309 = vpop.xlane.xlu0 %2308
    %v2310 = vmul.f32 %v2309, %v2304
    %v2311 = vadd.f32 %v2310, 1e-05
    %v2312 = vrsqrt.pop %v2311
    %v2313 = vmul.f32 %v2306, %v2312
    %2315 = vset.pattern.permute.xlu0 0
    %2316 = vperm.xlu0 %2315, %v2300
    %v2317 = vpop.permute.xlu0 %2316
    %v2319 = vmul.f32 %v2313, %v2317
    %2321 = vset.pattern.permute.xlu0 0
    %2322 = vperm.xlu0 %2321, %v2301
    %v2323 = vpop.permute.xlu0 %2322
    %v2325 = vadd.f32 %v2319, %v2323
    %vm2326 = vcmp.ge.f32.partialorder %v2325, 0.0
    %v2327 = vmul.f32 %v2325, 0.01
    %v2328 = vsel %vm2326, %v2325, %v2327
    %v2329 = vld [vmem:[%s13] sm:$0xff]
    %v2330 = vld [vmem:[%s13 + $0x8] sm:$0xff]
    %v2331 = vld [vmem:[%s13 + $0x10] sm:$0xff]
    %v2332 = vld [vmem:[%s13 + $0x18] sm:$0xff]
    %v2333 = vld [vmem:[%s13 + $0x20] sm:$0xff]
    %v2334 = vld [vmem:[%s13 + $0x28] sm:$0xff]
    %v2335 = vld [vmem:[%s13 + $0x30] sm:$0xff]
    %v2336 = vld [vmem:[%s13 + $0x38] sm:$0xff]
    %v2337 = vld [vmem:[%s13 + $0x40] sm:$0xff]
    %v2338 = vld [vmem:[%s13 + $0x48] sm:$0xff]
    %v2339 = vld [vmem:[%s13 + $0x50] sm:$0xff]
    %v2340 = vld [vmem:[%s13 + $0x58] sm:$0xff]
    %v2341 = vld [vmem:[%s13 + $0x60] sm:$0xff]
    %v2342 = vld [vmem:[%s13 + $0x68] sm:$0xff]
    %v2343 = vld [vmem:[%s13 + $0x70] sm:$0xff]
    %v2344 = vld [vmem:[%s13 + $0x78] sm:$0xff]
    %2345 = vmatprep.subr.mxu0 0.0
    %2346 = vmatpush1.msra.mxu0 %v2329
    %2347 = vmatprep.subr.mxu0 0.0
    %2348 = vmatpush1.msra.mxu0 %v2330
    %2349 = vmatprep.subr.mxu0 0.0
    %2350 = vmatpush1.msra.mxu0 %v2331
    %2351 = vmatprep.subr.mxu0 0.0
    %2352 = vmatpush1.msra.mxu0 %v2332
    %2353 = vmatprep.subr.mxu0 0.0
    %2354 = vmatpush1.msra.mxu0 %v2333
    %2355 = vmatprep.subr.mxu0 0.0
    %2356 = vmatpush1.msra.mxu0 %v2334
    %2357 = vmatprep.subr.mxu0 0.0
    %2358 = vmatpush1.msra.mxu0 %v2335
    %2359 = vmatprep.subr.mxu0 0.0
    %2360 = vmatpush1.msra.mxu0 %v2336
    %2361 = vmatprep.subr.mxu0 0.0
    %2362 = vmatpush1.msra.mxu0 %v2337
    %2363 = vmatprep.subr.mxu0 0.0
    %2364 = vmatpush1.msra.mxu0 %v2338
    %2365 = vmatprep.subr.mxu0 0.0
    %2366 = vmatpush1.msra.mxu0 %v2339
    %2367 = vmatprep.subr.mxu0 0.0
    %2368 = vmatpush1.msra.mxu0 %v2340
    %2369 = vmatprep.subr.mxu0 0.0
    %2370 = vmatpush1.msra.mxu0 %v2341
    %2371 = vmatprep.subr.mxu0 0.0
    %2372 = vmatpush1.msra.mxu0 %v2342
    %2373 = vmatprep.subr.mxu0 0.0
    %2374 = vmatpush1.msra.mxu0 %v2343
    %2375 = vmatprep.subr.mxu0 0.0
    %2376 = vmatpush1.msra.mxu0 %v2344
    %2377 = vmatprep.subr.mxu0 0.0
    %2378 = vmatpush1.msra.mxu0 0.0
    %2379 = vmatprep.subr.mxu0 0.0
    %2380 = vmatpush1.msra.mxu0 0.0
    %2381 = vmatprep.subr.mxu0 0.0
    %2382 = vmatpush1.msra.mxu0 0.0
    %2383 = vmatprep.subr.mxu0 0.0
    %2384 = vmatpush1.msra.mxu0 0.0
    %2385 = vmatprep.subr.mxu0 0.0
    %2386 = vmatpush1.msra.mxu0 0.0
    %2387 = vmatprep.subr.mxu0 0.0
    %2388 = vmatpush1.msra.mxu0 0.0
    %2389 = vmatprep.subr.mxu0 0.0
    %2390 = vmatpush1.msra.mxu0 0.0
    %2391 = vmatprep.subr.mxu0 0.0
    %2392 = vmatpush1.msra.mxu0 0.0
    %2393 = vmatprep.subr.mxu0 0.0
    %2394 = vmatpush1.msra.mxu0 0.0
    %2395 = vmatprep.subr.mxu0 0.0
    %2396 = vmatpush1.msra.mxu0 0.0
    %2397 = vmatprep.subr.mxu0 0.0
    %2398 = vmatpush1.msra.mxu0 0.0
    %2399 = vmatprep.subr.mxu0 0.0
    %2400 = vmatpush1.msra.mxu0 0.0
    %2401 = vmatprep.subr.mxu0 0.0
    %2402 = vmatpush1.msra.mxu0 0.0
    %2403 = vmatprep.subr.mxu0 0.0
    %2404 = vmatpush1.msra.mxu0 0.0
    %2405 = vmatprep.subr.mxu0 0.0
    %2406 = vmatpush1.msra.mxu0 0.0
    %2407 = vmatprep.subr.mxu0 0.0
    %2408 = vmatpush1.msra.mxu0 0.0
    %2409 = vmatprep.mubr.f32.mxu0 0.0
    %2410 = vmatmul.mubr.f32.gmra.mrb[0].mxu0 %v2328
    %v2411 = vpop.f32.mrb[0].mxu0
    %v2412 = vadd.f32 0.0, %v2411
    %v2413 = vpop.f32.mrb[0].mxu0
    %2414 = vdwg.mxu0
    %s2415 = scalar_lea.vmem %s13, 128
    %v2416 = vld [vmem:[%s2415] sm:$0xff]
    %v2417 = vld [vmem:[%s2415 + $0x8] sm:$0xff]
    %v2418 = vld [vmem:[%s2415 + $0x10] sm:$0xff]
    %v2419 = vld [vmem:[%s2415 + $0x18] sm:$0xff]
    %v2420 = vld [vmem:[%s2415 + $0x20] sm:$0xff]
    %v2421 = vld [vmem:[%s2415 + $0x28] sm:$0xff]
    %v2422 = vld [vmem:[%s2415 + $0x30] sm:$0xff]
    %v2423 = vld [vmem:[%s2415 + $0x38] sm:$0xff]
    %v2424 = vld [vmem:[%s2415 + $0x40] sm:$0xff]
    %v2425 = vld [vmem:[%s2415 + $0x48] sm:$0xff]
    %v2426 = vld [vmem:[%s2415 + $0x50] sm:$0xff]
    %v2427 = vld [vmem:[%s2415 + $0x58] sm:$0xff]
    %v2428 = vld [vmem:[%s2415 + $0x60] sm:$0xff]
    %v2429 = vld [vmem:[%s2415 + $0x68] sm:$0xff]
    %v2430 = vld [vmem:[%s2415 + $0x70] sm:$0xff]
    %v2431 = vld [vmem:[%s2415 + $0x78] sm:$0xff]
    %2432 = vmatprep.subr.mxu0 0.0
    %2433 = vmatpush1.msra.mxu0 %v2416
    %2434 = vmatprep.subr.mxu0 0.0
    %2435 = vmatpush1.msra.mxu0 %v2417
    %2436 = vmatprep.subr.mxu0 0.0
    %2437 = vmatpush1.msra.mxu0 %v2418
    %2438 = vmatprep.subr.mxu0 0.0
    %2439 = vmatpush1.msra.mxu0 %v2419
    %2440 = vmatprep.subr.mxu0 0.0
    %2441 = vmatpush1.msra.mxu0 %v2420
    %2442 = vmatprep.subr.mxu0 0.0
    %2443 = vmatpush1.msra.mxu0 %v2421
    %2444 = vmatprep.subr.mxu0 0.0
    %2445 = vmatpush1.msra.mxu0 %v2422
    %2446 = vmatprep.subr.mxu0 0.0
    %2447 = vmatpush1.msra.mxu0 %v2423
    %2448 = vmatprep.subr.mxu0 0.0
    %2449 = vmatpush1.msra.mxu0 %v2424
    %2450 = vmatprep.subr.mxu0 0.0
    %2451 = vmatpush1.msra.mxu0 %v2425
    %2452 = vmatprep.subr.mxu0 0.0
    %2453 = vmatpush1.msra.mxu0 %v2426
    %2454 = vmatprep.subr.mxu0 0.0
    %2455 = vmatpush1.msra.mxu0 %v2427
    %2456 = vmatprep.subr.mxu0 0.0
    %2457 = vmatpush1.msra.mxu0 %v2428
    %2458 = vmatprep.subr.mxu0 0.0
    %2459 = vmatpush1.msra.mxu0 %v2429
    %2460 = vmatprep.subr.mxu0 0.0
    %2461 = vmatpush1.msra.mxu0 %v2430
    %2462 = vmatprep.subr.mxu0 0.0
    %2463 = vmatpush1.msra.mxu0 %v2431
    %2464 = vmatprep.subr.mxu0 0.0
    %2465 = vmatpush1.msra.mxu0 0.0
    %2466 = vmatprep.subr.mxu0 0.0
    %2467 = vmatpush1.msra.mxu0 0.0
    %2468 = vmatprep.subr.mxu0 0.0
    %2469 = vmatpush1.msra.mxu0 0.0
    %2470 = vmatprep.subr.mxu0 0.0
    %2471 = vmatpush1.msra.mxu0 0.0
    %2472 = vmatprep.subr.mxu0 0.0
    %2473 = vmatpush1.msra.mxu0 0.0
    %2474 = vmatprep.subr.mxu0 0.0
    %2475 = vmatpush1.msra.mxu0 0.0
    %2476 = vmatprep.subr.mxu0 0.0
    %2477 = vmatpush1.msra.mxu0 0.0
    %2478 = vmatprep.subr.mxu0 0.0
    %2479 = vmatpush1.msra.mxu0 0.0
    %2480 = vmatprep.subr.mxu0 0.0
    %2481 = vmatpush1.msra.mxu0 0.0
    %2482 = vmatprep.subr.mxu0 0.0
    %2483 = vmatpush1.msra.mxu0 0.0
    %2484 = vmatprep.subr.mxu0 0.0
    %2485 = vmatpush1.msra.mxu0 0.0
    %2486 = vmatprep.subr.mxu0 0.0
    %2487 = vmatpush1.msra.mxu0 0.0
    %2488 = vmatprep.subr.mxu0 0.0
    %2489 = vmatpush1.msra.mxu0 0.0
    %2490 = vmatprep.subr.mxu0 0.0
    %2491 = vmatpush1.msra.mxu0 0.0
    %2492 = vmatprep.subr.mxu0 0.0
    %2493 = vmatpush1.msra.mxu0 0.0
    %2494 = vmatprep.subr.mxu0 0.0
    %2495 = vmatpush1.msra.mxu0 0.0
    %2496 = vmatprep.mubr.f32.mxu0 0.0
    %2497 = vmatmul.mubr.f32.gmra.mrb[0].mxu0 %v2328
    %v2498 = vpop.f32.mrb[0].mxu0
    %v2499 = vadd.f32 0.0, %v2498
    %v2500 = vpop.f32.mrb[0].mxu0
    %2501 = vdwg.mxu0
    %s2502 = scalar_lea.vmem %s13, 256
    %v2503 = vld [vmem:[%s2502] sm:$0xff]
    %v2504 = vld [vmem:[%s2502 + $0x8] sm:$0xff]
    %v2505 = vld [vmem:[%s2502 + $0x10] sm:$0xff]
    %v2506 = vld [vmem:[%s2502 + $0x18] sm:$0xff]
    %v2507 = vld [vmem:[%s2502 + $0x20] sm:$0xff]
    %v2508 = vld [vmem:[%s2502 + $0x28] sm:$0xff]
    %v2509 = vld [vmem:[%s2502 + $0x30] sm:$0xff]
    %v2510 = vld [vmem:[%s2502 + $0x38] sm:$0xff]
    %v2511 = vld [vmem:[%s2502 + $0x40] sm:$0xff]
    %v2512 = vld [vmem:[%s2502 + $0x48] sm:$0xff]
    %v2513 = vld [vmem:[%s2502 + $0x50] sm:$0xff]
    %v2514 = vld [vmem:[%s2502 + $0x58] sm:$0xff]
    %v2515 = vld [vmem:[%s2502 + $0x60] sm:$0xff]
    %v2516 = vld [vmem:[%s2502 + $0x68] sm:$0xff]
    %v2517 = vld [vmem:[%s2502 + $0x70] sm:$0xff]
    %v2518 = vld [vmem:[%s2502 + $0x78] sm:$0xff]
    %2519 = vmatprep.subr.mxu0 0.0
    %2520 = vmatpush1.msra.mxu0 %v2503
    %2521 = vmatprep.subr.mxu0 0.0
    %2522 = vmatpush1.msra.mxu0 %v2504
    %2523 = vmatprep.subr.mxu0 0.0
    %2524 = vmatpush1.msra.mxu0 %v2505
    %2525 = vmatprep.subr.mxu0 0.0
    %2526 = vmatpush1.msra.mxu0 %v2506
    %2527 = vmatprep.subr.mxu0 0.0
    %2528 = vmatpush1.msra.mxu0 %v2507
    %2529 = vmatprep.subr.mxu0 0.0
    %2530 = vmatpush1.msra.mxu0 %v2508
    %2531 = vmatprep.subr.mxu0 0.0
    %2532 = vmatpush1.msra.mxu0 %v2509
    %2533 = vmatprep.subr.mxu0 0.0
    %2534 = vmatpush1.msra.mxu0 %v2510
    %2535 = vmatprep.subr.mxu0 0.0
    %2536 = vmatpush1.msra.mxu0 %v2511
    %2537 = vmatprep.subr.mxu0 0.0
    %2538 = vmatpush1.msra.mxu0 %v2512
    %2539 = vmatprep.subr.mxu0 0.0
    %2540 = vmatpush1.msra.mxu0 %v2513
    %2541 = vmatprep.subr.mxu0 0.0
    %2542 = vmatpush1.msra.mxu0 %v2514
    %2543 = vmatprep.subr.mxu0 0.0
    %2544 = vmatpush1.msra.mxu0 %v2515
    %2545 = vmatprep.subr.mxu0 0.0
    %2546 = vmatpush1.msra.mxu0 %v2516
    %2547 = vmatprep.subr.mxu0 0.0
    %2548 = vmatpush1.msra.mxu0 %v2517
    %2549 = vmatprep.subr.mxu0 0.0
    %2550 = vmatpush1.msra.mxu0 %v2518
    %2551 = vmatprep.subr.mxu0 0.0
    %2552 = vmatpush1.msra.mxu0 0.0
    %2553 = vmatprep.subr.mxu0 0.0
    %2554 = vmatpush1.msra.mxu0 0.0
    %2555 = vmatprep.subr.mxu0 0.0
    %2556 = vmatpush1.msra.mxu0 0.0
    %2557 = vmatprep.subr.mxu0 0.0
    %2558 = vmatpush1.msra.mxu0 0.0
    %2559 = vmatprep.subr.mxu0 0.0
    %2560 = vmatpush1.msra.mxu0 0.0
    %2561 = vmatprep.subr.mxu0 0.0
    %2562 = vmatpush1.msra.mxu0 0.0
    %2563 = vmatprep.subr.mxu0 0.0
    %2564 = vmatpush1.msra.mxu0 0.0
    %2565 = vmatprep.subr.mxu0 0.0
    %2566 = vmatpush1.msra.mxu0 0.0
    %2567 = vmatprep.subr.mxu0 0.0
    %2568 = vmatpush1.msra.mxu0 0.0
    %2569 = vmatprep.subr.mxu0 0.0
    %2570 = vmatpush1.msra.mxu0 0.0
    %2571 = vmatprep.subr.mxu0 0.0
    %2572 = vmatpush1.msra.mxu0 0.0
    %2573 = vmatprep.subr.mxu0 0.0
    %2574 = vmatpush1.msra.mxu0 0.0
    %2575 = vmatprep.subr.mxu0 0.0
    %2576 = vmatpush1.msra.mxu0 0.0
    %2577 = vmatprep.subr.mxu0 0.0
    %2578 = vmatpush1.msra.mxu0 0.0
    %2579 = vmatprep.subr.mxu0 0.0
    %2580 = vmatpush1.msra.mxu0 0.0
    %2581 = vmatprep.subr.mxu0 0.0
    %2582 = vmatpush1.msra.mxu0 0.0
    %2583 = vmatprep.mubr.f32.mxu0 0.0
    %2584 = vmatmul.mubr.f32.gmra.mrb[0].mxu0 %v2328
    %v2585 = vpop.f32.mrb[0].mxu0
    %v2586 = vadd.f32 0.0, %v2585
    %v2587 = vpop.f32.mrb[0].mxu0
    %2588 = vdwg.mxu0
    %s2589 = scalar_lea.vmem %s13, 384
    %v2590 = vld [vmem:[%s2589] sm:$0xff]
    %v2591 = vld [vmem:[%s2589 + $0x8] sm:$0xff]
    %v2592 = vld [vmem:[%s2589 + $0x10] sm:$0xff]
    %v2593 = vld [vmem:[%s2589 + $0x18] sm:$0xff]
    %v2594 = vld [vmem:[%s2589 + $0x20] sm:$0xff]
    %v2595 = vld [vmem:[%s2589 + $0x28] sm:$0xff]
    %v2596 = vld [vmem:[%s2589 + $0x30] sm:$0xff]
    %v2597 = vld [vmem:[%s2589 + $0x38] sm:$0xff]
    %v2598 = vld [vmem:[%s2589 + $0x40] sm:$0xff]
    %v2599 = vld [vmem:[%s2589 + $0x48] sm:$0xff]
    %v2600 = vld [vmem:[%s2589 + $0x50] sm:$0xff]
    %v2601 = vld [vmem:[%s2589 + $0x58] sm:$0xff]
    %v2602 = vld [vmem:[%s2589 + $0x60] sm:$0xff]
    %v2603 = vld [vmem:[%s2589 + $0x68] sm:$0xff]
    %v2604 = vld [vmem:[%s2589 + $0x70] sm:$0xff]
    %v2605 = vld [vmem:[%s2589 + $0x78] sm:$0xff]
    %2606 = vmatprep.subr.mxu0 0.0
    %2607 = vmatpush1.msra.mxu0 %v2590
    %2608 = vmatprep.subr.mxu0 0.0
    %2609 = vmatpush1.msra.mxu0 %v2591
    %2610 = vmatprep.subr.mxu0 0.0
    %2611 = vmatpush1.msra.mxu0 %v2592
    %2612 = vmatprep.subr.mxu0 0.0
    %2613 = vmatpush1.msra.mxu0 %v2593
    %2614 = vmatprep.subr.mxu0 0.0
    %2615 = vmatpush1.msra.mxu0 %v2594
    %2616 = vmatprep.subr.mxu0 0.0
    %2617 = vmatpush1.msra.mxu0 %v2595
    %2618 = vmatprep.subr.mxu0 0.0
    %2619 = vmatpush1.msra.mxu0 %v2596
    %2620 = vmatprep.subr.mxu0 0.0
    %2621 = vmatpush1.msra.mxu0 %v2597
    %2622 = vmatprep.subr.mxu0 0.0
    %2623 = vmatpush1.msra.mxu0 %v2598
    %2624 = vmatprep.subr.mxu0 0.0
    %2625 = vmatpush1.msra.mxu0 %v2599
    %2626 = vmatprep.subr.mxu0 0.0
    %2627 = vmatpush1.msra.mxu0 %v2600
    %2628 = vmatprep.subr.mxu0 0.0
    %2629 = vmatpush1.msra.mxu0 %v2601
    %2630 = vmatprep.subr.mxu0 0.0
    %2631 = vmatpush1.msra.mxu0 %v2602
    %2632 = vmatprep.subr.mxu0 0.0
    %2633 = vmatpush1.msra.mxu0 %v2603
    %2634 = vmatprep.subr.mxu0 0.0
    %2635 = vmatpush1.msra.mxu0 %v2604
    %2636 = vmatprep.subr.mxu0 0.0
    %2637 = vmatpush1.msra.mxu0 %v2605
    %2638 = vmatprep.subr.mxu0 0.0
    %2639 = vmatpush1.msra.mxu0 0.0
    %2640 = vmatprep.subr.mxu0 0.0
    %2641 = vmatpush1.msra.mxu0 0.0
    %2642 = vmatprep.subr.mxu0 0.0
    %2643 = vmatpush1.msra.mxu0 0.0
    %2644 = vmatprep.subr.mxu0 0.0
    %2645 = vmatpush1.msra.mxu0 0.0
    %2646 = vmatprep.subr.mxu0 0.0
    %2647 = vmatpush1.msra.mxu0 0.0
    %2648 = vmatprep.subr.mxu0 0.0
    %2649 = vmatpush1.msra.mxu0 0.0
    %2650 = vmatprep.subr.mxu0 0.0
    %2651 = vmatpush1.msra.mxu0 0.0
    %2652 = vmatprep.subr.mxu0 0.0
    %2653 = vmatpush1.msra.mxu0 0.0
    %2654 = vmatprep.subr.mxu0 0.0
    %2655 = vmatpush1.msra.mxu0 0.0
    %2656 = vmatprep.subr.mxu0 0.0
    %2657 = vmatpush1.msra.mxu0 0.0
    %2658 = vmatprep.subr.mxu0 0.0
    %2659 = vmatpush1.msra.mxu0 0.0
    %2660 = vmatprep.subr.mxu0 0.0
    %2661 = vmatpush1.msra.mxu0 0.0
    %2662 = vmatprep.subr.mxu0 0.0
    %2663 = vmatpush1.msra.mxu0 0.0
    %2664 = vmatprep.subr.mxu0 0.0
    %2665 = vmatpush1.msra.mxu0 0.0
    %2666 = vmatprep.subr.mxu0 0.0
    %2667 = vmatpush1.msra.mxu0 0.0
    %2668 = vmatprep.subr.mxu0 0.0
    %2669 = vmatpush1.msra.mxu0 0.0
    %2670 = vmatprep.mubr.f32.mxu0 0.0
    %2671 = vmatmul.mubr.f32.gmra.mrb[0].mxu0 %v2328
    %v2672 = vpop.f32.mrb[0].mxu0
    %v2673 = vadd.f32 0.0, %v2672
    %v2674 = vpop.f32.mrb[0].mxu0
    %2675 = vdwg.mxu0
    %s2676 = scalar_lea.vmem %s13, 512
    %v2677 = vld [vmem:[%s2676] sm:$0xff]
    %v2678 = vld [vmem:[%s2676 + $0x8] sm:$0xff]
    %v2679 = vld [vmem:[%s2676 + $0x10] sm:$0xff]
    %v2680 = vld [vmem:[%s2676 + $0x18] sm:$0xff]
    %v2681 = vld [vmem:[%s2676 + $0x20] sm:$0xff]
    %v2682 = vld [vmem:[%s2676 + $0x28] sm:$0xff]
    %v2683 = vld [vmem:[%s2676 + $0x30] sm:$0xff]
    %v2684 = vld [vmem:[%s2676 + $0x38] sm:$0xff]
    %v2685 = vld [vmem:[%s2676 + $0x40] sm:$0xff]
    %v2686 = vld [vmem:[%s2676 + $0x48] sm:$0xff]
    %v2687 = vld [vmem:[%s2676 + $0x50] sm:$0xff]
    %v2688 = vld [vmem:[%s2676 + $0x58] sm:$0xff]
    %v2689 = vld [vmem:[%s2676 + $0x60] sm:$0xff]
    %v2690 = vld [vmem:[%s2676 + $0x68] sm:$0xff]
    %v2691 = vld [vmem:[%s2676 + $0x70] sm:$0xff]
    %v2692 = vld [vmem:[%s2676 + $0x78] sm:$0xff]
    %2693 = vmatprep.subr.mxu0 0.0
    %2694 = vmatpush1.msra.mxu0 %v2677
    %2695 = vmatprep.subr.mxu0 0.0
    %2696 = vmatpush1.msra.mxu0 %v2678
    %2697 = vmatprep.subr.mxu0 0.0
    %2698 = vmatpush1.msra.mxu0 %v2679
    %2699 = vmatprep.subr.mxu0 0.0
    %2700 = vmatpush1.msra.mxu0 %v2680
    %2701 = vmatprep.subr.mxu0 0.0
    %2702 = vmatpush1.msra.mxu0 %v2681
    %2703 = vmatprep.subr.mxu0 0.0
    %2704 = vmatpush1.msra.mxu0 %v2682
    %2705 = vmatprep.subr.mxu0 0.0
    %2706 = vmatpush1.msra.mxu0 %v2683
    %2707 = vmatprep.subr.mxu0 0.0
    %2708 = vmatpush1.msra.mxu0 %v2684
    %2709 = vmatprep.subr.mxu0 0.0
    %2710 = vmatpush1.msra.mxu0 %v2685
    %2711 = vmatprep.subr.mxu0 0.0
    %2712 = vmatpush1.msra.mxu0 %v2686
    %2713 = vmatprep.subr.mxu0 0.0
    %2714 = vmatpush1.msra.mxu0 %v2687
    %2715 = vmatprep.subr.mxu0 0.0
    %2716 = vmatpush1.msra.mxu0 %v2688
    %2717 = vmatprep.subr.mxu0 0.0
    %2718 = vmatpush1.msra.mxu0 %v2689
    %2719 = vmatprep.subr.mxu0 0.0
    %2720 = vmatpush1.msra.mxu0 %v2690
    %2721 = vmatprep.subr.mxu0 0.0
    %2722 = vmatpush1.msra.mxu0 %v2691
    %2723 = vmatprep.subr.mxu0 0.0
    %2724 = vmatpush1.msra.mxu0 %v2692
    %2725 = vmatprep.subr.mxu0 0.0
    %2726 = vmatpush1.msra.mxu0 0.0
    %2727 = vmatprep.subr.mxu0 0.0
    %2728 = vmatpush1.msra.mxu0 0.0
    %2729 = vmatprep.subr.mxu0 0.0
    %2730 = vmatpush1.msra.mxu0 0.0
    %2731 = vmatprep.subr.mxu0 0.0
    %2732 = vmatpush1.msra.mxu0 0.0
    %2733 = vmatprep.subr.mxu0 0.0
    %2734 = vmatpush1.msra.mxu0 0.0
    %2735 = vmatprep.subr.mxu0 0.0
    %2736 = vmatpush1.msra.mxu0 0.0
    %2737 = vmatprep.subr.mxu0 0.0
    %2738 = vmatpush1.msra.mxu0 0.0
    %2739 = vmatprep.subr.mxu0 0.0
    %2740 = vmatpush1.msra.mxu0 0.0
    %2741 = vmatprep.subr.mxu0 0.0
    %2742 = vmatpush1.msra.mxu0 0.0
    %2743 = vmatprep.subr.mxu0 0.0
    %2744 = vmatpush1.msra.mxu0 0.0
    %2745 = vmatprep.subr.mxu0 0.0
    %2746 = vmatpush1.msra.mxu0 0.0
    %2747 = vmatprep.subr.mxu0 0.0
    %2748 = vmatpush1.msra.mxu0 0.0
    %2749 = vmatprep.subr.mxu0 0.0
    %2750 = vmatpush1.msra.mxu0 0.0
    %2751 = vmatprep.subr.mxu0 0.0
    %2752 = vmatpush1.msra.mxu0 0.0
    %2753 = vmatprep.subr.mxu0 0.0
    %2754 = vmatpush1.msra.mxu0 0.0
    %2755 = vmatprep.subr.mxu0 0.0
    %2756 = vmatpush1.msra.mxu0 0.0
    %2757 = vmatprep.mubr.f32.mxu0 0.0
    %2758 = vmatmul.mubr.f32.gmra.mrb[0].mxu0 %v2328
    %v2759 = vpop.f32.mrb[0].mxu0
    %v2760 = vadd.f32 0.0, %v2759
    %v2761 = vpop.f32.mrb[0].mxu0
    %2762 = vdwg.mxu0
    %s2763 = scalar_lea.vmem %s13, 640
    %v2764 = vld [vmem:[%s2763] sm:$0xff]
    %v2765 = vld [vmem:[%s2763 + $0x8] sm:$0xff]
    %v2766 = vld [vmem:[%s2763 + $0x10] sm:$0xff]
    %v2767 = vld [vmem:[%s2763 + $0x18] sm:$0xff]
    %v2768 = vld [vmem:[%s2763 + $0x20] sm:$0xff]
    %v2769 = vld [vmem:[%s2763 + $0x28] sm:$0xff]
    %v2770 = vld [vmem:[%s2763 + $0x30] sm:$0xff]
    %v2771 = vld [vmem:[%s2763 + $0x38] sm:$0xff]
    %v2772 = vld [vmem:[%s2763 + $0x40] sm:$0xff]
    %v2773 = vld [vmem:[%s2763 + $0x48] sm:$0xff]
    %v2774 = vld [vmem:[%s2763 + $0x50] sm:$0xff]
    %v2775 = vld [vmem:[%s2763 + $0x58] sm:$0xff]
    %v2776 = vld [vmem:[%s2763 + $0x60] sm:$0xff]
    %v2777 = vld [vmem:[%s2763 + $0x68] sm:$0xff]
    %v2778 = vld [vmem:[%s2763 + $0x70] sm:$0xff]
    %v2779 = vld [vmem:[%s2763 + $0x78] sm:$0xff]
    %2780 = vmatprep.subr.mxu0 0.0
    %2781 = vmatpush1.msra.mxu0 %v2764
    %2782 = vmatprep.subr.mxu0 0.0
    %2783 = vmatpush1.msra.mxu0 %v2765
    %2784 = vmatprep.subr.mxu0 0.0
    %2785 = vmatpush1.msra.mxu0 %v2766
    %2786 = vmatprep.subr.mxu0 0.0
    %2787 = vmatpush1.msra.mxu0 %v2767
    %2788 = vmatprep.subr.mxu0 0.0
    %2789 = vmatpush1.msra.mxu0 %v2768
    %2790 = vmatprep.subr.mxu0 0.0
    %2791 = vmatpush1.msra.mxu0 %v2769
    %2792 = vmatprep.subr.mxu0 0.0
    %2793 = vmatpush1.msra.mxu0 %v2770
    %2794 = vmatprep.subr.mxu0 0.0
    %2795 = vmatpush1.msra.mxu0 %v2771
    %2796 = vmatprep.subr.mxu0 0.0
    %2797 = vmatpush1.msra.mxu0 %v2772
    %2798 = vmatprep.subr.mxu0 0.0
    %2799 = vmatpush1.msra.mxu0 %v2773
    %2800 = vmatprep.subr.mxu0 0.0
    %2801 = vmatpush1.msra.mxu0 %v2774
    %2802 = vmatprep.subr.mxu0 0.0
    %2803 = vmatpush1.msra.mxu0 %v2775
    %2804 = vmatprep.subr.mxu0 0.0
    %2805 = vmatpush1.msra.mxu0 %v2776
    %2806 = vmatprep.subr.mxu0 0.0
    %2807 = vmatpush1.msra.mxu0 %v2777
    %2808 = vmatprep.subr.mxu0 0.0
    %2809 = vmatpush1.msra.mxu0 %v2778
    %2810 = vmatprep.subr.mxu0 0.0
    %2811 = vmatpush1.msra.mxu0 %v2779
    %2812 = vmatprep.subr.mxu0 0.0
    %2813 = vmatpush1.msra.mxu0 0.0
    %2814 = vmatprep.subr.mxu0 0.0
    %2815 = vmatpush1.msra.mxu0 0.0
    %2816 = vmatprep.subr.mxu0 0.0
    %2817 = vmatpush1.msra.mxu0 0.0
    %2818 = vmatprep.subr.mxu0 0.0
    %2819 = vmatpush1.msra.mxu0 0.0
    %2820 = vmatprep.subr.mxu0 0.0
    %2821 = vmatpush1.msra.mxu0 0.0
    %2822 = vmatprep.subr.mxu0 0.0
    %2823 = vmatpush1.msra.mxu0 0.0
    %2824 = vmatprep.subr.mxu0 0.0
    %2825 = vmatpush1.msra.mxu0 0.0
    %2826 = vmatprep.subr.mxu0 0.0
    %2827 = vmatpush1.msra.mxu0 0.0
    %2828 = vmatprep.subr.mxu0 0.0
    %2829 = vmatpush1.msra.mxu0 0.0
    %2830 = vmatprep.subr.mxu0 0.0
    %2831 = vmatpush1.msra.mxu0 0.0
    %2832 = vmatprep.subr.mxu0 0.0
    %2833 = vmatpush1.msra.mxu0 0.0
    %2834 = vmatprep.subr.mxu0 0.0
    %2835 = vmatpush1.msra.mxu0 0.0
    %2836 = vmatprep.subr.mxu0 0.0
    %2837 = vmatpush1.msra.mxu0 0.0
    %2838 = vmatprep.subr.mxu0 0.0
    %2839 = vmatpush1.msra.mxu0 0.0
    %2840 = vmatprep.subr.mxu0 0.0
    %2841 = vmatpush1.msra.mxu0 0.0
    %2842 = vmatprep.subr.mxu0 0.0
    %2843 = vmatpush1.msra.mxu0 0.0
    %2844 = vmatprep.mubr.f32.mxu0 0.0
    %2845 = vmatmul.mubr.f32.gmra.mrb[0].mxu0 %v2328
    %v2846 = vpop.f32.mrb[0].mxu0
    %v2847 = vadd.f32 0.0, %v2846
    %v2848 = vpop.f32.mrb[0].mxu0
    %2849 = vdwg.mxu0
    %s2850 = scalar_lea.vmem %s13, 768
    %v2851 = vld [vmem:[%s2850] sm:$0xff]
    %v2852 = vld [vmem:[%s2850 + $0x8] sm:$0xff]
    %v2853 = vld [vmem:[%s2850 + $0x10] sm:$0xff]
    %v2854 = vld [vmem:[%s2850 + $0x18] sm:$0xff]
    %v2855 = vld [vmem:[%s2850 + $0x20] sm:$0xff]
    %v2856 = vld [vmem:[%s2850 + $0x28] sm:$0xff]
    %v2857 = vld [vmem:[%s2850 + $0x30] sm:$0xff]
    %v2858 = vld [vmem:[%s2850 + $0x38] sm:$0xff]
    %v2859 = vld [vmem:[%s2850 + $0x40] sm:$0xff]
    %v2860 = vld [vmem:[%s2850 + $0x48] sm:$0xff]
    %v2861 = vld [vmem:[%s2850 + $0x50] sm:$0xff]
    %v2862 = vld [vmem:[%s2850 + $0x58] sm:$0xff]
    %v2863 = vld [vmem:[%s2850 + $0x60] sm:$0xff]
    %v2864 = vld [vmem:[%s2850 + $0x68] sm:$0xff]
    %v2865 = vld [vmem:[%s2850 + $0x70] sm:$0xff]
    %v2866 = vld [vmem:[%s2850 + $0x78] sm:$0xff]
    %2867 = vmatprep.subr.mxu0 0.0
    %2868 = vmatpush1.msra.mxu0 %v2851
    %2869 = vmatprep.subr.mxu0 0.0
    %2870 = vmatpush1.msra.mxu0 %v2852
    %2871 = vmatprep.subr.mxu0 0.0
    %2872 = vmatpush1.msra.mxu0 %v2853
    %2873 = vmatprep.subr.mxu0 0.0
    %2874 = vmatpush1.msra.mxu0 %v2854
    %2875 = vmatprep.subr.mxu0 0.0
    %2876 = vmatpush1.msra.mxu0 %v2855
    %2877 = vmatprep.subr.mxu0 0.0
    %2878 = vmatpush1.msra.mxu0 %v2856
    %2879 = vmatprep.subr.mxu0 0.0
    %2880 = vmatpush1.msra.mxu0 %v2857
    %2881 = vmatprep.subr.mxu0 0.0
    %2882 = vmatpush1.msra.mxu0 %v2858
    %2883 = vmatprep.subr.mxu0 0.0
    %2884 = vmatpush1.msra.mxu0 %v2859
    %2885 = vmatprep.subr.mxu0 0.0
    %2886 = vmatpush1.msra.mxu0 %v2860
    %2887 = vmatprep.subr.mxu0 0.0
    %2888 = vmatpush1.msra.mxu0 %v2861
    %2889 = vmatprep.subr.mxu0 0.0
    %2890 = vmatpush1.msra.mxu0 %v2862
    %2891 = vmatprep.subr.mxu0 0.0
    %2892 = vmatpush1.msra.mxu0 %v2863
    %2893 = vmatprep.subr.mxu0 0.0
    %2894 = vmatpush1.msra.mxu0 %v2864
    %2895 = vmatprep.subr.mxu0 0.0
    %2896 = vmatpush1.msra.mxu0 %v2865
    %2897 = vmatprep.subr.mxu0 0.0
    %2898 = vmatpush1.msra.mxu0 %v2866
    %2899 = vmatprep.subr.mxu0 0.0
    %2900 = vmatpush1.msra.mxu0 0.0
    %2901 = vmatprep.subr.mxu0 0.0
    %2902 = vmatpush1.msra.mxu0 0.0
    %2903 = vmatprep.subr.mxu0 0.0
    %2904 = vmatpush1.msra.mxu0 0.0
    %2905 = vmatprep.subr.mxu0 0.0
    %2906 = vmatpush1.msra.mxu0 0.0
    %2907 = vmatprep.subr.mxu0 0.0
    %2908 = vmatpush1.msra.mxu0 0.0
    %2909 = vmatprep.subr.mxu0 0.0
    %2910 = vmatpush1.msra.mxu0 0.0
    %2911 = vmatprep.subr.mxu0 0.0
    %2912 = vmatpush1.msra.mxu0 0.0
    %2913 = vmatprep.subr.mxu0 0.0
    %2914 = vmatpush1.msra.mxu0 0.0
    %2915 = vmatprep.subr.mxu0 0.0
    %2916 = vmatpush1.msra.mxu0 0.0
    %2917 = vmatprep.subr.mxu0 0.0
    %2918 = vmatpush1.msra.mxu0 0.0
    %2919 = vmatprep.subr.mxu0 0.0
    %2920 = vmatpush1.msra.mxu0 0.0
    %2921 = vmatprep.subr.mxu0 0.0
    %2922 = vmatpush1.msra.mxu0 0.0
    %2923 = vmatprep.subr.mxu0 0.0
    %2924 = vmatpush1.msra.mxu0 0.0
    %2925 = vmatprep.subr.mxu0 0.0
    %2926 = vmatpush1.msra.mxu0 0.0
    %2927 = vmatprep.subr.mxu0 0.0
    %2928 = vmatpush1.msra.mxu0 0.0
    %2929 = vmatprep.subr.mxu0 0.0
    %2930 = vmatpush1.msra.mxu0 0.0
    %2931 = vmatprep.mubr.f32.mxu0 0.0
    %2932 = vmatmul.mubr.f32.gmra.mrb[0].mxu0 %v2328
    %v2933 = vpop.f32.mrb[0].mxu0
    %v2934 = vadd.f32 0.0, %v2933
    %v2935 = vpop.f32.mrb[0].mxu0
    %2936 = vdwg.mxu0
    %s2937 = scalar_lea.vmem %s13, 896
    %v2938 = vld [vmem:[%s2937] sm:$0xff]
    %v2939 = vld [vmem:[%s2937 + $0x8] sm:$0xff]
    %v2940 = vld [vmem:[%s2937 + $0x10] sm:$0xff]
    %v2941 = vld [vmem:[%s2937 + $0x18] sm:$0xff]
    %v2942 = vld [vmem:[%s2937 + $0x20] sm:$0xff]
    %v2943 = vld [vmem:[%s2937 + $0x28] sm:$0xff]
    %v2944 = vld [vmem:[%s2937 + $0x30] sm:$0xff]
    %v2945 = vld [vmem:[%s2937 + $0x38] sm:$0xff]
    %v2946 = vld [vmem:[%s2937 + $0x40] sm:$0xff]
    %v2947 = vld [vmem:[%s2937 + $0x48] sm:$0xff]
    %v2948 = vld [vmem:[%s2937 + $0x50] sm:$0xff]
    %v2949 = vld [vmem:[%s2937 + $0x58] sm:$0xff]
    %v2950 = vld [vmem:[%s2937 + $0x60] sm:$0xff]
    %v2951 = vld [vmem:[%s2937 + $0x68] sm:$0xff]
    %v2952 = vld [vmem:[%s2937 + $0x70] sm:$0xff]
    %v2953 = vld [vmem:[%s2937 + $0x78] sm:$0xff]
    %2954 = vmatprep.subr.mxu0 0.0
    %2955 = vmatpush1.msra.mxu0 %v2938
    %2956 = vmatprep.subr.mxu0 0.0
    %2957 = vmatpush1.msra.mxu0 %v2939
    %2958 = vmatprep.subr.mxu0 0.0
    %2959 = vmatpush1.msra.mxu0 %v2940
    %2960 = vmatprep.subr.mxu0 0.0
    %2961 = vmatpush1.msra.mxu0 %v2941
    %2962 = vmatprep.subr.mxu0 0.0
    %2963 = vmatpush1.msra.mxu0 %v2942
    %2964 = vmatprep.subr.mxu0 0.0
    %2965 = vmatpush1.msra.mxu0 %v2943
    %2966 = vmatprep.subr.mxu0 0.0
    %2967 = vmatpush1.msra.mxu0 %v2944
    %2968 = vmatprep.subr.mxu0 0.0
    %2969 = vmatpush1.msra.mxu0 %v2945
    %2970 = vmatprep.subr.mxu0 0.0
    %2971 = vmatpush1.msra.mxu0 %v2946
    %2972 = vmatprep.subr.mxu0 0.0
    %2973 = vmatpush1.msra.mxu0 %v2947
    %2974 = vmatprep.subr.mxu0 0.0
    %2975 = vmatpush1.msra.mxu0 %v2948
    %2976 = vmatprep.subr.mxu0 0.0
    %2977 = vmatpush1.msra.mxu0 %v2949
    %2978 = vmatprep.subr.mxu0 0.0
    %2979 = vmatpush1.msra.mxu0 %v2950
    %2980 = vmatprep.subr.mxu0 0.0
    %2981 = vmatpush1.msra.mxu0 %v2951
    %2982 = vmatprep.subr.mxu0 0.0
    %2983 = vmatpush1.msra.mxu0 %v2952
    %2984 = vmatprep.subr.mxu0 0.0
    %2985 = vmatpush1.msra.mxu0 %v2953
    %2986 = vmatprep.subr.mxu0 0.0
    %2987 = vmatpush1.msra.mxu0 0.0
    %2988 = vmatprep.subr.mxu0 0.0
    %2989 = vmatpush1.msra.mxu0 0.0
    %2990 = vmatprep.subr.mxu0 0.0
    %2991 = vmatpush1.msra.mxu0 0.0
    %2992 = vmatprep.subr.mxu0 0.0
    %2993 = vmatpush1.msra.mxu0 0.0
    %2994 = vmatprep.subr.mxu0 0.0
    %2995 = vmatpush1.msra.mxu0 0.0
    %2996 = vmatprep.subr.mxu0 0.0
    %2997 = vmatpush1.msra.mxu0 0.0
    %2998 = vmatprep.subr.mxu0 0.0
    %2999 = vmatpush1.msra.mxu0 0.0
    %3000 = vmatprep.subr.mxu0 0.0
    %3001 = vmatpush1.msra.mxu0 0.0
    %3002 = vmatprep.subr.mxu0 0.0
    %3003 = vmatpush1.msra.mxu0 0.0
    %3004 = vmatprep.subr.mxu0 0.0
    %3005 = vmatpush1.msra.mxu0 0.0
    %3006 = vmatprep.subr.mxu0 0.0
    %3007 = vmatpush1.msra.mxu0 0.0
    %3008 = vmatprep.subr.mxu0 0.0
    %3009 = vmatpush1.msra.mxu0 0.0
    %3010 = vmatprep.subr.mxu0 0.0
    %3011 = vmatpush1.msra.mxu0 0.0
    %3012 = vmatprep.subr.mxu0 0.0
    %3013 = vmatpush1.msra.mxu0 0.0
    %3014 = vmatprep.subr.mxu0 0.0
    %3015 = vmatpush1.msra.mxu0 0.0
    %3016 = vmatprep.subr.mxu0 0.0
    %3017 = vmatpush1.msra.mxu0 0.0
    %3018 = vmatprep.mubr.f32.mxu0 0.0
    %3019 = vmatmul.mubr.f32.gmra.mrb[0].mxu0 %v2328
    %v3020 = vpop.f32.mrb[0].mxu0
    %v3021 = vadd.f32 0.0, %v3020
    %v3022 = vpop.f32.mrb[0].mxu0
    %3023 = vdwg.mxu0
    %s3024 = scalar_lea.vmem %s13, 1024
    %v3025 = vld [vmem:[%s3024] sm:$0xff]
    %v3026 = vld [vmem:[%s3024 + $0x8] sm:$0xff]
    %v3027 = vld [vmem:[%s3024 + $0x10] sm:$0xff]
    %v3028 = vld [vmem:[%s3024 + $0x18] sm:$0xff]
    %v3029 = vld [vmem:[%s3024 + $0x20] sm:$0xff]
    %v3030 = vld [vmem:[%s3024 + $0x28] sm:$0xff]
    %v3031 = vld [vmem:[%s3024 + $0x30] sm:$0xff]
    %v3032 = vld [vmem:[%s3024 + $0x38] sm:$0xff]
    %v3033 = vld [vmem:[%s3024 + $0x40] sm:$0xff]
    %v3034 = vld [vmem:[%s3024 + $0x48] sm:$0xff]
    %v3035 = vld [vmem:[%s3024 + $0x50] sm:$0xff]
    %v3036 = vld [vmem:[%s3024 + $0x58] sm:$0xff]
    %v3037 = vld [vmem:[%s3024 + $0x60] sm:$0xff]
    %v3038 = vld [vmem:[%s3024 + $0x68] sm:$0xff]
    %v3039 = vld [vmem:[%s3024 + $0x70] sm:$0xff]
    %v3040 = vld [vmem:[%s3024 + $0x78] sm:$0xff]
    %3041 = vmatprep.subr.mxu0 0.0
    %3042 = vmatpush1.msra.mxu0 %v3025
    %3043 = vmatprep.subr.mxu0 0.0
    %3044 = vmatpush1.msra.mxu0 %v3026
    %3045 = vmatprep.subr.mxu0 0.0
    %3046 = vmatpush1.msra.mxu0 %v3027
    %3047 = vmatprep.subr.mxu0 0.0
    %3048 = vmatpush1.msra.mxu0 %v3028
    %3049 = vmatprep.subr.mxu0 0.0
    %3050 = vmatpush1.msra.mxu0 %v3029
    %3051 = vmatprep.subr.mxu0 0.0
    %3052 = vmatpush1.msra.mxu0 %v3030
    %3053 = vmatprep.subr.mxu0 0.0
    %3054 = vmatpush1.msra.mxu0 %v3031
    %3055 = vmatprep.subr.mxu0 0.0
    %3056 = vmatpush1.msra.mxu0 %v3032
    %3057 = vmatprep.subr.mxu0 0.0
    %3058 = vmatpush1.msra.mxu0 %v3033
    %3059 = vmatprep.subr.mxu0 0.0
    %3060 = vmatpush1.msra.mxu0 %v3034
    %3061 = vmatprep.subr.mxu0 0.0
    %3062 = vmatpush1.msra.mxu0 %v3035
    %3063 = vmatprep.subr.mxu0 0.0
    %3064 = vmatpush1.msra.mxu0 %v3036
    %3065 = vmatprep.subr.mxu0 0.0
    %3066 = vmatpush1.msra.mxu0 %v3037
    %3067 = vmatprep.subr.mxu0 0.0
    %3068 = vmatpush1.msra.mxu0 %v3038
    %3069 = vmatprep.subr.mxu0 0.0
    %3070 = vmatpush1.msra.mxu0 %v3039
    %3071 = vmatprep.subr.mxu0 0.0
    %3072 = vmatpush1.msra.mxu0 %v3040
    %3073 = vmatprep.subr.mxu0 0.0
    %3074 = vmatpush1.msra.mxu0 0.0
    %3075 = vmatprep.subr.mxu0 0.0
    %3076 = vmatpush1.msra.mxu0 0.0
    %3077 = vmatprep.subr.mxu0 0.0
    %3078 = vmatpush1.msra.mxu0 0.0
    %3079 = vmatprep.subr.mxu0 0.0
    %3080 = vmatpush1.msra.mxu0 0.0
    %3081 = vmatprep.subr.mxu0 0.0
    %3082 = vmatpush1.msra.mxu0 0.0
    %3083 = vmatprep.subr.mxu0 0.0
    %3084 = vmatpush1.msra.mxu0 0.0
    %3085 = vmatprep.subr.mxu0 0.0
    %3086 = vmatpush1.msra.mxu0 0.0
    %3087 = vmatprep.subr.mxu0 0.0
    %3088 = vmatpush1.msra.mxu0 0.0
    %3089 = vmatprep.subr.mxu0 0.0
    %3090 = vmatpush1.msra.mxu0 0.0
    %3091 = vmatprep.subr.mxu0 0.0
    %3092 = vmatpush1.msra.mxu0 0.0
    %3093 = vmatprep.subr.mxu0 0.0
    %3094 = vmatpush1.msra.mxu0 0.0
    %3095 = vmatprep.subr.mxu0 0.0
    %3096 = vmatpush1.msra.mxu0 0.0
    %3097 = vmatprep.subr.mxu0 0.0
    %3098 = vmatpush1.msra.mxu0 0.0
    %3099 = vmatprep.subr.mxu0 0.0
    %3100 = vmatpush1.msra.mxu0 0.0
    %3101 = vmatprep.subr.mxu0 0.0
    %3102 = vmatpush1.msra.mxu0 0.0
    %3103 = vmatprep.subr.mxu0 0.0
    %3104 = vmatpush1.msra.mxu0 0.0
    %3105 = vmatprep.mubr.f32.mxu0 0.0
    %3106 = vmatmul.mubr.f32.gmra.mrb[0].mxu0 %v2328
    %v3107 = vpop.f32.mrb[0].mxu0
    %v3108 = vadd.f32 0.0, %v3107
    %v3109 = vpop.f32.mrb[0].mxu0
    %3110 = vdwg.mxu0
    %v3111 = vld [vmem:[#allocation8] sm:$0xff]
    %v3112 = vld [vmem:[#allocation8 + $0x8] sm:$0xff]
    %vm3113 = vcmask 588800
    %v3115 = vsel %vm3113, %v3111, 0
    %v3118 = vsel %vm3113, %v3112, 0
    %3120 = vmatprep.subr.mxu0 0.0
    %3121 = vmatpush1.msra.mxu0 %v2412
    %3122 = vmatprep.subr.mxu0 0.0
    %3123 = vmatpush1.msra.mxu0 %v2499
    %3124 = vmatprep.subr.mxu0 0.0
    %3125 = vmatpush1.msra.mxu0 %v2586
    %3126 = vmatprep.subr.mxu0 0.0
    %3127 = vmatpush1.msra.mxu0 %v2673
    %3128 = vmatprep.subr.mxu0 0.0
    %3129 = vmatpush1.msra.mxu0 %v2760
    %3130 = vmatprep.subr.mxu0 0.0
    %3131 = vmatpush1.msra.mxu0 %v2847
    %3132 = vmatprep.subr.mxu0 0.0
    %3133 = vmatpush1.msra.mxu0 %v2934
    %3134 = vmatprep.subr.mxu0 0.0
    %3135 = vmatpush1.msra.mxu0 %v3021
    %3136 = vmatprep.subr.mxu0 0.0
    %3137 = vmatpush1.msra.mxu0 %v3108
    %3138 = vmatprep.subr.mxu0 0.0
    %3139 = vmatpush1.msra.mxu0 0.0
    %3140 = vmatprep.subr.mxu0 0.0
    %3141 = vmatpush1.msra.mxu0 0.0
    %3142 = vmatprep.subr.mxu0 0.0
    %3143 = vmatpush1.msra.mxu0 0.0
    %3144 = vmatprep.subr.mxu0 0.0
    %3145 = vmatpush1.msra.mxu0 0.0
    %3146 = vmatprep.subr.mxu0 0.0
    %3147 = vmatpush1.msra.mxu0 0.0
    %3148 = vmatprep.subr.mxu0 0.0
    %3149 = vmatpush1.msra.mxu0 0.0
    %3150 = vmatprep.subr.mxu0 0.0
    %3151 = vmatpush1.msra.mxu0 0.0
    %3152 = vmatprep.subr.mxu0 0.0
    %3153 = vmatpush1.msra.mxu0 0.0
    %3154 = vmatprep.subr.mxu0 0.0
    %3155 = vmatpush1.msra.mxu0 0.0
    %3156 = vmatprep.subr.mxu0 0.0
    %3157 = vmatpush1.msra.mxu0 0.0
    %3158 = vmatprep.subr.mxu0 0.0
    %3159 = vmatpush1.msra.mxu0 0.0
    %3160 = vmatprep.subr.mxu0 0.0
    %3161 = vmatpush1.msra.mxu0 0.0
    %3162 = vmatprep.subr.mxu0 0.0
    %3163 = vmatpush1.msra.mxu0 0.0
    %3164 = vmatprep.subr.mxu0 0.0
    %3165 = vmatpush1.msra.mxu0 0.0
    %3166 = vmatprep.subr.mxu0 0.0
    %3167 = vmatpush1.msra.mxu0 0.0
    %3168 = vmatprep.subr.mxu0 0.0
    %3169 = vmatpush1.msra.mxu0 0.0
    %3170 = vmatprep.subr.mxu0 0.0
    %3171 = vmatpush1.msra.mxu0 0.0
    %3172 = vmatprep.subr.mxu0 0.0
    %3173 = vmatpush1.msra.mxu0 0.0
    %3174 = vmatprep.subr.mxu0 0.0
    %3175 = vmatpush1.msra.mxu0 0.0
    %3176 = vmatprep.subr.mxu0 0.0
    %3177 = vmatpush1.msra.mxu0 0.0
    %3178 = vmatprep.subr.mxu0 0.0
    %3179 = vmatpush1.msra.mxu0 0.0
    %3180 = vmatprep.subr.mxu0 0.0
    %3181 = vmatpush1.msra.mxu0 0.0
    %3182 = vmatprep.subr.mxu0 0.0
    %3183 = vmatpush1.msra.mxu0 0.0
    %3184 = vmatprep.mubr.f32.mxu0 0.0
    %3185 = vmatmul.mubr.f32.gmra.mrb[0].mxu0 %v3115
    %v3186 = vpop.f32.mrb[0].mxu0
    %v3187 = vadd.f32 0.0, %v3186
    %v3188 = vpop.f32.mrb[0].mxu0
    %3189 = vmatprep.mubr.f32.mxu0 0.0
    %3190 = vmatmul.mubr.f32.gmra.mrb[0].mxu0 %v3118
    %v3191 = vpop.f32.mrb[0].mxu0
    %v3192 = vadd.f32 0.0, %v3191
    %v3193 = vpop.f32.mrb[0].mxu0
    %3194 = vdwg.mxu0
    %v3195 = vld [vmem:[%s17] sm:$0xff]
    %v3196 = vld [vmem:[%s17 + $0x8] sm:$0xff]
    %v3197 = vld [vmem:[%s19] sm:$0xff]
    %v3198 = vld [vmem:[%s19 + $0x8] sm:$0xff]
    %vm3199 = vcmask 261120
    %v3200 = vsel %vm3199, %v3187, 0.0
    %3201 = vadd.xlane.f32.xlu0 %v3200
    %v3202 = vpop.xlane.xlu0 %3201
    %v3203 = vsel %vm3199, %v3192, 0.0
    %3204 = vadd.xlane.f32.xlu0 %v3203
    %v3205 = vpop.xlane.xlu0 %3204
    %v3206 = vrcp.pop 32.0
    %v3207 = vmul.f32 %v3202, %v3206
    %v3208 = vmul.f32 %v3205, %v3206
    %v3209 = vsub.f32 %v3187, %v3207
    %v3210 = vsub.f32 %v3192, %v3208
    %v3211 = vmul.f32 %v3209, %v3209
    %v3212 = vmul.f32 %v3210, %v3210
    %v3213 = vsel %vm3199, %v3211, 0.0
    %3214 = vadd.xlane.f32.xlu0 %v3213
    %v3215 = vpop.xlane.xlu0 %3214
    %v3216 = vsel %vm3199, %v3212, 0.0
    %3217 = vadd.xlane.f32.xlu0 %v3216
    %v3218 = vpop.xlane.xlu0 %3217
    %v3219 = vmul.f32 %v3215, %v3206
    %v3220 = vmul.f32 %v3218, %v3206
    %v3221 = vadd.f32 %v3219, 1e-05
    %v3222 = vadd.f32 %v3220, 1e-05
    %v3223 = vrsqrt.pop %v3221
    %v3224 = vrsqrt.pop %v3222
    %v3225 = vmul.f32 %v3209, %v3223
    %v3226 = vmul.f32 %v3210, %v3224
    %3228 = vset.pattern.permute.xlu0 0
    %3229 = vperm.xlu0 %3228, %v3195
    %v3230 = vpop.permute.xlu0 %3229
    %3233 = vset.pattern.permute.xlu0 0
    %3234 = vperm.xlu0 %3233, %v3196
    %v3235 = vpop.permute.xlu0 %3234
    %v3237 = vmul.f32 %v3225, %v3230
    %v3238 = vmul.f32 %v3226, %v3235
    %3240 = vset.pattern.permute.xlu0 0
    %3241 = vperm.xlu0 %3240, %v3197
    %v3242 = vpop.permute.xlu0 %3241
    %3245 = vset.pattern.permute.xlu0 0
    %3246 = vperm.xlu0 %3245, %v3198
    %v3247 = vpop.permute.xlu0 %3246
    %v3249 = vadd.f32 %v3237, %v3242
    %v3250 = vadd.f32 %v3238, %v3247
    %vm3251 = vcmp.ge.f32.partialorder %v3249, 0.0
    %vm3252 = vcmp.ge.f32.partialorder %v3250, 0.0
    %v3253 = vmul.f32 %v3249, 0.01
    %v3254 = vmul.f32 %v3250, 0.01
    %v3255 = vsel %vm3251, %v3249, %v3253
    %v3256 = vsel %vm3252, %v3250, %v3254
    %v3257 = vld [vmem:[%s21] sm:$0xff]
    %v3258 = vld [vmem:[%s21 + $0x8] sm:$0xff]
    %v3259 = vld [vmem:[%s21 + $0x10] sm:$0xff]
    %v3260 = vld [vmem:[%s21 + $0x18] sm:$0xff]
    %v3262 = vsel %vm3199, %v3255, 0
    %v3265 = vsel %vm3199, %v3256, 0
    %3267 = vmatprep.subr.mxu0 0.0
    %3268 = vmatpush1.msra.mxu0 %v3257
    %3269 = vmatprep.subr.mxu0 0.0
    %3270 = vmatpush1.msra.mxu0 %v3258
    %3271 = vmatprep.subr.mxu0 0.0
    %3272 = vmatpush1.msra.mxu0 %v3259
    %3273 = vmatprep.subr.mxu0 0.0
    %3274 = vmatpush1.msra.mxu0 %v3260
    %3275 = vmatprep.subr.mxu0 0.0
    %3276 = vmatpush1.msra.mxu0 0.0
    %3277 = vmatprep.subr.mxu0 0.0
    %3278 = vmatpush1.msra.mxu0 0.0
    %3279 = vmatprep.subr.mxu0 0.0
    %3280 = vmatpush1.msra.mxu0 0.0
    %3281 = vmatprep.subr.mxu0 0.0
    %3282 = vmatpush1.msra.mxu0 0.0
    %3283 = vmatprep.subr.mxu0 0.0
    %3284 = vmatpush1.msra.mxu0 0.0
    %3285 = vmatprep.subr.mxu0 0.0
    %3286 = vmatpush1.msra.mxu0 0.0
    %3287 = vmatprep.subr.mxu0 0.0
    %3288 = vmatpush1.msra.mxu0 0.0
    %3289 = vmatprep.subr.mxu0 0.0
    %3290 = vmatpush1.msra.mxu0 0.0
    %3291 = vmatprep.subr.mxu0 0.0
    %3292 = vmatpush1.msra.mxu0 0.0
    %3293 = vmatprep.subr.mxu0 0.0
    %3294 = vmatpush1.msra.mxu0 0.0
    %3295 = vmatprep.subr.mxu0 0.0
    %3296 = vmatpush1.msra.mxu0 0.0
    %3297 = vmatprep.subr.mxu0 0.0
    %3298 = vmatpush1.msra.mxu0 0.0
    %3299 = vmatprep.subr.mxu0 0.0
    %3300 = vmatpush1.msra.mxu0 0.0
    %3301 = vmatprep.subr.mxu0 0.0
    %3302 = vmatpush1.msra.mxu0 0.0
    %3303 = vmatprep.subr.mxu0 0.0
    %3304 = vmatpush1.msra.mxu0 0.0
    %3305 = vmatprep.subr.mxu0 0.0
    %3306 = vmatpush1.msra.mxu0 0.0
    %3307 = vmatprep.subr.mxu0 0.0
    %3308 = vmatpush1.msra.mxu0 0.0
    %3309 = vmatprep.subr.mxu0 0.0
    %3310 = vmatpush1.msra.mxu0 0.0
    %3311 = vmatprep.subr.mxu0 0.0
    %3312 = vmatpush1.msra.mxu0 0.0
    %3313 = vmatprep.subr.mxu0 0.0
    %3314 = vmatpush1.msra.mxu0 0.0
    %3315 = vmatprep.subr.mxu0 0.0
    %3316 = vmatpush1.msra.mxu0 0.0
    %3317 = vmatprep.subr.mxu0 0.0
    %3318 = vmatpush1.msra.mxu0 0.0
    %3319 = vmatprep.subr.mxu0 0.0
    %3320 = vmatpush1.msra.mxu0 0.0
    %3321 = vmatprep.subr.mxu0 0.0
    %3322 = vmatpush1.msra.mxu0 0.0
    %3323 = vmatprep.subr.mxu0 0.0
    %3324 = vmatpush1.msra.mxu0 0.0
    %3325 = vmatprep.subr.mxu0 0.0
    %3326 = vmatpush1.msra.mxu0 0.0
    %3327 = vmatprep.subr.mxu0 0.0
    %3328 = vmatpush1.msra.mxu0 0.0
    %3329 = vmatprep.subr.mxu0 0.0
    %3330 = vmatpush1.msra.mxu0 0.0
    %3331 = vmatprep.mubr.f32.mxu0 0.0
    %3332 = vmatmul.mubr.f32.gmra.mrb[0].mxu0 %v3262
    %v3333 = vpop.f32.mrb[0].mxu0
    %v3334 = vadd.f32 0.0, %v3333
    %v3335 = vpop.f32.mrb[0].mxu0
    %3336 = vmatprep.mubr.f32.mxu0 0.0
    %3337 = vmatmul.mubr.f32.gmra.mrb[0].mxu0 %v3265
    %v3338 = vpop.f32.mrb[0].mxu0
    %v3339 = vadd.f32 0.0, %v3338
    %v3340 = vpop.f32.mrb[0].mxu0
    %3341 = vdwg.mxu0
    %s3342 = scalar_lea.vmem %s21, 32
    %v3343 = vld [vmem:[%s3342] sm:$0xff]
    %v3344 = vld [vmem:[%s3342 + $0x8] sm:$0xff]
    %v3345 = vld [vmem:[%s3342 + $0x10] sm:$0xff]
    %v3346 = vld [vmem:[%s3342 + $0x18] sm:$0xff]
    %3347 = vmatprep.subr.mxu0 0.0
    %3348 = vmatpush1.msra.mxu0 %v3343
    %3349 = vmatprep.subr.mxu0 0.0
    %3350 = vmatpush1.msra.mxu0 %v3344
    %3351 = vmatprep.subr.mxu0 0.0
    %3352 = vmatpush1.msra.mxu0 %v3345
    %3353 = vmatprep.subr.mxu0 0.0
    %3354 = vmatpush1.msra.mxu0 %v3346
    %3355 = vmatprep.subr.mxu0 0.0
    %3356 = vmatpush1.msra.mxu0 0.0
    %3357 = vmatprep.subr.mxu0 0.0
    %3358 = vmatpush1.msra.mxu0 0.0
    %3359 = vmatprep.subr.mxu0 0.0
    %3360 = vmatpush1.msra.mxu0 0.0
    %3361 = vmatprep.subr.mxu0 0.0
    %3362 = vmatpush1.msra.mxu0 0.0
    %3363 = vmatprep.subr.mxu0 0.0
    %3364 = vmatpush1.msra.mxu0 0.0
    %3365 = vmatprep.subr.mxu0 0.0
    %3366 = vmatpush1.msra.mxu0 0.0
    %3367 = vmatprep.subr.mxu0 0.0
    %3368 = vmatpush1.msra.mxu0 0.0
    %3369 = vmatprep.subr.mxu0 0.0
    %3370 = vmatpush1.msra.mxu0 0.0
    %3371 = vmatprep.subr.mxu0 0.0
    %3372 = vmatpush1.msra.mxu0 0.0
    %3373 = vmatprep.subr.mxu0 0.0
    %3374 = vmatpush1.msra.mxu0 0.0
    %3375 = vmatprep.subr.mxu0 0.0
    %3376 = vmatpush1.msra.mxu0 0.0
    %3377 = vmatprep.subr.mxu0 0.0
    %3378 = vmatpush1.msra.mxu0 0.0
    %3379 = vmatprep.subr.mxu0 0.0
    %3380 = vmatpush1.msra.mxu0 0.0
    %3381 = vmatprep.subr.mxu0 0.0
    %3382 = vmatpush1.msra.mxu0 0.0
    %3383 = vmatprep.subr.mxu0 0.0
    %3384 = vmatpush1.msra.mxu0 0.0
    %3385 = vmatprep.subr.mxu0 0.0
    %3386 = vmatpush1.msra.mxu0 0.0
    %3387 = vmatprep.subr.mxu0 0.0
    %3388 = vmatpush1.msra.mxu0 0.0
    %3389 = vmatprep.subr.mxu0 0.0
    %3390 = vmatpush1.msra.mxu0 0.0
    %3391 = vmatprep.subr.mxu0 0.0
    %3392 = vmatpush1.msra.mxu0 0.0
    %3393 = vmatprep.subr.mxu0 0.0
    %3394 = vmatpush1.msra.mxu0 0.0
    %3395 = vmatprep.subr.mxu0 0.0
    %3396 = vmatpush1.msra.mxu0 0.0
    %3397 = vmatprep.subr.mxu0 0.0
    %3398 = vmatpush1.msra.mxu0 0.0
    %3399 = vmatprep.subr.mxu0 0.0
    %3400 = vmatpush1.msra.mxu0 0.0
    %3401 = vmatprep.subr.mxu0 0.0
    %3402 = vmatpush1.msra.mxu0 0.0
    %3403 = vmatprep.subr.mxu0 0.0
    %3404 = vmatpush1.msra.mxu0 0.0
    %3405 = vmatprep.subr.mxu0 0.0
    %3406 = vmatpush1.msra.mxu0 0.0
    %3407 = vmatprep.subr.mxu0 0.0
    %3408 = vmatpush1.msra.mxu0 0.0
    %3409 = vmatprep.subr.mxu0 0.0
    %3410 = vmatpush1.msra.mxu0 0.0
    %3411 = vmatprep.mubr.f32.mxu0 0.0
    %3412 = vmatmul.mubr.f32.gmra.mrb[0].mxu0 %v3262
    %v3413 = vpop.f32.mrb[0].mxu0
    %v3414 = vadd.f32 0.0, %v3413
    %v3415 = vpop.f32.mrb[0].mxu0
    %3416 = vmatprep.mubr.f32.mxu0 0.0
    %3417 = vmatmul.mubr.f32.gmra.mrb[0].mxu0 %v3265
    %v3418 = vpop.f32.mrb[0].mxu0
    %v3419 = vadd.f32 0.0, %v3418
    %v3420 = vpop.f32.mrb[0].mxu0
    %3421 = vdwg.mxu0
    %s3422 = scalar_lea.vmem %s21, 64
    %v3423 = vld [vmem:[%s3422] sm:$0xff]
    %v3424 = vld [vmem:[%s3422 + $0x8] sm:$0xff]
    %v3425 = vld [vmem:[%s3422 + $0x10] sm:$0xff]
    %v3426 = vld [vmem:[%s3422 + $0x18] sm:$0xff]
    %3427 = vmatprep.subr.mxu0 0.0
    %3428 = vmatpush1.msra.mxu0 %v3423
    %3429 = vmatprep.subr.mxu0 0.0
    %3430 = vmatpush1.msra.mxu0 %v3424
    %3431 = vmatprep.subr.mxu0 0.0
    %3432 = vmatpush1.msra.mxu0 %v3425
    %3433 = vmatprep.subr.mxu0 0.0
    %3434 = vmatpush1.msra.mxu0 %v3426
    %3435 = vmatprep.subr.mxu0 0.0
    %3436 = vmatpush1.msra.mxu0 0.0
    %3437 = vmatprep.subr.mxu0 0.0
    %3438 = vmatpush1.msra.mxu0 0.0
    %3439 = vmatprep.subr.mxu0 0.0
    %3440 = vmatpush1.msra.mxu0 0.0
    %3441 = vmatprep.subr.mxu0 0.0
    %3442 = vmatpush1.msra.mxu0 0.0
    %3443 = vmatprep.subr.mxu0 0.0
    %3444 = vmatpush1.msra.mxu0 0.0
    %3445 = vmatprep.subr.mxu0 0.0
    %3446 = vmatpush1.msra.mxu0 0.0
    %3447 = vmatprep.subr.mxu0 0.0
    %3448 = vmatpush1.msra.mxu0 0.0
    %3449 = vmatprep.subr.mxu0 0.0
    %3450 = vmatpush1.msra.mxu0 0.0
    %3451 = vmatprep.subr.mxu0 0.0
    %3452 = vmatpush1.msra.mxu0 0.0
    %3453 = vmatprep.subr.mxu0 0.0
    %3454 = vmatpush1.msra.mxu0 0.0
    %3455 = vmatprep.subr.mxu0 0.0
    %3456 = vmatpush1.msra.mxu0 0.0
    %3457 = vmatprep.subr.mxu0 0.0
    %3458 = vmatpush1.msra.mxu0 0.0
    %3459 = vmatprep.subr.mxu0 0.0
    %3460 = vmatpush1.msra.mxu0 0.0
    %3461 = vmatprep.subr.mxu0 0.0
    %3462 = vmatpush1.msra.mxu0 0.0
    %3463 = vmatprep.subr.mxu0 0.0
    %3464 = vmatpush1.msra.mxu0 0.0
    %3465 = vmatprep.subr.mxu0 0.0
    %3466 = vmatpush1.msra.mxu0 0.0
    %3467 = vmatprep.subr.mxu0 0.0
    %3468 = vmatpush1.msra.mxu0 0.0
    %3469 = vmatprep.subr.mxu0 0.0
    %3470 = vmatpush1.msra.mxu0 0.0
    %3471 = vmatprep.subr.mxu0 0.0
    %3472 = vmatpush1.msra.mxu0 0.0
    %3473 = vmatprep.subr.mxu0 0.0
    %3474 = vmatpush1.msra.mxu0 0.0
    %3475 = vmatprep.subr.mxu0 0.0
    %3476 = vmatpush1.msra.mxu0 0.0
    %3477 = vmatprep.subr.mxu0 0.0
    %3478 = vmatpush1.msra.mxu0 0.0
    %3479 = vmatprep.subr.mxu0 0.0
    %3480 = vmatpush1.msra.mxu0 0.0
    %3481 = vmatprep.subr.mxu0 0.0
    %3482 = vmatpush1.msra.mxu0 0.0
    %3483 = vmatprep.subr.mxu0 0.0
    %3484 = vmatpush1.msra.mxu0 0.0
    %3485 = vmatprep.subr.mxu0 0.0
    %3486 = vmatpush1.msra.mxu0 0.0
    %3487 = vmatprep.subr.mxu0 0.0
    %3488 = vmatpush1.msra.mxu0 0.0
    %3489 = vmatprep.subr.mxu0 0.0
    %3490 = vmatpush1.msra.mxu0 0.0
    %3491 = vmatprep.mubr.f32.mxu0 0.0
    %3492 = vmatmul.mubr.f32.gmra.mrb[0].mxu0 %v3262
    %v3493 = vpop.f32.mrb[0].mxu0
    %v3494 = vadd.f32 0.0, %v3493
    %v3495 = vpop.f32.mrb[0].mxu0
    %3496 = vmatprep.mubr.f32.mxu0 0.0
    %3497 = vmatmul.mubr.f32.gmra.mrb[0].mxu0 %v3265
    %v3498 = vpop.f32.mrb[0].mxu0
    %v3499 = vadd.f32 0.0, %v3498
    %v3500 = vpop.f32.mrb[0].mxu0
    %3501 = vdwg.mxu0
    %s3502 = scalar_lea.vmem %s21, 96
    %v3503 = vld [vmem:[%s3502] sm:$0xff]
    %v3504 = vld [vmem:[%s3502 + $0x8] sm:$0xff]
    %v3505 = vld [vmem:[%s3502 + $0x10] sm:$0xff]
    %v3506 = vld [vmem:[%s3502 + $0x18] sm:$0xff]
    %3507 = vmatprep.subr.mxu0 0.0
    %3508 = vmatpush1.msra.mxu0 %v3503
    %3509 = vmatprep.subr.mxu0 0.0
    %3510 = vmatpush1.msra.mxu0 %v3504
    %3511 = vmatprep.subr.mxu0 0.0
    %3512 = vmatpush1.msra.mxu0 %v3505
    %3513 = vmatprep.subr.mxu0 0.0
    %3514 = vmatpush1.msra.mxu0 %v3506
    %3515 = vmatprep.subr.mxu0 0.0
    %3516 = vmatpush1.msra.mxu0 0.0
    %3517 = vmatprep.subr.mxu0 0.0
    %3518 = vmatpush1.msra.mxu0 0.0
    %3519 = vmatprep.subr.mxu0 0.0
    %3520 = vmatpush1.msra.mxu0 0.0
    %3521 = vmatprep.subr.mxu0 0.0
    %3522 = vmatpush1.msra.mxu0 0.0
    %3523 = vmatprep.subr.mxu0 0.0
    %3524 = vmatpush1.msra.mxu0 0.0
    %3525 = vmatprep.subr.mxu0 0.0
    %3526 = vmatpush1.msra.mxu0 0.0
    %3527 = vmatprep.subr.mxu0 0.0
    %3528 = vmatpush1.msra.mxu0 0.0
    %3529 = vmatprep.subr.mxu0 0.0
    %3530 = vmatpush1.msra.mxu0 0.0
    %3531 = vmatprep.subr.mxu0 0.0
    %3532 = vmatpush1.msra.mxu0 0.0
    %3533 = vmatprep.subr.mxu0 0.0
    %3534 = vmatpush1.msra.mxu0 0.0
    %3535 = vmatprep.subr.mxu0 0.0
    %3536 = vmatpush1.msra.mxu0 0.0
    %3537 = vmatprep.subr.mxu0 0.0
    %3538 = vmatpush1.msra.mxu0 0.0
    %3539 = vmatprep.subr.mxu0 0.0
    %3540 = vmatpush1.msra.mxu0 0.0
    %3541 = vmatprep.subr.mxu0 0.0
    %3542 = vmatpush1.msra.mxu0 0.0
    %3543 = vmatprep.subr.mxu0 0.0
    %3544 = vmatpush1.msra.mxu0 0.0
    %3545 = vmatprep.subr.mxu0 0.0
    %3546 = vmatpush1.msra.mxu0 0.0
    %3547 = vmatprep.subr.mxu0 0.0
    %3548 = vmatpush1.msra.mxu0 0.0
    %3549 = vmatprep.subr.mxu0 0.0
    %3550 = vmatpush1.msra.mxu0 0.0
    %3551 = vmatprep.subr.mxu0 0.0
    %3552 = vmatpush1.msra.mxu0 0.0
    %3553 = vmatprep.subr.mxu0 0.0
    %3554 = vmatpush1.msra.mxu0 0.0
    %3555 = vmatprep.subr.mxu0 0.0
    %3556 = vmatpush1.msra.mxu0 0.0
    %3557 = vmatprep.subr.mxu0 0.0
    %3558 = vmatpush1.msra.mxu0 0.0
    %3559 = vmatprep.subr.mxu0 0.0
    %3560 = vmatpush1.msra.mxu0 0.0
    %3561 = vmatprep.subr.mxu0 0.0
    %3562 = vmatpush1.msra.mxu0 0.0
    %3563 = vmatprep.subr.mxu0 0.0
    %3564 = vmatpush1.msra.mxu0 0.0
    %3565 = vmatprep.subr.mxu0 0.0
    %3566 = vmatpush1.msra.mxu0 0.0
    %3567 = vmatprep.subr.mxu0 0.0
    %3568 = vmatpush1.msra.mxu0 0.0
    %3569 = vmatprep.subr.mxu0 0.0
    %3570 = vmatpush1.msra.mxu0 0.0
    %3571 = vmatprep.mubr.f32.mxu0 0.0
    %3572 = vmatmul.mubr.f32.gmra.mrb[0].mxu0 %v3262
    %v3573 = vpop.f32.mrb[0].mxu0
    %v3574 = vadd.f32 0.0, %v3573
    %v3575 = vpop.f32.mrb[0].mxu0
    %3576 = vmatprep.mubr.f32.mxu0 0.0
    %3577 = vmatmul.mubr.f32.gmra.mrb[0].mxu0 %v3265
    %v3578 = vpop.f32.mrb[0].mxu0
    %v3579 = vadd.f32 0.0, %v3578
    %v3580 = vpop.f32.mrb[0].mxu0
    %3581 = vdwg.mxu0
    %s3582 = scalar_lea.vmem %s21, 128
    %v3583 = vld [vmem:[%s3582] sm:$0xff]
    %v3584 = vld [vmem:[%s3582 + $0x8] sm:$0xff]
    %v3585 = vld [vmem:[%s3582 + $0x10] sm:$0xff]
    %v3586 = vld [vmem:[%s3582 + $0x18] sm:$0xff]
    %3587 = vmatprep.subr.mxu0 0.0
    %3588 = vmatpush1.msra.mxu0 %v3583
    %3589 = vmatprep.subr.mxu0 0.0
    %3590 = vmatpush1.msra.mxu0 %v3584
    %3591 = vmatprep.subr.mxu0 0.0
    %3592 = vmatpush1.msra.mxu0 %v3585
    %3593 = vmatprep.subr.mxu0 0.0
    %3594 = vmatpush1.msra.mxu0 %v3586
    %3595 = vmatprep.subr.mxu0 0.0
    %3596 = vmatpush1.msra.mxu0 0.0
    %3597 = vmatprep.subr.mxu0 0.0
    %3598 = vmatpush1.msra.mxu0 0.0
    %3599 = vmatprep.subr.mxu0 0.0
    %3600 = vmatpush1.msra.mxu0 0.0
    %3601 = vmatprep.subr.mxu0 0.0
    %3602 = vmatpush1.msra.mxu0 0.0
    %3603 = vmatprep.subr.mxu0 0.0
    %3604 = vmatpush1.msra.mxu0 0.0
    %3605 = vmatprep.subr.mxu0 0.0
    %3606 = vmatpush1.msra.mxu0 0.0
    %3607 = vmatprep.subr.mxu0 0.0
    %3608 = vmatpush1.msra.mxu0 0.0
    %3609 = vmatprep.subr.mxu0 0.0
    %3610 = vmatpush1.msra.mxu0 0.0
    %3611 = vmatprep.subr.mxu0 0.0
    %3612 = vmatpush1.msra.mxu0 0.0
    %3613 = vmatprep.subr.mxu0 0.0
    %3614 = vmatpush1.msra.mxu0 0.0
    %3615 = vmatprep.subr.mxu0 0.0
    %3616 = vmatpush1.msra.mxu0 0.0
    %3617 = vmatprep.subr.mxu0 0.0
    %3618 = vmatpush1.msra.mxu0 0.0
    %3619 = vmatprep.subr.mxu0 0.0
    %3620 = vmatpush1.msra.mxu0 0.0
    %3621 = vmatprep.subr.mxu0 0.0
    %3622 = vmatpush1.msra.mxu0 0.0
    %3623 = vmatprep.subr.mxu0 0.0
    %3624 = vmatpush1.msra.mxu0 0.0
    %3625 = vmatprep.subr.mxu0 0.0
    %3626 = vmatpush1.msra.mxu0 0.0
    %3627 = vmatprep.subr.mxu0 0.0
    %3628 = vmatpush1.msra.mxu0 0.0
    %3629 = vmatprep.subr.mxu0 0.0
    %3630 = vmatpush1.msra.mxu0 0.0
    %3631 = vmatprep.subr.mxu0 0.0
    %3632 = vmatpush1.msra.mxu0 0.0
    %3633 = vmatprep.subr.mxu0 0.0
    %3634 = vmatpush1.msra.mxu0 0.0
    %3635 = vmatprep.subr.mxu0 0.0
    %3636 = vmatpush1.msra.mxu0 0.0
    %3637 = vmatprep.subr.mxu0 0.0
    %3638 = vmatpush1.msra.mxu0 0.0
    %3639 = vmatprep.subr.mxu0 0.0
    %3640 = vmatpush1.msra.mxu0 0.0
    %3641 = vmatprep.subr.mxu0 0.0
    %3642 = vmatpush1.msra.mxu0 0.0
    %3643 = vmatprep.subr.mxu0 0.0
    %3644 = vmatpush1.msra.mxu0 0.0
    %3645 = vmatprep.subr.mxu0 0.0
    %3646 = vmatpush1.msra.mxu0 0.0
    %3647 = vmatprep.subr.mxu0 0.0
    %3648 = vmatpush1.msra.mxu0 0.0
    %3649 = vmatprep.subr.mxu0 0.0
    %3650 = vmatpush1.msra.mxu0 0.0
    %3651 = vmatprep.mubr.f32.mxu0 0.0
    %3652 = vmatmul.mubr.f32.gmra.mrb[0].mxu0 %v3262
    %v3653 = vpop.f32.mrb[0].mxu0
    %v3654 = vadd.f32 0.0, %v3653
    %v3655 = vpop.f32.mrb[0].mxu0
    %3656 = vmatprep.mubr.f32.mxu0 0.0
    %3657 = vmatmul.mubr.f32.gmra.mrb[0].mxu0 %v3265
    %v3658 = vpop.f32.mrb[0].mxu0
    %v3659 = vadd.f32 0.0, %v3658
    %v3660 = vpop.f32.mrb[0].mxu0
    %3661 = vdwg.mxu0
    %s3662 = scalar_lea.vmem %s21, 160
    %v3663 = vld [vmem:[%s3662] sm:$0xff]
    %v3664 = vld [vmem:[%s3662 + $0x8] sm:$0xff]
    %v3665 = vld [vmem:[%s3662 + $0x10] sm:$0xff]
    %v3666 = vld [vmem:[%s3662 + $0x18] sm:$0xff]
    %3667 = vmatprep.subr.mxu0 0.0
    %3668 = vmatpush1.msra.mxu0 %v3663
    %3669 = vmatprep.subr.mxu0 0.0
    %3670 = vmatpush1.msra.mxu0 %v3664
    %3671 = vmatprep.subr.mxu0 0.0
    %3672 = vmatpush1.msra.mxu0 %v3665
    %3673 = vmatprep.subr.mxu0 0.0
    %3674 = vmatpush1.msra.mxu0 %v3666
    %3675 = vmatprep.subr.mxu0 0.0
    %3676 = vmatpush1.msra.mxu0 0.0
    %3677 = vmatprep.subr.mxu0 0.0
    %3678 = vmatpush1.msra.mxu0 0.0
    %3679 = vmatprep.subr.mxu0 0.0
    %3680 = vmatpush1.msra.mxu0 0.0
    %3681 = vmatprep.subr.mxu0 0.0
    %3682 = vmatpush1.msra.mxu0 0.0
    %3683 = vmatprep.subr.mxu0 0.0
    %3684 = vmatpush1.msra.mxu0 0.0
    %3685 = vmatprep.subr.mxu0 0.0
    %3686 = vmatpush1.msra.mxu0 0.0
    %3687 = vmatprep.subr.mxu0 0.0
    %3688 = vmatpush1.msra.mxu0 0.0
    %3689 = vmatprep.subr.mxu0 0.0
    %3690 = vmatpush1.msra.mxu0 0.0
    %3691 = vmatprep.subr.mxu0 0.0
    %3692 = vmatpush1.msra.mxu0 0.0
    %3693 = vmatprep.subr.mxu0 0.0
    %3694 = vmatpush1.msra.mxu0 0.0
    %3695 = vmatprep.subr.mxu0 0.0
    %3696 = vmatpush1.msra.mxu0 0.0
    %3697 = vmatprep.subr.mxu0 0.0
    %3698 = vmatpush1.msra.mxu0 0.0
    %3699 = vmatprep.subr.mxu0 0.0
    %3700 = vmatpush1.msra.mxu0 0.0
    %3701 = vmatprep.subr.mxu0 0.0
    %3702 = vmatpush1.msra.mxu0 0.0
    %3703 = vmatprep.subr.mxu0 0.0
    %3704 = vmatpush1.msra.mxu0 0.0
    %3705 = vmatprep.subr.mxu0 0.0
    %3706 = vmatpush1.msra.mxu0 0.0
    %3707 = vmatprep.subr.mxu0 0.0
    %3708 = vmatpush1.msra.mxu0 0.0
    %3709 = vmatprep.subr.mxu0 0.0
    %3710 = vmatpush1.msra.mxu0 0.0
    %3711 = vmatprep.subr.mxu0 0.0
    %3712 = vmatpush1.msra.mxu0 0.0
    %3713 = vmatprep.subr.mxu0 0.0
    %3714 = vmatpush1.msra.mxu0 0.0
    %3715 = vmatprep.subr.mxu0 0.0
    %3716 = vmatpush1.msra.mxu0 0.0
    %3717 = vmatprep.subr.mxu0 0.0
    %3718 = vmatpush1.msra.mxu0 0.0
    %3719 = vmatprep.subr.mxu0 0.0
    %3720 = vmatpush1.msra.mxu0 0.0
    %3721 = vmatprep.subr.mxu0 0.0
    %3722 = vmatpush1.msra.mxu0 0.0
    %3723 = vmatprep.subr.mxu0 0.0
    %3724 = vmatpush1.msra.mxu0 0.0
    %3725 = vmatprep.subr.mxu0 0.0
    %3726 = vmatpush1.msra.mxu0 0.0
    %3727 = vmatprep.subr.mxu0 0.0
    %3728 = vmatpush1.msra.mxu0 0.0
    %3729 = vmatprep.subr.mxu0 0.0
    %3730 = vmatpush1.msra.mxu0 0.0
    %3731 = vmatprep.mubr.f32.mxu0 0.0
    %3732 = vmatmul.mubr.f32.gmra.mrb[0].mxu0 %v3262
    %v3733 = vpop.f32.mrb[0].mxu0
    %v3734 = vadd.f32 0.0, %v3733
    %v3735 = vpop.f32.mrb[0].mxu0
    %3736 = vmatprep.mubr.f32.mxu0 0.0
    %3737 = vmatmul.mubr.f32.gmra.mrb[0].mxu0 %v3265
    %v3738 = vpop.f32.mrb[0].mxu0
    %v3739 = vadd.f32 0.0, %v3738
    %v3740 = vpop.f32.mrb[0].mxu0
    %3741 = vdwg.mxu0
    %s3742 = scalar_lea.vmem %s21, 192
    %v3743 = vld [vmem:[%s3742] sm:$0xff]
    %v3744 = vld [vmem:[%s3742 + $0x8] sm:$0xff]
    %v3745 = vld [vmem:[%s3742 + $0x10] sm:$0xff]
    %v3746 = vld [vmem:[%s3742 + $0x18] sm:$0xff]
    %3747 = vmatprep.subr.mxu0 0.0
    %3748 = vmatpush1.msra.mxu0 %v3743
    %3749 = vmatprep.subr.mxu0 0.0
    %3750 = vmatpush1.msra.mxu0 %v3744
    %3751 = vmatprep.subr.mxu0 0.0
    %3752 = vmatpush1.msra.mxu0 %v3745
    %3753 = vmatprep.subr.mxu0 0.0
    %3754 = vmatpush1.msra.mxu0 %v3746
    %3755 = vmatprep.subr.mxu0 0.0
    %3756 = vmatpush1.msra.mxu0 0.0
    %3757 = vmatprep.subr.mxu0 0.0
    %3758 = vmatpush1.msra.mxu0 0.0
    %3759 = vmatprep.subr.mxu0 0.0
    %3760 = vmatpush1.msra.mxu0 0.0
    %3761 = vmatprep.subr.mxu0 0.0
    %3762 = vmatpush1.msra.mxu0 0.0
    %3763 = vmatprep.subr.mxu0 0.0
    %3764 = vmatpush1.msra.mxu0 0.0
    %3765 = vmatprep.subr.mxu0 0.0
    %3766 = vmatpush1.msra.mxu0 0.0
    %3767 = vmatprep.subr.mxu0 0.0
    %3768 = vmatpush1.msra.mxu0 0.0
    %3769 = vmatprep.subr.mxu0 0.0
    %3770 = vmatpush1.msra.mxu0 0.0
    %3771 = vmatprep.subr.mxu0 0.0
    %3772 = vmatpush1.msra.mxu0 0.0
    %3773 = vmatprep.subr.mxu0 0.0
    %3774 = vmatpush1.msra.mxu0 0.0
    %3775 = vmatprep.subr.mxu0 0.0
    %3776 = vmatpush1.msra.mxu0 0.0
    %3777 = vmatprep.subr.mxu0 0.0
    %3778 = vmatpush1.msra.mxu0 0.0
    %3779 = vmatprep.subr.mxu0 0.0
    %3780 = vmatpush1.msra.mxu0 0.0
    %3781 = vmatprep.subr.mxu0 0.0
    %3782 = vmatpush1.msra.mxu0 0.0
    %3783 = vmatprep.subr.mxu0 0.0
    %3784 = vmatpush1.msra.mxu0 0.0
    %3785 = vmatprep.subr.mxu0 0.0
    %3786 = vmatpush1.msra.mxu0 0.0
    %3787 = vmatprep.subr.mxu0 0.0
    %3788 = vmatpush1.msra.mxu0 0.0
    %3789 = vmatprep.subr.mxu0 0.0
    %3790 = vmatpush1.msra.mxu0 0.0
    %3791 = vmatprep.subr.mxu0 0.0
    %3792 = vmatpush1.msra.mxu0 0.0
    %3793 = vmatprep.subr.mxu0 0.0
    %3794 = vmatpush1.msra.mxu0 0.0
    %3795 = vmatprep.subr.mxu0 0.0
    %3796 = vmatpush1.msra.mxu0 0.0
    %3797 = vmatprep.subr.mxu0 0.0
    %3798 = vmatpush1.msra.mxu0 0.0
    %3799 = vmatprep.subr.mxu0 0.0
    %3800 = vmatpush1.msra.mxu0 0.0
    %3801 = vmatprep.subr.mxu0 0.0
    %3802 = vmatpush1.msra.mxu0 0.0
    %3803 = vmatprep.subr.mxu0 0.0
    %3804 = vmatpush1.msra.mxu0 0.0
    %3805 = vmatprep.subr.mxu0 0.0
    %3806 = vmatpush1.msra.mxu0 0.0
    %3807 = vmatprep.subr.mxu0 0.0
    %3808 = vmatpush1.msra.mxu0 0.0
    %3809 = vmatprep.subr.mxu0 0.0
    %3810 = vmatpush1.msra.mxu0 0.0
    %3811 = vmatprep.mubr.f32.mxu0 0.0
    %3812 = vmatmul.mubr.f32.gmra.mrb[0].mxu0 %v3262
    %v3813 = vpop.f32.mrb[0].mxu0
    %v3814 = vadd.f32 0.0, %v3813
    %v3815 = vpop.f32.mrb[0].mxu0
    %3816 = vmatprep.mubr.f32.mxu0 0.0
    %3817 = vmatmul.mubr.f32.gmra.mrb[0].mxu0 %v3265
    %v3818 = vpop.f32.mrb[0].mxu0
    %v3819 = vadd.f32 0.0, %v3818
    %v3820 = vpop.f32.mrb[0].mxu0
    %3821 = vdwg.mxu0
    %s3822 = scalar_lea.vmem %s21, 224
    %v3823 = vld [vmem:[%s3822] sm:$0xff]
    %v3824 = vld [vmem:[%s3822 + $0x8] sm:$0xff]
    %v3825 = vld [vmem:[%s3822 + $0x10] sm:$0xff]
    %v3826 = vld [vmem:[%s3822 + $0x18] sm:$0xff]
    %3827 = vmatprep.subr.mxu0 0.0
    %3828 = vmatpush1.msra.mxu0 %v3823
    %3829 = vmatprep.subr.mxu0 0.0
    %3830 = vmatpush1.msra.mxu0 %v3824
    %3831 = vmatprep.subr.mxu0 0.0
    %3832 = vmatpush1.msra.mxu0 %v3825
    %3833 = vmatprep.subr.mxu0 0.0
    %3834 = vmatpush1.msra.mxu0 %v3826
    %3835 = vmatprep.subr.mxu0 0.0
    %3836 = vmatpush1.msra.mxu0 0.0
    %3837 = vmatprep.subr.mxu0 0.0
    %3838 = vmatpush1.msra.mxu0 0.0
    %3839 = vmatprep.subr.mxu0 0.0
    %3840 = vmatpush1.msra.mxu0 0.0
    %3841 = vmatprep.subr.mxu0 0.0
    %3842 = vmatpush1.msra.mxu0 0.0
    %3843 = vmatprep.subr.mxu0 0.0
    %3844 = vmatpush1.msra.mxu0 0.0
    %3845 = vmatprep.subr.mxu0 0.0
    %3846 = vmatpush1.msra.mxu0 0.0
    %3847 = vmatprep.subr.mxu0 0.0
    %3848 = vmatpush1.msra.mxu0 0.0
    %3849 = vmatprep.subr.mxu0 0.0
    %3850 = vmatpush1.msra.mxu0 0.0
    %3851 = vmatprep.subr.mxu0 0.0
    %3852 = vmatpush1.msra.mxu0 0.0
    %3853 = vmatprep.subr.mxu0 0.0
    %3854 = vmatpush1.msra.mxu0 0.0
    %3855 = vmatprep.subr.mxu0 0.0
    %3856 = vmatpush1.msra.mxu0 0.0
    %3857 = vmatprep.subr.mxu0 0.0
    %3858 = vmatpush1.msra.mxu0 0.0
    %3859 = vmatprep.subr.mxu0 0.0
    %3860 = vmatpush1.msra.mxu0 0.0
    %3861 = vmatprep.subr.mxu0 0.0
    %3862 = vmatpush1.msra.mxu0 0.0
    %3863 = vmatprep.subr.mxu0 0.0
    %3864 = vmatpush1.msra.mxu0 0.0
    %3865 = vmatprep.subr.mxu0 0.0
    %3866 = vmatpush1.msra.mxu0 0.0
    %3867 = vmatprep.subr.mxu0 0.0
    %3868 = vmatpush1.msra.mxu0 0.0
    %3869 = vmatprep.subr.mxu0 0.0
    %3870 = vmatpush1.msra.mxu0 0.0
    %3871 = vmatprep.subr.mxu0 0.0
    %3872 = vmatpush1.msra.mxu0 0.0
    %3873 = vmatprep.subr.mxu0 0.0
    %3874 = vmatpush1.msra.mxu0 0.0
    %3875 = vmatprep.subr.mxu0 0.0
    %3876 = vmatpush1.msra.mxu0 0.0
    %3877 = vmatprep.subr.mxu0 0.0
    %3878 = vmatpush1.msra.mxu0 0.0
    %3879 = vmatprep.subr.mxu0 0.0
    %3880 = vmatpush1.msra.mxu0 0.0
    %3881 = vmatprep.subr.mxu0 0.0
    %3882 = vmatpush1.msra.mxu0 0.0
    %3883 = vmatprep.subr.mxu0 0.0
    %3884 = vmatpush1.msra.mxu0 0.0
    %3885 = vmatprep.subr.mxu0 0.0
    %3886 = vmatpush1.msra.mxu0 0.0
    %3887 = vmatprep.subr.mxu0 0.0
    %3888 = vmatpush1.msra.mxu0 0.0
    %3889 = vmatprep.subr.mxu0 0.0
    %3890 = vmatpush1.msra.mxu0 0.0
    %3891 = vmatprep.mubr.f32.mxu0 0.0
    %3892 = vmatmul.mubr.f32.gmra.mrb[0].mxu0 %v3262
    %v3893 = vpop.f32.mrb[0].mxu0
    %v3894 = vadd.f32 0.0, %v3893
    %v3895 = vpop.f32.mrb[0].mxu0
    %3896 = vmatprep.mubr.f32.mxu0 0.0
    %3897 = vmatmul.mubr.f32.gmra.mrb[0].mxu0 %v3265
    %v3898 = vpop.f32.mrb[0].mxu0
    %v3899 = vadd.f32 0.0, %v3898
    %v3900 = vpop.f32.mrb[0].mxu0
    %3901 = vdwg.mxu0
    %s3902 = scalar_lea.vmem %s21, 256
    %v3903 = vld [vmem:[%s3902] sm:$0xff]
    %v3904 = vld [vmem:[%s3902 + $0x8] sm:$0xff]
    %v3905 = vld [vmem:[%s3902 + $0x10] sm:$0xff]
    %v3906 = vld [vmem:[%s3902 + $0x18] sm:$0xff]
    %3907 = vmatprep.subr.mxu0 0.0
    %3908 = vmatpush1.msra.mxu0 %v3903
    %3909 = vmatprep.subr.mxu0 0.0
    %3910 = vmatpush1.msra.mxu0 %v3904
    %3911 = vmatprep.subr.mxu0 0.0
    %3912 = vmatpush1.msra.mxu0 %v3905
    %3913 = vmatprep.subr.mxu0 0.0
    %3914 = vmatpush1.msra.mxu0 %v3906
    %3915 = vmatprep.subr.mxu0 0.0
    %3916 = vmatpush1.msra.mxu0 0.0
    %3917 = vmatprep.subr.mxu0 0.0
    %3918 = vmatpush1.msra.mxu0 0.0
    %3919 = vmatprep.subr.mxu0 0.0
    %3920 = vmatpush1.msra.mxu0 0.0
    %3921 = vmatprep.subr.mxu0 0.0
    %3922 = vmatpush1.msra.mxu0 0.0
    %3923 = vmatprep.subr.mxu0 0.0
    %3924 = vmatpush1.msra.mxu0 0.0
    %3925 = vmatprep.subr.mxu0 0.0
    %3926 = vmatpush1.msra.mxu0 0.0
    %3927 = vmatprep.subr.mxu0 0.0
    %3928 = vmatpush1.msra.mxu0 0.0
    %3929 = vmatprep.subr.mxu0 0.0
    %3930 = vmatpush1.msra.mxu0 0.0
    %3931 = vmatprep.subr.mxu0 0.0
    %3932 = vmatpush1.msra.mxu0 0.0
    %3933 = vmatprep.subr.mxu0 0.0
    %3934 = vmatpush1.msra.mxu0 0.0
    %3935 = vmatprep.subr.mxu0 0.0
    %3936 = vmatpush1.msra.mxu0 0.0
    %3937 = vmatprep.subr.mxu0 0.0
    %3938 = vmatpush1.msra.mxu0 0.0
    %3939 = vmatprep.subr.mxu0 0.0
    %3940 = vmatpush1.msra.mxu0 0.0
    %3941 = vmatprep.subr.mxu0 0.0
    %3942 = vmatpush1.msra.mxu0 0.0
    %3943 = vmatprep.subr.mxu0 0.0
    %3944 = vmatpush1.msra.mxu0 0.0
    %3945 = vmatprep.subr.mxu0 0.0
    %3946 = vmatpush1.msra.mxu0 0.0
    %3947 = vmatprep.subr.mxu0 0.0
    %3948 = vmatpush1.msra.mxu0 0.0
    %3949 = vmatprep.subr.mxu0 0.0
    %3950 = vmatpush1.msra.mxu0 0.0
    %3951 = vmatprep.subr.mxu0 0.0
    %3952 = vmatpush1.msra.mxu0 0.0
    %3953 = vmatprep.subr.mxu0 0.0
    %3954 = vmatpush1.msra.mxu0 0.0
    %3955 = vmatprep.subr.mxu0 0.0
    %3956 = vmatpush1.msra.mxu0 0.0
    %3957 = vmatprep.subr.mxu0 0.0
    %3958 = vmatpush1.msra.mxu0 0.0
    %3959 = vmatprep.subr.mxu0 0.0
    %3960 = vmatpush1.msra.mxu0 0.0
    %3961 = vmatprep.subr.mxu0 0.0
    %3962 = vmatpush1.msra.mxu0 0.0
    %3963 = vmatprep.subr.mxu0 0.0
    %3964 = vmatpush1.msra.mxu0 0.0
    %3965 = vmatprep.subr.mxu0 0.0
    %3966 = vmatpush1.msra.mxu0 0.0
    %3967 = vmatprep.subr.mxu0 0.0
    %3968 = vmatpush1.msra.mxu0 0.0
    %3969 = vmatprep.subr.mxu0 0.0
    %3970 = vmatpush1.msra.mxu0 0.0
    %3971 = vmatprep.mubr.f32.mxu0 0.0
    %3972 = vmatmul.mubr.f32.gmra.mrb[0].mxu0 %v3262
    %v3973 = vpop.f32.mrb[0].mxu0
    %v3974 = vadd.f32 0.0, %v3973
    %v3975 = vpop.f32.mrb[0].mxu0
    %3976 = vmatprep.mubr.f32.mxu0 0.0
    %3977 = vmatmul.mubr.f32.gmra.mrb[0].mxu0 %v3265
    %v3978 = vpop.f32.mrb[0].mxu0
    %v3979 = vadd.f32 0.0, %v3978
    %v3980 = vpop.f32.mrb[0].mxu0
    %3981 = vdwg.mxu0
    %v3982 = vld [vmem:[#allocation9] sm:$0xff]
    %v3983 = vld [vmem:[#allocation9 + $0x8] sm:$0xff]
    %v3984 = vld [vmem:[#allocation9 + $0x10] sm:$0xff]
    %v3985 = vld [vmem:[#allocation9 + $0x18] sm:$0xff]
    %v3986 = vld [vmem:[#allocation9 + $0x20] sm:$0xff]
    %v3987 = vld [vmem:[#allocation9 + $0x28] sm:$0xff]
    %v3988 = vld [vmem:[#allocation9 + $0x30] sm:$0xff]
    %v3989 = vld [vmem:[#allocation9 + $0x38] sm:$0xff]
    %vm3990 = vcmask 130048
    %v3992 = vsel %vm3990, %v3983, 0
    %v3995 = vsel %vm3990, %v3985, 0
    %v3998 = vsel %vm3990, %v3987, 0
    %v4001 = vsel %vm3990, %v3989, 0
    %4003 = vmatprep.subr.mxu0 0.0
    %4004 = vmatpush1.msra.mxu0 %v3334
    %4005 = vmatprep.subr.mxu0 0.0
    %4006 = vmatpush1.msra.mxu0 %v3339
    %4007 = vmatprep.subr.mxu0 0.0
    %4008 = vmatpush1.msra.mxu0 %v3414
    %4009 = vmatprep.subr.mxu0 0.0
    %4010 = vmatpush1.msra.mxu0 %v3419
    %4011 = vmatprep.subr.mxu0 0.0
    %4012 = vmatpush1.msra.mxu0 %v3494
    %4013 = vmatprep.subr.mxu0 0.0
    %4014 = vmatpush1.msra.mxu0 %v3499
    %4015 = vmatprep.subr.mxu0 0.0
    %4016 = vmatpush1.msra.mxu0 %v3574
    %4017 = vmatprep.subr.mxu0 0.0
    %4018 = vmatpush1.msra.mxu0 %v3579
    %4019 = vmatprep.subr.mxu0 0.0
    %4020 = vmatpush1.msra.mxu0 %v3654
    %4021 = vmatprep.subr.mxu0 0.0
    %4022 = vmatpush1.msra.mxu0 %v3659
    %4023 = vmatprep.subr.mxu0 0.0
    %4024 = vmatpush1.msra.mxu0 %v3734
    %4025 = vmatprep.subr.mxu0 0.0
    %4026 = vmatpush1.msra.mxu0 %v3739
    %4027 = vmatprep.subr.mxu0 0.0
    %4028 = vmatpush1.msra.mxu0 %v3814
    %4029 = vmatprep.subr.mxu0 0.0
    %4030 = vmatpush1.msra.mxu0 %v3819
    %4031 = vmatprep.subr.mxu0 0.0
    %4032 = vmatpush1.msra.mxu0 %v3894
    %4033 = vmatprep.subr.mxu0 0.0
    %4034 = vmatpush1.msra.mxu0 %v3899
    %4035 = vmatprep.subr.mxu0 0.0
    %4036 = vmatpush1.msra.mxu0 %v3974
    %4037 = vmatprep.subr.mxu0 0.0
    %4038 = vmatpush1.msra.mxu0 %v3979
    %4039 = vmatprep.subr.mxu0 0.0
    %4040 = vmatpush1.msra.mxu0 0.0
    %4041 = vmatprep.subr.mxu0 0.0
    %4042 = vmatpush1.msra.mxu0 0.0
    %4043 = vmatprep.subr.mxu0 0.0
    %4044 = vmatpush1.msra.mxu0 0.0
    %4045 = vmatprep.subr.mxu0 0.0
    %4046 = vmatpush1.msra.mxu0 0.0
    %4047 = vmatprep.subr.mxu0 0.0
    %4048 = vmatpush1.msra.mxu0 0.0
    %4049 = vmatprep.subr.mxu0 0.0
    %4050 = vmatpush1.msra.mxu0 0.0
    %4051 = vmatprep.subr.mxu0 0.0
    %4052 = vmatpush1.msra.mxu0 0.0
    %4053 = vmatprep.subr.mxu0 0.0
    %4054 = vmatpush1.msra.mxu0 0.0
    %4055 = vmatprep.subr.mxu0 0.0
    %4056 = vmatpush1.msra.mxu0 0.0
    %4057 = vmatprep.subr.mxu0 0.0
    %4058 = vmatpush1.msra.mxu0 0.0
    %4059 = vmatprep.subr.mxu0 0.0
    %4060 = vmatpush1.msra.mxu0 0.0
    %4061 = vmatprep.subr.mxu0 0.0
    %4062 = vmatpush1.msra.mxu0 0.0
    %4063 = vmatprep.subr.mxu0 0.0
    %4064 = vmatpush1.msra.mxu0 0.0
    %4065 = vmatprep.subr.mxu0 0.0
    %4066 = vmatpush1.msra.mxu0 0.0
    %4067 = vmatprep.mubr.f32.mxu0 %v3992
    %4068 = vmatmul.mubr.f32.gmra.mrb[0].mxu0 %v3982
    %v4069 = vpop.f32.mrb[0].mxu0
    %v4070 = vadd.f32 0.0, %v4069
    %v4071 = vpop.f32.mrb[0].mxu0
    %4072 = vmatprep.mubr.f32.mxu0 %v3995
    %4073 = vmatmul.mubr.f32.gmra.mrb[0].mxu0 %v3984
    %v4074 = vpop.f32.mrb[0].mxu0
    %v4075 = vadd.f32 0.0, %v4074
    %v4076 = vpop.f32.mrb[0].mxu0
    %4077 = vmatprep.mubr.f32.mxu0 %v3998
    %4078 = vmatmul.mubr.f32.gmra.mrb[0].mxu0 %v3986
    %v4079 = vpop.f32.mrb[0].mxu0
    %v4080 = vadd.f32 0.0, %v4079
    %v4081 = vpop.f32.mrb[0].mxu0
    %4082 = vmatprep.mubr.f32.mxu0 %v4001
    %4083 = vmatmul.mubr.f32.gmra.mrb[0].mxu0 %v3988
    %v4084 = vpop.f32.mrb[0].mxu0
    %v4085 = vadd.f32 0.0, %v4084
    %v4086 = vpop.f32.mrb[0].mxu0
    %4087 = vdwg.mxu0
    %v4088 = vld [vmem:[%s25] sm:$0xff]
    %v4089 = vld [vmem:[%s25 + $0x8] sm:$0xff]
    %v4090 = vld [vmem:[%s25 + $0x10] sm:$0xff]
    %v4091 = vld [vmem:[%s25 + $0x18] sm:$0xff]
    %v4092 = vld [vmem:[%s27] sm:$0xff]
    %v4093 = vld [vmem:[%s27 + $0x8] sm:$0xff]
    %v4094 = vld [vmem:[%s27 + $0x10] sm:$0xff]
    %v4095 = vld [vmem:[%s27 + $0x18] sm:$0xff]
    %vm4096 = vcmask 64512
    %v4097 = vsel %vm4096, %v4070, 0.0
    %4098 = vadd.xlane.f32.xlu0 %v4097
    %v4099 = vpop.xlane.xlu0 %4098
    %v4100 = vsel %vm4096, %v4075, 0.0
    %4101 = vadd.xlane.f32.xlu0 %v4100
    %v4102 = vpop.xlane.xlu0 %4101
    %v4103 = vsel %vm4096, %v4080, 0.0
    %4104 = vadd.xlane.f32.xlu0 %v4103
    %v4105 = vpop.xlane.xlu0 %4104
    %v4106 = vsel %vm4096, %v4085, 0.0
    %4107 = vadd.xlane.f32.xlu0 %v4106
    %v4108 = vpop.xlane.xlu0 %4107
    %v4109 = vrcp.pop 8.0
    %v4110 = vmul.f32 %v4099, %v4109
    %v4111 = vmul.f32 %v4102, %v4109
    %v4112 = vmul.f32 %v4105, %v4109
    %v4113 = vmul.f32 %v4108, %v4109
    %v4114 = vsub.f32 %v4070, %v4110
    %v4115 = vsub.f32 %v4075, %v4111
    %v4116 = vsub.f32 %v4080, %v4112
    %v4117 = vsub.f32 %v4085, %v4113
    %v4118 = vmul.f32 %v4114, %v4114
    %v4119 = vmul.f32 %v4115, %v4115
    %v4120 = vmul.f32 %v4116, %v4116
    %v4121 = vmul.f32 %v4117, %v4117
    %v4122 = vsel %vm4096, %v4118, 0.0
    %4123 = vadd.xlane.f32.xlu0 %v4122
    %v4124 = vpop.xlane.xlu0 %4123
    %v4125 = vsel %vm4096, %v4119, 0.0
    %4126 = vadd.xlane.f32.xlu0 %v4125
    %v4127 = vpop.xlane.xlu0 %4126
    %v4128 = vsel %vm4096, %v4120, 0.0
    %4129 = vadd.xlane.f32.xlu0 %v4128
    %v4130 = vpop.xlane.xlu0 %4129
    %v4131 = vsel %vm4096, %v4121, 0.0
    %4132 = vadd.xlane.f32.xlu0 %v4131
    %v4133 = vpop.xlane.xlu0 %4132
    %v4134 = vmul.f32 %v4124, %v4109
    %v4135 = vmul.f32 %v4127, %v4109
    %v4136 = vmul.f32 %v4130, %v4109
    %v4137 = vmul.f32 %v4133, %v4109
    %v4138 = vadd.f32 %v4134, 1e-05
    %v4139 = vadd.f32 %v4135, 1e-05
    %v4140 = vadd.f32 %v4136, 1e-05
    %v4141 = vadd.f32 %v4137, 1e-05
    %v4142 = vrsqrt.pop %v4138
    %v4143 = vrsqrt.pop %v4139
    %v4144 = vrsqrt.pop %v4140
    %v4145 = vrsqrt.pop %v4141
    %v4146 = vmul.f32 %v4114, %v4142
    %v4147 = vmul.f32 %v4115, %v4143
    %v4148 = vmul.f32 %v4116, %v4144
    %v4149 = vmul.f32 %v4117, %v4145
    %4151 = vset.pattern.permute.xlu0 0
    %4152 = vperm.xlu0 %4151, %v4088
    %v4153 = vpop.permute.xlu0 %4152
    %4156 = vset.pattern.permute.xlu0 0
    %4157 = vperm.xlu0 %4156, %v4089
    %v4158 = vpop.permute.xlu0 %4157
    %4161 = vset.pattern.permute.xlu0 0
    %4162 = vperm.xlu0 %4161, %v4090
    %v4163 = vpop.permute.xlu0 %4162
    %4166 = vset.pattern.permute.xlu0 0
    %4167 = vperm.xlu0 %4166, %v4091
    %v4168 = vpop.permute.xlu0 %4167
    %v4170 = vmul.f32 %v4146, %v4153
    %v4171 = vmul.f32 %v4147, %v4158
    %v4172 = vmul.f32 %v4148, %v4163
    %v4173 = vmul.f32 %v4149, %v4168
    %4175 = vset.pattern.permute.xlu0 0
    %4176 = vperm.xlu0 %4175, %v4092
    %v4177 = vpop.permute.xlu0 %4176
    %4180 = vset.pattern.permute.xlu0 0
    %4181 = vperm.xlu0 %4180, %v4093
    %v4182 = vpop.permute.xlu0 %4181
    %4185 = vset.pattern.permute.xlu0 0
    %4186 = vperm.xlu0 %4185, %v4094
    %v4187 = vpop.permute.xlu0 %4186
    %4190 = vset.pattern.permute.xlu0 0
    %4191 = vperm.xlu0 %4190, %v4095
    %v4192 = vpop.permute.xlu0 %4191
    %v4194 = vadd.f32 %v4170, %v4177
    %v4195 = vadd.f32 %v4171, %v4182
    %v4196 = vadd.f32 %v4172, %v4187
    %v4197 = vadd.f32 %v4173, %v4192
    %vm4198 = vcmp.ge.f32.partialorder %v4194, 0.0
    %vm4199 = vcmp.ge.f32.partialorder %v4195, 0.0
    %vm4200 = vcmp.ge.f32.partialorder %v4196, 0.0
    %vm4201 = vcmp.ge.f32.partialorder %v4197, 0.0
    %v4202 = vmul.f32 %v4194, 0.01
    %v4203 = vmul.f32 %v4195, 0.01
    %v4204 = vmul.f32 %v4196, 0.01
    %v4205 = vmul.f32 %v4197, 0.01
    %v4206 = vsel %vm4198, %v4194, %v4202
    %v4207 = vsel %vm4199, %v4195, %v4203
    %v4208 = vsel %vm4200, %v4196, %v4204
    %v4209 = vsel %vm4201, %v4197, %v4205
    %v4210 = vld [vmem:[%s29] sm:$0xff]
    %v4212 = vsel %vm4096, %v4206, 0
    %v4215 = vsel %vm4096, %v4207, 0
    %v4218 = vsel %vm4096, %v4208, 0
    %v4221 = vsel %vm4096, %v4209, 0
    %4223 = vmatprep.subr.mxu0 0.0
    %4224 = vmatpush1.msra.mxu0 %v4210
    %4225 = vmatprep.subr.mxu0 0.0
    %4226 = vmatpush1.msra.mxu0 0.0
    %4227 = vmatprep.subr.mxu0 0.0
    %4228 = vmatpush1.msra.mxu0 0.0
    %4229 = vmatprep.subr.mxu0 0.0
    %4230 = vmatpush1.msra.mxu0 0.0
    %4231 = vmatprep.subr.mxu0 0.0
    %4232 = vmatpush1.msra.mxu0 0.0
    %4233 = vmatprep.subr.mxu0 0.0
    %4234 = vmatpush1.msra.mxu0 0.0
    %4235 = vmatprep.subr.mxu0 0.0
    %4236 = vmatpush1.msra.mxu0 0.0
    %4237 = vmatprep.subr.mxu0 0.0
    %4238 = vmatpush1.msra.mxu0 0.0
    %4239 = vmatprep.subr.mxu0 0.0
    %4240 = vmatpush1.msra.mxu0 0.0
    %4241 = vmatprep.subr.mxu0 0.0
    %4242 = vmatpush1.msra.mxu0 0.0
    %4243 = vmatprep.subr.mxu0 0.0
    %4244 = vmatpush1.msra.mxu0 0.0
    %4245 = vmatprep.subr.mxu0 0.0
    %4246 = vmatpush1.msra.mxu0 0.0
    %4247 = vmatprep.subr.mxu0 0.0
    %4248 = vmatpush1.msra.mxu0 0.0
    %4249 = vmatprep.subr.mxu0 0.0
    %4250 = vmatpush1.msra.mxu0 0.0
    %4251 = vmatprep.subr.mxu0 0.0
    %4252 = vmatpush1.msra.mxu0 0.0
    %4253 = vmatprep.subr.mxu0 0.0
    %4254 = vmatpush1.msra.mxu0 0.0
    %4255 = vmatprep.subr.mxu0 0.0
    %4256 = vmatpush1.msra.mxu0 0.0
    %4257 = vmatprep.subr.mxu0 0.0
    %4258 = vmatpush1.msra.mxu0 0.0
    %4259 = vmatprep.subr.mxu0 0.0
    %4260 = vmatpush1.msra.mxu0 0.0
    %4261 = vmatprep.subr.mxu0 0.0
    %4262 = vmatpush1.msra.mxu0 0.0
    %4263 = vmatprep.subr.mxu0 0.0
    %4264 = vmatpush1.msra.mxu0 0.0
    %4265 = vmatprep.subr.mxu0 0.0
    %4266 = vmatpush1.msra.mxu0 0.0
    %4267 = vmatprep.subr.mxu0 0.0
    %4268 = vmatpush1.msra.mxu0 0.0
    %4269 = vmatprep.subr.mxu0 0.0
    %4270 = vmatpush1.msra.mxu0 0.0
    %4271 = vmatprep.subr.mxu0 0.0
    %4272 = vmatpush1.msra.mxu0 0.0
    %4273 = vmatprep.subr.mxu0 0.0
    %4274 = vmatpush1.msra.mxu0 0.0
    %4275 = vmatprep.subr.mxu0 0.0
    %4276 = vmatpush1.msra.mxu0 0.0
    %4277 = vmatprep.subr.mxu0 0.0
    %4278 = vmatpush1.msra.mxu0 0.0
    %4279 = vmatprep.subr.mxu0 0.0
    %4280 = vmatpush1.msra.mxu0 0.0
    %4281 = vmatprep.subr.mxu0 0.0
    %4282 = vmatpush1.msra.mxu0 0.0
    %4283 = vmatprep.subr.mxu0 0.0
    %4284 = vmatpush1.msra.mxu0 0.0
    %4285 = vmatprep.subr.mxu0 0.0
    %4286 = vmatpush1.msra.mxu0 0.0
    %4287 = vmatprep.mubr.f32.mxu0 0.0
    %4288 = vmatmul.mubr.f32.gmra.mrb[0].mxu0 %v4212
    %v4289 = vpop.f32.mrb[0].mxu0
    %v4290 = vadd.f32 0.0, %v4289
    %v4291 = vpop.f32.mrb[0].mxu0
    %4292 = vmatprep.mubr.f32.mxu0 0.0
    %4293 = vmatmul.mubr.f32.gmra.mrb[0].mxu0 %v4215
    %v4294 = vpop.f32.mrb[0].mxu0
    %v4295 = vadd.f32 0.0, %v4294
    %v4296 = vpop.f32.mrb[0].mxu0
    %4297 = vmatprep.mubr.f32.mxu0 0.0
    %4298 = vmatmul.mubr.f32.gmra.mrb[0].mxu0 %v4218
    %v4299 = vpop.f32.mrb[0].mxu0
    %v4300 = vadd.f32 0.0, %v4299
    %v4301 = vpop.f32.mrb[0].mxu0
    %4302 = vmatprep.mubr.f32.mxu0 0.0
    %4303 = vmatmul.mubr.f32.gmra.mrb[0].mxu0 %v4221
    %v4304 = vpop.f32.mrb[0].mxu0
    %v4305 = vadd.f32 0.0, %v4304
    %v4306 = vpop.f32.mrb[0].mxu0
    %4307 = vdwg.mxu0
    %s4308 = scalar_lea.vmem %s29, 8
    %v4309 = vld [vmem:[%s4308] sm:$0xff]
    %4310 = vmatprep.subr.mxu0 0.0
    %4311 = vmatpush1.msra.mxu0 %v4309
    %4312 = vmatprep.subr.mxu0 0.0
    %4313 = vmatpush1.msra.mxu0 0.0
    %4314 = vmatprep.subr.mxu0 0.0
    %4315 = vmatpush1.msra.mxu0 0.0
    %4316 = vmatprep.subr.mxu0 0.0
    %4317 = vmatpush1.msra.mxu0 0.0
    %4318 = vmatprep.subr.mxu0 0.0
    %4319 = vmatpush1.msra.mxu0 0.0
    %4320 = vmatprep.subr.mxu0 0.0
    %4321 = vmatpush1.msra.mxu0 0.0
    %4322 = vmatprep.subr.mxu0 0.0
    %4323 = vmatpush1.msra.mxu0 0.0
    %4324 = vmatprep.subr.mxu0 0.0
    %4325 = vmatpush1.msra.mxu0 0.0
    %4326 = vmatprep.subr.mxu0 0.0
    %4327 = vmatpush1.msra.mxu0 0.0
    %4328 = vmatprep.subr.mxu0 0.0
    %4329 = vmatpush1.msra.mxu0 0.0
    %4330 = vmatprep.subr.mxu0 0.0
    %4331 = vmatpush1.msra.mxu0 0.0
    %4332 = vmatprep.subr.mxu0 0.0
    %4333 = vmatpush1.msra.mxu0 0.0
    %4334 = vmatprep.subr.mxu0 0.0
    %4335 = vmatpush1.msra.mxu0 0.0
    %4336 = vmatprep.subr.mxu0 0.0
    %4337 = vmatpush1.msra.mxu0 0.0
    %4338 = vmatprep.subr.mxu0 0.0
    %4339 = vmatpush1.msra.mxu0 0.0
    %4340 = vmatprep.subr.mxu0 0.0
    %4341 = vmatpush1.msra.mxu0 0.0
    %4342 = vmatprep.subr.mxu0 0.0
    %4343 = vmatpush1.msra.mxu0 0.0
    %4344 = vmatprep.subr.mxu0 0.0
    %4345 = vmatpush1.msra.mxu0 0.0
    %4346 = vmatprep.subr.mxu0 0.0
    %4347 = vmatpush1.msra.mxu0 0.0
    %4348 = vmatprep.subr.mxu0 0.0
    %4349 = vmatpush1.msra.mxu0 0.0
    %4350 = vmatprep.subr.mxu0 0.0
    %4351 = vmatpush1.msra.mxu0 0.0
    %4352 = vmatprep.subr.mxu0 0.0
    %4353 = vmatpush1.msra.mxu0 0.0
    %4354 = vmatprep.subr.mxu0 0.0
    %4355 = vmatpush1.msra.mxu0 0.0
    %4356 = vmatprep.subr.mxu0 0.0
    %4357 = vmatpush1.msra.mxu0 0.0
    %4358 = vmatprep.subr.mxu0 0.0
    %4359 = vmatpush1.msra.mxu0 0.0
    %4360 = vmatprep.subr.mxu0 0.0
    %4361 = vmatpush1.msra.mxu0 0.0
    %4362 = vmatprep.subr.mxu0 0.0
    %4363 = vmatpush1.msra.mxu0 0.0
    %4364 = vmatprep.subr.mxu0 0.0
    %4365 = vmatpush1.msra.mxu0 0.0
    %4366 = vmatprep.subr.mxu0 0.0
    %4367 = vmatpush1.msra.mxu0 0.0
    %4368 = vmatprep.subr.mxu0 0.0
    %4369 = vmatpush1.msra.mxu0 0.0
    %4370 = vmatprep.subr.mxu0 0.0
    %4371 = vmatpush1.msra.mxu0 0.0
    %4372 = vmatprep.subr.mxu0 0.0
    %4373 = vmatpush1.msra.mxu0 0.0
    %4374 = vmatprep.mubr.f32.mxu0 0.0
    %4375 = vmatmul.mubr.f32.gmra.mrb[0].mxu0 %v4212
    %v4376 = vpop.f32.mrb[0].mxu0
    %v4377 = vadd.f32 0.0, %v4376
    %v4378 = vpop.f32.mrb[0].mxu0
    %4379 = vmatprep.mubr.f32.mxu0 0.0
    %4380 = vmatmul.mubr.f32.gmra.mrb[0].mxu0 %v4215
    %v4381 = vpop.f32.mrb[0].mxu0
    %v4382 = vadd.f32 0.0, %v4381
    %v4383 = vpop.f32.mrb[0].mxu0
    %4384 = vmatprep.mubr.f32.mxu0 0.0
    %4385 = vmatmul.mubr.f32.gmra.mrb[0].mxu0 %v4218
    %v4386 = vpop.f32.mrb[0].mxu0
    %v4387 = vadd.f32 0.0, %v4386
    %v4388 = vpop.f32.mrb[0].mxu0
    %4389 = vmatprep.mubr.f32.mxu0 0.0
    %4390 = vmatmul.mubr.f32.gmra.mrb[0].mxu0 %v4221
    %v4391 = vpop.f32.mrb[0].mxu0
    %v4392 = vadd.f32 0.0, %v4391
    %v4393 = vpop.f32.mrb[0].mxu0
    %4394 = vdwg.mxu0
    %s4395 = scalar_lea.vmem %s29, 16
    %v4396 = vld [vmem:[%s4395] sm:$0xff]
    %4397 = vmatprep.subr.mxu0 0.0
    %4398 = vmatpush1.msra.mxu0 %v4396
    %4399 = vmatprep.subr.mxu0 0.0
    %4400 = vmatpush1.msra.mxu0 0.0
    %4401 = vmatprep.subr.mxu0 0.0
    %4402 = vmatpush1.msra.mxu0 0.0
    %4403 = vmatprep.subr.mxu0 0.0
    %4404 = vmatpush1.msra.mxu0 0.0
    %4405 = vmatprep.subr.mxu0 0.0
    %4406 = vmatpush1.msra.mxu0 0.0
    %4407 = vmatprep.subr.mxu0 0.0
    %4408 = vmatpush1.msra.mxu0 0.0
    %4409 = vmatprep.subr.mxu0 0.0
    %4410 = vmatpush1.msra.mxu0 0.0
    %4411 = vmatprep.subr.mxu0 0.0
    %4412 = vmatpush1.msra.mxu0 0.0
    %4413 = vmatprep.subr.mxu0 0.0
    %4414 = vmatpush1.msra.mxu0 0.0
    %4415 = vmatprep.subr.mxu0 0.0
    %4416 = vmatpush1.msra.mxu0 0.0
    %4417 = vmatprep.subr.mxu0 0.0
    %4418 = vmatpush1.msra.mxu0 0.0
    %4419 = vmatprep.subr.mxu0 0.0
    %4420 = vmatpush1.msra.mxu0 0.0
    %4421 = vmatprep.subr.mxu0 0.0
    %4422 = vmatpush1.msra.mxu0 0.0
    %4423 = vmatprep.subr.mxu0 0.0
    %4424 = vmatpush1.msra.mxu0 0.0
    %4425 = vmatprep.subr.mxu0 0.0
    %4426 = vmatpush1.msra.mxu0 0.0
    %4427 = vmatprep.subr.mxu0 0.0
    %4428 = vmatpush1.msra.mxu0 0.0
    %4429 = vmatprep.subr.mxu0 0.0
    %4430 = vmatpush1.msra.mxu0 0.0
    %4431 = vmatprep.subr.mxu0 0.0
    %4432 = vmatpush1.msra.mxu0 0.0
    %4433 = vmatprep.subr.mxu0 0.0
    %4434 = vmatpush1.msra.mxu0 0.0
    %4435 = vmatprep.subr.mxu0 0.0
    %4436 = vmatpush1.msra.mxu0 0.0
    %4437 = vmatprep.subr.mxu0 0.0
    %4438 = vmatpush1.msra.mxu0 0.0
    %4439 = vmatprep.subr.mxu0 0.0
    %4440 = vmatpush1.msra.mxu0 0.0
    %4441 = vmatprep.subr.mxu0 0.0
    %4442 = vmatpush1.msra.mxu0 0.0
    %4443 = vmatprep.subr.mxu0 0.0
    %4444 = vmatpush1.msra.mxu0 0.0
    %4445 = vmatprep.subr.mxu0 0.0
    %4446 = vmatpush1.msra.mxu0 0.0
    %4447 = vmatprep.subr.mxu0 0.0
    %4448 = vmatpush1.msra.mxu0 0.0
    %4449 = vmatprep.subr.mxu0 0.0
    %4450 = vmatpush1.msra.mxu0 0.0
    %4451 = vmatprep.subr.mxu0 0.0
    %4452 = vmatpush1.msra.mxu0 0.0
    %4453 = vmatprep.subr.mxu0 0.0
    %4454 = vmatpush1.msra.mxu0 0.0
    %4455 = vmatprep.subr.mxu0 0.0
    %4456 = vmatpush1.msra.mxu0 0.0
    %4457 = vmatprep.subr.mxu0 0.0
    %4458 = vmatpush1.msra.mxu0 0.0
    %4459 = vmatprep.subr.mxu0 0.0
    %4460 = vmatpush1.msra.mxu0 0.0
    %4461 = vmatprep.mubr.f32.mxu0 0.0
    %4462 = vmatmul.mubr.f32.gmra.mrb[0].mxu0 %v4212
    %v4463 = vpop.f32.mrb[0].mxu0
    %v4464 = vadd.f32 0.0, %v4463
    %v4465 = vpop.f32.mrb[0].mxu0
    %4466 = vmatprep.mubr.f32.mxu0 0.0
    %4467 = vmatmul.mubr.f32.gmra.mrb[0].mxu0 %v4215
    %v4468 = vpop.f32.mrb[0].mxu0
    %v4469 = vadd.f32 0.0, %v4468
    %v4470 = vpop.f32.mrb[0].mxu0
    %4471 = vmatprep.mubr.f32.mxu0 0.0
    %4472 = vmatmul.mubr.f32.gmra.mrb[0].mxu0 %v4218
    %v4473 = vpop.f32.mrb[0].mxu0
    %v4474 = vadd.f32 0.0, %v4473
    %v4475 = vpop.f32.mrb[0].mxu0
    %4476 = vmatprep.mubr.f32.mxu0 0.0
    %4477 = vmatmul.mubr.f32.gmra.mrb[0].mxu0 %v4221
    %v4478 = vpop.f32.mrb[0].mxu0
    %v4479 = vadd.f32 0.0, %v4478
    %v4480 = vpop.f32.mrb[0].mxu0
    %4481 = vdwg.mxu0
    %s4482 = scalar_lea.vmem %s29, 24
    %v4483 = vld [vmem:[%s4482] sm:$0xff]
    %4484 = vmatprep.subr.mxu0 0.0
    %4485 = vmatpush1.msra.mxu0 %v4483
    %4486 = vmatprep.subr.mxu0 0.0
    %4487 = vmatpush1.msra.mxu0 0.0
    %4488 = vmatprep.subr.mxu0 0.0
    %4489 = vmatpush1.msra.mxu0 0.0
    %4490 = vmatprep.subr.mxu0 0.0
    %4491 = vmatpush1.msra.mxu0 0.0
    %4492 = vmatprep.subr.mxu0 0.0
    %4493 = vmatpush1.msra.mxu0 0.0
    %4494 = vmatprep.subr.mxu0 0.0
    %4495 = vmatpush1.msra.mxu0 0.0
    %4496 = vmatprep.subr.mxu0 0.0
    %4497 = vmatpush1.msra.mxu0 0.0
    %4498 = vmatprep.subr.mxu0 0.0
    %4499 = vmatpush1.msra.mxu0 0.0
    %4500 = vmatprep.subr.mxu0 0.0
    %4501 = vmatpush1.msra.mxu0 0.0
    %4502 = vmatprep.subr.mxu0 0.0
    %4503 = vmatpush1.msra.mxu0 0.0
    %4504 = vmatprep.subr.mxu0 0.0
    %4505 = vmatpush1.msra.mxu0 0.0
    %4506 = vmatprep.subr.mxu0 0.0
    %4507 = vmatpush1.msra.mxu0 0.0
    %4508 = vmatprep.subr.mxu0 0.0
    %4509 = vmatpush1.msra.mxu0 0.0
    %4510 = vmatprep.subr.mxu0 0.0
    %4511 = vmatpush1.msra.mxu0 0.0
    %4512 = vmatprep.subr.mxu0 0.0
    %4513 = vmatpush1.msra.mxu0 0.0
    %4514 = vmatprep.subr.mxu0 0.0
    %4515 = vmatpush1.msra.mxu0 0.0
    %4516 = vmatprep.subr.mxu0 0.0
    %4517 = vmatpush1.msra.mxu0 0.0
    %4518 = vmatprep.subr.mxu0 0.0
    %4519 = vmatpush1.msra.mxu0 0.0
    %4520 = vmatprep.subr.mxu0 0.0
    %4521 = vmatpush1.msra.mxu0 0.0
    %4522 = vmatprep.subr.mxu0 0.0
    %4523 = vmatpush1.msra.mxu0 0.0
    %4524 = vmatprep.subr.mxu0 0.0
    %4525 = vmatpush1.msra.mxu0 0.0
    %4526 = vmatprep.subr.mxu0 0.0
    %4527 = vmatpush1.msra.mxu0 0.0
    %4528 = vmatprep.subr.mxu0 0.0
    %4529 = vmatpush1.msra.mxu0 0.0
    %4530 = vmatprep.subr.mxu0 0.0
    %4531 = vmatpush1.msra.mxu0 0.0
    %4532 = vmatprep.subr.mxu0 0.0
    %4533 = vmatpush1.msra.mxu0 0.0
    %4534 = vmatprep.subr.mxu0 0.0
    %4535 = vmatpush1.msra.mxu0 0.0
    %4536 = vmatprep.subr.mxu0 0.0
    %4537 = vmatpush1.msra.mxu0 0.0
    %4538 = vmatprep.subr.mxu0 0.0
    %4539 = vmatpush1.msra.mxu0 0.0
    %4540 = vmatprep.subr.mxu0 0.0
    %4541 = vmatpush1.msra.mxu0 0.0
    %4542 = vmatprep.subr.mxu0 0.0
    %4543 = vmatpush1.msra.mxu0 0.0
    %4544 = vmatprep.subr.mxu0 0.0
    %4545 = vmatpush1.msra.mxu0 0.0
    %4546 = vmatprep.subr.mxu0 0.0
    %4547 = vmatpush1.msra.mxu0 0.0
    %4548 = vmatprep.mubr.f32.mxu0 0.0
    %4549 = vmatmul.mubr.f32.gmra.mrb[0].mxu0 %v4212
    %v4550 = vpop.f32.mrb[0].mxu0
    %v4551 = vadd.f32 0.0, %v4550
    %v4552 = vpop.f32.mrb[0].mxu0
    %4553 = vmatprep.mubr.f32.mxu0 0.0
    %4554 = vmatmul.mubr.f32.gmra.mrb[0].mxu0 %v4215
    %v4555 = vpop.f32.mrb[0].mxu0
    %v4556 = vadd.f32 0.0, %v4555
    %v4557 = vpop.f32.mrb[0].mxu0
    %4558 = vmatprep.mubr.f32.mxu0 0.0
    %4559 = vmatmul.mubr.f32.gmra.mrb[0].mxu0 %v4218
    %v4560 = vpop.f32.mrb[0].mxu0
    %v4561 = vadd.f32 0.0, %v4560
    %v4562 = vpop.f32.mrb[0].mxu0
    %4563 = vmatprep.mubr.f32.mxu0 0.0
    %4564 = vmatmul.mubr.f32.gmra.mrb[0].mxu0 %v4221
    %v4565 = vpop.f32.mrb[0].mxu0
    %v4566 = vadd.f32 0.0, %v4565
    %v4567 = vpop.f32.mrb[0].mxu0
    %4568 = vdwg.mxu0
    %v4569 = vld [vmem:[#allocation11] sm:$0xff]
    %v4570 = vld [vmem:[#allocation11 + $0x8] sm:$0xff]
    %v4571 = vld [vmem:[#allocation11 + $0x10] sm:$0xff]
    %v4572 = vld [vmem:[#allocation11 + $0x18] sm:$0xff]
    %4573 = vmatprep.subr.mxu0 0.0
    %4574 = vmatpush1.msra.mxu0 %v4290
    %4575 = vmatprep.subr.mxu0 0.0
    %4576 = vmatpush1.msra.mxu0 %v4295
    %4577 = vmatprep.subr.mxu0 0.0
    %4578 = vmatpush1.msra.mxu0 %v4300
    %4579 = vmatprep.subr.mxu0 0.0
    %4580 = vmatpush1.msra.mxu0 %v4305
    %4581 = vmatprep.subr.mxu0 0.0
    %4582 = vmatpush1.msra.mxu0 %v4377
    %4583 = vmatprep.subr.mxu0 0.0
    %4584 = vmatpush1.msra.mxu0 %v4382
    %4585 = vmatprep.subr.mxu0 0.0
    %4586 = vmatpush1.msra.mxu0 %v4387
    %4587 = vmatprep.subr.mxu0 0.0
    %4588 = vmatpush1.msra.mxu0 %v4392
    %4589 = vmatprep.subr.mxu0 0.0
    %4590 = vmatpush1.msra.mxu0 %v4464
    %4591 = vmatprep.subr.mxu0 0.0
    %4592 = vmatpush1.msra.mxu0 %v4469
    %4593 = vmatprep.subr.mxu0 0.0
    %4594 = vmatpush1.msra.mxu0 %v4474
    %4595 = vmatprep.subr.mxu0 0.0
    %4596 = vmatpush1.msra.mxu0 %v4479
    %4597 = vmatprep.subr.mxu0 0.0
    %4598 = vmatpush1.msra.mxu0 %v4551
    %4599 = vmatprep.subr.mxu0 0.0
    %4600 = vmatpush1.msra.mxu0 %v4556
    %4601 = vmatprep.subr.mxu0 0.0
    %4602 = vmatpush1.msra.mxu0 %v4561
    %4603 = vmatprep.subr.mxu0 0.0
    %4604 = vmatpush1.msra.mxu0 %v4566
    %4605 = vmatprep.subr.mxu0 0.0
    %4606 = vmatpush1.msra.mxu0 0.0
    %4607 = vmatprep.subr.mxu0 0.0
    %4608 = vmatpush1.msra.mxu0 0.0
    %4609 = vmatprep.subr.mxu0 0.0
    %4610 = vmatpush1.msra.mxu0 0.0
    %4611 = vmatprep.subr.mxu0 0.0
    %4612 = vmatpush1.msra.mxu0 0.0
    %4613 = vmatprep.subr.mxu0 0.0
    %4614 = vmatpush1.msra.mxu0 0.0
    %4615 = vmatprep.subr.mxu0 0.0
    %4616 = vmatpush1.msra.mxu0 0.0
    %4617 = vmatprep.subr.mxu0 0.0
    %4618 = vmatpush1.msra.mxu0 0.0
    %4619 = vmatprep.subr.mxu0 0.0
    %4620 = vmatpush1.msra.mxu0 0.0
    %4621 = vmatprep.subr.mxu0 0.0
    %4622 = vmatpush1.msra.mxu0 0.0
    %4623 = vmatprep.subr.mxu0 0.0
    %4624 = vmatpush1.msra.mxu0 0.0
    %4625 = vmatprep.subr.mxu0 0.0
    %4626 = vmatpush1.msra.mxu0 0.0
    %4627 = vmatprep.subr.mxu0 0.0
    %4628 = vmatpush1.msra.mxu0 0.0
    %4629 = vmatprep.subr.mxu0 0.0
    %4630 = vmatpush1.msra.mxu0 0.0
    %4631 = vmatprep.subr.mxu0 0.0
    %4632 = vmatpush1.msra.mxu0 0.0
    %4633 = vmatprep.subr.mxu0 0.0
    %4634 = vmatpush1.msra.mxu0 0.0
    %4635 = vmatprep.subr.mxu0 0.0
    %4636 = vmatpush1.msra.mxu0 0.0
    %4637 = vmatprep.mubr.f32.mxu0 0.0
    %4638 = vmatmul.mubr.f32.gmra.mrb[0].mxu0 %v4569
    %v4639 = vpop.f32.mrb[0].mxu0
    %v4640 = vadd.f32 0.0, %v4639
    %v4641 = vpop.f32.mrb[0].mxu0
    %4642 = vmatprep.mubr.f32.mxu0 0.0
    %4643 = vmatmul.mubr.f32.gmra.mrb[0].mxu0 %v4570
    %v4644 = vpop.f32.mrb[0].mxu0
    %v4645 = vadd.f32 0.0, %v4644
    %v4646 = vpop.f32.mrb[0].mxu0
    %4647 = vmatprep.mubr.f32.mxu0 0.0
    %4648 = vmatmul.mubr.f32.gmra.mrb[0].mxu0 %v4571
    %v4649 = vpop.f32.mrb[0].mxu0
    %v4650 = vadd.f32 0.0, %v4649
    %v4651 = vpop.f32.mrb[0].mxu0
    %4652 = vmatprep.mubr.f32.mxu0 0.0
    %4653 = vmatmul.mubr.f32.gmra.mrb[0].mxu0 %v4572
    %v4654 = vpop.f32.mrb[0].mxu0
    %v4655 = vadd.f32 0.0, %v4654
    %v4656 = vpop.f32.mrb[0].mxu0
    %4657 = vdwg.mxu0
    %v4658 = vld [vmem:[%s33] sm:$0xff]
    %v4659 = vld [vmem:[%s33 + $0x8] sm:$0xff]
    %v4660 = vld [vmem:[%s33 + $0x10] sm:$0xff]
    %v4661 = vld [vmem:[%s33 + $0x18] sm:$0xff]
    %v4662 = vld [vmem:[%s35] sm:$0xff]
    %v4663 = vld [vmem:[%s35 + $0x8] sm:$0xff]
    %v4664 = vld [vmem:[%s35 + $0x10] sm:$0xff]
    %v4665 = vld [vmem:[%s35 + $0x18] sm:$0xff]
    %vm4666 = vcmask 15360
    %v4667 = vsel %vm4666, %v4640, 0.0
    %4668 = vadd.xlane.f32.xlu0 %v4667
    %v4669 = vpop.xlane.xlu0 %4668
    %v4670 = vsel %vm4666, %v4645, 0.0
    %4671 = vadd.xlane.f32.xlu0 %v4670
    %v4672 = vpop.xlane.xlu0 %4671
    %v4673 = vsel %vm4666, %v4650, 0.0
    %4674 = vadd.xlane.f32.xlu0 %v4673
    %v4675 = vpop.xlane.xlu0 %4674
    %v4676 = vsel %vm4666, %v4655, 0.0
    %4677 = vadd.xlane.f32.xlu0 %v4676
    %v4678 = vpop.xlane.xlu0 %4677
    %v4679 = vrcp.pop 2.0
    %v4680 = vmul.f32 %v4669, %v4679
    %v4681 = vmul.f32 %v4672, %v4679
    %v4682 = vmul.f32 %v4675, %v4679
    %v4683 = vmul.f32 %v4678, %v4679
    %v4684 = vsub.f32 %v4640, %v4680
    %v4685 = vsub.f32 %v4645, %v4681
    %v4686 = vsub.f32 %v4650, %v4682
    %v4687 = vsub.f32 %v4655, %v4683
    %v4688 = vmul.f32 %v4684, %v4684
    %v4689 = vmul.f32 %v4685, %v4685
    %v4690 = vmul.f32 %v4686, %v4686
    %v4691 = vmul.f32 %v4687, %v4687
    %v4692 = vsel %vm4666, %v4688, 0.0
    %4693 = vadd.xlane.f32.xlu0 %v4692
    %v4694 = vpop.xlane.xlu0 %4693
    %v4695 = vsel %vm4666, %v4689, 0.0
    %4696 = vadd.xlane.f32.xlu0 %v4695
    %v4697 = vpop.xlane.xlu0 %4696
    %v4698 = vsel %vm4666, %v4690, 0.0
    %4699 = vadd.xlane.f32.xlu0 %v4698
    %v4700 = vpop.xlane.xlu0 %4699
    %v4701 = vsel %vm4666, %v4691, 0.0
    %4702 = vadd.xlane.f32.xlu0 %v4701
    %v4703 = vpop.xlane.xlu0 %4702
    %v4704 = vmul.f32 %v4694, %v4679
    %v4705 = vmul.f32 %v4697, %v4679
    %v4706 = vmul.f32 %v4700, %v4679
    %v4707 = vmul.f32 %v4703, %v4679
    %v4708 = vadd.f32 %v4704, 1e-05
    %v4709 = vadd.f32 %v4705, 1e-05
    %v4710 = vadd.f32 %v4706, 1e-05
    %v4711 = vadd.f32 %v4707, 1e-05
    %v4712 = vrsqrt.pop %v4708
    %v4713 = vrsqrt.pop %v4709
    %v4714 = vrsqrt.pop %v4710
    %v4715 = vrsqrt.pop %v4711
    %v4716 = vmul.f32 %v4684, %v4712
    %v4717 = vmul.f32 %v4685, %v4713
    %v4718 = vmul.f32 %v4686, %v4714
    %v4719 = vmul.f32 %v4687, %v4715
    %4721 = vset.pattern.permute.xlu0 0
    %4722 = vperm.xlu0 %4721, %v4658
    %v4723 = vpop.permute.xlu0 %4722
    %4726 = vset.pattern.permute.xlu0 0
    %4727 = vperm.xlu0 %4726, %v4659
    %v4728 = vpop.permute.xlu0 %4727
    %4731 = vset.pattern.permute.xlu0 0
    %4732 = vperm.xlu0 %4731, %v4660
    %v4733 = vpop.permute.xlu0 %4732
    %4736 = vset.pattern.permute.xlu0 0
    %4737 = vperm.xlu0 %4736, %v4661
    %v4738 = vpop.permute.xlu0 %4737
    %v4740 = vmul.f32 %v4716, %v4723
    %v4741 = vmul.f32 %v4717, %v4728
    %v4742 = vmul.f32 %v4718, %v4733
    %v4743 = vmul.f32 %v4719, %v4738
    %4745 = vset.pattern.permute.xlu0 0
    %4746 = vperm.xlu0 %4745, %v4662
    %v4747 = vpop.permute.xlu0 %4746
    %4750 = vset.pattern.permute.xlu0 0
    %4751 = vperm.xlu0 %4750, %v4663
    %v4752 = vpop.permute.xlu0 %4751
    %4755 = vset.pattern.permute.xlu0 0
    %4756 = vperm.xlu0 %4755, %v4664
    %v4757 = vpop.permute.xlu0 %4756
    %4760 = vset.pattern.permute.xlu0 0
    %4761 = vperm.xlu0 %4760, %v4665
    %v4762 = vpop.permute.xlu0 %4761
    %v4764 = vadd.f32 %v4740, %v4747
    %v4765 = vadd.f32 %v4741, %v4752
    %v4766 = vadd.f32 %v4742, %v4757
    %v4767 = vadd.f32 %v4743, %v4762
    %vm4768 = vcmp.ge.f32.partialorder %v4764, 0.0
    %vm4769 = vcmp.ge.f32.partialorder %v4765, 0.0
    %vm4770 = vcmp.ge.f32.partialorder %v4766, 0.0
    %vm4771 = vcmp.ge.f32.partialorder %v4767, 0.0
    %v4772 = vmul.f32 %v4764, 0.01
    %v4773 = vmul.f32 %v4765, 0.01
    %v4774 = vmul.f32 %v4766, 0.01
    %v4775 = vmul.f32 %v4767, 0.01
    %v4776 = vsel %vm4768, %v4764, %v4772
    %v4777 = vsel %vm4769, %v4765, %v4773
    %v4778 = vsel %vm4770, %v4766, %v4774
    %v4779 = vsel %vm4771, %v4767, %v4775
    %v4780 = vld [vmem:[#allocation12] sm:$0xff]
    %v4781 = vld [vmem:[#allocation12 + $0x8] sm:$0xff]
    %v4782 = vld [vmem:[%s39] sm:$0xff]
    %v4783 = vld [vmem:[%s39 + $0x8] sm:$0xff]
    %4785 = vset.pattern.permute.xlu0 0
    %4786 = vperm.xlu0 %4785, %v4782
    %v4787 = vpop.permute.xlu0 %4786
    %4790 = vset.pattern.permute.xlu0 0
    %4791 = vperm.xlu0 %4790, %v4783
    %v4792 = vpop.permute.xlu0 %4791
    %v4795 = vsel %vm3199, %v4780, 0
    %v4798 = vsel %vm3199, %v4781, 0
    %4800 = vmatprep.subr.mxu0 0.0
    %4801 = vmatpush1.msra.mxu0 %v4776
    %4802 = vmatprep.subr.mxu0 0.0
    %4803 = vmatpush1.msra.mxu0 %v4777
    %4804 = vmatprep.subr.mxu0 0.0
    %4805 = vmatpush1.msra.mxu0 %v4778
    %4806 = vmatprep.subr.mxu0 0.0
    %4807 = vmatpush1.msra.mxu0 %v4779
    %4808 = vmatprep.subr.mxu0 0.0
    %4809 = vmatpush1.msra.mxu0 0.0
    %4810 = vmatprep.subr.mxu0 0.0
    %4811 = vmatpush1.msra.mxu0 0.0
    %4812 = vmatprep.subr.mxu0 0.0
    %4813 = vmatpush1.msra.mxu0 0.0
    %4814 = vmatprep.subr.mxu0 0.0
    %4815 = vmatpush1.msra.mxu0 0.0
    %4816 = vmatprep.subr.mxu0 0.0
    %4817 = vmatpush1.msra.mxu0 0.0
    %4818 = vmatprep.subr.mxu0 0.0
    %4819 = vmatpush1.msra.mxu0 0.0
    %4820 = vmatprep.subr.mxu0 0.0
    %4821 = vmatpush1.msra.mxu0 0.0
    %4822 = vmatprep.subr.mxu0 0.0
    %4823 = vmatpush1.msra.mxu0 0.0
    %4824 = vmatprep.subr.mxu0 0.0
    %4825 = vmatpush1.msra.mxu0 0.0
    %4826 = vmatprep.subr.mxu0 0.0
    %4827 = vmatpush1.msra.mxu0 0.0
    %4828 = vmatprep.subr.mxu0 0.0
    %4829 = vmatpush1.msra.mxu0 0.0
    %4830 = vmatprep.subr.mxu0 0.0
    %4831 = vmatpush1.msra.mxu0 0.0
    %4832 = vmatprep.subr.mxu0 0.0
    %4833 = vmatpush1.msra.mxu0 0.0
    %4834 = vmatprep.subr.mxu0 0.0
    %4835 = vmatpush1.msra.mxu0 0.0
    %4836 = vmatprep.subr.mxu0 0.0
    %4837 = vmatpush1.msra.mxu0 0.0
    %4838 = vmatprep.subr.mxu0 0.0
    %4839 = vmatpush1.msra.mxu0 0.0
    %4840 = vmatprep.subr.mxu0 0.0
    %4841 = vmatpush1.msra.mxu0 0.0
    %4842 = vmatprep.subr.mxu0 0.0
    %4843 = vmatpush1.msra.mxu0 0.0
    %4844 = vmatprep.subr.mxu0 0.0
    %4845 = vmatpush1.msra.mxu0 0.0
    %4846 = vmatprep.subr.mxu0 0.0
    %4847 = vmatpush1.msra.mxu0 0.0
    %4848 = vmatprep.subr.mxu0 0.0
    %4849 = vmatpush1.msra.mxu0 0.0
    %4850 = vmatprep.subr.mxu0 0.0
    %4851 = vmatpush1.msra.mxu0 0.0
    %4852 = vmatprep.subr.mxu0 0.0
    %4853 = vmatpush1.msra.mxu0 0.0
    %4854 = vmatprep.subr.mxu0 0.0
    %4855 = vmatpush1.msra.mxu0 0.0
    %4856 = vmatprep.subr.mxu0 0.0
    %4857 = vmatpush1.msra.mxu0 0.0
    %4858 = vmatprep.subr.mxu0 0.0
    %4859 = vmatpush1.msra.mxu0 0.0
    %4860 = vmatprep.subr.mxu0 0.0
    %4861 = vmatpush1.msra.mxu0 0.0
    %4862 = vmatprep.subr.mxu0 0.0
    %4863 = vmatpush1.msra.mxu0 0.0
    %4864 = vmatprep.mubr.f32.mxu0 0.0
    %4865 = vmatmul.mubr.f32.gmra.mrb[0].mxu0 %v4795
    %v4866 = vpop.f32.mrb[0].mxu0
    %v4867 = vadd.f32 %v4787, %v4866
    %v4868 = vpop.f32.mrb[0].mxu0
    %4869 = vmatprep.mubr.f32.mxu0 0.0
    %4870 = vmatmul.mubr.f32.gmra.mrb[0].mxu0 %v4798
    %v4871 = vpop.f32.mrb[0].mxu0
    %v4872 = vadd.f32 %v4792, %v4871
    %v4873 = vpop.f32.mrb[0].mxu0
    %4874 = vdwg.mxu0
    %v4875 = vld [vmem:[%s3] sm:$0xff]
    %v4876 = vmul.f32 %v4872, 0.5
    %v4877 = vmul.f32 %v4876, 1.442695
    %v4878 = vpow.pop %v4877
    %v4879 = vmul.f32 %v4875, %v4878
    %v4880 = vadd.f32 %v4879, %v4867
    %4881 = vst.msk [vmem:[%s73] sm:$0xff] %vm4666, %v4867
    %4882 = vst.msk [vmem:[%s73 + $0x8] sm:$0xff] %vm4666, %v4872
    %v4883 = vld [vmem:[%s41] sm:$0xff]
    %v4884 = vld [vmem:[%s41 + $0x8] sm:$0xff]
    %v4885 = vld [vmem:[%s41 + $0x10] sm:$0xff]
    %v4886 = vld [vmem:[%s41 + $0x18] sm:$0xff]
    %v4887 = vld [vmem:[%s43] sm:$0xff]
    %v4888 = vld [vmem:[%s43 + $0x8] sm:$0xff]
    %v4889 = vld [vmem:[%s43 + $0x10] sm:$0xff]
    %v4890 = vld [vmem:[%s43 + $0x18] sm:$0xff]
    %4892 = vset.pattern.permute.xlu0 0
    %4893 = vperm.xlu0 %4892, %v4887
    %v4894 = vpop.permute.xlu0 %4893
    %4897 = vset.pattern.permute.xlu0 0
    %4898 = vperm.xlu0 %4897, %v4888
    %v4899 = vpop.permute.xlu0 %4898
    %4902 = vset.pattern.permute.xlu0 0
    %4903 = vperm.xlu0 %4902, %v4889
    %v4904 = vpop.permute.xlu0 %4903
    %4907 = vset.pattern.permute.xlu0 0
    %4908 = vperm.xlu0 %4907, %v4890
    %v4909 = vpop.permute.xlu0 %4908
    %v4912 = vsel %vm4096, %v4883, 0
    %v4915 = vsel %vm4096, %v4884, 0
    %v4918 = vsel %vm4096, %v4885, 0
    %v4921 = vsel %vm4096, %v4886, 0
    %4923 = vmatprep.subr.mxu0 0.0
    %4924 = vmatpush1.msra.mxu0 %v4880
    %4925 = vmatprep.subr.mxu0 0.0
    %4926 = vmatpush1.msra.mxu0 0.0
    %4927 = vmatprep.subr.mxu0 0.0
    %4928 = vmatpush1.msra.mxu0 0.0
    %4929 = vmatprep.subr.mxu0 0.0
    %4930 = vmatpush1.msra.mxu0 0.0
    %4931 = vmatprep.subr.mxu0 0.0
    %4932 = vmatpush1.msra.mxu0 0.0
    %4933 = vmatprep.subr.mxu0 0.0
    %4934 = vmatpush1.msra.mxu0 0.0
    %4935 = vmatprep.subr.mxu0 0.0
    %4936 = vmatpush1.msra.mxu0 0.0
    %4937 = vmatprep.subr.mxu0 0.0
    %4938 = vmatpush1.msra.mxu0 0.0
    %4939 = vmatprep.subr.mxu0 0.0
    %4940 = vmatpush1.msra.mxu0 0.0
    %4941 = vmatprep.subr.mxu0 0.0
    %4942 = vmatpush1.msra.mxu0 0.0
    %4943 = vmatprep.subr.mxu0 0.0
    %4944 = vmatpush1.msra.mxu0 0.0
    %4945 = vmatprep.subr.mxu0 0.0
    %4946 = vmatpush1.msra.mxu0 0.0
    %4947 = vmatprep.subr.mxu0 0.0
    %4948 = vmatpush1.msra.mxu0 0.0
    %4949 = vmatprep.subr.mxu0 0.0
    %4950 = vmatpush1.msra.mxu0 0.0
    %4951 = vmatprep.subr.mxu0 0.0
    %4952 = vmatpush1.msra.mxu0 0.0
    %4953 = vmatprep.subr.mxu0 0.0
    %4954 = vmatpush1.msra.mxu0 0.0
    %4955 = vmatprep.subr.mxu0 0.0
    %4956 = vmatpush1.msra.mxu0 0.0
    %4957 = vmatprep.subr.mxu0 0.0
    %4958 = vmatpush1.msra.mxu0 0.0
    %4959 = vmatprep.subr.mxu0 0.0
    %4960 = vmatpush1.msra.mxu0 0.0
    %4961 = vmatprep.subr.mxu0 0.0
    %4962 = vmatpush1.msra.mxu0 0.0
    %4963 = vmatprep.subr.mxu0 0.0
    %4964 = vmatpush1.msra.mxu0 0.0
    %4965 = vmatprep.subr.mxu0 0.0
    %4966 = vmatpush1.msra.mxu0 0.0
    %4967 = vmatprep.subr.mxu0 0.0
    %4968 = vmatpush1.msra.mxu0 0.0
    %4969 = vmatprep.subr.mxu0 0.0
    %4970 = vmatpush1.msra.mxu0 0.0
    %4971 = vmatprep.subr.mxu0 0.0
    %4972 = vmatpush1.msra.mxu0 0.0
    %4973 = vmatprep.subr.mxu0 0.0
    %4974 = vmatpush1.msra.mxu0 0.0
    %4975 = vmatprep.subr.mxu0 0.0
    %4976 = vmatpush1.msra.mxu0 0.0
    %4977 = vmatprep.subr.mxu0 0.0
    %4978 = vmatpush1.msra.mxu0 0.0
    %4979 = vmatprep.subr.mxu0 0.0
    %4980 = vmatpush1.msra.mxu0 0.0
    %4981 = vmatprep.subr.mxu0 0.0
    %4982 = vmatpush1.msra.mxu0 0.0
    %4983 = vmatprep.subr.mxu0 0.0
    %4984 = vmatpush1.msra.mxu0 0.0
    %4985 = vmatprep.subr.mxu0 0.0
    %4986 = vmatpush1.msra.mxu0 0.0
    %4987 = vmatprep.mubr.f32.mxu0 0.0
    %4988 = vmatmul.mubr.f32.gmra.mrb[0].mxu0 %v4912
    %v4989 = vpop.f32.mrb[0].mxu0
    %v4990 = vadd.f32 %v4894, %v4989
    %v4991 = vpop.f32.mrb[0].mxu0
    %4992 = vmatprep.mubr.f32.mxu0 0.0
    %4993 = vmatmul.mubr.f32.gmra.mrb[0].mxu0 %v4915
    %v4994 = vpop.f32.mrb[0].mxu0
    %v4995 = vadd.f32 %v4899, %v4994
    %v4996 = vpop.f32.mrb[0].mxu0
    %4997 = vmatprep.mubr.f32.mxu0 0.0
    %4998 = vmatmul.mubr.f32.gmra.mrb[0].mxu0 %v4918
    %v4999 = vpop.f32.mrb[0].mxu0
    %v5000 = vadd.f32 %v4904, %v4999
    %v5001 = vpop.f32.mrb[0].mxu0
    %5002 = vmatprep.mubr.f32.mxu0 0.0
    %5003 = vmatmul.mubr.f32.gmra.mrb[0].mxu0 %v4921
    %v5004 = vpop.f32.mrb[0].mxu0
    %v5005 = vadd.f32 %v4909, %v5004
    %v5006 = vpop.f32.mrb[0].mxu0
    %5007 = vdwg.mxu0
    %vm5008 = vcmp.ge.f32.partialorder %v4990, 0.0
    %vm5009 = vcmp.ge.f32.partialorder %v4995, 0.0
    %vm5010 = vcmp.ge.f32.partialorder %v5000, 0.0
    %vm5011 = vcmp.ge.f32.partialorder %v5005, 0.0
    %v5012 = vmul.f32 %v4990, 0.01
    %v5013 = vmul.f32 %v4995, 0.01
    %v5014 = vmul.f32 %v5000, 0.01
    %v5015 = vmul.f32 %v5005, 0.01
    %v5016 = vsel %vm5008, %v4990, %v5012
    %v5017 = vsel %vm5009, %v4995, %v5013
    %v5018 = vsel %vm5010, %v5000, %v5014
    %v5019 = vsel %vm5011, %v5005, %v5015
    %v5020 = vld [vmem:[#allocation14] sm:$0x3]
    %s5021 = scalar_lea.vmem %s41, 32
    %v5022 = vld [vmem:[%s5021] sm:$0xff]
    %v5023 = vld [vmem:[%s5021 + $0x8] sm:$0xff]
    %v5024 = vld [vmem:[%s5021 + $0x10] sm:$0xff]
    %v5025 = vld [vmem:[%s5021 + $0x18] sm:$0xff]
    %s5026 = scalar_lea.vmem %s43, 32
    %v5027 = vld [vmem:[%s5026] sm:$0xff]
    %v5028 = vld [vmem:[%s5026 + $0x8] sm:$0xff]
    %v5029 = vld [vmem:[%s5026 + $0x10] sm:$0xff]
    %v5030 = vld [vmem:[%s5026 + $0x18] sm:$0xff]
    %5032 = vset.pattern.permute.xlu0 0
    %5033 = vperm.xlu0 %5032, %v5027
    %v5034 = vpop.permute.xlu0 %5033
    %5037 = vset.pattern.permute.xlu0 0
    %5038 = vperm.xlu0 %5037, %v5028
    %v5039 = vpop.permute.xlu0 %5038
    %5042 = vset.pattern.permute.xlu0 0
    %5043 = vperm.xlu0 %5042, %v5029
    %v5044 = vpop.permute.xlu0 %5043
    %5047 = vset.pattern.permute.xlu0 0
    %5048 = vperm.xlu0 %5047, %v5030
    %v5049 = vpop.permute.xlu0 %5048
    %v5052 = vsel %vm4096, %v5022, 0
    %v5055 = vsel %vm4096, %v5023, 0
    %v5058 = vsel %vm4096, %v5024, 0
    %v5061 = vsel %vm4096, %v5025, 0
    %5063 = vmatprep.subr.mxu0 0.0
    %5064 = vmatpush1.msra.mxu0 %v4880
    %5065 = vmatprep.subr.mxu0 0.0
    %5066 = vmatpush1.msra.mxu0 0.0
    %5067 = vmatprep.subr.mxu0 0.0
    %5068 = vmatpush1.msra.mxu0 0.0
    %5069 = vmatprep.subr.mxu0 0.0
    %5070 = vmatpush1.msra.mxu0 0.0
    %5071 = vmatprep.subr.mxu0 0.0
    %5072 = vmatpush1.msra.mxu0 0.0
    %5073 = vmatprep.subr.mxu0 0.0
    %5074 = vmatpush1.msra.mxu0 0.0
    %5075 = vmatprep.subr.mxu0 0.0
    %5076 = vmatpush1.msra.mxu0 0.0
    %5077 = vmatprep.subr.mxu0 0.0
    %5078 = vmatpush1.msra.mxu0 0.0
    %5079 = vmatprep.subr.mxu0 0.0
    %5080 = vmatpush1.msra.mxu0 0.0
    %5081 = vmatprep.subr.mxu0 0.0
    %5082 = vmatpush1.msra.mxu0 0.0
    %5083 = vmatprep.subr.mxu0 0.0
    %5084 = vmatpush1.msra.mxu0 0.0
    %5085 = vmatprep.subr.mxu0 0.0
    %5086 = vmatpush1.msra.mxu0 0.0
    %5087 = vmatprep.subr.mxu0 0.0
    %5088 = vmatpush1.msra.mxu0 0.0
    %5089 = vmatprep.subr.mxu0 0.0
    %5090 = vmatpush1.msra.mxu0 0.0
    %5091 = vmatprep.subr.mxu0 0.0
    %5092 = vmatpush1.msra.mxu0 0.0
    %5093 = vmatprep.subr.mxu0 0.0
    %5094 = vmatpush1.msra.mxu0 0.0
    %5095 = vmatprep.subr.mxu0 0.0
    %5096 = vmatpush1.msra.mxu0 0.0
    %5097 = vmatprep.subr.mxu0 0.0
    %5098 = vmatpush1.msra.mxu0 0.0
    %5099 = vmatprep.subr.mxu0 0.0
    %5100 = vmatpush1.msra.mxu0 0.0
    %5101 = vmatprep.subr.mxu0 0.0
    %5102 = vmatpush1.msra.mxu0 0.0
    %5103 = vmatprep.subr.mxu0 0.0
    %5104 = vmatpush1.msra.mxu0 0.0
    %5105 = vmatprep.subr.mxu0 0.0
    %5106 = vmatpush1.msra.mxu0 0.0
    %5107 = vmatprep.subr.mxu0 0.0
    %5108 = vmatpush1.msra.mxu0 0.0
    %5109 = vmatprep.subr.mxu0 0.0
    %5110 = vmatpush1.msra.mxu0 0.0
    %5111 = vmatprep.subr.mxu0 0.0
    %5112 = vmatpush1.msra.mxu0 0.0
    %5113 = vmatprep.subr.mxu0 0.0
    %5114 = vmatpush1.msra.mxu0 0.0
    %5115 = vmatprep.subr.mxu0 0.0
    %5116 = vmatpush1.msra.mxu0 0.0
    %5117 = vmatprep.subr.mxu0 0.0
    %5118 = vmatpush1.msra.mxu0 0.0
    %5119 = vmatprep.subr.mxu0 0.0
    %5120 = vmatpush1.msra.mxu0 0.0
    %5121 = vmatprep.subr.mxu0 0.0
    %5122 = vmatpush1.msra.mxu0 0.0
    %5123 = vmatprep.subr.mxu0 0.0
    %5124 = vmatpush1.msra.mxu0 0.0
    %5125 = vmatprep.subr.mxu0 0.0
    %5126 = vmatpush1.msra.mxu0 0.0
    %5127 = vmatprep.mubr.f32.mxu0 0.0
    %5128 = vmatmul.mubr.f32.gmra.mrb[0].mxu0 %v5052
    %v5129 = vpop.f32.mrb[0].mxu0
    %v5130 = vadd.f32 %v5034, %v5129
    %v5131 = vpop.f32.mrb[0].mxu0
    %5132 = vmatprep.mubr.f32.mxu0 0.0
    %5133 = vmatmul.mubr.f32.gmra.mrb[0].mxu0 %v5055
    %v5134 = vpop.f32.mrb[0].mxu0
    %v5135 = vadd.f32 %v5039, %v5134
    %v5136 = vpop.f32.mrb[0].mxu0
    %5137 = vmatprep.mubr.f32.mxu0 0.0
    %5138 = vmatmul.mubr.f32.gmra.mrb[0].mxu0 %v5058
    %v5139 = vpop.f32.mrb[0].mxu0
    %v5140 = vadd.f32 %v5044, %v5139
    %v5141 = vpop.f32.mrb[0].mxu0
    %5142 = vmatprep.mubr.f32.mxu0 0.0
    %5143 = vmatmul.mubr.f32.gmra.mrb[0].mxu0 %v5061
    %v5144 = vpop.f32.mrb[0].mxu0
    %v5145 = vadd.f32 %v5049, %v5144
    %v5146 = vpop.f32.mrb[0].mxu0
    %5147 = vdwg.mxu0
    %vm5148 = vcmp.ge.f32.partialorder %v5130, 0.0
    %vm5149 = vcmp.ge.f32.partialorder %v5135, 0.0
    %vm5150 = vcmp.ge.f32.partialorder %v5140, 0.0
    %vm5151 = vcmp.ge.f32.partialorder %v5145, 0.0
    %v5152 = vmul.f32 %v5130, 0.01
    %v5153 = vmul.f32 %v5135, 0.01
    %v5154 = vmul.f32 %v5140, 0.01
    %v5155 = vmul.f32 %v5145, 0.01
    %v5156 = vsel %vm5148, %v5130, %v5152
    %v5157 = vsel %vm5149, %v5135, %v5153
    %v5158 = vsel %vm5150, %v5140, %v5154
    %v5159 = vsel %vm5151, %v5145, %v5155
    %s5160 = scalar_lea.vmem [#allocation14], 2
    %v5161 = vld [vmem:[%s5160] sm:$0x3]
    %v5163 = vsel %vm4666, %v5156, 0
    %v5166 = vsel %vm4666, %v5157, 0
    %v5169 = vsel %vm4666, %v5158, 0
    %v5172 = vsel %vm4666, %v5159, 0
    %v5175 = vsel %vm2210, %v5161, 0
    %5177 = vmatprep.subr.mxu0 0.0
    %5178 = vmatpush1.msra.mxu0 %v5175
    %5179 = vmatprep.subr.mxu0 0.0
    %5180 = vmatpush1.msra.mxu0 0.0
    %5181 = vmatprep.subr.mxu0 0.0
    %5182 = vmatpush1.msra.mxu0 0.0
    %5183 = vmatprep.subr.mxu0 0.0
    %5184 = vmatpush1.msra.mxu0 0.0
    %5185 = vmatprep.subr.mxu0 0.0
    %5186 = vmatpush1.msra.mxu0 0.0
    %5187 = vmatprep.subr.mxu0 0.0
    %5188 = vmatpush1.msra.mxu0 0.0
    %5189 = vmatprep.subr.mxu0 0.0
    %5190 = vmatpush1.msra.mxu0 0.0
    %5191 = vmatprep.subr.mxu0 0.0
    %5192 = vmatpush1.msra.mxu0 0.0
    %5193 = vmatprep.subr.mxu0 0.0
    %5194 = vmatpush1.msra.mxu0 0.0
    %5195 = vmatprep.subr.mxu0 0.0
    %5196 = vmatpush1.msra.mxu0 0.0
    %5197 = vmatprep.subr.mxu0 0.0
    %5198 = vmatpush1.msra.mxu0 0.0
    %5199 = vmatprep.subr.mxu0 0.0
    %5200 = vmatpush1.msra.mxu0 0.0
    %5201 = vmatprep.subr.mxu0 0.0
    %5202 = vmatpush1.msra.mxu0 0.0
    %5203 = vmatprep.subr.mxu0 0.0
    %5204 = vmatpush1.msra.mxu0 0.0
    %5205 = vmatprep.subr.mxu0 0.0
    %5206 = vmatpush1.msra.mxu0 0.0
    %5207 = vmatprep.subr.mxu0 0.0
    %5208 = vmatpush1.msra.mxu0 0.0
    %5209 = vmatprep.subr.mxu0 0.0
    %5210 = vmatpush1.msra.mxu0 0.0
    %5211 = vmatprep.subr.mxu0 0.0
    %5212 = vmatpush1.msra.mxu0 0.0
    %5213 = vmatprep.subr.mxu0 0.0
    %5214 = vmatpush1.msra.mxu0 0.0
    %5215 = vmatprep.subr.mxu0 0.0
    %5216 = vmatpush1.msra.mxu0 0.0
    %5217 = vmatprep.subr.mxu0 0.0
    %5218 = vmatpush1.msra.mxu0 0.0
    %5219 = vmatprep.subr.mxu0 0.0
    %5220 = vmatpush1.msra.mxu0 0.0
    %5221 = vmatprep.subr.mxu0 0.0
    %5222 = vmatpush1.msra.mxu0 0.0
    %5223 = vmatprep.subr.mxu0 0.0
    %5224 = vmatpush1.msra.mxu0 0.0
    %5225 = vmatprep.subr.mxu0 0.0
    %5226 = vmatpush1.msra.mxu0 0.0
    %5227 = vmatprep.subr.mxu0 0.0
    %5228 = vmatpush1.msra.mxu0 0.0
    %5229 = vmatprep.subr.mxu0 0.0
    %5230 = vmatpush1.msra.mxu0 0.0
    %5231 = vmatprep.subr.mxu0 0.0
    %5232 = vmatpush1.msra.mxu0 0.0
    %5233 = vmatprep.subr.mxu0 0.0
    %5234 = vmatpush1.msra.mxu0 0.0
    %5235 = vmatprep.subr.mxu0 0.0
    %5236 = vmatpush1.msra.mxu0 0.0
    %5237 = vmatprep.subr.mxu0 0.0
    %5238 = vmatpush1.msra.mxu0 0.0
    %5239 = vmatprep.subr.mxu0 0.0
    %5240 = vmatpush1.msra.mxu0 0.0
    %5241 = vmatprep.mubr.f32.mxu0 0.0
    %5242 = vmatmul.mubr.f32.gmra.mrb[0].mxu0 %v5163
    %v5243 = vpop.f32.mrb[0].mxu0
    %v5244 = vadd.f32 0.0, %v5243
    %v5245 = vpop.f32.mrb[0].mxu0
    %5246 = vmatprep.mubr.f32.mxu0 0.0
    %5247 = vmatmul.mubr.f32.gmra.mrb[0].mxu0 %v5166
    %v5248 = vpop.f32.mrb[0].mxu0
    %v5249 = vadd.f32 0.0, %v5248
    %v5250 = vpop.f32.mrb[0].mxu0
    %5251 = vmatprep.mubr.f32.mxu0 0.0
    %5252 = vmatmul.mubr.f32.gmra.mrb[0].mxu0 %v5169
    %v5253 = vpop.f32.mrb[0].mxu0
    %v5254 = vadd.f32 0.0, %v5253
    %v5255 = vpop.f32.mrb[0].mxu0
    %5256 = vmatprep.mubr.f32.mxu0 0.0
    %5257 = vmatmul.mubr.f32.gmra.mrb[0].mxu0 %v5172
    %v5258 = vpop.f32.mrb[0].mxu0
    %v5259 = vadd.f32 0.0, %v5258
    %v5260 = vpop.f32.mrb[0].mxu0
    %5261 = vdwg.mxu0
    %v5263 = vsel %vm4666, %v5016, 0
    %v5266 = vsel %vm4666, %v5017, 0
    %v5269 = vsel %vm4666, %v5018, 0
    %v5272 = vsel %vm4666, %v5019, 0
    %v5275 = vsel %vm2210, %v5020, 0
    %5277 = vmatprep.subr.mxu0 0.0
    %5278 = vmatpush1.msra.mxu0 %v5275
    %5279 = vmatprep.subr.mxu0 0.0
    %5280 = vmatpush1.msra.mxu0 0.0
    %5281 = vmatprep.subr.mxu0 0.0
    %5282 = vmatpush1.msra.mxu0 0.0
    %5283 = vmatprep.subr.mxu0 0.0
    %5284 = vmatpush1.msra.mxu0 0.0
    %5285 = vmatprep.subr.mxu0 0.0
    %5286 = vmatpush1.msra.mxu0 0.0
    %5287 = vmatprep.subr.mxu0 0.0
    %5288 = vmatpush1.msra.mxu0 0.0
    %5289 = vmatprep.subr.mxu0 0.0
    %5290 = vmatpush1.msra.mxu0 0.0
    %5291 = vmatprep.subr.mxu0 0.0
    %5292 = vmatpush1.msra.mxu0 0.0
    %5293 = vmatprep.subr.mxu0 0.0
    %5294 = vmatpush1.msra.mxu0 0.0
    %5295 = vmatprep.subr.mxu0 0.0
    %5296 = vmatpush1.msra.mxu0 0.0
    %5297 = vmatprep.subr.mxu0 0.0
    %5298 = vmatpush1.msra.mxu0 0.0
    %5299 = vmatprep.subr.mxu0 0.0
    %5300 = vmatpush1.msra.mxu0 0.0
    %5301 = vmatprep.subr.mxu0 0.0
    %5302 = vmatpush1.msra.mxu0 0.0
    %5303 = vmatprep.subr.mxu0 0.0
    %5304 = vmatpush1.msra.mxu0 0.0
    %5305 = vmatprep.subr.mxu0 0.0
    %5306 = vmatpush1.msra.mxu0 0.0
    %5307 = vmatprep.subr.mxu0 0.0
    %5308 = vmatpush1.msra.mxu0 0.0
    %5309 = vmatprep.subr.mxu0 0.0
    %5310 = vmatpush1.msra.mxu0 0.0
    %5311 = vmatprep.subr.mxu0 0.0
    %5312 = vmatpush1.msra.mxu0 0.0
    %5313 = vmatprep.subr.mxu0 0.0
    %5314 = vmatpush1.msra.mxu0 0.0
    %5315 = vmatprep.subr.mxu0 0.0
    %5316 = vmatpush1.msra.mxu0 0.0
    %5317 = vmatprep.subr.mxu0 0.0
    %5318 = vmatpush1.msra.mxu0 0.0
    %5319 = vmatprep.subr.mxu0 0.0
    %5320 = vmatpush1.msra.mxu0 0.0
    %5321 = vmatprep.subr.mxu0 0.0
    %5322 = vmatpush1.msra.mxu0 0.0
    %5323 = vmatprep.subr.mxu0 0.0
    %5324 = vmatpush1.msra.mxu0 0.0
    %5325 = vmatprep.subr.mxu0 0.0
    %5326 = vmatpush1.msra.mxu0 0.0
    %5327 = vmatprep.subr.mxu0 0.0
    %5328 = vmatpush1.msra.mxu0 0.0
    %5329 = vmatprep.subr.mxu0 0.0
    %5330 = vmatpush1.msra.mxu0 0.0
    %5331 = vmatprep.subr.mxu0 0.0
    %5332 = vmatpush1.msra.mxu0 0.0
    %5333 = vmatprep.subr.mxu0 0.0
    %5334 = vmatpush1.msra.mxu0 0.0
    %5335 = vmatprep.subr.mxu0 0.0
    %5336 = vmatpush1.msra.mxu0 0.0
    %5337 = vmatprep.subr.mxu0 0.0
    %5338 = vmatpush1.msra.mxu0 0.0
    %5339 = vmatprep.subr.mxu0 0.0
    %5340 = vmatpush1.msra.mxu0 0.0
    %5341 = vmatprep.mubr.f32.mxu0 0.0
    %5342 = vmatmul.mubr.f32.gmra.mrb[0].mxu0 %v5263
    %v5343 = vpop.f32.mrb[0].mxu0
    %v5344 = vadd.f32 %v5244, %v5343
    %v5345 = vpop.f32.mrb[0].mxu0
    %5346 = vmatprep.mubr.f32.mxu0 0.0
    %5347 = vmatmul.mubr.f32.gmra.mrb[0].mxu0 %v5266
    %v5348 = vpop.f32.mrb[0].mxu0
    %v5349 = vadd.f32 %v5249, %v5348
    %v5350 = vpop.f32.mrb[0].mxu0
    %5351 = vmatprep.mubr.f32.mxu0 0.0
    %5352 = vmatmul.mubr.f32.gmra.mrb[0].mxu0 %v5269
    %v5353 = vpop.f32.mrb[0].mxu0
    %v5354 = vadd.f32 %v5254, %v5353
    %v5355 = vpop.f32.mrb[0].mxu0
    %5356 = vmatprep.mubr.f32.mxu0 0.0
    %5357 = vmatmul.mubr.f32.gmra.mrb[0].mxu0 %v5272
    %v5358 = vpop.f32.mrb[0].mxu0
    %v5359 = vadd.f32 %v5259, %v5358
    %v5360 = vpop.f32.mrb[0].mxu0
    %5361 = vdwg.mxu0
    %s5362 = scalar_lea.vmem %s41, 64
    %v5363 = vld [vmem:[%s5362] sm:$0xff]
    %v5364 = vld [vmem:[%s5362 + $0x8] sm:$0xff]
    %v5365 = vld [vmem:[%s5362 + $0x10] sm:$0xff]
    %v5366 = vld [vmem:[%s5362 + $0x18] sm:$0xff]
    %s5367 = scalar_lea.vmem %s43, 64
    %v5368 = vld [vmem:[%s5367] sm:$0xff]
    %v5369 = vld [vmem:[%s5367 + $0x8] sm:$0xff]
    %v5370 = vld [vmem:[%s5367 + $0x10] sm:$0xff]
    %v5371 = vld [vmem:[%s5367 + $0x18] sm:$0xff]
    %5373 = vset.pattern.permute.xlu0 0
    %5374 = vperm.xlu0 %5373, %v5368
    %v5375 = vpop.permute.xlu0 %5374
    %5378 = vset.pattern.permute.xlu0 0
    %5379 = vperm.xlu0 %5378, %v5369
    %v5380 = vpop.permute.xlu0 %5379
    %5383 = vset.pattern.permute.xlu0 0
    %5384 = vperm.xlu0 %5383, %v5370
    %v5385 = vpop.permute.xlu0 %5384
    %5388 = vset.pattern.permute.xlu0 0
    %5389 = vperm.xlu0 %5388, %v5371
    %v5390 = vpop.permute.xlu0 %5389
    %v5393 = vsel %vm4096, %v5363, 0
    %v5396 = vsel %vm4096, %v5364, 0
    %v5399 = vsel %vm4096, %v5365, 0
    %v5402 = vsel %vm4096, %v5366, 0
    %5404 = vmatprep.subr.mxu0 0.0
    %5405 = vmatpush1.msra.mxu0 %v4880
    %5406 = vmatprep.subr.mxu0 0.0
    %5407 = vmatpush1.msra.mxu0 0.0
    %5408 = vmatprep.subr.mxu0 0.0
    %5409 = vmatpush1.msra.mxu0 0.0
    %5410 = vmatprep.subr.mxu0 0.0
    %5411 = vmatpush1.msra.mxu0 0.0
    %5412 = vmatprep.subr.mxu0 0.0
    %5413 = vmatpush1.msra.mxu0 0.0
    %5414 = vmatprep.subr.mxu0 0.0
    %5415 = vmatpush1.msra.mxu0 0.0
    %5416 = vmatprep.subr.mxu0 0.0
    %5417 = vmatpush1.msra.mxu0 0.0
    %5418 = vmatprep.subr.mxu0 0.0
    %5419 = vmatpush1.msra.mxu0 0.0
    %5420 = vmatprep.subr.mxu0 0.0
    %5421 = vmatpush1.msra.mxu0 0.0
    %5422 = vmatprep.subr.mxu0 0.0
    %5423 = vmatpush1.msra.mxu0 0.0
    %5424 = vmatprep.subr.mxu0 0.0
    %5425 = vmatpush1.msra.mxu0 0.0
    %5426 = vmatprep.subr.mxu0 0.0
    %5427 = vmatpush1.msra.mxu0 0.0
    %5428 = vmatprep.subr.mxu0 0.0
    %5429 = vmatpush1.msra.mxu0 0.0
    %5430 = vmatprep.subr.mxu0 0.0
    %5431 = vmatpush1.msra.mxu0 0.0
    %5432 = vmatprep.subr.mxu0 0.0
    %5433 = vmatpush1.msra.mxu0 0.0
    %5434 = vmatprep.subr.mxu0 0.0
    %5435 = vmatpush1.msra.mxu0 0.0
    %5436 = vmatprep.subr.mxu0 0.0
    %5437 = vmatpush1.msra.mxu0 0.0
    %5438 = vmatprep.subr.mxu0 0.0
    %5439 = vmatpush1.msra.mxu0 0.0
    %5440 = vmatprep.subr.mxu0 0.0
    %5441 = vmatpush1.msra.mxu0 0.0
    %5442 = vmatprep.subr.mxu0 0.0
    %5443 = vmatpush1.msra.mxu0 0.0
    %5444 = vmatprep.subr.mxu0 0.0
    %5445 = vmatpush1.msra.mxu0 0.0
    %5446 = vmatprep.subr.mxu0 0.0
    %5447 = vmatpush1.msra.mxu0 0.0
    %5448 = vmatprep.subr.mxu0 0.0
    %5449 = vmatpush1.msra.mxu0 0.0
    %5450 = vmatprep.subr.mxu0 0.0
    %5451 = vmatpush1.msra.mxu0 0.0
    %5452 = vmatprep.subr.mxu0 0.0
    %5453 = vmatpush1.msra.mxu0 0.0
    %5454 = vmatprep.subr.mxu0 0.0
    %5455 = vmatpush1.msra.mxu0 0.0
    %5456 = vmatprep.subr.mxu0 0.0
    %5457 = vmatpush1.msra.mxu0 0.0
    %5458 = vmatprep.subr.mxu0 0.0
    %5459 = vmatpush1.msra.mxu0 0.0
    %5460 = vmatprep.subr.mxu0 0.0
    %5461 = vmatpush1.msra.mxu0 0.0
    %5462 = vmatprep.subr.mxu0 0.0
    %5463 = vmatpush1.msra.mxu0 0.0
    %5464 = vmatprep.subr.mxu0 0.0
    %5465 = vmatpush1.msra.mxu0 0.0
    %5466 = vmatprep.subr.mxu0 0.0
    %5467 = vmatpush1.msra.mxu0 0.0
    %5468 = vmatprep.mubr.f32.mxu0 0.0
    %5469 = vmatmul.mubr.f32.gmra.mrb[0].mxu0 %v5393
    %v5470 = vpop.f32.mrb[0].mxu0
    %v5471 = vadd.f32 %v5375, %v5470
    %v5472 = vpop.f32.mrb[0].mxu0
    %5473 = vmatprep.mubr.f32.mxu0 0.0
    %5474 = vmatmul.mubr.f32.gmra.mrb[0].mxu0 %v5396
    %v5475 = vpop.f32.mrb[0].mxu0
    %v5476 = vadd.f32 %v5380, %v5475
    %v5477 = vpop.f32.mrb[0].mxu0
    %5478 = vmatprep.mubr.f32.mxu0 0.0
    %5479 = vmatmul.mubr.f32.gmra.mrb[0].mxu0 %v5399
    %v5480 = vpop.f32.mrb[0].mxu0
    %v5481 = vadd.f32 %v5385, %v5480
    %v5482 = vpop.f32.mrb[0].mxu0
    %5483 = vmatprep.mubr.f32.mxu0 0.0
    %5484 = vmatmul.mubr.f32.gmra.mrb[0].mxu0 %v5402
    %v5485 = vpop.f32.mrb[0].mxu0
    %v5486 = vadd.f32 %v5390, %v5485
    %v5487 = vpop.f32.mrb[0].mxu0
    %5488 = vdwg.mxu0
    %vm5489 = vcmp.ge.f32.partialorder %v5471, 0.0
    %vm5490 = vcmp.ge.f32.partialorder %v5476, 0.0
    %vm5491 = vcmp.ge.f32.partialorder %v5481, 0.0
    %vm5492 = vcmp.ge.f32.partialorder %v5486, 0.0
    %v5493 = vmul.f32 %v5471, 0.01
    %v5494 = vmul.f32 %v5476, 0.01
    %v5495 = vmul.f32 %v5481, 0.01
    %v5496 = vmul.f32 %v5486, 0.01
    %v5497 = vsel %vm5489, %v5471, %v5493
    %v5498 = vsel %vm5490, %v5476, %v5494
    %v5499 = vsel %vm5491, %v5481, %v5495
    %v5500 = vsel %vm5492, %v5486, %v5496
    %s5501 = scalar_lea.vmem [#allocation14], 4
    %v5502 = vld [vmem:[%s5501] sm:$0x3]
    %v5504 = vsel %vm4666, %v5497, 0
    %v5507 = vsel %vm4666, %v5498, 0
    %v5510 = vsel %vm4666, %v5499, 0
    %v5513 = vsel %vm4666, %v5500, 0
    %v5516 = vsel %vm2210, %v5502, 0
    %5518 = vmatprep.subr.mxu0 0.0
    %5519 = vmatpush1.msra.mxu0 %v5516
    %5520 = vmatprep.subr.mxu0 0.0
    %5521 = vmatpush1.msra.mxu0 0.0
    %5522 = vmatprep.subr.mxu0 0.0
    %5523 = vmatpush1.msra.mxu0 0.0
    %5524 = vmatprep.subr.mxu0 0.0
    %5525 = vmatpush1.msra.mxu0 0.0
    %5526 = vmatprep.subr.mxu0 0.0
    %5527 = vmatpush1.msra.mxu0 0.0
    %5528 = vmatprep.subr.mxu0 0.0
    %5529 = vmatpush1.msra.mxu0 0.0
    %5530 = vmatprep.subr.mxu0 0.0
    %5531 = vmatpush1.msra.mxu0 0.0
    %5532 = vmatprep.subr.mxu0 0.0
    %5533 = vmatpush1.msra.mxu0 0.0
    %5534 = vmatprep.subr.mxu0 0.0
    %5535 = vmatpush1.msra.mxu0 0.0
    %5536 = vmatprep.subr.mxu0 0.0
    %5537 = vmatpush1.msra.mxu0 0.0
    %5538 = vmatprep.subr.mxu0 0.0
    %5539 = vmatpush1.msra.mxu0 0.0
    %5540 = vmatprep.subr.mxu0 0.0
    %5541 = vmatpush1.msra.mxu0 0.0
    %5542 = vmatprep.subr.mxu0 0.0
    %5543 = vmatpush1.msra.mxu0 0.0
    %5544 = vmatprep.subr.mxu0 0.0
    %5545 = vmatpush1.msra.mxu0 0.0
    %5546 = vmatprep.subr.mxu0 0.0
    %5547 = vmatpush1.msra.mxu0 0.0
    %5548 = vmatprep.subr.mxu0 0.0
    %5549 = vmatpush1.msra.mxu0 0.0
    %5550 = vmatprep.subr.mxu0 0.0
    %5551 = vmatpush1.msra.mxu0 0.0
    %5552 = vmatprep.subr.mxu0 0.0
    %5553 = vmatpush1.msra.mxu0 0.0
    %5554 = vmatprep.subr.mxu0 0.0
    %5555 = vmatpush1.msra.mxu0 0.0
    %5556 = vmatprep.subr.mxu0 0.0
    %5557 = vmatpush1.msra.mxu0 0.0
    %5558 = vmatprep.subr.mxu0 0.0
    %5559 = vmatpush1.msra.mxu0 0.0
    %5560 = vmatprep.subr.mxu0 0.0
    %5561 = vmatpush1.msra.mxu0 0.0
    %5562 = vmatprep.subr.mxu0 0.0
    %5563 = vmatpush1.msra.mxu0 0.0
    %5564 = vmatprep.subr.mxu0 0.0
    %5565 = vmatpush1.msra.mxu0 0.0
    %5566 = vmatprep.subr.mxu0 0.0
    %5567 = vmatpush1.msra.mxu0 0.0
    %5568 = vmatprep.subr.mxu0 0.0
    %5569 = vmatpush1.msra.mxu0 0.0
    %5570 = vmatprep.subr.mxu0 0.0
    %5571 = vmatpush1.msra.mxu0 0.0
    %5572 = vmatprep.subr.mxu0 0.0
    %5573 = vmatpush1.msra.mxu0 0.0
    %5574 = vmatprep.subr.mxu0 0.0
    %5575 = vmatpush1.msra.mxu0 0.0
    %5576 = vmatprep.subr.mxu0 0.0
    %5577 = vmatpush1.msra.mxu0 0.0
    %5578 = vmatprep.subr.mxu0 0.0
    %5579 = vmatpush1.msra.mxu0 0.0
    %5580 = vmatprep.subr.mxu0 0.0
    %5581 = vmatpush1.msra.mxu0 0.0
    %5582 = vmatprep.mubr.f32.mxu0 0.0
    %5583 = vmatmul.mubr.f32.gmra.mrb[0].mxu0 %v5504
    %v5584 = vpop.f32.mrb[0].mxu0
    %v5585 = vadd.f32 0.0, %v5584
    %v5586 = vpop.f32.mrb[0].mxu0
    %5587 = vmatprep.mubr.f32.mxu0 0.0
    %5588 = vmatmul.mubr.f32.gmra.mrb[0].mxu0 %v5507
    %v5589 = vpop.f32.mrb[0].mxu0
    %v5590 = vadd.f32 0.0, %v5589
    %v5591 = vpop.f32.mrb[0].mxu0
    %5592 = vmatprep.mubr.f32.mxu0 0.0
    %5593 = vmatmul.mubr.f32.gmra.mrb[0].mxu0 %v5510
    %v5594 = vpop.f32.mrb[0].mxu0
    %v5595 = vadd.f32 0.0, %v5594
    %v5596 = vpop.f32.mrb[0].mxu0
    %5597 = vmatprep.mubr.f32.mxu0 0.0
    %5598 = vmatmul.mubr.f32.gmra.mrb[0].mxu0 %v5513
    %v5599 = vpop.f32.mrb[0].mxu0
    %v5600 = vadd.f32 0.0, %v5599
    %v5601 = vpop.f32.mrb[0].mxu0
    %5602 = vdwg.mxu0
    %v5603 = vadd.f32 %v5344, %v5585
    %v5604 = vadd.f32 %v5349, %v5590
    %v5605 = vadd.f32 %v5354, %v5595
    %v5606 = vadd.f32 %v5359, %v5600
    %s5607 = scalar_lea.vmem %s41, 96
    %v5608 = vld [vmem:[%s5607] sm:$0xff]
    %v5609 = vld [vmem:[%s5607 + $0x8] sm:$0xff]
    %v5610 = vld [vmem:[%s5607 + $0x10] sm:$0xff]
    %v5611 = vld [vmem:[%s5607 + $0x18] sm:$0xff]
    %s5612 = scalar_lea.vmem %s43, 96
    %v5613 = vld [vmem:[%s5612] sm:$0xff]
    %v5614 = vld [vmem:[%s5612 + $0x8] sm:$0xff]
    %v5615 = vld [vmem:[%s5612 + $0x10] sm:$0xff]
    %v5616 = vld [vmem:[%s5612 + $0x18] sm:$0xff]
    %5618 = vset.pattern.permute.xlu0 0
    %5619 = vperm.xlu0 %5618, %v5613
    %v5620 = vpop.permute.xlu0 %5619
    %5623 = vset.pattern.permute.xlu0 0
    %5624 = vperm.xlu0 %5623, %v5614
    %v5625 = vpop.permute.xlu0 %5624
    %5628 = vset.pattern.permute.xlu0 0
    %5629 = vperm.xlu0 %5628, %v5615
    %v5630 = vpop.permute.xlu0 %5629
    %5633 = vset.pattern.permute.xlu0 0
    %5634 = vperm.xlu0 %5633, %v5616
    %v5635 = vpop.permute.xlu0 %5634
    %v5638 = vsel %vm4096, %v5608, 0
    %v5641 = vsel %vm4096, %v5609, 0
    %v5644 = vsel %vm4096, %v5610, 0
    %v5647 = vsel %vm4096, %v5611, 0
    %5649 = vmatprep.subr.mxu0 0.0
    %5650 = vmatpush1.msra.mxu0 %v4880
    %5651 = vmatprep.subr.mxu0 0.0
    %5652 = vmatpush1.msra.mxu0 0.0
    %5653 = vmatprep.subr.mxu0 0.0
    %5654 = vmatpush1.msra.mxu0 0.0
    %5655 = vmatprep.subr.mxu0 0.0
    %5656 = vmatpush1.msra.mxu0 0.0
    %5657 = vmatprep.subr.mxu0 0.0
    %5658 = vmatpush1.msra.mxu0 0.0
    %5659 = vmatprep.subr.mxu0 0.0
    %5660 = vmatpush1.msra.mxu0 0.0
    %5661 = vmatprep.subr.mxu0 0.0
    %5662 = vmatpush1.msra.mxu0 0.0
    %5663 = vmatprep.subr.mxu0 0.0
    %5664 = vmatpush1.msra.mxu0 0.0
    %5665 = vmatprep.subr.mxu0 0.0
    %5666 = vmatpush1.msra.mxu0 0.0
    %5667 = vmatprep.subr.mxu0 0.0
    %5668 = vmatpush1.msra.mxu0 0.0
    %5669 = vmatprep.subr.mxu0 0.0
    %5670 = vmatpush1.msra.mxu0 0.0
    %5671 = vmatprep.subr.mxu0 0.0
    %5672 = vmatpush1.msra.mxu0 0.0
    %5673 = vmatprep.subr.mxu0 0.0
    %5674 = vmatpush1.msra.mxu0 0.0
    %5675 = vmatprep.subr.mxu0 0.0
    %5676 = vmatpush1.msra.mxu0 0.0
    %5677 = vmatprep.subr.mxu0 0.0
    %5678 = vmatpush1.msra.mxu0 0.0
    %5679 = vmatprep.subr.mxu0 0.0
    %5680 = vmatpush1.msra.mxu0 0.0
    %5681 = vmatprep.subr.mxu0 0.0
    %5682 = vmatpush1.msra.mxu0 0.0
    %5683 = vmatprep.subr.mxu0 0.0
    %5684 = vmatpush1.msra.mxu0 0.0
    %5685 = vmatprep.subr.mxu0 0.0
    %5686 = vmatpush1.msra.mxu0 0.0
    %5687 = vmatprep.subr.mxu0 0.0
    %5688 = vmatpush1.msra.mxu0 0.0
    %5689 = vmatprep.subr.mxu0 0.0
    %5690 = vmatpush1.msra.mxu0 0.0
    %5691 = vmatprep.subr.mxu0 0.0
    %5692 = vmatpush1.msra.mxu0 0.0
    %5693 = vmatprep.subr.mxu0 0.0
    %5694 = vmatpush1.msra.mxu0 0.0
    %5695 = vmatprep.subr.mxu0 0.0
    %5696 = vmatpush1.msra.mxu0 0.0
    %5697 = vmatprep.subr.mxu0 0.0
    %5698 = vmatpush1.msra.mxu0 0.0
    %5699 = vmatprep.subr.mxu0 0.0
    %5700 = vmatpush1.msra.mxu0 0.0
    %5701 = vmatprep.subr.mxu0 0.0
    %5702 = vmatpush1.msra.mxu0 0.0
    %5703 = vmatprep.subr.mxu0 0.0
    %5704 = vmatpush1.msra.mxu0 0.0
    %5705 = vmatprep.subr.mxu0 0.0
    %5706 = vmatpush1.msra.mxu0 0.0
    %5707 = vmatprep.subr.mxu0 0.0
    %5708 = vmatpush1.msra.mxu0 0.0
    %5709 = vmatprep.subr.mxu0 0.0
    %5710 = vmatpush1.msra.mxu0 0.0
    %5711 = vmatprep.subr.mxu0 0.0
    %5712 = vmatpush1.msra.mxu0 0.0
    %5713 = vmatprep.mubr.f32.mxu0 0.0
    %5714 = vmatmul.mubr.f32.gmra.mrb[0].mxu0 %v5638
    %v5715 = vpop.f32.mrb[0].mxu0
    %v5716 = vadd.f32 %v5620, %v5715
    %v5717 = vpop.f32.mrb[0].mxu0
    %5718 = vmatprep.mubr.f32.mxu0 0.0
    %5719 = vmatmul.mubr.f32.gmra.mrb[0].mxu0 %v5641
    %v5720 = vpop.f32.mrb[0].mxu0
    %v5721 = vadd.f32 %v5625, %v5720
    %v5722 = vpop.f32.mrb[0].mxu0
    %5723 = vmatprep.mubr.f32.mxu0 0.0
    %5724 = vmatmul.mubr.f32.gmra.mrb[0].mxu0 %v5644
    %v5725 = vpop.f32.mrb[0].mxu0
    %v5726 = vadd.f32 %v5630, %v5725
    %v5727 = vpop.f32.mrb[0].mxu0
    %5728 = vmatprep.mubr.f32.mxu0 0.0
    %5729 = vmatmul.mubr.f32.gmra.mrb[0].mxu0 %v5647
    %v5730 = vpop.f32.mrb[0].mxu0
    %v5731 = vadd.f32 %v5635, %v5730
    %v5732 = vpop.f32.mrb[0].mxu0
    %5733 = vdwg.mxu0
    %vm5734 = vcmp.ge.f32.partialorder %v5716, 0.0
    %vm5735 = vcmp.ge.f32.partialorder %v5721, 0.0
    %vm5736 = vcmp.ge.f32.partialorder %v5726, 0.0
    %vm5737 = vcmp.ge.f32.partialorder %v5731, 0.0
    %v5738 = vmul.f32 %v5716, 0.01
    %v5739 = vmul.f32 %v5721, 0.01
    %v5740 = vmul.f32 %v5726, 0.01
    %v5741 = vmul.f32 %v5731, 0.01
    %v5742 = vsel %vm5734, %v5716, %v5738
    %v5743 = vsel %vm5735, %v5721, %v5739
    %v5744 = vsel %vm5736, %v5726, %v5740
    %v5745 = vsel %vm5737, %v5731, %v5741
    %s5746 = scalar_lea.vmem [#allocation14], 6
    %v5747 = vld [vmem:[%s5746] sm:$0x3]
    %v5749 = vsel %vm4666, %v5742, 0
    %v5752 = vsel %vm4666, %v5743, 0
    %v5755 = vsel %vm4666, %v5744, 0
    %v5758 = vsel %vm4666, %v5745, 0
    %v5761 = vsel %vm2210, %v5747, 0
    %5763 = vmatprep.subr.mxu0 0.0
    %5764 = vmatpush1.msra.mxu0 %v5761
    %5765 = vmatprep.subr.mxu0 0.0
    %5766 = vmatpush1.msra.mxu0 0.0
    %5767 = vmatprep.subr.mxu0 0.0
    %5768 = vmatpush1.msra.mxu0 0.0
    %5769 = vmatprep.subr.mxu0 0.0
    %5770 = vmatpush1.msra.mxu0 0.0
    %5771 = vmatprep.subr.mxu0 0.0
    %5772 = vmatpush1.msra.mxu0 0.0
    %5773 = vmatprep.subr.mxu0 0.0
    %5774 = vmatpush1.msra.mxu0 0.0
    %5775 = vmatprep.subr.mxu0 0.0
    %5776 = vmatpush1.msra.mxu0 0.0
    %5777 = vmatprep.subr.mxu0 0.0
    %5778 = vmatpush1.msra.mxu0 0.0
    %5779 = vmatprep.subr.mxu0 0.0
    %5780 = vmatpush1.msra.mxu0 0.0
    %5781 = vmatprep.subr.mxu0 0.0
    %5782 = vmatpush1.msra.mxu0 0.0
    %5783 = vmatprep.subr.mxu0 0.0
    %5784 = vmatpush1.msra.mxu0 0.0
    %5785 = vmatprep.subr.mxu0 0.0
    %5786 = vmatpush1.msra.mxu0 0.0
    %5787 = vmatprep.subr.mxu0 0.0
    %5788 = vmatpush1.msra.mxu0 0.0
    %5789 = vmatprep.subr.mxu0 0.0
    %5790 = vmatpush1.msra.mxu0 0.0
    %5791 = vmatprep.subr.mxu0 0.0
    %5792 = vmatpush1.msra.mxu0 0.0
    %5793 = vmatprep.subr.mxu0 0.0
    %5794 = vmatpush1.msra.mxu0 0.0
    %5795 = vmatprep.subr.mxu0 0.0
    %5796 = vmatpush1.msra.mxu0 0.0
    %5797 = vmatprep.subr.mxu0 0.0
    %5798 = vmatpush1.msra.mxu0 0.0
    %5799 = vmatprep.subr.mxu0 0.0
    %5800 = vmatpush1.msra.mxu0 0.0
    %5801 = vmatprep.subr.mxu0 0.0
    %5802 = vmatpush1.msra.mxu0 0.0
    %5803 = vmatprep.subr.mxu0 0.0
    %5804 = vmatpush1.msra.mxu0 0.0
    %5805 = vmatprep.subr.mxu0 0.0
    %5806 = vmatpush1.msra.mxu0 0.0
    %5807 = vmatprep.subr.mxu0 0.0
    %5808 = vmatpush1.msra.mxu0 0.0
    %5809 = vmatprep.subr.mxu0 0.0
    %5810 = vmatpush1.msra.mxu0 0.0
    %5811 = vmatprep.subr.mxu0 0.0
    %5812 = vmatpush1.msra.mxu0 0.0
    %5813 = vmatprep.subr.mxu0 0.0
    %5814 = vmatpush1.msra.mxu0 0.0
    %5815 = vmatprep.subr.mxu0 0.0
    %5816 = vmatpush1.msra.mxu0 0.0
    %5817 = vmatprep.subr.mxu0 0.0
    %5818 = vmatpush1.msra.mxu0 0.0
    %5819 = vmatprep.subr.mxu0 0.0
    %5820 = vmatpush1.msra.mxu0 0.0
    %5821 = vmatprep.subr.mxu0 0.0
    %5822 = vmatpush1.msra.mxu0 0.0
    %5823 = vmatprep.subr.mxu0 0.0
    %5824 = vmatpush1.msra.mxu0 0.0
    %5825 = vmatprep.subr.mxu0 0.0
    %5826 = vmatpush1.msra.mxu0 0.0
    %5827 = vmatprep.mubr.f32.mxu0 0.0
    %5828 = vmatmul.mubr.f32.gmra.mrb[0].mxu0 %v5749
    %v5829 = vpop.f32.mrb[0].mxu0
    %v5830 = vadd.f32 0.0, %v5829
    %v5831 = vpop.f32.mrb[0].mxu0
    %5832 = vmatprep.mubr.f32.mxu0 0.0
    %5833 = vmatmul.mubr.f32.gmra.mrb[0].mxu0 %v5752
    %v5834 = vpop.f32.mrb[0].mxu0
    %v5835 = vadd.f32 0.0, %v5834
    %v5836 = vpop.f32.mrb[0].mxu0
    %5837 = vmatprep.mubr.f32.mxu0 0.0
    %5838 = vmatmul.mubr.f32.gmra.mrb[0].mxu0 %v5755
    %v5839 = vpop.f32.mrb[0].mxu0
    %v5840 = vadd.f32 0.0, %v5839
    %v5841 = vpop.f32.mrb[0].mxu0
    %5842 = vmatprep.mubr.f32.mxu0 0.0
    %5843 = vmatmul.mubr.f32.gmra.mrb[0].mxu0 %v5758
    %v5844 = vpop.f32.mrb[0].mxu0
    %v5845 = vadd.f32 0.0, %v5844
    %v5846 = vpop.f32.mrb[0].mxu0
    %5847 = vdwg.mxu0
    %v5848 = vadd.f32 %v5603, %v5830
    %v5849 = vadd.f32 %v5604, %v5835
    %v5850 = vadd.f32 %v5605, %v5840
    %v5851 = vadd.f32 %v5606, %v5845
    %v5852 = vld [vmem:[#allocation15] sm:$0xff]
    %v5854 = vsel %vm4096, %v5848, 0
    %v5857 = vsel %vm4096, %v5849, 0
    %v5860 = vsel %vm4096, %v5850, 0
    %v5863 = vsel %vm4096, %v5851, 0
    %5865 = vmatprep.subr.mxu0 0.0
    %5866 = vmatpush1.msra.mxu0 %v5852
    %5867 = vmatprep.subr.mxu0 0.0
    %5868 = vmatpush1.msra.mxu0 0.0
    %5869 = vmatprep.subr.mxu0 0.0
    %5870 = vmatpush1.msra.mxu0 0.0
    %5871 = vmatprep.subr.mxu0 0.0
    %5872 = vmatpush1.msra.mxu0 0.0
    %5873 = vmatprep.subr.mxu0 0.0
    %5874 = vmatpush1.msra.mxu0 0.0
    %5875 = vmatprep.subr.mxu0 0.0
    %5876 = vmatpush1.msra.mxu0 0.0
    %5877 = vmatprep.subr.mxu0 0.0
    %5878 = vmatpush1.msra.mxu0 0.0
    %5879 = vmatprep.subr.mxu0 0.0
    %5880 = vmatpush1.msra.mxu0 0.0
    %5881 = vmatprep.subr.mxu0 0.0
    %5882 = vmatpush1.msra.mxu0 0.0
    %5883 = vmatprep.subr.mxu0 0.0
    %5884 = vmatpush1.msra.mxu0 0.0
    %5885 = vmatprep.subr.mxu0 0.0
    %5886 = vmatpush1.msra.mxu0 0.0
    %5887 = vmatprep.subr.mxu0 0.0
    %5888 = vmatpush1.msra.mxu0 0.0
    %5889 = vmatprep.subr.mxu0 0.0
    %5890 = vmatpush1.msra.mxu0 0.0
    %5891 = vmatprep.subr.mxu0 0.0
    %5892 = vmatpush1.msra.mxu0 0.0
    %5893 = vmatprep.subr.mxu0 0.0
    %5894 = vmatpush1.msra.mxu0 0.0
    %5895 = vmatprep.subr.mxu0 0.0
    %5896 = vmatpush1.msra.mxu0 0.0
    %5897 = vmatprep.subr.mxu0 0.0
    %5898 = vmatpush1.msra.mxu0 0.0
    %5899 = vmatprep.subr.mxu0 0.0
    %5900 = vmatpush1.msra.mxu0 0.0
    %5901 = vmatprep.subr.mxu0 0.0
    %5902 = vmatpush1.msra.mxu0 0.0
    %5903 = vmatprep.subr.mxu0 0.0
    %5904 = vmatpush1.msra.mxu0 0.0
    %5905 = vmatprep.subr.mxu0 0.0
    %5906 = vmatpush1.msra.mxu0 0.0
    %5907 = vmatprep.subr.mxu0 0.0
    %5908 = vmatpush1.msra.mxu0 0.0
    %5909 = vmatprep.subr.mxu0 0.0
    %5910 = vmatpush1.msra.mxu0 0.0
    %5911 = vmatprep.subr.mxu0 0.0
    %5912 = vmatpush1.msra.mxu0 0.0
    %5913 = vmatprep.subr.mxu0 0.0
    %5914 = vmatpush1.msra.mxu0 0.0
    %5915 = vmatprep.subr.mxu0 0.0
    %5916 = vmatpush1.msra.mxu0 0.0
    %5917 = vmatprep.subr.mxu0 0.0
    %5918 = vmatpush1.msra.mxu0 0.0
    %5919 = vmatprep.subr.mxu0 0.0
    %5920 = vmatpush1.msra.mxu0 0.0
    %5921 = vmatprep.subr.mxu0 0.0
    %5922 = vmatpush1.msra.mxu0 0.0
    %5923 = vmatprep.subr.mxu0 0.0
    %5924 = vmatpush1.msra.mxu0 0.0
    %5925 = vmatprep.subr.mxu0 0.0
    %5926 = vmatpush1.msra.mxu0 0.0
    %5927 = vmatprep.subr.mxu0 0.0
    %5928 = vmatpush1.msra.mxu0 0.0
    %5929 = vmatprep.mubr.f32.mxu0 0.0
    %5930 = vmatmul.mubr.f32.gmra.mrb[0].mxu0 %v5854
    %v5931 = vpop.f32.mrb[0].mxu0
    %v5932 = vadd.f32 0.0, %v5931
    %v5933 = vpop.f32.mrb[0].mxu0
    %5934 = vmatprep.mubr.f32.mxu0 0.0
    %5935 = vmatmul.mubr.f32.gmra.mrb[0].mxu0 %v5857
    %v5936 = vpop.f32.mrb[0].mxu0
    %v5937 = vadd.f32 0.0, %v5936
    %v5938 = vpop.f32.mrb[0].mxu0
    %5939 = vmatprep.mubr.f32.mxu0 0.0
    %5940 = vmatmul.mubr.f32.gmra.mrb[0].mxu0 %v5860
    %v5941 = vpop.f32.mrb[0].mxu0
    %v5942 = vadd.f32 0.0, %v5941
    %v5943 = vpop.f32.mrb[0].mxu0
    %5944 = vmatprep.mubr.f32.mxu0 0.0
    %5945 = vmatmul.mubr.f32.gmra.mrb[0].mxu0 %v5863
    %v5946 = vpop.f32.mrb[0].mxu0
    %v5947 = vadd.f32 0.0, %v5946
    %v5948 = vpop.f32.mrb[0].mxu0
    %5949 = vdwg.mxu0
    %v5950 = vld [vmem:[#allocation17] sm:$0xff]
    %v5951 = vld [vmem:[#allocation17 + $0x8] sm:$0xff]
    %v5953 = vsel %vm3199, %v5950, 0
    %v5956 = vsel %vm3199, %v5951, 0
    %5958 = vmatprep.subr.mxu0 0.0
    %5959 = vmatpush1.msra.mxu0 %v5932
    %5960 = vmatprep.subr.mxu0 0.0
    %5961 = vmatpush1.msra.mxu0 %v5937
    %5962 = vmatprep.subr.mxu0 0.0
    %5963 = vmatpush1.msra.mxu0 %v5942
    %5964 = vmatprep.subr.mxu0 0.0
    %5965 = vmatpush1.msra.mxu0 %v5947
    %5966 = vmatprep.subr.mxu0 0.0
    %5967 = vmatpush1.msra.mxu0 0.0
    %5968 = vmatprep.subr.mxu0 0.0
    %5969 = vmatpush1.msra.mxu0 0.0
    %5970 = vmatprep.subr.mxu0 0.0
    %5971 = vmatpush1.msra.mxu0 0.0
    %5972 = vmatprep.subr.mxu0 0.0
    %5973 = vmatpush1.msra.mxu0 0.0
    %5974 = vmatprep.subr.mxu0 0.0
    %5975 = vmatpush1.msra.mxu0 0.0
    %5976 = vmatprep.subr.mxu0 0.0
    %5977 = vmatpush1.msra.mxu0 0.0
    %5978 = vmatprep.subr.mxu0 0.0
    %5979 = vmatpush1.msra.mxu0 0.0
    %5980 = vmatprep.subr.mxu0 0.0
    %5981 = vmatpush1.msra.mxu0 0.0
    %5982 = vmatprep.subr.mxu0 0.0
    %5983 = vmatpush1.msra.mxu0 0.0
    %5984 = vmatprep.subr.mxu0 0.0
    %5985 = vmatpush1.msra.mxu0 0.0
    %5986 = vmatprep.subr.mxu0 0.0
    %5987 = vmatpush1.msra.mxu0 0.0
    %5988 = vmatprep.subr.mxu0 0.0
    %5989 = vmatpush1.msra.mxu0 0.0
    %5990 = vmatprep.subr.mxu0 0.0
    %5991 = vmatpush1.msra.mxu0 0.0
    %5992 = vmatprep.subr.mxu0 0.0
    %5993 = vmatpush1.msra.mxu0 0.0
    %5994 = vmatprep.subr.mxu0 0.0
    %5995 = vmatpush1.msra.mxu0 0.0
    %5996 = vmatprep.subr.mxu0 0.0
    %5997 = vmatpush1.msra.mxu0 0.0
    %5998 = vmatprep.subr.mxu0 0.0
    %5999 = vmatpush1.msra.mxu0 0.0
    %6000 = vmatprep.subr.mxu0 0.0
    %6001 = vmatpush1.msra.mxu0 0.0
    %6002 = vmatprep.subr.mxu0 0.0
    %6003 = vmatpush1.msra.mxu0 0.0
    %6004 = vmatprep.subr.mxu0 0.0
    %6005 = vmatpush1.msra.mxu0 0.0
    %6006 = vmatprep.subr.mxu0 0.0
    %6007 = vmatpush1.msra.mxu0 0.0
    %6008 = vmatprep.subr.mxu0 0.0
    %6009 = vmatpush1.msra.mxu0 0.0
    %6010 = vmatprep.subr.mxu0 0.0
    %6011 = vmatpush1.msra.mxu0 0.0
    %6012 = vmatprep.subr.mxu0 0.0
    %6013 = vmatpush1.msra.mxu0 0.0
    %6014 = vmatprep.subr.mxu0 0.0
    %6015 = vmatpush1.msra.mxu0 0.0
    %6016 = vmatprep.subr.mxu0 0.0
    %6017 = vmatpush1.msra.mxu0 0.0
    %6018 = vmatprep.subr.mxu0 0.0
    %6019 = vmatpush1.msra.mxu0 0.0
    %6020 = vmatprep.subr.mxu0 0.0
    %6021 = vmatpush1.msra.mxu0 0.0
    %6022 = vmatprep.mubr.f32.mxu0 0.0
    %6023 = vmatmul.mubr.f32.gmra.mrb[0].mxu0 %v5953
    %v6024 = vpop.f32.mrb[0].mxu0
    %v6025 = vadd.f32 0.0, %v6024
    %v6026 = vpop.f32.mrb[0].mxu0
    %6027 = vmatprep.mubr.f32.mxu0 0.0
    %6028 = vmatmul.mubr.f32.gmra.mrb[0].mxu0 %v5956
    %v6029 = vpop.f32.mrb[0].mxu0
    %v6030 = vadd.f32 0.0, %v6029
    %v6031 = vpop.f32.mrb[0].mxu0
    %6032 = vdwg.mxu0
    %v6033 = vld [vmem:[%s51] sm:$0xff]
    %v6034 = vld [vmem:[%s51 + $0x8] sm:$0xff]
    %v6035 = vld [vmem:[%s53] sm:$0xff]
    %v6036 = vld [vmem:[%s53 + $0x8] sm:$0xff]
    %v6037 = vsel %vm3199, %v6025, 0.0
    %6038 = vadd.xlane.f32.xlu0 %v6037
    %v6039 = vpop.xlane.xlu0 %6038
    %v6040 = vsel %vm3199, %v6030, 0.0
    %6041 = vadd.xlane.f32.xlu0 %v6040
    %v6042 = vpop.xlane.xlu0 %6041
    %v6043 = vmul.f32 %v6039, %v3206
    %v6044 = vmul.f32 %v6042, %v3206
    %v6045 = vsub.f32 %v6025, %v6043
    %v6046 = vsub.f32 %v6030, %v6044
    %v6047 = vmul.f32 %v6045, %v6045
    %v6048 = vmul.f32 %v6046, %v6046
    %v6049 = vsel %vm3199, %v6047, 0.0
    %6050 = vadd.xlane.f32.xlu0 %v6049
    %v6051 = vpop.xlane.xlu0 %6050
    %v6052 = vsel %vm3199, %v6048, 0.0
    %6053 = vadd.xlane.f32.xlu0 %v6052
    %v6054 = vpop.xlane.xlu0 %6053
    %v6055 = vmul.f32 %v6051, %v3206
    %v6056 = vmul.f32 %v6054, %v3206
    %v6057 = vadd.f32 %v6055, 1e-05
    %v6058 = vadd.f32 %v6056, 1e-05
    %v6059 = vrsqrt.pop %v6057
    %v6060 = vrsqrt.pop %v6058
    %v6061 = vmul.f32 %v6045, %v6059
    %v6062 = vmul.f32 %v6046, %v6060
    %6064 = vset.pattern.permute.xlu0 0
    %6065 = vperm.xlu0 %6064, %v6033
    %v6066 = vpop.permute.xlu0 %6065
    %6069 = vset.pattern.permute.xlu0 0
    %6070 = vperm.xlu0 %6069, %v6034
    %v6071 = vpop.permute.xlu0 %6070
    %v6073 = vmul.f32 %v6061, %v6066
    %v6074 = vmul.f32 %v6062, %v6071
    %6076 = vset.pattern.permute.xlu0 0
    %6077 = vperm.xlu0 %6076, %v6035
    %v6078 = vpop.permute.xlu0 %6077
    %6081 = vset.pattern.permute.xlu0 0
    %6082 = vperm.xlu0 %6081, %v6036
    %v6083 = vpop.permute.xlu0 %6082
    %v6085 = vadd.f32 %v6073, %v6078
    %v6086 = vadd.f32 %v6074, %v6083
    %vm6087 = vcmp.ge.f32.partialorder %v6085, 0.0
    %vm6088 = vcmp.ge.f32.partialorder %v6086, 0.0
    %v6089 = vmul.f32 %v6085, 0.01
    %v6090 = vmul.f32 %v6086, 0.01
    %v6091 = vsel %vm6087, %v6085, %v6089
    %v6092 = vsel %vm6088, %v6086, %v6090
    %v6093 = vld [vmem:[#allocation18] sm:$0xff]
    %v6094 = vld [vmem:[#allocation18 + $0x8] sm:$0xff]
    %v6095 = vld [vmem:[#allocation18 + $0x10] sm:$0xff]
    %v6096 = vld [vmem:[#allocation18 + $0x18] sm:$0xff]
    %v6098 = vsel %vm3199, %v6091, 0
    %v6101 = vsel %vm3199, %v6092, 0
    %6103 = vmatprep.subr.mxu0 0.0
    %6104 = vmatpush1.msra.mxu0 %v6093
    %6105 = vmatprep.subr.mxu0 0.0
    %6106 = vmatpush1.msra.mxu0 %v6094
    %6107 = vmatprep.subr.mxu0 0.0
    %6108 = vmatpush1.msra.mxu0 %v6095
    %6109 = vmatprep.subr.mxu0 0.0
    %6110 = vmatpush1.msra.mxu0 %v6096
    %6111 = vmatprep.subr.mxu0 0.0
    %6112 = vmatpush1.msra.mxu0 0.0
    %6113 = vmatprep.subr.mxu0 0.0
    %6114 = vmatpush1.msra.mxu0 0.0
    %6115 = vmatprep.subr.mxu0 0.0
    %6116 = vmatpush1.msra.mxu0 0.0
    %6117 = vmatprep.subr.mxu0 0.0
    %6118 = vmatpush1.msra.mxu0 0.0
    %6119 = vmatprep.subr.mxu0 0.0
    %6120 = vmatpush1.msra.mxu0 0.0
    %6121 = vmatprep.subr.mxu0 0.0
    %6122 = vmatpush1.msra.mxu0 0.0
    %6123 = vmatprep.subr.mxu0 0.0
    %6124 = vmatpush1.msra.mxu0 0.0
    %6125 = vmatprep.subr.mxu0 0.0
    %6126 = vmatpush1.msra.mxu0 0.0
    %6127 = vmatprep.subr.mxu0 0.0
    %6128 = vmatpush1.msra.mxu0 0.0
    %6129 = vmatprep.subr.mxu0 0.0
    %6130 = vmatpush1.msra.mxu0 0.0
    %6131 = vmatprep.subr.mxu0 0.0
    %6132 = vmatpush1.msra.mxu0 0.0
    %6133 = vmatprep.subr.mxu0 0.0
    %6134 = vmatpush1.msra.mxu0 0.0
    %6135 = vmatprep.subr.mxu0 0.0
    %6136 = vmatpush1.msra.mxu0 0.0
    %6137 = vmatprep.subr.mxu0 0.0
    %6138 = vmatpush1.msra.mxu0 0.0
    %6139 = vmatprep.subr.mxu0 0.0
    %6140 = vmatpush1.msra.mxu0 0.0
    %6141 = vmatprep.subr.mxu0 0.0
    %6142 = vmatpush1.msra.mxu0 0.0
    %6143 = vmatprep.subr.mxu0 0.0
    %6144 = vmatpush1.msra.mxu0 0.0
    %6145 = vmatprep.subr.mxu0 0.0
    %6146 = vmatpush1.msra.mxu0 0.0
    %6147 = vmatprep.subr.mxu0 0.0
    %6148 = vmatpush1.msra.mxu0 0.0
    %6149 = vmatprep.subr.mxu0 0.0
    %6150 = vmatpush1.msra.mxu0 0.0
    %6151 = vmatprep.subr.mxu0 0.0
    %6152 = vmatpush1.msra.mxu0 0.0
    %6153 = vmatprep.subr.mxu0 0.0
    %6154 = vmatpush1.msra.mxu0 0.0
    %6155 = vmatprep.subr.mxu0 0.0
    %6156 = vmatpush1.msra.mxu0 0.0
    %6157 = vmatprep.subr.mxu0 0.0
    %6158 = vmatpush1.msra.mxu0 0.0
    %6159 = vmatprep.subr.mxu0 0.0
    %6160 = vmatpush1.msra.mxu0 0.0
    %6161 = vmatprep.subr.mxu0 0.0
    %6162 = vmatpush1.msra.mxu0 0.0
    %6163 = vmatprep.subr.mxu0 0.0
    %6164 = vmatpush1.msra.mxu0 0.0
    %6165 = vmatprep.subr.mxu0 0.0
    %6166 = vmatpush1.msra.mxu0 0.0
    %6167 = vmatprep.mubr.f32.mxu0 0.0
    %6168 = vmatmul.mubr.f32.gmra.mrb[0].mxu0 %v6098
    %v6169 = vpop.f32.mrb[0].mxu0
    %v6170 = vadd.f32 0.0, %v6169
    %v6171 = vpop.f32.mrb[0].mxu0
    %6172 = vmatprep.mubr.f32.mxu0 0.0
    %6173 = vmatmul.mubr.f32.gmra.mrb[0].mxu0 %v6101
    %v6174 = vpop.f32.mrb[0].mxu0
    %v6175 = vadd.f32 0.0, %v6174
    %v6176 = vpop.f32.mrb[0].mxu0
    %6177 = vdwg.mxu0
    %v6178 = vld [vmem:[#allocation20] sm:$0xff]
    %v6180 = vsel %vm3990, %v6178, 0
    %6182 = vmatprep.subr.mxu0 0.0
    %6183 = vmatpush1.msra.mxu0 %v6170
    %6184 = vmatprep.subr.mxu0 0.0
    %6185 = vmatpush1.msra.mxu0 %v6175
    %6186 = vmatprep.subr.mxu0 0.0
    %6187 = vmatpush1.msra.mxu0 0.0
    %6188 = vmatprep.subr.mxu0 0.0
    %6189 = vmatpush1.msra.mxu0 0.0
    %6190 = vmatprep.subr.mxu0 0.0
    %6191 = vmatpush1.msra.mxu0 0.0
    %6192 = vmatprep.subr.mxu0 0.0
    %6193 = vmatpush1.msra.mxu0 0.0
    %6194 = vmatprep.subr.mxu0 0.0
    %6195 = vmatpush1.msra.mxu0 0.0
    %6196 = vmatprep.subr.mxu0 0.0
    %6197 = vmatpush1.msra.mxu0 0.0
    %6198 = vmatprep.subr.mxu0 0.0
    %6199 = vmatpush1.msra.mxu0 0.0
    %6200 = vmatprep.subr.mxu0 0.0
    %6201 = vmatpush1.msra.mxu0 0.0
    %6202 = vmatprep.subr.mxu0 0.0
    %6203 = vmatpush1.msra.mxu0 0.0
    %6204 = vmatprep.subr.mxu0 0.0
    %6205 = vmatpush1.msra.mxu0 0.0
    %6206 = vmatprep.subr.mxu0 0.0
    %6207 = vmatpush1.msra.mxu0 0.0
    %6208 = vmatprep.subr.mxu0 0.0
    %6209 = vmatpush1.msra.mxu0 0.0
    %6210 = vmatprep.subr.mxu0 0.0
    %6211 = vmatpush1.msra.mxu0 0.0
    %6212 = vmatprep.subr.mxu0 0.0
    %6213 = vmatpush1.msra.mxu0 0.0
    %6214 = vmatprep.subr.mxu0 0.0
    %6215 = vmatpush1.msra.mxu0 0.0
    %6216 = vmatprep.subr.mxu0 0.0
    %6217 = vmatpush1.msra.mxu0 0.0
    %6218 = vmatprep.subr.mxu0 0.0
    %6219 = vmatpush1.msra.mxu0 0.0
    %6220 = vmatprep.subr.mxu0 0.0
    %6221 = vmatpush1.msra.mxu0 0.0
    %6222 = vmatprep.subr.mxu0 0.0
    %6223 = vmatpush1.msra.mxu0 0.0
    %6224 = vmatprep.subr.mxu0 0.0
    %6225 = vmatpush1.msra.mxu0 0.0
    %6226 = vmatprep.subr.mxu0 0.0
    %6227 = vmatpush1.msra.mxu0 0.0
    %6228 = vmatprep.subr.mxu0 0.0
    %6229 = vmatpush1.msra.mxu0 0.0
    %6230 = vmatprep.subr.mxu0 0.0
    %6231 = vmatpush1.msra.mxu0 0.0
    %6232 = vmatprep.subr.mxu0 0.0
    %6233 = vmatpush1.msra.mxu0 0.0
    %6234 = vmatprep.subr.mxu0 0.0
    %6235 = vmatpush1.msra.mxu0 0.0
    %6236 = vmatprep.subr.mxu0 0.0
    %6237 = vmatpush1.msra.mxu0 0.0
    %6238 = vmatprep.subr.mxu0 0.0
    %6239 = vmatpush1.msra.mxu0 0.0
    %6240 = vmatprep.subr.mxu0 0.0
    %6241 = vmatpush1.msra.mxu0 0.0
    %6242 = vmatprep.subr.mxu0 0.0
    %6243 = vmatpush1.msra.mxu0 0.0
    %6244 = vmatprep.subr.mxu0 0.0
    %6245 = vmatpush1.msra.mxu0 0.0
    %6246 = vmatprep.mubr.f32.mxu0 0.0
    %6247 = vmatmul.mubr.f32.gmra.mrb[0].mxu0 %v6180
    %v6248 = vpop.f32.mrb[0].mxu0
    %v6249 = vadd.f32 0.0, %v6248
    %v6250 = vpop.f32.mrb[0].mxu0
    %6251 = vdwg.mxu0
    %v6252 = vld [vmem:[%s59] sm:$0xff]
    %v6253 = vld [vmem:[%s61] sm:$0xff]
    %6254 = vadd.xlane.f32.xlu0 %v6249
    %v6255 = vpop.xlane.xlu0 %6254
    %v6256 = vmul.f32 %v6255, %v2304
    %v6257 = vsub.f32 %v6249, %v6256
    %v6258 = vmul.f32 %v6257, %v6257
    %6259 = vadd.xlane.f32.xlu0 %v6258
    %v6260 = vpop.xlane.xlu0 %6259
    %v6261 = vmul.f32 %v6260, %v2304
    %v6262 = vadd.f32 %v6261, 1e-05
    %v6263 = vrsqrt.pop %v6262
    %v6264 = vmul.f32 %v6257, %v6263
    %6266 = vset.pattern.permute.xlu0 0
    %6267 = vperm.xlu0 %6266, %v6252
    %v6268 = vpop.permute.xlu0 %6267
    %v6270 = vmul.f32 %v6264, %v6268
    %6272 = vset.pattern.permute.xlu0 0
    %6273 = vperm.xlu0 %6272, %v6253
    %v6274 = vpop.permute.xlu0 %6273
    %v6276 = vadd.f32 %v6270, %v6274
    %vm6277 = vcmp.ge.f32.partialorder %v6276, 0.0
    %v6278 = vmul.f32 %v6276, 0.01
    %v6279 = vsel %vm6277, %v6276, %v6278
    %v6280 = vld [vmem:[#allocation21] sm:$0xff]
    %v6281 = vld [vmem:[#allocation21 + $0x8] sm:$0xff]
    %v6282 = vld [vmem:[#allocation21 + $0x10] sm:$0xff]
    %v6283 = vld [vmem:[#allocation21 + $0x18] sm:$0xff]
    %v6284 = vld [vmem:[#allocation21 + $0x20] sm:$0xff]
    %v6285 = vld [vmem:[#allocation21 + $0x28] sm:$0xff]
    %v6286 = vld [vmem:[#allocation21 + $0x30] sm:$0xff]
    %v6287 = vld [vmem:[#allocation21 + $0x38] sm:$0xff]
    %v6288 = vld [vmem:[#allocation21 + $0x40] sm:$0xff]
    %v6289 = vld [vmem:[#allocation21 + $0x48] sm:$0xff]
    %v6290 = vld [vmem:[#allocation21 + $0x50] sm:$0xff]
    %v6291 = vld [vmem:[#allocation21 + $0x58] sm:$0xff]
    %v6292 = vld [vmem:[#allocation21 + $0x60] sm:$0xff]
    %v6293 = vld [vmem:[#allocation21 + $0x68] sm:$0xff]
    %v6294 = vld [vmem:[#allocation21 + $0x70] sm:$0xff]
    %v6295 = vld [vmem:[#allocation21 + $0x78] sm:$0xff]
    %v6296 = vld [vmem:[#allocation21 + $0x80] sm:$0xff]
    %v6297 = vld [vmem:[#allocation21 + $0x88] sm:$0xff]
    %v6298 = vld [vmem:[#allocation21 + $0x90] sm:$0xff]
    %v6299 = vld [vmem:[#allocation21 + $0x98] sm:$0xff]
    %v6300 = vld [vmem:[#allocation21 + $0xa0] sm:$0xff]
    %v6301 = vld [vmem:[#allocation21 + $0xa8] sm:$0xff]
    %v6302 = vld [vmem:[#allocation21 + $0xb0] sm:$0xff]
    %v6303 = vld [vmem:[#allocation21 + $0xb8] sm:$0xff]
    %v6304 = vld [vmem:[#allocation21 + $0xc0] sm:$0xff]
    %v6305 = vld [vmem:[#allocation21 + $0xc8] sm:$0xff]
    %v6306 = vld [vmem:[#allocation21 + $0xd0] sm:$0xff]
    %v6307 = vld [vmem:[#allocation21 + $0xd8] sm:$0xff]
    %v6308 = vld [vmem:[#allocation21 + $0xe0] sm:$0xff]
    %v6309 = vld [vmem:[#allocation21 + $0xe8] sm:$0xff]
    %v6310 = vld [vmem:[#allocation21 + $0xf0] sm:$0xff]
    %v6311 = vld [vmem:[#allocation21 + $0xf8] sm:$0xff]
    %v6312 = vld [vmem:[#allocation21 + $0x100] sm:$0xff]
    %v6313 = vld [vmem:[#allocation21 + $0x108] sm:$0xff]
    %v6314 = vld [vmem:[#allocation21 + $0x110] sm:$0xff]
    %v6315 = vld [vmem:[#allocation21 + $0x118] sm:$0xff]
    %v6316 = vld [vmem:[#allocation21 + $0x120] sm:$0xff]
    %v6317 = vld [vmem:[#allocation21 + $0x128] sm:$0xff]
    %v6318 = vld [vmem:[#allocation21 + $0x130] sm:$0xff]
    %v6319 = vld [vmem:[#allocation21 + $0x138] sm:$0xff]
    %v6320 = vld [vmem:[#allocation21 + $0x140] sm:$0xff]
    %v6321 = vld [vmem:[#allocation21 + $0x148] sm:$0xff]
    %v6322 = vld [vmem:[#allocation21 + $0x150] sm:$0xff]
    %v6323 = vld [vmem:[#allocation21 + $0x158] sm:$0xff]
    %v6324 = vld [vmem:[#allocation21 + $0x160] sm:$0xff]
    %v6325 = vld [vmem:[#allocation21 + $0x168] sm:$0xff]
    %v6326 = vld [vmem:[#allocation21 + $0x170] sm:$0xff]
    %v6327 = vld [vmem:[#allocation21 + $0x178] sm:$0xff]
    %v6328 = vld [vmem:[#allocation21 + $0x180] sm:$0xff]
    %v6329 = vld [vmem:[#allocation21 + $0x188] sm:$0xff]
    %v6330 = vld [vmem:[#allocation21 + $0x190] sm:$0xff]
    %v6331 = vld [vmem:[#allocation21 + $0x198] sm:$0xff]
    %v6332 = vld [vmem:[#allocation21 + $0x1a0] sm:$0xff]
    %v6333 = vld [vmem:[#allocation21 + $0x1a8] sm:$0xff]
    %v6334 = vld [vmem:[#allocation21 + $0x1b0] sm:$0xff]
    %v6335 = vld [vmem:[#allocation21 + $0x1b8] sm:$0xff]
    %v6336 = vld [vmem:[#allocation21 + $0x1c0] sm:$0xff]
    %v6337 = vld [vmem:[#allocation21 + $0x1c8] sm:$0xff]
    %v6338 = vld [vmem:[#allocation21 + $0x1d0] sm:$0xff]
    %v6339 = vld [vmem:[#allocation21 + $0x1d8] sm:$0xff]
    %v6340 = vld [vmem:[#allocation21 + $0x1e0] sm:$0xff]
    %v6341 = vld [vmem:[#allocation21 + $0x1e8] sm:$0xff]
    %v6342 = vld [vmem:[#allocation21 + $0x1f0] sm:$0xff]
    %v6343 = vld [vmem:[#allocation21 + $0x1f8] sm:$0xff]
    %6344 = vmatprep.subr.mxu0 %v6281
    %6345 = vmatpush1.msra.mxu0 %v6280
    %6346 = vmatprep.subr.mxu0 %v6285
    %6347 = vmatpush1.msra.mxu0 %v6284
    %6348 = vmatprep.subr.mxu0 %v6289
    %6349 = vmatpush1.msra.mxu0 %v6288
    %6350 = vmatprep.subr.mxu0 %v6293
    %6351 = vmatpush1.msra.mxu0 %v6292
    %6352 = vmatprep.subr.mxu0 %v6297
    %6353 = vmatpush1.msra.mxu0 %v6296
    %6354 = vmatprep.subr.mxu0 %v6301
    %6355 = vmatpush1.msra.mxu0 %v6300
    %6356 = vmatprep.subr.mxu0 %v6305
    %6357 = vmatpush1.msra.mxu0 %v6304
    %6358 = vmatprep.subr.mxu0 %v6309
    %6359 = vmatpush1.msra.mxu0 %v6308
    %6360 = vmatprep.subr.mxu0 %v6313
    %6361 = vmatpush1.msra.mxu0 %v6312
    %6362 = vmatprep.subr.mxu0 %v6317
    %6363 = vmatpush1.msra.mxu0 %v6316
    %6364 = vmatprep.subr.mxu0 %v6321
    %6365 = vmatpush1.msra.mxu0 %v6320
    %6366 = vmatprep.subr.mxu0 %v6325
    %6367 = vmatpush1.msra.mxu0 %v6324
    %6368 = vmatprep.subr.mxu0 %v6329
    %6369 = vmatpush1.msra.mxu0 %v6328
    %6370 = vmatprep.subr.mxu0 %v6333
    %6371 = vmatpush1.msra.mxu0 %v6332
    %6372 = vmatprep.subr.mxu0 %v6337
    %6373 = vmatpush1.msra.mxu0 %v6336
    %6374 = vmatprep.subr.mxu0 %v6341
    %6375 = vmatpush1.msra.mxu0 %v6340
    %6376 = vmatprep.subr.mxu0 0.0
    %6377 = vmatpush1.msra.mxu0 0.0
    %6378 = vmatprep.subr.mxu0 0.0
    %6379 = vmatpush1.msra.mxu0 0.0
    %6380 = vmatprep.subr.mxu0 0.0
    %6381 = vmatpush1.msra.mxu0 0.0
    %6382 = vmatprep.subr.mxu0 0.0
    %6383 = vmatpush1.msra.mxu0 0.0
    %6384 = vmatprep.subr.mxu0 0.0
    %6385 = vmatpush1.msra.mxu0 0.0
    %6386 = vmatprep.subr.mxu0 0.0
    %6387 = vmatpush1.msra.mxu0 0.0
    %6388 = vmatprep.subr.mxu0 0.0
    %6389 = vmatpush1.msra.mxu0 0.0
    %6390 = vmatprep.subr.mxu0 0.0
    %6391 = vmatpush1.msra.mxu0 0.0
    %6392 = vmatprep.subr.mxu0 0.0
    %6393 = vmatpush1.msra.mxu0 0.0
    %6394 = vmatprep.subr.mxu0 0.0
    %6395 = vmatpush1.msra.mxu0 0.0
    %6396 = vmatprep.subr.mxu0 0.0
    %6397 = vmatpush1.msra.mxu0 0.0
    %6398 = vmatprep.subr.mxu0 0.0
    %6399 = vmatpush1.msra.mxu0 0.0
    %6400 = vmatprep.subr.mxu0 0.0
    %6401 = vmatpush1.msra.mxu0 0.0
    %6402 = vmatprep.subr.mxu0 0.0
    %6403 = vmatpush1.msra.mxu0 0.0
    %6404 = vmatprep.subr.mxu0 0.0
    %6405 = vmatpush1.msra.mxu0 0.0
    %6406 = vmatprep.subr.mxu0 0.0
    %6407 = vmatpush1.msra.mxu0 0.0
    %6408 = vmatprep.mubr.f32.mxu0 0.0
    %6409 = vmatmul.mubr.f32.gmra.mrb[0].mxu0 %v6279
    %v6410 = vpop.f32.mrb[0].mxu0
    %v6411 = vadd.f32 0.0, %v6410
    %v6412 = vpop.f32.mrb[0].mxu0
    %v6413 = vadd.f32 0.0, %v6412
    %6414 = vdwg.mxu0
    %6415 = vmatprep.subr.mxu0 %v6283
    %6416 = vmatpush1.msra.mxu0 %v6282
    %6417 = vmatprep.subr.mxu0 %v6287
    %6418 = vmatpush1.msra.mxu0 %v6286
    %6419 = vmatprep.subr.mxu0 %v6291
    %6420 = vmatpush1.msra.mxu0 %v6290
    %6421 = vmatprep.subr.mxu0 %v6295
    %6422 = vmatpush1.msra.mxu0 %v6294
    %6423 = vmatprep.subr.mxu0 %v6299
    %6424 = vmatpush1.msra.mxu0 %v6298
    %6425 = vmatprep.subr.mxu0 %v6303
    %6426 = vmatpush1.msra.mxu0 %v6302
    %6427 = vmatprep.subr.mxu0 %v6307
    %6428 = vmatpush1.msra.mxu0 %v6306
    %6429 = vmatprep.subr.mxu0 %v6311
    %6430 = vmatpush1.msra.mxu0 %v6310
    %6431 = vmatprep.subr.mxu0 %v6315
    %6432 = vmatpush1.msra.mxu0 %v6314
    %6433 = vmatprep.subr.mxu0 %v6319
    %6434 = vmatpush1.msra.mxu0 %v6318
    %6435 = vmatprep.subr.mxu0 %v6323
    %6436 = vmatpush1.msra.mxu0 %v6322
    %6437 = vmatprep.subr.mxu0 %v6327
    %6438 = vmatpush1.msra.mxu0 %v6326
    %6439 = vmatprep.subr.mxu0 %v6331
    %6440 = vmatpush1.msra.mxu0 %v6330
    %6441 = vmatprep.subr.mxu0 %v6335
    %6442 = vmatpush1.msra.mxu0 %v6334
    %6443 = vmatprep.subr.mxu0 %v6339
    %6444 = vmatpush1.msra.mxu0 %v6338
    %6445 = vmatprep.subr.mxu0 %v6343
    %6446 = vmatpush1.msra.mxu0 %v6342
    %6447 = vmatprep.subr.mxu0 0.0
    %6448 = vmatpush1.msra.mxu0 0.0
    %6449 = vmatprep.subr.mxu0 0.0
    %6450 = vmatpush1.msra.mxu0 0.0
    %6451 = vmatprep.subr.mxu0 0.0
    %6452 = vmatpush1.msra.mxu0 0.0
    %6453 = vmatprep.subr.mxu0 0.0
    %6454 = vmatpush1.msra.mxu0 0.0
    %6455 = vmatprep.subr.mxu0 0.0
    %6456 = vmatpush1.msra.mxu0 0.0
    %6457 = vmatprep.subr.mxu0 0.0
    %6458 = vmatpush1.msra.mxu0 0.0
    %6459 = vmatprep.subr.mxu0 0.0
    %6460 = vmatpush1.msra.mxu0 0.0
    %6461 = vmatprep.subr.mxu0 0.0
    %6462 = vmatpush1.msra.mxu0 0.0
    %6463 = vmatprep.subr.mxu0 0.0
    %6464 = vmatpush1.msra.mxu0 0.0
    %6465 = vmatprep.subr.mxu0 0.0
    %6466 = vmatpush1.msra.mxu0 0.0
    %6467 = vmatprep.subr.mxu0 0.0
    %6468 = vmatpush1.msra.mxu0 0.0
    %6469 = vmatprep.subr.mxu0 0.0
    %6470 = vmatpush1.msra.mxu0 0.0
    %6471 = vmatprep.subr.mxu0 0.0
    %6472 = vmatpush1.msra.mxu0 0.0
    %6473 = vmatprep.subr.mxu0 0.0
    %6474 = vmatpush1.msra.mxu0 0.0
    %6475 = vmatprep.subr.mxu0 0.0
    %6476 = vmatpush1.msra.mxu0 0.0
    %6477 = vmatprep.subr.mxu0 0.0
    %6478 = vmatpush1.msra.mxu0 0.0
    %6479 = vmatprep.mubr.f32.mxu0 0.0
    %6480 = vmatmul.mubr.f32.gmra.mrb[0].mxu0 %v6279
    %v6481 = vpop.f32.mrb[0].mxu0
    %v6482 = vadd.f32 0.0, %v6481
    %v6483 = vpop.f32.mrb[0].mxu0
    %v6484 = vadd.f32 0.0, %v6483
    %6485 = vdwg.mxu0
    %v6486 = vld [vmem:[#allocation23] sm:$0x1]
    %v6488 = vsel %vm4096, %v6486, 0
    %6490 = vmatprep.subr.mxu0 %v6413
    %6491 = vmatpush1.msra.mxu0 %v6411
    %6492 = vmatprep.subr.mxu0 0.0
    %6493 = vmatpush1.msra.mxu0 0.0
    %6494 = vmatprep.subr.mxu0 0.0
    %6495 = vmatpush1.msra.mxu0 0.0
    %6496 = vmatprep.subr.mxu0 0.0
    %6497 = vmatpush1.msra.mxu0 0.0
    %6498 = vmatprep.subr.mxu0 0.0
    %6499 = vmatpush1.msra.mxu0 0.0
    %6500 = vmatprep.subr.mxu0 0.0
    %6501 = vmatpush1.msra.mxu0 0.0
    %6502 = vmatprep.subr.mxu0 0.0
    %6503 = vmatpush1.msra.mxu0 0.0
    %6504 = vmatprep.subr.mxu0 0.0
    %6505 = vmatpush1.msra.mxu0 0.0
    %6506 = vmatprep.subr.mxu0 0.0
    %6507 = vmatpush1.msra.mxu0 0.0
    %6508 = vmatprep.subr.mxu0 0.0
    %6509 = vmatpush1.msra.mxu0 0.0
    %6510 = vmatprep.subr.mxu0 0.0
    %6511 = vmatpush1.msra.mxu0 0.0
    %6512 = vmatprep.subr.mxu0 0.0
    %6513 = vmatpush1.msra.mxu0 0.0
    %6514 = vmatprep.subr.mxu0 0.0
    %6515 = vmatpush1.msra.mxu0 0.0
    %6516 = vmatprep.subr.mxu0 0.0
    %6517 = vmatpush1.msra.mxu0 0.0
    %6518 = vmatprep.subr.mxu0 0.0
    %6519 = vmatpush1.msra.mxu0 0.0
    %6520 = vmatprep.subr.mxu0 0.0
    %6521 = vmatpush1.msra.mxu0 0.0
    %6522 = vmatprep.subr.mxu0 0.0
    %6523 = vmatpush1.msra.mxu0 0.0
    %6524 = vmatprep.subr.mxu0 0.0
    %6525 = vmatpush1.msra.mxu0 0.0
    %6526 = vmatprep.subr.mxu0 0.0
    %6527 = vmatpush1.msra.mxu0 0.0
    %6528 = vmatprep.subr.mxu0 0.0
    %6529 = vmatpush1.msra.mxu0 0.0
    %6530 = vmatprep.subr.mxu0 0.0
    %6531 = vmatpush1.msra.mxu0 0.0
    %6532 = vmatprep.subr.mxu0 0.0
    %6533 = vmatpush1.msra.mxu0 0.0
    %6534 = vmatprep.subr.mxu0 0.0
    %6535 = vmatpush1.msra.mxu0 0.0
    %6536 = vmatprep.subr.mxu0 0.0
    %6537 = vmatpush1.msra.mxu0 0.0
    %6538 = vmatprep.subr.mxu0 0.0
    %6539 = vmatpush1.msra.mxu0 0.0
    %6540 = vmatprep.subr.mxu0 0.0
    %6541 = vmatpush1.msra.mxu0 0.0
    %6542 = vmatprep.subr.mxu0 0.0
    %6543 = vmatpush1.msra.mxu0 0.0
    %6544 = vmatprep.subr.mxu0 0.0
    %6545 = vmatpush1.msra.mxu0 0.0
    %6546 = vmatprep.subr.mxu0 0.0
    %6547 = vmatpush1.msra.mxu0 0.0
    %6548 = vmatprep.subr.mxu0 0.0
    %6549 = vmatpush1.msra.mxu0 0.0
    %6550 = vmatprep.subr.mxu0 0.0
    %6551 = vmatpush1.msra.mxu0 0.0
    %6552 = vmatprep.subr.mxu0 0.0
    %6553 = vmatpush1.msra.mxu0 0.0
    %6554 = vmatprep.mubr.f32.mxu0 0.0
    %6555 = vmatmul.mubr.f32.gmra.mrb[0].mxu0 %v6488
    %v6556 = vpop.f32.mrb[0].mxu0
    %v6557 = vadd.f32 0.0, %v6556
    %v6558 = vpop.f32.mrb[0].mxu0
    %v6559 = vadd.f32 0.0, %v6558
    %6560 = vdwg.mxu0
    %6561 = vmatprep.subr.mxu0 %v6484
    %6562 = vmatpush1.msra.mxu0 %v6482
    %6563 = vmatprep.subr.mxu0 0.0
    %6564 = vmatpush1.msra.mxu0 0.0
    %6565 = vmatprep.subr.mxu0 0.0
    %6566 = vmatpush1.msra.mxu0 0.0
    %6567 = vmatprep.subr.mxu0 0.0
    %6568 = vmatpush1.msra.mxu0 0.0
    %6569 = vmatprep.subr.mxu0 0.0
    %6570 = vmatpush1.msra.mxu0 0.0
    %6571 = vmatprep.subr.mxu0 0.0
    %6572 = vmatpush1.msra.mxu0 0.0
    %6573 = vmatprep.subr.mxu0 0.0
    %6574 = vmatpush1.msra.mxu0 0.0
    %6575 = vmatprep.subr.mxu0 0.0
    %6576 = vmatpush1.msra.mxu0 0.0
    %6577 = vmatprep.subr.mxu0 0.0
    %6578 = vmatpush1.msra.mxu0 0.0
    %6579 = vmatprep.subr.mxu0 0.0
    %6580 = vmatpush1.msra.mxu0 0.0
    %6581 = vmatprep.subr.mxu0 0.0
    %6582 = vmatpush1.msra.mxu0 0.0
    %6583 = vmatprep.subr.mxu0 0.0
    %6584 = vmatpush1.msra.mxu0 0.0
    %6585 = vmatprep.subr.mxu0 0.0
    %6586 = vmatpush1.msra.mxu0 0.0
    %6587 = vmatprep.subr.mxu0 0.0
    %6588 = vmatpush1.msra.mxu0 0.0
    %6589 = vmatprep.subr.mxu0 0.0
    %6590 = vmatpush1.msra.mxu0 0.0
    %6591 = vmatprep.subr.mxu0 0.0
    %6592 = vmatpush1.msra.mxu0 0.0
    %6593 = vmatprep.subr.mxu0 0.0
    %6594 = vmatpush1.msra.mxu0 0.0
    %6595 = vmatprep.subr.mxu0 0.0
    %6596 = vmatpush1.msra.mxu0 0.0
    %6597 = vmatprep.subr.mxu0 0.0
    %6598 = vmatpush1.msra.mxu0 0.0
    %6599 = vmatprep.subr.mxu0 0.0
    %6600 = vmatpush1.msra.mxu0 0.0
    %6601 = vmatprep.subr.mxu0 0.0
    %6602 = vmatpush1.msra.mxu0 0.0
    %6603 = vmatprep.subr.mxu0 0.0
    %6604 = vmatpush1.msra.mxu0 0.0
    %6605 = vmatprep.subr.mxu0 0.0
    %6606 = vmatpush1.msra.mxu0 0.0
    %6607 = vmatprep.subr.mxu0 0.0
    %6608 = vmatpush1.msra.mxu0 0.0
    %6609 = vmatprep.subr.mxu0 0.0
    %6610 = vmatpush1.msra.mxu0 0.0
    %6611 = vmatprep.subr.mxu0 0.0
    %6612 = vmatpush1.msra.mxu0 0.0
    %6613 = vmatprep.subr.mxu0 0.0
    %6614 = vmatpush1.msra.mxu0 0.0
    %6615 = vmatprep.subr.mxu0 0.0
    %6616 = vmatpush1.msra.mxu0 0.0
    %6617 = vmatprep.subr.mxu0 0.0
    %6618 = vmatpush1.msra.mxu0 0.0
    %6619 = vmatprep.subr.mxu0 0.0
    %6620 = vmatpush1.msra.mxu0 0.0
    %6621 = vmatprep.subr.mxu0 0.0
    %6622 = vmatpush1.msra.mxu0 0.0
    %6623 = vmatprep.subr.mxu0 0.0
    %6624 = vmatpush1.msra.mxu0 0.0
    %6625 = vmatprep.mubr.f32.mxu0 0.0
    %6626 = vmatmul.mubr.f32.gmra.mrb[0].mxu0 %v6488
    %v6627 = vpop.f32.mrb[0].mxu0
    %v6628 = vadd.f32 0.0, %v6627
    %v6629 = vpop.f32.mrb[0].mxu0
    %v6630 = vadd.f32 0.0, %v6629
    %6631 = vdwg.mxu0
    %v6632 = vld [vmem:[#allocation2] sm:$0x1]
    %v6633 = vld [vmem:[#allocation3] sm:$0x1]
    %v6634 = vsel %vm2208, %v6557, 0.0
    %v6635 = vsel %vm2208, %v6559, 0.0
    %v6636 = vadd.f32 %v6634, %v6635
    %v6637 = vsel %vm2208, %v6628, 0.0
    %v6638 = vadd.f32 %v6636, %v6637
    %v6639 = vsel %vm2208, %v6630, 0.0
    %v6640 = vadd.f32 %v6638, %v6639
    %6641 = vadd.xlane.f32.xlu0 %v6640
    %v6642 = vpop.xlane.xlu0 %6641
    %v6643 = vrcp.pop 512.0
    %v6644 = vmul.f32 %v6642, %v6643
    %v6645 = vsub.f32 %v6557, %v6644
    %v6646 = vsub.f32 %v6559, %v6644
    %v6647 = vsub.f32 %v6628, %v6644
    %v6648 = vsub.f32 %v6630, %v6644
    %v6649 = vmul.f32 %v6645, %v6645
    %v6650 = vmul.f32 %v6646, %v6646
    %v6651 = vmul.f32 %v6647, %v6647
    %v6652 = vmul.f32 %v6648, %v6648
    %v6653 = vsel %vm2208, %v6649, 0.0
    %v6654 = vsel %vm2208, %v6650, 0.0
    %v6655 = vadd.f32 %v6653, %v6654
    %v6656 = vsel %vm2208, %v6651, 0.0
    %v6657 = vadd.f32 %v6655, %v6656
    %v6658 = vsel %vm2208, %v6652, 0.0
    %v6659 = vadd.f32 %v6657, %v6658
    %6660 = vadd.xlane.f32.xlu0 %v6659
    %v6661 = vpop.xlane.xlu0 %6660
    %v6662 = vmul.f32 %v6661, %v6643
    %v6663 = vadd.f32 %v6662, 1e-05
    %v6664 = vrsqrt.pop %v6663
    %v6665 = vmul.f32 %v6645, %v6664
    %v6666 = vmul.f32 %v6646, %v6664
    %v6667 = vmul.f32 %v6647, %v6664
    %v6668 = vmul.f32 %v6648, %v6664
    %6670 = vset.pattern.permute.xlu0 0
    %6671 = vperm.xlu0 %6670, %v6632
    %v6672 = vpop.permute.xlu0 %6671
    %v6674 = vlaneseq
    %v6675 = vshrl.u32 %v6674, 7
    %v6676 = vsub.s32 0, %v6675
    %v6677 = vrot.slane %v6672, %v6676
    %v6678 = vmul.f32 %v6665, %v6677
    %v6679 = vmul.f32 %v6666, %v6677
    %v6680 = vmul.f32 %v6667, %v6677
    %v6681 = vmul.f32 %v6668, %v6677
    %6683 = vset.pattern.permute.xlu0 0
    %6684 = vperm.xlu0 %6683, %v6633
    %v6685 = vpop.permute.xlu0 %6684
    %v6687 = vlaneseq
    %v6688 = vshrl.u32 %v6687, 7
    %v6689 = vsub.s32 0, %v6688
    %v6690 = vrot.slane %v6685, %v6689
    %v6691 = vadd.f32 %v6678, %v6690
    %v6692 = vadd.f32 %v6679, %v6690
    %v6693 = vadd.f32 %v6680, %v6690
    %v6694 = vadd.f32 %v6681, %v6690
    %v6699 = vcombine.low %v6691, %v6692
    %v6700 = vcombine.low %v6693, %v6694
    %v6702 = vunpack.c.l.s4 1966171168
    %v6703 = vunpack.c.0.s8 %v6702
    %v6704 = vlaneseq
    %v6705 = vshrl.u32 %v6704, 7
    %v6706 = vsub.s32 %v6703, %v6705
    %v6707 = vrot.slane %v6699, %v6706
    %v6709 = vunpack.c.l.s4 1966171168
    %v6710 = vunpack.c.0.s8 %v6709
    %v6711 = vlaneseq
    %v6712 = vshrl.u32 %v6711, 7
    %v6713 = vsub.s32 %v6710, %v6712
    %v6714 = vrot.slane %v6700, %v6713
    %v6715 = vcombine.low %v6707, %v6714
    %v6717 = vunpack.c.l.s4 1966171168
    %v6718 = vunpack.c.0.s8 %v6717
    %v6719 = vlaneseq
    %v6720 = vshrl.u32 %v6719, 7
    %v6721 = vsub.s32 %v6718, %v6720
    %v6722 = vrot.slane %v6715, %v6721
    %v6724 = vlaneseq
    %vm6725 = vcmp.ge.s32.totalorder %v6724, 0
    %vm6726 = vcmp.lt.s32.totalorder %v6724, 512
    %vm6727 = vmand %vm6725, %vm6726
    %6728 = vst.msk [vmem:[%s71] sm:$0xf] %vm6727, %v6722
    // Predicated region
    $region194: #{_forward.1} parent=1 // pred_check
      _
    $region195: #{_forward.1} parent=1 // pred_check_branch
      %6730 = sbr.rel (0) target = $region197
    $region196: #{_forward.1} parent=1 // pred_region
      _
    $region197: #{_forward.1} parent=1 // pred_fallthru
      _
    // Predicated region
    $region198: #{_forward.1} parent=1 // pred_check
      _
    $region199: #{_forward.1} parent=1 // pred_check_branch
      %6732 = sbr.rel (0) target = $region201
    $region200: #{_forward.1} parent=1 // pred_region
      _
    $region201: #{_forward.1} parent=1 // pred_fallthru
      _
    // Predicated region
    $region202: #{_forward.1} parent=1 // pred_check
      _
    $region203: #{_forward.1} parent=1 // pred_check_branch
      %6734 = sbr.rel (0) target = $region205
    $region204: #{_forward.1} parent=1 // pred_region
      _
    $region205: #{_forward.1} parent=1 // pred_fallthru
      _
    // Predicated region
    $region206: #{_forward.1} parent=1 // pred_check
      _
    $region207: #{_forward.1} parent=1 // pred_check_branch
      %6736 = sbr.rel (0) target = $region209
    $region208: #{_forward.1} parent=1 // pred_region
      _
    $region209: #{_forward.1} parent=1 // pred_fallthru
      _
    %6737 = vsyncpa [#allocation5], 1
    %6738 = vsyncpa [#allocation7], 1
    %6739 = vsyncpa [#allocation10], 1
    %6740 = vsyncpa [#allocation13], 1
    %6741 = vsyncpa [#allocation16], 1
    %6742 = vsyncpa [#allocation19], 1
    %6743 = vsyncpa [#allocation22], 1

</llo_original>
